<compile_context>
chip_gen: v5e
topology: v5e:2x2
jax: 0.10.0
libtpu: 0.0.40
codegen_flags: <defaults>
</compile_context>

<pallas_src>
import functools

import numpy as np

import jax
import jax.numpy as jnp
from jax.experimental import pallas as pl
from jax.experimental.pallas import tpu as pltpu

EPS = 1e-5  # torch nn.BatchNorm2d default


# ----------------------------------------------------------------------------
# helpers
# ----------------------------------------------------------------------------
def _round_up(n, m):
    return (n + m - 1) // m * m


def _choose_tm(M):
    """Row tile and padded row count.  Prefer 256/512 tiles; pad awkward M with
    zero rows instead of collapsing to tiny tiles or whole-M blocks."""
    if M <= 256:
        mp = _round_up(M, 8)
        return mp, mp
    for t in (512, 256):
        if M % t == 0:
            return t, M
    return 256, _round_up(M, 256)


def _pad_rows(a, mp):
    m = a.shape[0]
    if m == mp:
        return a
    return jnp.pad(a, ((0, mp - m), (0, 0)))


def _col_map(col):
    return lambda i: (i, col)


def _row_map():
    return lambda i: (i, 0)


def _const_map():
    return lambda i: (0, 0)


def _compiler_params(semantics, block_bytes, scratch_bytes=0):
    # double-buffered blocks + scratch + headroom; <= 40 MiB keeps us well inside
    # v7x's 64 MiB physical VMEM per TensorCore (v5e/v6e have 128 MiB).
    limit = 2 * block_bytes + scratch_bytes + (4 << 20)
    limit = int(min(max(limit, 8 << 20), 40 << 20))
    return pltpu.CompilerParams(dimension_semantics=semantics,
                                vmem_limit_bytes=limit)


def _gelu_erf(x):
    # Exact-GELU via the Abramowitz&Stegun 7.1.26 erf polynomial (max err ~1.5e-7);
    # only mul/add/div/exp/where -> VPU + EUP, no erf primitive needed.
    z = x * 0.7071067811865476
    az = jnp.abs(z)
    t = 1.0 / (1.0 + 0.3275911 * az)
    poly = ((((1.061405429 * t - 1.453152027) * t + 1.421413741) * t
             - 0.284496736) * t + 0.254829592) * t
    erf_abs = 1.0 - poly * jnp.exp(-az * az)
    erf = jnp.where(z >= 0.0, erf_abs, -erf_abs)
    return 0.5 * x * (1.0 + erf)


# ----------------------------------------------------------------------------
# Kernel 1: BatchNorm statistics -> per-channel (scale, shift)
# ----------------------------------------------------------------------------
def _bn_stats_kernel(x_ref, g_ref, b_ref, scale_ref, shift_ref,
                     sum_ref, sq_ref, *, inv_count):
    m = pl.program_id(1)  # reduction (row) grid axis — last

    @pl.when(m == 0)
    def _():
        sum_ref[...] = jnp.zeros_like(sum_ref)
        sq_ref[...] = jnp.zeros_like(sq_ref)

    x = x_ref[...].astype(jnp.float32)
    # Column reduction per step; this mem-bound sweep hides the reduce under the
    # (tm, tc) block DMA.
    sum_ref[...] += jnp.sum(x, axis=0, keepdims=True)
    sq_ref[...] += jnp.sum(x * x, axis=0, keepdims=True)

    @pl.when(m == pl.num_programs(1) - 1)
    def _():
        mean = sum_ref[...] * inv_count
        # NOTE: one-pass var = E[x^2] - mean^2 (f32); fine for activation-scale data.
        var = jnp.maximum(sq_ref[...] * inv_count - mean * mean, 0.0)
        scale = g_ref[...].astype(jnp.float32) * jax.lax.rsqrt(var + EPS)
        scale_ref[...] = scale
        shift_ref[...] = b_ref[...].astype(jnp.float32) - mean * scale


def bn_stats(x2d, gamma, beta):
    """Training-mode (biased-var) BN scale/shift for an (M, C) tensor."""
    M, C = x2d.shape
    tm, Mp = _choose_tm(M)
    xp = _pad_rows(x2d, Mp)          # zero rows do not change the sums
    tc = 256 if C % 256 == 0 else (128 if C % 128 == 0 else C)
    g = gamma.reshape(1, C).astype(jnp.float32)
    b = beta.reshape(1, C).astype(jnp.float32)
    block_bytes = 4 * (tm * tc + 6 * tc)
    scratch_bytes = 4 * 2 * tc

    return pl.pallas_call(
        functools.partial(_bn_stats_kernel, inv_count=1.0 / M),
        out_shape=(jax.ShapeDtypeStruct((1, C), jnp.float32),
                   jax.ShapeDtypeStruct((1, C), jnp.float32)),
        grid_spec=pltpu.PrefetchScalarGridSpec(
            num_scalar_prefetch=0,
            grid=(C // tc, Mp // tm),                   # reduction axis last
            in_specs=[
                pl.BlockSpec((tm, tc), lambda c, m: (m, c)),
                pl.BlockSpec((1, tc), lambda c, m: (0, c)),
                pl.BlockSpec((1, tc), lambda c, m: (0, c)),
            ],
            out_specs=(pl.BlockSpec((1, tc), lambda c, m: (0, c)),
                       pl.BlockSpec((1, tc), lambda c, m: (0, c))),
            scratch_shapes=[pltpu.VMEM((1, tc), jnp.float32),
                            pltpu.VMEM((1, tc), jnp.float32)],
        ),
        compiler_params=_compiler_params(("parallel", "arbitrary"),
                                         block_bytes, scratch_bytes),
        cost_estimate=pl.CostEstimate(flops=int(3 * Mp * C), transcendentals=0,
                                      bytes_accessed=int(4 * (Mp * C + 6 * C))),
    )(xp, g, b)


# ----------------------------------------------------------------------------
# Kernel 2: weight-resident matmul with optional fused BN / bias / GELU / residual
# ----------------------------------------------------------------------------
def _make_linear_kernel(has_affine, has_bias, has_res, gelu):
    def kernel(*refs):
        i = 0
        x_ref = refs[i]; i += 1
        w_ref = refs[i]; i += 1
        if has_affine:
            s_ref, t_ref = refs[i], refs[i + 1]; i += 2
        if has_bias:
            b_ref = refs[i]; i += 1
        if has_res:
            r_ref = refs[i]; i += 1
        o_ref = refs[i]

        if has_affine:
            x = (x_ref[...].astype(jnp.float32) * s_ref[...] + t_ref[...]
                 ).astype(jnp.bfloat16)
        else:
            x = x_ref[...].astype(jnp.bfloat16)
        acc = jnp.dot(x, w_ref[...], preferred_element_type=jnp.float32)
        if has_bias:
            acc = acc + b_ref[...]
        if gelu:
            acc = _gelu_erf(acc)
        if has_res:
            acc = acc + r_ref[...].astype(jnp.float32)
        o_ref[...] = acc.astype(o_ref.dtype)

    return kernel


def linear_fused(x, w, *, bias=None, scale=None, shift=None, x_col_block=0,
                 gelu=False, residual=None):
    """out = [gelu]((x_block*scale+shift) @ w + bias) [+ residual].

    The whole (K, N) weight is held in VMEM (single j/k step); the grid is the
    row-tile axis only.  `x_col_block` selects which K-wide column block of `x`
    feeds the matmul (so channel halves of the 1536-wide tensor are read in
    place, no XLA slice)."""
    M = x.shape[0]
    K, N = w.shape
    assert x.shape[1] % K == 0 and x_col_block < x.shape[1] // K
    tm, Mp = _choose_tm(M)
    has_affine = scale is not None
    has_bias = bias is not None
    has_res = residual is not None

    in_specs = [pl.BlockSpec((tm, K), _col_map(x_col_block)),
                pl.BlockSpec((K, N), _const_map())]
    args = [_pad_rows(x, Mp), w.astype(jnp.bfloat16)]
    if has_affine:
        in_specs += [pl.BlockSpec((1, K), _const_map()),
                     pl.BlockSpec((1, K), _const_map())]
        args += [jnp.asarray(scale, jnp.float32).reshape(1, K),
                 jnp.asarray(shift, jnp.float32).reshape(1, K)]
    if has_bias:
        in_specs += [pl.BlockSpec((1, N), _const_map())]
        args += [jnp.asarray(bias, jnp.float32).reshape(1, N)]
    if has_res:
        assert residual.shape == (M, N)
        in_specs += [pl.BlockSpec((tm, N), _row_map())]
        args += [_pad_rows(residual, Mp)]

    block_bytes = (4 * tm * K + 2 * K * N + 4 * tm * N
                   + (4 * tm * N if has_res else 0) + 4 * (2 * K + N))

    # NOTE: on v7x keep Mp//tm >= 2 (even) so the two TensorCores both get work;
    # the padding above guarantees that for realistic M.
    out = pl.pallas_call(
        _make_linear_kernel(has_affine, has_bias, has_res, gelu),
        out_shape=jax.ShapeDtypeStruct((Mp, N), x.dtype),
        grid_spec=pltpu.PrefetchScalarGridSpec(
            num_scalar_prefetch=0,
            grid=(Mp // tm,),
            in_specs=in_specs,
            out_specs=pl.BlockSpec((tm, N), _row_map()),
        ),
        compiler_params=_compiler_params(("parallel",), block_bytes),
        cost_estimate=pl.CostEstimate(
            flops=int(2 * Mp * N * K),
            transcendentals=int(Mp * N) if gelu else 0,
            bytes_accessed=int(4 * Mp * K + 2 * K * N + 4 * Mp * N)),
    )(*args)
    return out[:M] if Mp != M else out


# ----------------------------------------------------------------------------
# Kernel 3: attention output projection + concat + residual assembly (one pass)
#   out[:, :dim] = attn_o @ Wout + bout + x[:, :dim]
#   out[:, dim:] = x[:, dim:] * (scale_y + 1) + shift_y     (= y_norm + x_y)
# ----------------------------------------------------------------------------
def _attn_out_kernel(o_ref, w_ref, b_ref, x_ref, s_ref, t_ref, out_ref, *, dim):
    o = jnp.dot(o_ref[...].astype(jnp.bfloat16), w_ref[...],
                preferred_element_type=jnp.float32) + b_ref[...]
    x = x_ref[...].astype(jnp.float32)
    out_ref[:, :dim] = (o + x[:, :dim]).astype(out_ref.dtype)
    out_ref[:, dim:] = (x[:, dim:] * (s_ref[...] + 1.0) + t_ref[...]
                        ).astype(out_ref.dtype)


def attn_out_assemble(attn_o, w_out, b_out, x2d, scale_y, shift_y, dim):
    M, inner = attn_o.shape
    C = x2d.shape[1]
    tm, Mp = _choose_tm(M)
    block_bytes = 4 * tm * inner + 2 * inner * dim + 4 * tm * C + 4 * tm * C + 4 * 3 * dim

    out = pl.pallas_call(
        functools.partial(_attn_out_kernel, dim=dim),
        out_shape=jax.ShapeDtypeStruct((Mp, C), x2d.dtype),
        grid_spec=pltpu.PrefetchScalarGridSpec(
            num_scalar_prefetch=0,
            grid=(Mp // tm,),
            in_specs=[
                pl.BlockSpec((tm, inner), _row_map()),
                pl.BlockSpec((inner, dim), _const_map()),
                pl.BlockSpec((1, dim), _const_map()),
                pl.BlockSpec((tm, C), _row_map()),
                pl.BlockSpec((1, dim), _const_map()),
                pl.BlockSpec((1, dim), _const_map()),
            ],
            out_specs=pl.BlockSpec((tm, C), _row_map()),
        ),
        compiler_params=_compiler_params(("parallel",), block_bytes),
        cost_estimate=pl.CostEstimate(
            flops=int(2 * Mp * dim * inner + 4 * Mp * C), transcendentals=0,
            bytes_accessed=int(4 * Mp * (inner + 2 * C) + 2 * inner * dim)),
    )(_pad_rows(attn_o, Mp),
      w_out.astype(jnp.bfloat16),
      jnp.asarray(b_out, jnp.float32).reshape(1, dim),
      _pad_rows(x2d, Mp),
      jnp.asarray(scale_y, jnp.float32).reshape(1, dim),
      jnp.asarray(shift_y, jnp.float32).reshape(1, dim))
    return out[:M] if Mp != M else out


# ----------------------------------------------------------------------------
# Window-attention plumbing (layout + tiny per-window math, left in jnp/XLA)
# ----------------------------------------------------------------------------
def _to_windows(t, heads, ws):
    # 'b (nw_h w_h) (nw_w w_w) (h d) -> b h (nw_h nw_w) (w_h w_w) d'
    B, H, W, inner = t.shape
    d = inner // heads
    nwh, nww = H // ws, W // ws
    t = t.reshape(B, nwh, ws, nww, ws, heads, d)
    t = jnp.transpose(t, (0, 5, 1, 3, 2, 4, 6))
    return t.reshape(B, heads, nwh * nww, ws * ws, d)


def _from_windows(t, H, W, ws):
    # 'b h (nw_h nw_w) (w_h w_w) d -> b (nw_h w_h) (nw_w w_w) (h d)'
    B, heads, _, _, d = t.shape
    nwh, nww = H // ws, W // ws
    t = t.reshape(B, heads, nwh, nww, ws, ws, d)
    t = jnp.transpose(t, (0, 2, 4, 3, 5, 1, 6))
    return t.reshape(B, H, W, heads * d)


def _rel_pos_bias(pos_embedding, ws, relative):
    if not relative:
        return pos_embedding
    idx = np.array([[i, j] for i in range(ws) for j in range(ws)])
    rel = idx[None, :, :] - idx[:, None, :] + ws - 1
    return pos_embedding[rel[..., 0], rel[..., 1]]


def _shift_mask(ws, disp, nw_h, nw_w):
    ws2 = ws * ws
    ul = np.zeros((ws2, ws2), np.float32)
    ul[-disp * ws:, :-disp * ws] = -np.inf
    ul[:-disp * ws, -disp * ws:] = -np.inf
    lr = np.zeros((ws, ws, ws, ws), np.float32)
    lr[:, -disp:, :, :-disp] = -np.inf
    lr[:, :-disp, :, -disp:] = -np.inf
    lr = lr.reshape(ws2, ws2)
    mask = np.zeros((nw_h * nw_w, ws2, ws2), np.float32)
    mask[-nw_w:] += ul
    mask[nw_w - 1::nw_w] += lr
    return jnp.asarray(mask)


# ----------------------------------------------------------------------------
# SwinBlock4 forward
# ----------------------------------------------------------------------------
def _attention_block(x, p, *, heads, head_dim, window_size, shifted,
                     relative_pos_embedding):
    B, H, W, C = x.shape
    dim = C // 2
    inner = heads * head_dim
    ws = window_size
    M = B * H * W
    nw_h, nw_w = H // ws, W // ws
    disp = ws // 2

    x2d = x.reshape(M, C)
    scale1, shift1 = bn_stats(x2d, p['g1'], p['b1'])
    sx, tx = scale1[:, :dim], shift1[:, :dim]
    sy, ty = scale1[:, dim:], shift1[:, dim:]

    # q branch: BN normalize fused into the qkv matmul input load.
    if shifted:
        # TODO(synk): fold the cyclic shift into the qkv LHS index_map (scalar-
        # prefetch row table) instead of materializing the rolled half in XLA.
        xa = jnp.roll(x[..., :dim], shift=(-disp, -disp), axis=(1, 2)).reshape(M, dim)
        qkv_x = linear_fused(xa, p['Wqkv'], scale=sx, shift=tx)
    else:
        qkv_x = linear_fused(x2d, p['Wqkv'], scale=sx, shift=tx, x_col_block=0)
    # k/v branch: second channel half selected via index_map column block; y_norm
    # is never materialized.
    qkv_y = linear_fused(x2d, p['Wqkv'], scale=sy, shift=ty, x_col_block=1)

    q = _to_windows(qkv_x[:, :inner].reshape(B, H, W, inner), heads, ws)
    k_win = _to_windows(qkv_y[:, inner:2 * inner].reshape(B, H, W, inner), heads, ws)
    v_win = _to_windows(qkv_y[:, 2 * inner:].reshape(B, H, W, inner), heads, ws)

    # TODO(synk): tiny per-window matmuls + layout permutes + softmax left in XLA;
    # a Pallas flash kernel is not worthwhile at these window sizes.
    dots = jnp.einsum('bhwid,bhwjd->bhwij', q, k_win) * (head_dim ** -0.5)
    dots = dots + _rel_pos_bias(p['pos'], ws, relative_pos_embedding)
    if shifted:
        dots = dots + _shift_mask(ws, disp, nw_h, nw_w)
    attn = jax.nn.softmax(dots, axis=-1)
    o = _from_windows(jnp.einsum('bhwij,bhwjd->bhwid', attn, v_win),
                      H, W, ws).reshape(M, inner)

    if shifted:
        # TODO(synk): the back cyclic shift breaks the fused assembly; fall back
        # to XLA for the roll + concat + residual on the shifted variant.
        o = linear_fused(o, p['Wout'], bias=p['bout']).reshape(B, H, W, dim)
        o = jnp.roll(o, shift=(disp, disp), axis=(1, 2)).reshape(M, dim)
        y_res = x2d[:, dim:] * (sy + 1.0) + ty
        x1 = jnp.concatenate([o + x2d[:, :dim], y_res], axis=-1)
    else:
        # to_out + concat + residual in one Pallas pass.
        x1 = attn_out_assemble(o, p['Wout'], p['bout'], x2d, sy, ty, dim)
    return x1.reshape(B, H, W, C)


def _mlp_block(x1, p):
    B, H, W, C = x1.shape
    M = B * H * W
    x1_2d = x1.reshape(M, C)
    scale2, shift2 = bn_stats(x1_2d, p['g2'], p['b2'])
    # BN normalize fused into the FF1 input load; exact erf-GELU fused into its
    # epilogue -> the normalized (M, C) tensor and the pre-GELU (M, mlp) tensor
    # never make an HBM round trip.
    h = linear_fused(x1_2d, p['W1'], bias=p['bf1'],
                     scale=scale2, shift=shift2, gelu=True)
    # FF2 with the residual add fused into its epilogue.
    x2 = linear_fused(h, p['W2'], bias=p['bf2'], residual=x1_2d)
    return x2.reshape(B, H, W, C)


def swin_block4_forward(x, params, *, heads, head_dim, window_size, shifted,
                        relative_pos_embedding):
    x = _attention_block(x, params, heads=heads, head_dim=head_dim,
                         window_size=window_size, shifted=shifted,
                         relative_pos_embedding=relative_pos_embedding)
    x = _mlp_block(x, params)
    return x


# ----------------------------------------------------------------------------
# Pure-jnp f32 reference (mirrors the PyTorch forward)
# ----------------------------------------------------------------------------
def _reference_forward(x, p, *, heads, head_dim, window_size, shifted,
                       relative_pos_embedding):
    B, H, W, C = x.shape
    dim = C // 2
    inner = heads * head_dim
    ws = window_size
    nw_h, nw_w = H // ws, W // ws
    disp = ws // 2

    def bn(t, g, b):
        tf = t.astype(jnp.float32)
        mean = jnp.mean(tf, axis=(0, 1, 2), keepdims=True)
        var = jnp.mean((tf - mean) ** 2, axis=(0, 1, 2), keepdims=True)
        return (tf - mean) / jnp.sqrt(var + EPS) * g + b

    def attn_fn(z):
        xa, ya = z[..., :dim], z[..., dim:]
        if shifted:
            xa = jnp.roll(xa, shift=(-disp, -disp), axis=(1, 2))
        qkv = xa.reshape(-1, dim) @ p['Wqkv']
        QKV = ya.reshape(-1, dim) @ p['Wqkv']
        q = _to_windows(qkv[:, :inner].reshape(B, H, W, inner), heads, ws)
        K = _to_windows(QKV[:, inner:2 * inner].reshape(B, H, W, inner), heads, ws)
        V = _to_windows(QKV[:, 2 * inner:].reshape(B, H, W, inner), heads, ws)
        dots = jnp.einsum('bhwid,bhwjd->bhwij', q, K) * (head_dim ** -0.5)
        dots = dots + _rel_pos_bias(p['pos'], ws, relative_pos_embedding)
        if shifted:
            dots = dots + _shift_mask(ws, disp, nw_h, nw_w)
        attn = jax.nn.softmax(dots, axis=-1)
        o = _from_windows(jnp.einsum('bhwij,bhwjd->bhwid', attn, V), H, W, ws)
        o = (o.reshape(-1, inner) @ p['Wout'] + p['bout']).reshape(B, H, W, dim)
        if shifted:
            o = jnp.roll(o, shift=(disp, disp), axis=(1, 2))
        return jnp.concatenate([o, ya], axis=-1)

    x1 = attn_fn(bn(x, p['g1'], p['b1'])) + x
    y2 = bn(x1, p['g2'], p['b2'])
    h = jax.nn.gelu(y2.reshape(-1, C) @ p['W1'] + p['bf1'], approximate=False)
    ff = (h @ p['W2'] + p['bf2']).reshape(B, H, W, C)
    return ff + x1


# ----------------------------------------------------------------------------
if __name__ == "__main__":
    key = jax.random.PRNGKey(0)
    ks = jax.random.split(key, 13)

    # The module hard-codes BatchNorm2d(1536), so channels must be 1536 (=2*dim).
    B, H, W = 2, 4, 4
    dim = 768
    C = 2 * dim
    heads, head_dim = 4, 32          # inner_dim = 128
    window_size = 2
    mlp_dim = 256
    shifted = False
    relative_pos_embedding = True
    inner = heads * head_dim

    def rnd(k, shape, s=1.0):
        return s * jax.random.normal(k, shape, dtype=jnp.float32)

    params = {
        'g1': 1.0 + 0.02 * rnd(ks[0], (C,)),
        'b1': 0.02 * rnd(ks[1], (C,)),
        'Wqkv': rnd(ks[2], (dim, 3 * inner), dim ** -0.5),
        'Wout': rnd(ks[3], (inner, dim), inner ** -0.5),
        'bout': 0.02 * rnd(ks[4], (dim,)),
        'pos': 0.02 * rnd(ks[5], ((2 * window_size - 1, 2 * window_size - 1)
                                  if relative_pos_embedding
                                  else (window_size ** 2, window_size ** 2))),
        'g2': 1.0 + 0.02 * rnd(ks[6], (C,)),
        'b2': 0.02 * rnd(ks[7], (C,)),
        'W1': rnd(ks[8], (C, mlp_dim), C ** -0.5),
        'bf1': 0.02 * rnd(ks[9], (mlp_dim,)),
        'W2': rnd(ks[10], (mlp_dim, C), mlp_dim ** -0.5),
        'bf2': 0.02 * rnd(ks[11], (C,)),
    }
    x = rnd(ks[12], (B, H, W, C))

    fwd = jax.jit(swin_block4_forward,
                  static_argnames=("heads", "head_dim", "window_size",
                                   "shifted", "relative_pos_embedding"))
    out = jax.block_until_ready(
        fwd(x, params, heads=heads, head_dim=head_dim,
            window_size=window_size, shifted=shifted,
            relative_pos_embedding=relative_pos_embedding))

    ref = _reference_forward(x, params, heads=heads, head_dim=head_dim,
                             window_size=window_size, shifted=shifted,
                             relative_pos_embedding=relative_pos_embedding)

    assert out.shape == (B, H, W, C)
    err = float(jnp.max(jnp.abs(out - ref)))
    rel = float(jnp.linalg.norm(out - ref) / jnp.linalg.norm(ref))
    # bf16 MXU operands vs f32 reference: allow bf16-scale error.
    assert err < 1e-1 and rel < 1e-2, f"max abs err {err}, rel fro err {rel}"
    print("KERNEL_OK")
</pallas_src>

<mosaic_0001>
module attributes {stable_mosaic.version = 11 : i64} {
  func.func @_bn_stats_kernel(%arg0: i32, %arg1: i32, %arg2: memref<32x256xf32, #tpu.memory_space<vmem>>, %arg3: memref<1x256xf32, #tpu.memory_space<vmem>>, %arg4: memref<1x256xf32, #tpu.memory_space<vmem>>, %arg5: memref<1x256xf32, #tpu.memory_space<vmem>>, %arg6: memref<1x256xf32, #tpu.memory_space<vmem>>, %arg7: memref<1x256xf32, #tpu.memory_space<vmem>>, %arg8: memref<1x256xf32, #tpu.memory_space<vmem>>) attributes {dimension_semantics = [#tpu.dimension_semantics<parallel>, #tpu.dimension_semantics<arbitrary>], iteration_bounds = array<i64: 6, 1>, scalar_prefetch = 0 : i64, scratch_operands = 2 : i64, tpu.core_type = #tpu.core_type<tc>, window_params = [{transform_indices = @transform_0, window_bounds = array<i64: 32, 256>}, {transform_indices = @transform_1, window_bounds = array<i64: 1, 256>}, {transform_indices = @transform_2, window_bounds = array<i64: 1, 256>}, {transform_indices = @transform_3, window_bounds = array<i64: 1, 256>}, {transform_indices = @transform_4, window_bounds = array<i64: 1, 256>}]} {
    %c0_i32 = arith.constant 0 : i32
    %0 = arith.cmpi eq, %arg1, %c0_i32 : i32
    %1 = arith.extui %0 : i1 to i32
    %c0_i32_0 = arith.constant 0 : i32
    %2 = arith.cmpi ne, %1, %c0_i32_0 : i32
    scf.if %2 {
      %cst_13 = arith.constant 0.000000e+00 : f32
      %18 = vector.broadcast %cst_13 : f32 to vector<1x256xf32>
      %c0_14 = arith.constant 0 : index
      %c0_15 = arith.constant 0 : index
      %19 = vector.load %arg7[%c0_14, %c0_15] : memref<1x256xf32, #tpu.memory_space<vmem>>, vector<1x256xf32>
      tpu.vector_store %arg7[%c0_14, %c0_15], %18 {strides = array<i32>} : memref<1x256xf32, #tpu.memory_space<vmem>>, vector<1x256xf32>,
      %cst_16 = arith.constant 0.000000e+00 : f32
      %20 = vector.broadcast %cst_16 : f32 to vector<1x256xf32>
      %c0_17 = arith.constant 0 : index
      %c0_18 = arith.constant 0 : index
      %21 = vector.load %arg8[%c0_17, %c0_18] : memref<1x256xf32, #tpu.memory_space<vmem>>, vector<1x256xf32>
      tpu.vector_store %arg8[%c0_17, %c0_18], %20 {strides = array<i32>} : memref<1x256xf32, #tpu.memory_space<vmem>>, vector<1x256xf32>,
    } else {
    }
    %c0 = arith.constant 0 : index
    %c0_1 = arith.constant 0 : index
    %3 = vector.load %arg2[%c0, %c0_1] : memref<32x256xf32, #tpu.memory_space<vmem>>, vector<32x256xf32>
    %c0_2 = arith.constant 0 : index
    %c0_3 = arith.constant 0 : index
    %4 = vector.load %arg7[%c0_2, %c0_3] : memref<1x256xf32, #tpu.memory_space<vmem>>, vector<1x256xf32>
    %cst = arith.constant dense<0.000000e+00> : vector<256xf32>
    %5 = vector.multi_reduction <add>, %3, %cst [0] : vector<32x256xf32> to vector<256xf32>
    %6 = vector.shape_cast %5 : vector<256xf32> to vector<1x256xf32>
    %7 = arith.addf %4, %6 : vector<1x256xf32>
    %c0_4 = arith.constant 0 : index
    %c0_5 = arith.constant 0 : index
    %8 = vector.load %arg7[%c0_4, %c0_5] : memref<1x256xf32, #tpu.memory_space<vmem>>, vector<1x256xf32>
    tpu.vector_store %arg7[%c0_4, %c0_5], %7 {strides = array<i32>} : memref<1x256xf32, #tpu.memory_space<vmem>>, vector<1x256xf32>,
    %c0_6 = arith.constant 0 : index
    %c0_7 = arith.constant 0 : index
    %9 = vector.load %arg8[%c0_6, %c0_7] : memref<1x256xf32, #tpu.memory_space<vmem>>, vector<1x256xf32>
    %10 = arith.mulf %3, %3 : vector<32x256xf32>
    %cst_8 = arith.constant dense<0.000000e+00> : vector<256xf32>
    %11 = vector.multi_reduction <add>, %10, %cst_8 [0] : vector<32x256xf32> to vector<256xf32>
    %12 = vector.shape_cast %11 : vector<256xf32> to vector<1x256xf32>
    %13 = arith.addf %9, %12 : vector<1x256xf32>
    %c0_9 = arith.constant 0 : index
    %c0_10 = arith.constant 0 : index
    %14 = vector.load %arg8[%c0_9, %c0_10] : memref<1x256xf32, #tpu.memory_space<vmem>>, vector<1x256xf32>
    tpu.vector_store %arg8[%c0_9, %c0_10], %13 {strides = array<i32>} : memref<1x256xf32, #tpu.memory_space<vmem>>, vector<1x256xf32>,
    %c0_i32_11 = arith.constant 0 : i32
    %15 = arith.cmpi eq, %arg1, %c0_i32_11 : i32
    %16 = arith.extui %15 : i1 to i32
    %c0_i32_12 = arith.constant 0 : i32
    %17 = arith.cmpi ne, %16, %c0_i32_12 : i32
    scf.if %17 {
      %c0_13 = arith.constant 0 : index
      %c0_14 = arith.constant 0 : index
      %18 = vector.load %arg7[%c0_13, %c0_14] : memref<1x256xf32, #tpu.memory_space<vmem>>, vector<1x256xf32>
      %cst_15 = arith.constant 3.125000e-02 : f32
      %19 = vector.broadcast %cst_15 : f32 to vector<1x256xf32>
      %20 = arith.mulf %18, %19 : vector<1x256xf32>
      %c0_16 = arith.constant 0 : index
      %c0_17 = arith.constant 0 : index
      %21 = vector.load %arg8[%c0_16, %c0_17] : memref<1x256xf32, #tpu.memory_space<vmem>>, vector<1x256xf32>
      %cst_18 = arith.constant 3.125000e-02 : f32
      %22 = vector.broadcast %cst_18 : f32 to vector<1x256xf32>
      %23 = arith.mulf %21, %22 : vector<1x256xf32>
      %24 = arith.mulf %20, %20 : vector<1x256xf32>
      %25 = arith.subf %23, %24 : vector<1x256xf32>
      %cst_19 = arith.constant 0.000000e+00 : f32
      %26 = vector.broadcast %cst_19 : f32 to vector<1x256xf32>
      %27 = arith.maximumf %25, %26 : vector<1x256xf32>
      %c0_20 = arith.constant 0 : index
      %c0_21 = arith.constant 0 : index
      %28 = vector.load %arg3[%c0_20, %c0_21] : memref<1x256xf32, #tpu.memory_space<vmem>>, vector<1x256xf32>
      %cst_22 = arith.constant 9.99999974E-6 : f32
      %29 = vector.broadcast %cst_22 : f32 to vector<1x256xf32>
      %30 = arith.addf %27, %29 : vector<1x256xf32>
      %31 = math.rsqrt %30 : vector<1x256xf32>
      %32 = arith.mulf %28, %31 : vector<1x256xf32>
      %c0_23 = arith.constant 0 : index
      %c0_24 = arith.constant 0 : index
      %33 = vector.load %arg5[%c0_23, %c0_24] : memref<1x256xf32, #tpu.memory_space<vmem>>, vector<1x256xf32>
      tpu.vector_store %arg5[%c0_23, %c0_24], %32 {strides = array<i32>} : memref<1x256xf32, #tpu.memory_space<vmem>>, vector<1x256xf32>,
      %c0_25 = arith.constant 0 : index
      %c0_26 = arith.constant 0 : index
      %34 = vector.load %arg4[%c0_25, %c0_26] : memref<1x256xf32, #tpu.memory_space<vmem>>, vector<1x256xf32>
      %35 = arith.mulf %20, %32 : vector<1x256xf32>
      %36 = arith.subf %34, %35 : vector<1x256xf32>
      %c0_27 = arith.constant 0 : index
      %c0_28 = arith.constant 0 : index
      %37 = vector.load %arg6[%c0_27, %c0_28] : memref<1x256xf32, #tpu.memory_space<vmem>>, vector<1x256xf32>
      tpu.vector_store %arg6[%c0_27, %c0_28], %36 {strides = array<i32>} : memref<1x256xf32, #tpu.memory_space<vmem>>, vector<1x256xf32>,
    } else {
    }
    return
  }
  func.func @transform_0(%arg0: i32, %arg1: i32) -> (i32, i32) {
    %c0_i32 = arith.constant 0 : i32
    return %arg1, %arg0 : i32, i32
  }
  func.func @transform_1(%arg0: i32, %arg1: i32) -> (i32, i32) {
    %c0_i32 = arith.constant 0 : i32
    %c0_i32_0 = arith.constant 0 : i32
    return %c0_i32, %arg0 : i32, i32
  }
  func.func @transform_2(%arg0: i32, %arg1: i32) -> (i32, i32) {
    %c0_i32 = arith.constant 0 : i32
    %c0_i32_0 = arith.constant 0 : i32
    return %c0_i32, %arg0 : i32, i32
  }
  func.func @transform_3(%arg0: i32, %arg1: i32) -> (i32, i32) {
    %c0_i32 = arith.constant 0 : i32
    %c0_i32_0 = arith.constant 0 : i32
    return %c0_i32, %arg0 : i32, i32
  }
  func.func @transform_4(%arg0: i32, %arg1: i32) -> (i32, i32) {
    %c0_i32 = arith.constant 0 : i32
    %c0_i32_0 = arith.constant 0 : i32
    return %c0_i32, %arg0 : i32, i32
  }
}

module attributes {stable_mosaic.version = 11 : i64} {
  func.func @kernel(%arg0: i32, %arg1: memref<32x768xf32, #tpu.memory_space<vmem>>, %arg2: memref<768x384xbf16, #tpu.memory_space<vmem>>, %arg3: memref<1x768xf32, #tpu.memory_space<vmem>>, %arg4: memref<1x768xf32, #tpu.memory_space<vmem>>, %arg5: memref<32x384xf32, #tpu.memory_space<vmem>>) attributes {dimension_semantics = [#tpu.dimension_semantics<parallel>], iteration_bounds = array<i64: 1>, scalar_prefetch = 0 : i64, scratch_operands = 0 : i64, tpu.core_type = #tpu.core_type<tc>, window_params = [{transform_indices = @transform_0, window_bounds = array<i64: 32, 768>}, {pipeline_mode = #tpu.pipeline_mode<synchronous>, transform_indices = @transform_1, window_bounds = array<i64: 768, 384>}, {pipeline_mode = #tpu.pipeline_mode<synchronous>, transform_indices = @transform_2, window_bounds = array<i64: 1, 768>}, {pipeline_mode = #tpu.pipeline_mode<synchronous>, transform_indices = @transform_3, window_bounds = array<i64: 1, 768>}, {transform_indices = @transform_4, window_bounds = array<i64: 32, 384>}]} {
    %c0 = arith.constant 0 : index
    %c0_0 = arith.constant 0 : index
    %0 = vector.load %arg1[%c0, %c0_0] : memref<32x768xf32, #tpu.memory_space<vmem>>, vector<32x768xf32>
    %c0_1 = arith.constant 0 : index
    %c0_2 = arith.constant 0 : index
    %1 = vector.load %arg3[%c0_1, %c0_2] : memref<1x768xf32, #tpu.memory_space<vmem>>, vector<1x768xf32>
    %2 = vector.broadcast %1 : vector<1x768xf32> to vector<32x768xf32>
    %3 = arith.mulf %0, %2 : vector<32x768xf32>
    %c0_3 = arith.constant 0 : index
    %c0_4 = arith.constant 0 : index
    %4 = vector.load %arg4[%c0_3, %c0_4] : memref<1x768xf32, #tpu.memory_space<vmem>>, vector<1x768xf32>
    %5 = vector.broadcast %4 : vector<1x768xf32> to vector<32x768xf32>
    %6 = arith.addf %3, %5 : vector<32x768xf32>
    %7 = arith.truncf %6 : vector<32x768xf32> to vector<32x768xbf16>
    %c0_5 = arith.constant 0 : index
    %c0_6 = arith.constant 0 : index
    %8 = vector.load %arg2[%c0_5, %c0_6] : memref<768x384xbf16, #tpu.memory_space<vmem>>, vector<768x384xbf16>
    %cst = arith.constant dense<0.000000e+00> : vector<32x384xf32>
    %9 = tpu.matmul %7, %8, %cst {dimension_numbers = #tpu.dot_dimension_numbers<[1], [0], [0], [1], [0, 0, 1, 1], [], []>} : vector<32x768xbf16>, vector<768x384xbf16>, vector<32x384xf32> -> vector<32x384xf32>
    %c0_7 = arith.constant 0 : index
    %c0_8 = arith.constant 0 : index
    %10 = vector.load %arg5[%c0_7, %c0_8] : memref<32x384xf32, #tpu.memory_space<vmem>>, vector<32x384xf32>
    tpu.vector_store %arg5[%c0_7, %c0_8], %9 {strides = array<i32>} : memref<32x384xf32, #tpu.memory_space<vmem>>, vector<32x384xf32>,
    return
  }
  func.func @transform_0(%arg0: i32) -> (i32, i32) {
    %c0_i32 = arith.constant 0 : i32
    %c0_i32_0 = arith.constant 0 : i32
    return %arg0, %c0_i32 : i32, i32
  }
  func.func @transform_1(%arg0: i32) -> (i32, i32) {
    %c0_i32 = arith.constant 0 : i32
    %c0_i32_0 = arith.constant 0 : i32
    %c0_i32_1 = arith.constant 0 : i32
    return %c0_i32, %c0_i32_0 : i32, i32
  }
  func.func @transform_2(%arg0: i32) -> (i32, i32) {
    %c0_i32 = arith.constant 0 : i32
    %c0_i32_0 = arith.constant 0 : i32
    %c0_i32_1 = arith.constant 0 : i32
    return %c0_i32, %c0_i32_0 : i32, i32
  }
  func.func @transform_3(%arg0: i32) -> (i32, i32) {
    %c0_i32 = arith.constant 0 : i32
    %c0_i32_0 = arith.constant 0 : i32
    %c0_i32_1 = arith.constant 0 : i32
    return %c0_i32, %c0_i32_0 : i32, i32
  }
  func.func @transform_4(%arg0: i32) -> (i32, i32) {
    %c0_i32 = arith.constant 0 : i32
    %c0_i32_0 = arith.constant 0 : i32
    return %arg0, %c0_i32 : i32, i32
  }
}

module attributes {stable_mosaic.version = 11 : i64} {
  func.func @kernel(%arg0: i32, %arg1: memref<32x768xf32, #tpu.memory_space<vmem>>, %arg2: memref<768x384xbf16, #tpu.memory_space<vmem>>, %arg3: memref<1x768xf32, #tpu.memory_space<vmem>>, %arg4: memref<1x768xf32, #tpu.memory_space<vmem>>, %arg5: memref<32x384xf32, #tpu.memory_space<vmem>>) attributes {dimension_semantics = [#tpu.dimension_semantics<parallel>], iteration_bounds = array<i64: 1>, scalar_prefetch = 0 : i64, scratch_operands = 0 : i64, tpu.core_type = #tpu.core_type<tc>, window_params = [{transform_indices = @transform_0, window_bounds = array<i64: 32, 768>}, {pipeline_mode = #tpu.pipeline_mode<synchronous>, transform_indices = @transform_1, window_bounds = array<i64: 768, 384>}, {pipeline_mode = #tpu.pipeline_mode<synchronous>, transform_indices = @transform_2, window_bounds = array<i64: 1, 768>}, {pipeline_mode = #tpu.pipeline_mode<synchronous>, transform_indices = @transform_3, window_bounds = array<i64: 1, 768>}, {transform_indices = @transform_4, window_bounds = array<i64: 32, 384>}]} {
    %c0 = arith.constant 0 : index
    %c0_0 = arith.constant 0 : index
    %0 = vector.load %arg1[%c0, %c0_0] : memref<32x768xf32, #tpu.memory_space<vmem>>, vector<32x768xf32>
    %c0_1 = arith.constant 0 : index
    %c0_2 = arith.constant 0 : index
    %1 = vector.load %arg3[%c0_1, %c0_2] : memref<1x768xf32, #tpu.memory_space<vmem>>, vector<1x768xf32>
    %2 = vector.broadcast %1 : vector<1x768xf32> to vector<32x768xf32>
    %3 = arith.mulf %0, %2 : vector<32x768xf32>
    %c0_3 = arith.constant 0 : index
    %c0_4 = arith.constant 0 : index
    %4 = vector.load %arg4[%c0_3, %c0_4] : memref<1x768xf32, #tpu.memory_space<vmem>>, vector<1x768xf32>
    %5 = vector.broadcast %4 : vector<1x768xf32> to vector<32x768xf32>
    %6 = arith.addf %3, %5 : vector<32x768xf32>
    %7 = arith.truncf %6 : vector<32x768xf32> to vector<32x768xbf16>
    %c0_5 = arith.constant 0 : index
    %c0_6 = arith.constant 0 : index
    %8 = vector.load %arg2[%c0_5, %c0_6] : memref<768x384xbf16, #tpu.memory_space<vmem>>, vector<768x384xbf16>
    %cst = arith.constant dense<0.000000e+00> : vector<32x384xf32>
    %9 = tpu.matmul %7, %8, %cst {dimension_numbers = #tpu.dot_dimension_numbers<[1], [0], [0], [1], [0, 0, 1, 1], [], []>} : vector<32x768xbf16>, vector<768x384xbf16>, vector<32x384xf32> -> vector<32x384xf32>
    %c0_7 = arith.constant 0 : index
    %c0_8 = arith.constant 0 : index
    %10 = vector.load %arg5[%c0_7, %c0_8] : memref<32x384xf32, #tpu.memory_space<vmem>>, vector<32x384xf32>
    tpu.vector_store %arg5[%c0_7, %c0_8], %9 {strides = array<i32>} : memref<32x384xf32, #tpu.memory_space<vmem>>, vector<32x384xf32>,
    return
  }
  func.func @transform_0(%arg0: i32) -> (i32, i32) {
    %c1_i32 = arith.constant 1 : i32
    %c0_i32 = arith.constant 0 : i32
    return %arg0, %c1_i32 : i32, i32
  }
  func.func @transform_1(%arg0: i32) -> (i32, i32) {
    %c0_i32 = arith.constant 0 : i32
    %c0_i32_0 = arith.constant 0 : i32
    %c0_i32_1 = arith.constant 0 : i32
    return %c0_i32, %c0_i32_0 : i32, i32
  }
  func.func @transform_2(%arg0: i32) -> (i32, i32) {
    %c0_i32 = arith.constant 0 : i32
    %c0_i32_0 = arith.constant 0 : i32
    %c0_i32_1 = arith.constant 0 : i32
    return %c0_i32, %c0_i32_0 : i32, i32
  }
  func.func @transform_3(%arg0: i32) -> (i32, i32) {
    %c0_i32 = arith.constant 0 : i32
    %c0_i32_0 = arith.constant 0 : i32
    %c0_i32_1 = arith.constant 0 : i32
    return %c0_i32, %c0_i32_0 : i32, i32
  }
  func.func @transform_4(%arg0: i32) -> (i32, i32) {
    %c0_i32 = arith.constant 0 : i32
    %c0_i32_0 = arith.constant 0 : i32
    return %arg0, %c0_i32 : i32, i32
  }
}

module attributes {stable_mosaic.version = 11 : i64} {
  func.func @_attn_out_kernel(%arg0: i32, %arg1: memref<32x128xf32, #tpu.memory_space<vmem>>, %arg2: memref<128x768xbf16, #tpu.memory_space<vmem>>, %arg3: memref<1x768xf32, #tpu.memory_space<vmem>>, %arg4: memref<32x1536xf32, #tpu.memory_space<vmem>>, %arg5: memref<1x768xf32, #tpu.memory_space<vmem>>, %arg6: memref<1x768xf32, #tpu.memory_space<vmem>>, %arg7: memref<32x1536xf32, #tpu.memory_space<vmem>>) attributes {dimension_semantics = [#tpu.dimension_semantics<parallel>], iteration_bounds = array<i64: 1>, scalar_prefetch = 0 : i64, scratch_operands = 0 : i64, tpu.core_type = #tpu.core_type<tc>, window_params = [{transform_indices = @transform_0, window_bounds = array<i64: 32, 128>}, {pipeline_mode = #tpu.pipeline_mode<synchronous>, transform_indices = @transform_1, window_bounds = array<i64: 128, 768>}, {pipeline_mode = #tpu.pipeline_mode<synchronous>, transform_indices = @transform_2, window_bounds = array<i64: 1, 768>}, {transform_indices = @transform_3, window_bounds = array<i64: 32, 1536>}, {pipeline_mode = #tpu.pipeline_mode<synchronous>, transform_indices = @transform_4, window_bounds = array<i64: 1, 768>}, {pipeline_mode = #tpu.pipeline_mode<synchronous>, transform_indices = @transform_5, window_bounds = array<i64: 1, 768>}, {transform_indices = @transform_6, window_bounds = array<i64: 32, 1536>}]} {
    %c0 = arith.constant 0 : index
    %c0_0 = arith.constant 0 : index
    %0 = vector.load %arg1[%c0, %c0_0] : memref<32x128xf32, #tpu.memory_space<vmem>>, vector<32x128xf32>
    %1 = arith.truncf %0 : vector<32x128xf32> to vector<32x128xbf16>
    %c0_1 = arith.constant 0 : index
    %c0_2 = arith.constant 0 : index
    %2 = vector.load %arg2[%c0_1, %c0_2] : memref<128x768xbf16, #tpu.memory_space<vmem>>, vector<128x768xbf16>
    %cst = arith.constant dense<0.000000e+00> : vector<32x768xf32>
    %3 = tpu.matmul %1, %2, %cst {dimension_numbers = #tpu.dot_dimension_numbers<[1], [0], [0], [1], [0, 0, 1, 1], [], []>} : vector<32x128xbf16>, vector<128x768xbf16>, vector<32x768xf32> -> vector<32x768xf32>
    %c0_3 = arith.constant 0 : index
    %c0_4 = arith.constant 0 : index
    %4 = vector.load %arg3[%c0_3, %c0_4] : memref<1x768xf32, #tpu.memory_space<vmem>>, vector<1x768xf32>
    %5 = vector.broadcast %4 : vector<1x768xf32> to vector<32x768xf32>
    %6 = arith.addf %3, %5 : vector<32x768xf32>
    %c0_5 = arith.constant 0 : index
    %c0_6 = arith.constant 0 : index
    %7 = vector.load %arg4[%c0_5, %c0_6] : memref<32x1536xf32, #tpu.memory_space<vmem>>, vector<32x1536xf32>
    %8 = vector.extract_strided_slice %7 {offsets = [0, 0], sizes = [32, 768], strides = [1, 1]} : vector<32x1536xf32> to vector<32x768xf32>
    %9 = arith.addf %6, %8 : vector<32x768xf32>
    %c0_7 = arith.constant 0 : index
    %c0_8 = arith.constant 0 : index
    %10 = vector.load %arg7[%c0_7, %c0_8] : memref<32x1536xf32, #tpu.memory_space<vmem>>, vector<32x768xf32>
    tpu.vector_store %arg7[%c0_7, %c0_8], %9 {strides = array<i32>} : memref<32x1536xf32, #tpu.memory_space<vmem>>, vector<32x768xf32>,
    %11 = vector.extract_strided_slice %7 {offsets = [0, 768], sizes = [32, 768], strides = [1, 1]} : vector<32x1536xf32> to vector<32x768xf32>
    %c0_9 = arith.constant 0 : index
    %c0_10 = arith.constant 0 : index
    %12 = vector.load %arg5[%c0_9, %c0_10] : memref<1x768xf32, #tpu.memory_space<vmem>>, vector<1x768xf32>
    %cst_11 = arith.constant 1.000000e+00 : f32
    %13 = vector.broadcast %cst_11 : f32 to vector<1x768xf32>
    %14 = arith.addf %12, %13 : vector<1x768xf32>
    %15 = vector.broadcast %14 : vector<1x768xf32> to vector<32x768xf32>
    %16 = arith.mulf %11, %15 : vector<32x768xf32>
    %c0_12 = arith.constant 0 : index
    %c0_13 = arith.constant 0 : index
    %17 = vector.load %arg6[%c0_12, %c0_13] : memref<1x768xf32, #tpu.memory_space<vmem>>, vector<1x768xf32>
    %18 = vector.broadcast %17 : vector<1x768xf32> to vector<32x768xf32>
    %19 = arith.addf %16, %18 : vector<32x768xf32>
    %c0_14 = arith.constant 0 : index
    %c768 = arith.constant 768 : index
    %20 = vector.load %arg7[%c0_14, %c768] : memref<32x1536xf32, #tpu.memory_space<vmem>>, vector<32x768xf32>
    tpu.vector_store %arg7[%c0_14, %c768], %19 {strides = array<i32>} : memref<32x1536xf32, #tpu.memory_space<vmem>>, vector<32x768xf32>,
    return
  }
  func.func @transform_0(%arg0: i32) -> (i32, i32) {
    %c0_i32 = arith.constant 0 : i32
    %c0_i32_0 = arith.constant 0 : i32
    return %arg0, %c0_i32 : i32, i32
  }
  func.func @transform_1(%arg0: i32) -> (i32, i32) {
    %c0_i32 = arith.constant 0 : i32
    %c0_i32_0 = arith.constant 0 : i32
    %c0_i32_1 = arith.constant 0 : i32
    return %c0_i32, %c0_i32_0 : i32, i32
  }
  func.func @transform_2(%arg0: i32) -> (i32, i32) {
    %c0_i32 = arith.constant 0 : i32
    %c0_i32_0 = arith.constant 0 : i32
    %c0_i32_1 = arith.constant 0 : i32
    return %c0_i32, %c0_i32_0 : i32, i32
  }
  func.func @transform_3(%arg0: i32) -> (i32, i32) {
    %c0_i32 = arith.constant 0 : i32
    %c0_i32_0 = arith.constant 0 : i32
    return %arg0, %c0_i32 : i32, i32
  }
  func.func @transform_4(%arg0: i32) -> (i32, i32) {
    %c0_i32 = arith.constant 0 : i32
    %c0_i32_0 = arith.constant 0 : i32
    %c0_i32_1 = arith.constant 0 : i32
    return %c0_i32, %c0_i32_0 : i32, i32
  }
  func.func @transform_5(%arg0: i32) -> (i32, i32) {
    %c0_i32 = arith.constant 0 : i32
    %c0_i32_0 = arith.constant 0 : i32
    %c0_i32_1 = arith.constant 0 : i32
    return %c0_i32, %c0_i32_0 : i32, i32
  }
  func.func @transform_6(%arg0: i32) -> (i32, i32) {
    %c0_i32 = arith.constant 0 : i32
    %c0_i32_0 = arith.constant 0 : i32
    return %arg0, %c0_i32 : i32, i32
  }
}

module attributes {stable_mosaic.version = 11 : i64} {
  func.func @kernel(%arg0: i32, %arg1: memref<32x256xf32, #tpu.memory_space<vmem>>, %arg2: memref<256x1536xbf16, #tpu.memory_space<vmem>>, %arg3: memref<1x1536xf32, #tpu.memory_space<vmem>>, %arg4: memref<32x1536xf32, #tpu.memory_space<vmem>>, %arg5: memref<32x1536xf32, #tpu.memory_space<vmem>>) attributes {dimension_semantics = [#tpu.dimension_semantics<parallel>], iteration_bounds = array<i64: 1>, scalar_prefetch = 0 : i64, scratch_operands = 0 : i64, tpu.core_type = #tpu.core_type<tc>, window_params = [{transform_indices = @transform_0, window_bounds = array<i64: 32, 256>}, {pipeline_mode = #tpu.pipeline_mode<synchronous>, transform_indices = @transform_1, window_bounds = array<i64: 256, 1536>}, {pipeline_mode = #tpu.pipeline_mode<synchronous>, transform_indices = @transform_2, window_bounds = array<i64: 1, 1536>}, {transform_indices = @transform_3, window_bounds = array<i64: 32, 1536>}, {transform_indices = @transform_4, window_bounds = array<i64: 32, 1536>}]} {
    %c0 = arith.constant 0 : index
    %c0_0 = arith.constant 0 : index
    %0 = vector.load %arg1[%c0, %c0_0] : memref<32x256xf32, #tpu.memory_space<vmem>>, vector<32x256xf32>
    %1 = arith.truncf %0 : vector<32x256xf32> to vector<32x256xbf16>
    %c0_1 = arith.constant 0 : index
    %c0_2 = arith.constant 0 : index
    %2 = vector.load %arg2[%c0_1, %c0_2] : memref<256x1536xbf16, #tpu.memory_space<vmem>>, vector<256x1536xbf16>
    %cst = arith.constant dense<0.000000e+00> : vector<32x1536xf32>
    %3 = tpu.matmul %1, %2, %cst {dimension_numbers = #tpu.dot_dimension_numbers<[1], [0], [0], [1], [0, 0, 1, 1], [], []>} : vector<32x256xbf16>, vector<256x1536xbf16>, vector<32x1536xf32> -> vector<32x1536xf32>
    %c0_3 = arith.constant 0 : index
    %c0_4 = arith.constant 0 : index
    %4 = vector.load %arg3[%c0_3, %c0_4] : memref<1x1536xf32, #tpu.memory_space<vmem>>, vector<1x1536xf32>
    %5 = vector.broadcast %4 : vector<1x1536xf32> to vector<32x1536xf32>
    %6 = arith.addf %3, %5 : vector<32x1536xf32>
    %c0_5 = arith.constant 0 : index
    %c0_6 = arith.constant 0 : index
    %7 = vector.load %arg4[%c0_5, %c0_6] : memref<32x1536xf32, #tpu.memory_space<vmem>>, vector<32x1536xf32>
    %8 = arith.addf %6, %7 : vector<32x1536xf32>
    %c0_7 = arith.constant 0 : index
    %c0_8 = arith.constant 0 : index
    %9 = vector.load %arg5[%c0_7, %c0_8] : memref<32x1536xf32, #tpu.memory_space<vmem>>, vector<32x1536xf32>
    tpu.vector_store %arg5[%c0_7, %c0_8], %8 {strides = array<i32>} : memref<32x1536xf32, #tpu.memory_space<vmem>>, vector<32x1536xf32>,
    return
  }
  func.func @transform_0(%arg0: i32) -> (i32, i32) {
    %c0_i32 = arith.constant 0 : i32
    %c0_i32_0 = arith.constant 0 : i32
    return %arg0, %c0_i32 : i32, i32
  }
  func.func @transform_1(%arg0: i32) -> (i32, i32) {
    %c0_i32 = arith.constant 0 : i32
    %c0_i32_0 = arith.constant 0 : i32
    %c0_i32_1 = arith.constant 0 : i32
    return %c0_i32, %c0_i32_0 : i32, i32
  }
  func.func @transform_2(%arg0: i32) -> (i32, i32) {
    %c0_i32 = arith.constant 0 : i32
    %c0_i32_0 = arith.constant 0 : i32
    %c0_i32_1 = arith.constant 0 : i32
    return %c0_i32, %c0_i32_0 : i32, i32
  }
  func.func @transform_3(%arg0: i32) -> (i32, i32) {
    %c0_i32 = arith.constant 0 : i32
    %c0_i32_0 = arith.constant 0 : i32
    return %arg0, %c0_i32 : i32, i32
  }
  func.func @transform_4(%arg0: i32) -> (i32, i32) {
    %c0_i32 = arith.constant 0 : i32
    %c0_i32_0 = arith.constant 0 : i32
    return %arg0, %c0_i32 : i32, i32
  }
}

module attributes {stable_mosaic.version = 11 : i64} {
  func.func @kernel(%arg0: i32, %arg1: memref<32x1536xf32, #tpu.memory_space<vmem>>, %arg2: memref<1536x256xbf16, #tpu.memory_space<vmem>>, %arg3: memref<1x1536xf32, #tpu.memory_space<vmem>>, %arg4: memref<1x1536xf32, #tpu.memory_space<vmem>>, %arg5: memref<1x256xf32, #tpu.memory_space<vmem>>, %arg6: memref<32x256xf32, #tpu.memory_space<vmem>>) attributes {dimension_semantics = [#tpu.dimension_semantics<parallel>], iteration_bounds = array<i64: 1>, scalar_prefetch = 0 : i64, scratch_operands = 0 : i64, tpu.core_type = #tpu.core_type<tc>, window_params = [{transform_indices = @transform_0, window_bounds = array<i64: 32, 1536>}, {pipeline_mode = #tpu.pipeline_mode<synchronous>, transform_indices = @transform_1, window_bounds = array<i64: 1536, 256>}, {pipeline_mode = #tpu.pipeline_mode<synchronous>, transform_indices = @transform_2, window_bounds = array<i64: 1, 1536>}, {pipeline_mode = #tpu.pipeline_mode<synchronous>, transform_indices = @transform_3, window_bounds = array<i64: 1, 1536>}, {pipeline_mode = #tpu.pipeline_mode<synchronous>, transform_indices = @transform_4, window_bounds = array<i64: 1, 256>}, {transform_indices = @transform_5, window_bounds = array<i64: 32, 256>}]} {
    %c0 = arith.constant 0 : index
    %c0_0 = arith.constant 0 : index
    %0 = vector.load %arg1[%c0, %c0_0] : memref<32x1536xf32, #tpu.memory_space<vmem>>, vector<32x1536xf32>
    %c0_1 = arith.constant 0 : index
    %c0_2 = arith.constant 0 : index
    %1 = vector.load %arg3[%c0_1, %c0_2] : memref<1x1536xf32, #tpu.memory_space<vmem>>, vector<1x1536xf32>
    %2 = vector.broadcast %1 : vector<1x1536xf32> to vector<32x1536xf32>
    %3 = arith.mulf %0, %2 : vector<32x1536xf32>
    %c0_3 = arith.constant 0 : index
    %c0_4 = arith.constant 0 : index
    %4 = vector.load %arg4[%c0_3, %c0_4] : memref<1x1536xf32, #tpu.memory_space<vmem>>, vector<1x1536xf32>
    %5 = vector.broadcast %4 : vector<1x1536xf32> to vector<32x1536xf32>
    %6 = arith.addf %3, %5 : vector<32x1536xf32>
    %7 = arith.truncf %6 : vector<32x1536xf32> to vector<32x1536xbf16>
    %c0_5 = arith.constant 0 : index
    %c0_6 = arith.constant 0 : index
    %8 = vector.load %arg2[%c0_5, %c0_6] : memref<1536x256xbf16, #tpu.memory_space<vmem>>, vector<1536x256xbf16>
    %cst = arith.constant dense<0.000000e+00> : vector<32x256xf32>
    %9 = tpu.matmul %7, %8, %cst {dimension_numbers = #tpu.dot_dimension_numbers<[1], [0], [0], [1], [0, 0, 1, 1], [], []>} : vector<32x1536xbf16>, vector<1536x256xbf16>, vector<32x256xf32> -> vector<32x256xf32>
    %c0_7 = arith.constant 0 : index
    %c0_8 = arith.constant 0 : index
    %10 = vector.load %arg5[%c0_7, %c0_8] : memref<1x256xf32, #tpu.memory_space<vmem>>, vector<1x256xf32>
    %11 = vector.broadcast %10 : vector<1x256xf32> to vector<32x256xf32>
    %12 = arith.addf %9, %11 : vector<32x256xf32>
    %cst_9 = arith.constant 0.707106769 : f32
    %13 = vector.broadcast %cst_9 : f32 to vector<32x256xf32>
    %14 = arith.mulf %12, %13 : vector<32x256xf32>
    %15 = math.absf %14 : vector<32x256xf32>
    %cst_10 = arith.constant 0.327591091 : f32
    %16 = vector.broadcast %cst_10 : f32 to vector<32x256xf32>
    %17 = arith.mulf %16, %15 : vector<32x256xf32>
    %cst_11 = arith.constant 1.000000e+00 : f32
    %18 = vector.broadcast %cst_11 : f32 to vector<32x256xf32>
    %19 = arith.addf %18, %17 : vector<32x256xf32>
    %cst_12 = arith.constant 1.000000e+00 : f32
    %20 = vector.broadcast %cst_12 : f32 to vector<32x256xf32>
    %21 = arith.divf %20, %19 : vector<32x256xf32>
    %cst_13 = arith.constant 1.06140542 : f32
    %22 = vector.broadcast %cst_13 : f32 to vector<32x256xf32>
    %23 = arith.mulf %22, %21 : vector<32x256xf32>
    %cst_14 = arith.constant 1.45315206 : f32
    %24 = vector.broadcast %cst_14 : f32 to vector<32x256xf32>
    %25 = arith.subf %23, %24 : vector<32x256xf32>
    %26 = arith.mulf %25, %21 : vector<32x256xf32>
    %cst_15 = arith.constant 1.42141378 : f32
    %27 = vector.broadcast %cst_15 : f32 to vector<32x256xf32>
    %28 = arith.addf %26, %27 : vector<32x256xf32>
    %29 = arith.mulf %28, %21 : vector<32x256xf32>
    %cst_16 = arith.constant 0.284496725 : f32
    %30 = vector.broadcast %cst_16 : f32 to vector<32x256xf32>
    %31 = arith.subf %29, %30 : vector<32x256xf32>
    %32 = arith.mulf %31, %21 : vector<32x256xf32>
    %cst_17 = arith.constant 0.254829586 : f32
    %33 = vector.broadcast %cst_17 : f32 to vector<32x256xf32>
    %34 = arith.addf %32, %33 : vector<32x256xf32>
    %35 = arith.mulf %34, %21 : vector<32x256xf32>
    %cst_18 = arith.constant 0.000000e+00 : f32
    %36 = vector.broadcast %cst_18 : f32 to vector<32x256xf32>
    %37 = arith.subf %36, %15 : vector<32x256xf32>
    %38 = arith.mulf %37, %15 : vector<32x256xf32>
    %39 = math.exp %38 : vector<32x256xf32>
    %40 = arith.mulf %35, %39 : vector<32x256xf32>
    %cst_19 = arith.constant 1.000000e+00 : f32
    %41 = vector.broadcast %cst_19 : f32 to vector<32x256xf32>
    %42 = arith.subf %41, %40 : vector<32x256xf32>
    %cst_20 = arith.constant 0.000000e+00 : f32
    %43 = vector.broadcast %cst_20 : f32 to vector<32x256xf32>
    %44 = arith.cmpf oge, %14, %43 : vector<32x256xf32>
    %cst_21 = arith.constant 0.000000e+00 : f32
    %45 = vector.broadcast %cst_21 : f32 to vector<32x256xf32>
    %46 = arith.subf %45, %42 : vector<32x256xf32>
    %47 = arith.select %44, %42, %46 : vector<32x256xi1>, vector<32x256xf32>
    %cst_22 = arith.constant 5.000000e-01 : f32
    %48 = vector.broadcast %cst_22 : f32 to vector<32x256xf32>
    %49 = arith.mulf %48, %12 : vector<32x256xf32>
    %cst_23 = arith.constant 1.000000e+00 : f32
    %50 = vector.broadcast %cst_23 : f32 to vector<32x256xf32>
    %51 = arith.addf %50, %47 : vector<32x256xf32>
    %52 = arith.mulf %49, %51 : vector<32x256xf32>
    %c0_24 = arith.constant 0 : index
    %c0_25 = arith.constant 0 : index
    %53 = vector.load %arg6[%c0_24, %c0_25] : memref<32x256xf32, #tpu.memory_space<vmem>>, vector<32x256xf32>
    tpu.vector_store %arg6[%c0_24, %c0_25], %52 {strides = array<i32>} : memref<32x256xf32, #tpu.memory_space<vmem>>, vector<32x256xf32>,
    return
  }
  func.func @transform_0(%arg0: i32) -> (i32, i32) {
    %c0_i32 = arith.constant 0 : i32
    %c0_i32_0 = arith.constant 0 : i32
    return %arg0, %c0_i32 : i32, i32
  }
  func.func @transform_1(%arg0: i32) -> (i32, i32) {
    %c0_i32 = arith.constant 0 : i32
    %c0_i32_0 = arith.constant 0 : i32
    %c0_i32_1 = arith.constant 0 : i32
    return %c0_i32, %c0_i32_0 : i32, i32
  }
  func.func @transform_2(%arg0: i32) -> (i32, i32) {
    %c0_i32 = arith.constant 0 : i32
    %c0_i32_0 = arith.constant 0 : i32
    %c0_i32_1 = arith.constant 0 : i32
    return %c0_i32, %c0_i32_0 : i32, i32
  }
  func.func @transform_3(%arg0: i32) -> (i32, i32) {
    %c0_i32 = arith.constant 0 : i32
    %c0_i32_0 = arith.constant 0 : i32
    %c0_i32_1 = arith.constant 0 : i32
    return %c0_i32, %c0_i32_0 : i32, i32
  }
  func.func @transform_4(%arg0: i32) -> (i32, i32) {
    %c0_i32 = arith.constant 0 : i32
    %c0_i32_0 = arith.constant 0 : i32
    %c0_i32_1 = arith.constant 0 : i32
    return %c0_i32, %c0_i32_0 : i32, i32
  }
  func.func @transform_5(%arg0: i32) -> (i32, i32) {
    %c0_i32 = arith.constant 0 : i32
    %c0_i32_0 = arith.constant 0 : i32
    return %arg0, %c0_i32 : i32, i32
  }
}

</mosaic_0001>

<llo_original>
// kernel: swin_block4_forward.7
$region0: #{swin_block4_forward.7}
  #allocation0 [shape = 'u32[]', space=smem, size = 0x4, offset = 0x4, fixed_abs, tag = 'smem constant byte address 0x4 - core index']
  #allocation1 [shape = 'u32[72,128]{1,0:T(1,128)}', space=vmem, size = 0x9000, scoped, tag = 'internal scratch']
  #allocation2 [shape = 'f32[1,256]{1,0:T(1,128)}', space=vmem, size = 0x400, scoped, tag = 'scratch operand']
  #allocation3 [shape = 'f32[1,256]{1,0:T(1,128)}', space=vmem, size = 0x400, scoped, tag = 'scratch operand']
  %s0 = inlined_call_operand.vmem [shape: f32[32,1536], index: 0, kind: input, shape index: {}]
  %s1 = inlined_call_operand.vmem [shape: f32[1,1536], index: 1, kind: input, shape index: {}]
  %s2 = inlined_call_operand.vmem [shape: f32[1,1536], index: 2, kind: input, shape index: {}]
  %s3 = inlined_call_operand.vmem [shape: f32[1,1536], index: 3, kind: output, shape index: {0}]
  %s4 = inlined_call_operand.vmem [shape: f32[1,1536], index: 4, kind: output, shape index: {1}]
  %5 = xla_tuple %s3, %s4
  %s6 = sld [smem:[#allocation0]]
  $region84: #{swin_block4_forward.7} parent=0
    _
  %s8 = ssub.s32 1, %s6
  %s9 = scalar_select 0, %s8, %s6
  $region1: #{swin_block4_forward.7} parent=0
    #allocation4 [shape = 'u8[65536]{0}', space=vmem, size = 0x10000, scoped, tag = 'input window, operand 0']
    loop: start=0, step=1, limit=8
    $region2: #{swin_block4_forward.7} parent=1 // loop_pre_header
      _
    $region3: #{swin_block4_forward.7} parent=1 // loop_header
      %s11 = sphi 0, %s15
      %p12 = scmp.ge.s32.totalorder %s11, 8
      %s18 = sphi 0, %s30
      %s19 = sphi 0, %s26
      %s20 = sphi 0, %s18
      %s21 = sphi 0, %s19
      %s22 = sphi 0, %s20
      %s23 = sphi 0, %s21
      %s35 = sphi 0, %s37
      %s38 = sphi 0, %s35
      %s39 = sphi 0, %s38
      %s55 = sphi 0, %s39
      %s61 = sphi 0, %s63
      %s64 = sphi 0, %s61
      %s65 = sphi 0, %s64
      %s81 = sphi 0, %s65
      %s87 = sphi 0, %s89
      %s90 = sphi 0, %s87
      %s91 = sphi 0, %s90
      %s107 = sphi 0, %s91
      %s113 = sphi 0, %s115
      %s116 = sphi 0, %s113
      %s117 = sphi 0, %s116
      %s133 = sphi 0, %s117
      %s139 = sphi 0, %s141
      %s142 = sphi 0, %s139
      %s143 = sphi 0, %s142
      %s159 = sphi 0, %s143
    $region4: #{swin_block4_forward.7} parent=1 // loop_header_branch
      %14 = sbr.rel (%p12) target = $region8
    $region5: #{swin_block4_forward.7} parent=1 // loop_body
      %s16 = ssub.s32 %s11, 1
      %s17 = ssub.s32 %s11, 2
      %s24 = sadd.s32 1, %s19
      %p25 = scmp.ge.s32.totalorder %s24, 1
      %s26 = scalar_select %p25, 0, %s24
      %s27 = sadd.s32 1, %s18
      %s28 = scalar_select %p25, %s27, %s18
      %p29 = scmp.ge.s32.totalorder %s28, 6
      %s30 = scalar_select %p29, 0, %s28
      %s31 = ssub.s32 %s19, %s26
      %s32 = ssub.s32 %s18, %s30
      %s33 = sor.u32 %s31, %s32
      %p34 = scmp.eq.s32.totalorder %s33, 0
      %s36 = sadd.s32 %s35, 1
      %s37 = scalar_select %p34, %s35, %s36
      %p40 = pneg %p34
      %p41 = scmp.eq.s32.totalorder %s11, 5
      %p42 = por %p40, %p41
      %p43 = scmp.ne.s32.totalorder %s35, %s38
      %p44 = scmp.eq.s32.totalorder %s11, 0
      %p45 = por %p43, %p44
      %p46 = scmp.ne.s32.totalorder %s35, %s38
      %p47 = scmp.eq.s32.totalorder %s16, 5
      %p48 = por %p46, %p47
      %p49 = scmp.ne.s32.totalorder %s38, %s39
      %p50 = scmp.eq.s32.totalorder %s16, 0
      %p51 = por %p49, %p50
      %p52 = scmp.ne.s32.totalorder %s38, %s39
      %p53 = scmp.eq.s32.totalorder %s17, 5
      %p54 = por %p52, %p53
      %p56 = scmp.ne.s32.totalorder %s39, %s55
      %p57 = scmp.eq.s32.totalorder %s17, 0
      %p58 = por %p56, %p57
      %s59 = ssub.s32 %s18, %s30
      %p60 = scmp.eq.s32.totalorder %s59, 0
      %s62 = sadd.s32 %s61, 1
      %s63 = scalar_select %p60, %s61, %s62
      %p66 = pneg %p60
      %p67 = scmp.eq.s32.totalorder %s11, 5
      %p68 = por %p66, %p67
      %p69 = scmp.ne.s32.totalorder %s61, %s64
      %p70 = scmp.eq.s32.totalorder %s11, 0
      %p71 = por %p69, %p70
      %p72 = scmp.ne.s32.totalorder %s61, %s64
      %p73 = scmp.eq.s32.totalorder %s16, 5
      %p74 = por %p72, %p73
      %p75 = scmp.ne.s32.totalorder %s64, %s65
      %p76 = scmp.eq.s32.totalorder %s16, 0
      %p77 = por %p75, %p76
      %p78 = scmp.ne.s32.totalorder %s64, %s65
      %p79 = scmp.eq.s32.totalorder %s17, 5
      %p80 = por %p78, %p79
      %p82 = scmp.ne.s32.totalorder %s65, %s81
      %p83 = scmp.eq.s32.totalorder %s17, 0
      %p84 = por %p82, %p83
      %s85 = ssub.s32 %s18, %s30
      %p86 = scmp.eq.s32.totalorder %s85, 0
      %s88 = sadd.s32 %s87, 1
      %s89 = scalar_select %p86, %s87, %s88
      %p92 = pneg %p86
      %p93 = scmp.eq.s32.totalorder %s11, 5
      %p94 = por %p92, %p93
      %p95 = scmp.ne.s32.totalorder %s87, %s90
      %p96 = scmp.eq.s32.totalorder %s11, 0
      %p97 = por %p95, %p96
      %p98 = scmp.ne.s32.totalorder %s87, %s90
      %p99 = scmp.eq.s32.totalorder %s16, 5
      %p100 = por %p98, %p99
      %p101 = scmp.ne.s32.totalorder %s90, %s91
      %p102 = scmp.eq.s32.totalorder %s16, 0
      %p103 = por %p101, %p102
      %p104 = scmp.ne.s32.totalorder %s90, %s91
      %p105 = scmp.eq.s32.totalorder %s17, 5
      %p106 = por %p104, %p105
      %p108 = scmp.ne.s32.totalorder %s91, %s107
      %p109 = scmp.eq.s32.totalorder %s17, 0
      %p110 = por %p108, %p109
      %s111 = ssub.s32 %s18, %s30
      %p112 = scmp.eq.s32.totalorder %s111, 0
      %s114 = sadd.s32 %s113, 1
      %s115 = scalar_select %p112, %s113, %s114
      %p118 = pneg %p112
      %p119 = scmp.eq.s32.totalorder %s11, 5
      %p120 = por %p118, %p119
      %p121 = scmp.ne.s32.totalorder %s113, %s116
      %p122 = scmp.eq.s32.totalorder %s11, 0
      %p123 = por %p121, %p122
      %p124 = scmp.ne.s32.totalorder %s113, %s116
      %p125 = scmp.eq.s32.totalorder %s16, 5
      %p126 = por %p124, %p125
      %p127 = scmp.ne.s32.totalorder %s116, %s117
      %p128 = scmp.eq.s32.totalorder %s16, 0
      %p129 = por %p127, %p128
      %p130 = scmp.ne.s32.totalorder %s116, %s117
      %p131 = scmp.eq.s32.totalorder %s17, 5
      %p132 = por %p130, %p131
      %p134 = scmp.ne.s32.totalorder %s117, %s133
      %p135 = scmp.eq.s32.totalorder %s17, 0
      %p136 = por %p134, %p135
      %s137 = ssub.s32 %s18, %s30
      %p138 = scmp.eq.s32.totalorder %s137, 0
      %s140 = sadd.s32 %s139, 1
      %s141 = scalar_select %p138, %s139, %s140
      %p144 = pneg %p138
      %p145 = scmp.eq.s32.totalorder %s11, 5
      %p146 = por %p144, %p145
      %p147 = scmp.ne.s32.totalorder %s139, %s142
      %p148 = scmp.eq.s32.totalorder %s11, 0
      %p149 = por %p147, %p148
      %p150 = scmp.ne.s32.totalorder %s139, %s142
      %p151 = scmp.eq.s32.totalorder %s16, 5
      %p152 = por %p150, %p151
      %p153 = scmp.ne.s32.totalorder %s142, %s143
      %p154 = scmp.eq.s32.totalorder %s16, 0
      %p155 = por %p153, %p154
      %p156 = scmp.ne.s32.totalorder %s142, %s143
      %p157 = scmp.eq.s32.totalorder %s17, 5
      %p158 = por %p156, %p157
      %p160 = scmp.ne.s32.totalorder %s143, %s159
      %p161 = scmp.eq.s32.totalorder %s17, 0
      %p162 = por %p160, %p161
      %p163 = scmp.le.s32.totalorder 1, %s11
      %p164 = scmp.lt.s32.totalorder %s11, 7
      %p165 = pnand %p163, %p164
      %p166 = pneg %p165
      // Predicated region
      $region9: #{swin_block4_forward.7} parent=5 // pred_check
        _
      $region10: #{swin_block4_forward.7} parent=5 // pred_check_branch
        %168 = sbr.rel (%p165) target = $region12
      $region11: #{swin_block4_forward.7} parent=5 // pred_region
        %s169 = ssub.s32 %s11, 1
      $region12: #{swin_block4_forward.7} parent=5 // pred_fallthru
        _
      %p170 = scmp.lt.s32.totalorder %s11, 6
      // Predicated region
      $region13: #{swin_block4_forward.7} parent=5 // pred_check
        %p171 = pneg %p170
      $region14: #{swin_block4_forward.7} parent=5 // pred_check_branch
        %173 = sbr.rel (%p171) target = $region16
      $region15: #{swin_block4_forward.7} parent=5 // pred_region
        // Predicated region
        $region17: #{swin_block4_forward.7} parent=15 // pred_check
          %p174 = pneg %p45
        $region18: #{swin_block4_forward.7} parent=15 // pred_check_branch
          %176 = sbr.rel (%p174) target = $region20
        $region19: #{swin_block4_forward.7} parent=15 // pred_region
          %s177 = sand.u32 %s35, 1
          %s178 = sand.u32 %s35, 1
          %s179 = smul.addr %s178, 64
          %s180 = scalar_lea.vmem [#allocation4], %s179
          %s181 = smul.u32 4, %s19
          %s182 = smul.u32 2, %s18
          %s183 = smul.addr %s181, 12
          %s184 = sadd.s32 %s182, %s183
          %s185 = smul.addr %s184, 8
          %s186 = scalar_lea.vmem %s0, %s185
          // Predicated region
          $region21: #{swin_block4_forward.7} parent=19 // pred_check
            _
          $region22: #{swin_block4_forward.7} parent=19 // pred_check_branch
            %188 = sbr.rel (0) target = $region24
          $region23: #{swin_block4_forward.7} parent=19 // pred_region
            // Predicated region
            $region25: #{swin_block4_forward.7} parent=23 // pred_check
              _
            $region26: #{swin_block4_forward.7} parent=23 // pred_check_branch
              %190 = sbr.rel (0) target = $region28
            $region27: #{swin_block4_forward.7} parent=23 // pred_region
              loop: start=0, step=1, limit=1
              $region29: #{swin_block4_forward.7} parent=27 // loop_pre_header
                _
              $region30: #{swin_block4_forward.7} parent=27 // loop_header
                %s192 = sphi 0, %s196
                %p193 = scmp.ge.s32.totalorder %s192, 1
                %s197 = sphi %s186, %s186
                %s198 = sphi %s180, %s180
              $region31: #{swin_block4_forward.7} parent=27 // loop_header_branch
                %195 = sbr.rel (%p193) target = $region35
              $region32: #{swin_block4_forward.7} parent=27 // loop_body
                %v199 = vld [vmem:[%s197] sm:$0xff]
                %200 = vst [vmem:[%s198] sm:$0xff] %v199
                %v201 = vld [vmem:[%s197 + $0x8] sm:$0xff]
                %202 = vst [vmem:[%s198 + $0x8] sm:$0xff] %v201
                %v203 = vld [vmem:[%s197 + $0x60] sm:$0xff]
                %204 = vst [vmem:[%s198 + $0x10] sm:$0xff] %v203
                %v205 = vld [vmem:[%s197 + $0x68] sm:$0xff]
                %206 = vst [vmem:[%s198 + $0x18] sm:$0xff] %v205
                %v207 = vld [vmem:[%s197 + $0xc0] sm:$0xff]
                %208 = vst [vmem:[%s198 + $0x20] sm:$0xff] %v207
                %v209 = vld [vmem:[%s197 + $0xc8] sm:$0xff]
                %210 = vst [vmem:[%s198 + $0x28] sm:$0xff] %v209
                %v211 = vld [vmem:[%s197 + $0x120] sm:$0xff]
                %212 = vst [vmem:[%s198 + $0x30] sm:$0xff] %v211
                %v213 = vld [vmem:[%s197 + $0x128] sm:$0xff]
                %214 = vst [vmem:[%s198 + $0x38] sm:$0xff] %v213
              $region33: #{swin_block4_forward.7} parent=27 // loop_footer
                %s196 = sadd.s32 1, %s192
              $region34: #{swin_block4_forward.7} parent=27 // loop_footer_branch
                %191 = sbr.rel target = $region30
              $region35: #{swin_block4_forward.7} parent=27 // loop_exit
                _
            $region28: #{swin_block4_forward.7} parent=23 // pred_fallthru
              _
            // Predicated region
            $region36: #{swin_block4_forward.7} parent=23 // pred_check
              _
            $region37: #{swin_block4_forward.7} parent=23 // pred_check_branch
              %216 = sbr.rel target = $region39
            $region38: #{swin_block4_forward.7} parent=23 // pred_region
              _
            $region39: #{swin_block4_forward.7} parent=23 // pred_fallthru
              _
          $region24: #{swin_block4_forward.7} parent=19 // pred_fallthru
            _
          %217 = vnop
        $region20: #{swin_block4_forward.7} parent=15 // pred_fallthru
          _
        // Predicated region
        $region40: #{swin_block4_forward.7} parent=15 // pred_check
          %p218 = pneg %p71
        $region41: #{swin_block4_forward.7} parent=15 // pred_check_branch
          %220 = sbr.rel (%p218) target = $region43
        $region42: #{swin_block4_forward.7} parent=15 // pred_region
          %s221 = smul.u32 2, %s18
          %p222 = scmp.lt.s32.totalorder %s221, 11
          %s223 = scalar_select %p222, %s221, 11
          %s224 = scalar_lea.vmem %s1, %s223
          %s225 = smul.u32 2, %s18
        $region43: #{swin_block4_forward.7} parent=15 // pred_fallthru
          _
        // Predicated region
        $region44: #{swin_block4_forward.7} parent=15 // pred_check
          %p226 = pneg %p97
        $region45: #{swin_block4_forward.7} parent=15 // pred_check_branch
          %228 = sbr.rel (%p226) target = $region47
        $region46: #{swin_block4_forward.7} parent=15 // pred_region
          %s229 = smul.u32 2, %s18
          %p230 = scmp.lt.s32.totalorder %s229, 11
          %s231 = scalar_select %p230, %s229, 11
          %s232 = scalar_lea.vmem %s2, %s231
          %s233 = smul.u32 2, %s18
        $region47: #{swin_block4_forward.7} parent=15 // pred_fallthru
          _
      $region16: #{swin_block4_forward.7} parent=5 // pred_fallthru
        _
      %p234 = scmp.le.s32.totalorder 1, %s11
      %p235 = scmp.lt.s32.totalorder %s11, 7
      %p236 = pnand %p234, %p235
      %p237 = pneg %p236
      // Predicated region
      $region48: #{swin_block4_forward.7} parent=5 // pred_check
        _
      $region49: #{swin_block4_forward.7} parent=5 // pred_check_branch
        %239 = sbr.rel (%p236) target = $region51
      $region50: #{swin_block4_forward.7} parent=5 // pred_region
        %s240 = ssub.s32 %s11, 1
        %s241 = sand.u32 %s38, 1
        %s242 = sand.u32 %s38, 1
        %s243 = smul.addr %s242, 64
        %s244 = scalar_lea.vmem [#allocation4], %s243
        // Predicated region
        $region52: #{swin_block4_forward.7} parent=50 // pred_check
          %p245 = pneg %p51
        $region53: #{swin_block4_forward.7} parent=50 // pred_check_branch
          %247 = sbr.rel (%p245) target = $region55
        $region54: #{swin_block4_forward.7} parent=50 // pred_region
          _
        $region55: #{swin_block4_forward.7} parent=50 // pred_fallthru
          _
        %s248 = sand.u32 %s38, 1
        %s249 = sand.u32 %s38, 1
        %s250 = smul.addr %s249, 64
        %s251 = scalar_lea.vmem [#allocation4], %s250
        %p252 = pneg %p51
        %p253 = pneg %p48
        %s254 = smul.u32 2, %s20
        %p255 = scmp.lt.s32.totalorder %s254, 11
        %s256 = scalar_select %p255, %s254, 11
        %s257 = scalar_lea.vmem %s1, %s256
        %p258 = pneg %p77
        %p259 = pneg %p74
        %s260 = smul.u32 2, %s20
        %p261 = scmp.lt.s32.totalorder %s260, 11
        %s262 = scalar_select %p261, %s260, 11
        %s263 = scalar_lea.vmem %s2, %s262
        %p264 = pneg %p103
        %p265 = pneg %p100
        %p266 = pneg %p129
        %p267 = pneg %p126
        %s268 = smul.u32 2, %s20
        %p269 = scmp.lt.s32.totalorder %s268, 11
        %s270 = scalar_select %p269, %s268, 11
        %s271 = scalar_lea.vmem %s3, %s270
        %p272 = pneg %p155
        %p273 = pneg %p152
        %s274 = smul.u32 2, %s20
        %p275 = scmp.lt.s32.totalorder %s274, 11
        %s276 = scalar_select %p275, %s274, 11
        %s277 = scalar_lea.vmem %s4, %s276
        %s278 = smul.u32 4, %s21
        %s279 = smul.u32 2, %s20
        %s280 = smul.u32 2, %s20
        %p281 = scmp.lt.s32.totalorder %s280, 11
        %s282 = scalar_select %p281, %s280, 11
        %s283 = scalar_lea.vmem %s1, %s282
        %s284 = smul.u32 2, %s20
        %s285 = smul.u32 2, %s20
        %p286 = scmp.lt.s32.totalorder %s285, 11
        %s287 = scalar_select %p286, %s285, 11
        %s288 = scalar_lea.vmem %s2, %s287
        %s289 = smul.u32 2, %s20
        %s290 = smul.u32 2, %s20
        %p291 = scmp.lt.s32.totalorder %s290, 11
        %s292 = scalar_select %p291, %s290, 11
        %s293 = scalar_lea.vmem %s3, %s292
        %s294 = smul.u32 2, %s20
        %s295 = smul.u32 2, %s20
        %p296 = scmp.lt.s32.totalorder %s295, 11
        %s297 = scalar_select %p296, %s295, 11
        %s298 = scalar_lea.vmem %s4, %s297
        %s299 = smul.u32 2, %s20
        %p300 = scmp.eq.s32.totalorder %s21, 0
        // Predicated region
        $region56: #{swin_block4_forward.7} parent=50 // pred_check
          %p301 = pneg %p300
        $region57: #{swin_block4_forward.7} parent=50 // pred_check_branch
          %303 = sbr.rel (%p301) target = $region59
        $region58: #{swin_block4_forward.7} parent=50 // pred_region
          %v304 = vlaneseq
          %vm305 = vcmp.ge.s32.totalorder %v304, 0
          %vm306 = vcmp.lt.s32.totalorder %v304, 256
          %vm307 = vmand %vm305, %vm306
          %308 = vst.msk [vmem:[#allocation2] sm:$0x3] %vm307, 0.0
          %309 = vst.msk [vmem:[#allocation3] sm:$0x3] %vm307, 0.0
        $region59: #{swin_block4_forward.7} parent=50 // pred_fallthru
          _
        %v310 = vld [vmem:[%s244] sm:$0xff]
        %v311 = vld [vmem:[%s244 + $0x8] sm:$0xff]
        %v312 = vld [vmem:[%s244 + $0x10] sm:$0xff]
        %v313 = vld [vmem:[%s244 + $0x18] sm:$0xff]
        %v314 = vld [vmem:[%s244 + $0x20] sm:$0xff]
        %v315 = vld [vmem:[%s244 + $0x28] sm:$0xff]
        %v316 = vld [vmem:[%s244 + $0x30] sm:$0xff]
        %v317 = vld [vmem:[%s244 + $0x38] sm:$0xff]
        %v318 = vld [vmem:[#allocation2] sm:$0x3]
        %v319 = vadd.f32 %v310, %v312
        %v320 = vadd.f32 %v319, %v314
        %v321 = vadd.f32 %v320, %v316
        %v322 = vrot.slane %v321, 4
        %v323 = vadd.f32 %v321, %v322
        %v324 = vrot.slane %v323, 2
        %v325 = vadd.f32 %v323, %v324
        %v326 = vrot.slane %v325, 1
        %v327 = vadd.f32 %v325, %v326
        %v328 = vadd.f32 %v311, %v313
        %v329 = vadd.f32 %v328, %v315
        %v330 = vadd.f32 %v329, %v317
        %v331 = vrot.slane %v330, 4
        %v332 = vadd.f32 %v330, %v331
        %v333 = vrot.slane %v332, 2
        %v334 = vadd.f32 %v332, %v333
        %v335 = vrot.slane %v334, 1
        %v336 = vadd.f32 %v334, %v335
        %v339 = vrot.slane %v336, 7
        %vm340 = vcmask 1040384
        %v341 = vsel %vm340, %v327, %v339
        %v343 = vadd.f32 %v318, %v341
        %v344 = vlaneseq
        %vm345 = vcmp.ge.s32.totalorder %v344, 0
        %vm346 = vcmp.lt.s32.totalorder %v344, 256
        %vm347 = vmand %vm345, %vm346
        %348 = vst.msk [vmem:[#allocation2] sm:$0x3] %vm347, %v343
        %v349 = vld [vmem:[#allocation3] sm:$0x3]
        %v350 = vmul.f32 %v310, %v310
        %v351 = vmul.f32 %v311, %v311
        %v352 = vmul.f32 %v312, %v312
        %v353 = vmul.f32 %v313, %v313
        %v354 = vmul.f32 %v314, %v314
        %v355 = vmul.f32 %v315, %v315
        %v356 = vmul.f32 %v316, %v316
        %v357 = vmul.f32 %v317, %v317
        %v358 = vadd.f32 %v350, %v352
        %v359 = vadd.f32 %v358, %v354
        %v360 = vadd.f32 %v359, %v356
        %v361 = vrot.slane %v360, 4
        %v362 = vadd.f32 %v360, %v361
        %v363 = vrot.slane %v362, 2
        %v364 = vadd.f32 %v362, %v363
        %v365 = vrot.slane %v364, 1
        %v366 = vadd.f32 %v364, %v365
        %v367 = vadd.f32 %v351, %v353
        %v368 = vadd.f32 %v367, %v355
        %v369 = vadd.f32 %v368, %v357
        %v370 = vrot.slane %v369, 4
        %v371 = vadd.f32 %v369, %v370
        %v372 = vrot.slane %v371, 2
        %v373 = vadd.f32 %v371, %v372
        %v374 = vrot.slane %v373, 1
        %v375 = vadd.f32 %v373, %v374
        %v378 = vrot.slane %v375, 7
        %v379 = vsel %vm340, %v366, %v378
        %v381 = vadd.f32 %v349, %v379
        %382 = vst.msk [vmem:[#allocation3] sm:$0x3] %vm347, %v381
        // Predicated region
        $region60: #{swin_block4_forward.7} parent=50 // pred_check
          %p383 = pneg %p300
        $region61: #{swin_block4_forward.7} parent=50 // pred_check_branch
          %385 = sbr.rel (%p383) target = $region63
        $region62: #{swin_block4_forward.7} parent=50 // pred_region
          %v386 = vld [vmem:[#allocation2] sm:$0x3]
          %v387 = vmul.f32 %v386, 0.03125
          %v388 = vld [vmem:[#allocation3] sm:$0x3]
          %v389 = vmul.f32 %v388, 0.03125
          %v390 = vmul.f32 %v387, %v387
          %v391 = vsub.f32 %v389, %v390
          %v392 = vmax.f32 %v391, 0.0
          %v393 = vld [vmem:[%s283] sm:$0x3]
          %v394 = vadd.f32 %v392, 1e-05
          %v395 = vrsqrt.pop %v394
          %v396 = vmul.f32 %v395, %v394
          %v397 = vmul.f32 %v396, %v395
          %v398 = vmul.f32 0.5, %v397
          %v399 = vsub.f32 1.5, %v398
          %v400 = vmul.f32 %v395, %v399
          %vm401 = vweird.f32 %v394
          %vm402 = vweird.f32 %v395
          %vm403 = vmor %vm401, %vm402
          %v404 = vsel %vm403, %v395, %v400
          %v405 = vmul.f32 %v393, %v404
          %406 = vst.msk [vmem:[%s293] sm:$0x3] %vm347, %v405
          %v407 = vld [vmem:[%s288] sm:$0x3]
          %v408 = vmul.f32 %v387, %v405
          %v409 = vsub.f32 %v407, %v408
          %410 = vst.msk [vmem:[%s298] sm:$0x3] %vm347, %v409
        $region63: #{swin_block4_forward.7} parent=50 // pred_fallthru
          _
        %s411 = smul.u32 2, %s20
        %p412 = scmp.lt.s32.totalorder %s411, 11
        %s413 = scalar_select %p412, %s411, 11
        %s414 = scalar_lea.vmem %s3, %s413
        %s415 = smul.u32 2, %s20
        %p416 = scmp.lt.s32.totalorder %s415, 11
        %s417 = scalar_select %p416, %s415, 11
        %s418 = scalar_lea.vmem %s4, %s417
        // Predicated region
        $region64: #{swin_block4_forward.7} parent=50 // pred_check
          %p419 = pneg %p126
        $region65: #{swin_block4_forward.7} parent=50 // pred_check_branch
          %421 = sbr.rel (%p419) target = $region67
        $region66: #{swin_block4_forward.7} parent=50 // pred_region
          %s422 = smul.u32 2, %s20
        $region67: #{swin_block4_forward.7} parent=50 // pred_fallthru
          _
        // Predicated region
        $region68: #{swin_block4_forward.7} parent=50 // pred_check
          %p423 = pneg %p152
        $region69: #{swin_block4_forward.7} parent=50 // pred_check_branch
          %425 = sbr.rel (%p423) target = $region71
        $region70: #{swin_block4_forward.7} parent=50 // pred_region
          %s426 = smul.u32 2, %s20
        $region71: #{swin_block4_forward.7} parent=50 // pred_fallthru
          _
      $region51: #{swin_block4_forward.7} parent=5 // pred_fallthru
        _
      %p427 = scmp.le.s32.totalorder 2, %s11
      // Predicated region
      $region72: #{swin_block4_forward.7} parent=5 // pred_check
        %p428 = pneg %p427
      $region73: #{swin_block4_forward.7} parent=5 // pred_check_branch
        %430 = sbr.rel (%p428) target = $region75
      $region74: #{swin_block4_forward.7} parent=5 // pred_region
        %s431 = ssub.s32 %s11, 2
        // Predicated region
        $region76: #{swin_block4_forward.7} parent=74 // pred_check
          %p432 = pneg %p132
        $region77: #{swin_block4_forward.7} parent=74 // pred_check_branch
          %434 = sbr.rel (%p432) target = $region79
        $region78: #{swin_block4_forward.7} parent=74 // pred_region
          %s435 = smul.u32 2, %s22
          %p436 = scmp.lt.s32.totalorder %s435, 11
          %s437 = scalar_select %p436, %s435, 11
          %s438 = scalar_lea.vmem %s3, %s437
        $region79: #{swin_block4_forward.7} parent=74 // pred_fallthru
          _
        // Predicated region
        $region80: #{swin_block4_forward.7} parent=74 // pred_check
          %p439 = pneg %p158
        $region81: #{swin_block4_forward.7} parent=74 // pred_check_branch
          %441 = sbr.rel (%p439) target = $region83
        $region82: #{swin_block4_forward.7} parent=74 // pred_region
          %s442 = smul.u32 2, %s22
          %p443 = scmp.lt.s32.totalorder %s442, 11
          %s444 = scalar_select %p443, %s442, 11
          %s445 = scalar_lea.vmem %s4, %s444
        $region83: #{swin_block4_forward.7} parent=74 // pred_fallthru
          _
      $region75: #{swin_block4_forward.7} parent=5 // pred_fallthru
        _
    $region6: #{swin_block4_forward.7} parent=1 // loop_footer
      %s15 = sadd.s32 1, %s11
    $region7: #{swin_block4_forward.7} parent=1 // loop_footer_branch
      %10 = sbr.rel target = $region3
    $region8: #{swin_block4_forward.7} parent=1 // loop_exit
      _

// kernel: swin_block4_forward.9
$region0: #{swin_block4_forward.9}
  #allocation0 [shape = 'u32[]', space=smem, size = 0x4, offset = 0x4, fixed_abs, tag = 'smem constant byte address 0x4 - core index']
  #allocation1 [shape = 'u32[72,128]{1,0:T(1,128)}', space=vmem, size = 0x9000, scoped, tag = 'internal scratch']
  %s0 = inlined_call_operand.vmem [shape: f32[32,1536], index: 0, kind: input, shape index: {}]
  %s1 = inlined_call_operand.vmem [shape: bf16[768,384], index: 1, kind: input, shape index: {}]
  %s2 = inlined_call_operand.vmem [shape: f32[1,768], index: 2, kind: input, shape index: {}]
  %s3 = inlined_call_operand.vmem [shape: f32[1,768], index: 3, kind: input, shape index: {}]
  %s4 = inlined_call_operand.vmem [shape: f32[32,384], index: 4, kind: output, shape index: {}]
  %s5 = sld [smem:[#allocation0]]
  $region49: #{swin_block4_forward.9} parent=0
    _
  %s7 = ssub.s32 1, %s5
  %s8 = scalar_select 0, %s7, %s5
  $region1: #{swin_block4_forward.9} parent=0
    #allocation2 [shape = 'u8[98304]{0}', space=vmem, size = 0x18000, scoped, tag = 'input window, operand 0, single buffered']
    // Predicated region
    $region2: #{swin_block4_forward.9} parent=1 // pred_check
      _
    $region3: #{swin_block4_forward.9} parent=1 // pred_check_branch
      %10 = sbr.rel (0) target = $region5
    $region4: #{swin_block4_forward.9} parent=1 // pred_region
      %s11 = scalar_lea.vmem %s0, 48
      // Predicated region
      $region6: #{swin_block4_forward.9} parent=4 // pred_check
        _
      $region7: #{swin_block4_forward.9} parent=4 // pred_check_branch
        %13 = sbr.rel (0) target = $region9
      $region8: #{swin_block4_forward.9} parent=4 // pred_region
        // Predicated region
        $region10: #{swin_block4_forward.9} parent=8 // pred_check
          _
        $region11: #{swin_block4_forward.9} parent=8 // pred_check_branch
          %15 = sbr.rel (0) target = $region13
        $region12: #{swin_block4_forward.9} parent=8 // pred_region
          loop: start=0, step=1, limit=1
          $region14: #{swin_block4_forward.9} parent=12 // loop_pre_header
            _
          $region15: #{swin_block4_forward.9} parent=12 // loop_header
            %s17 = sphi 0, %s21
            %p18 = scmp.ge.s32.totalorder %s17, 1
            %s22 = sphi %s11, %s11
            %s23 = sphi [#allocation2], [#allocation2]
          $region16: #{swin_block4_forward.9} parent=12 // loop_header_branch
            %20 = sbr.rel (%p18) target = $region20
          $region17: #{swin_block4_forward.9} parent=12 // loop_body
            %v24 = vld [vmem:[%s22] sm:$0xff]
            %25 = vst [vmem:[%s23] sm:$0xff] %v24
            %v26 = vld [vmem:[%s22 + $0x8] sm:$0xff]
            %27 = vst [vmem:[%s23 + $0x8] sm:$0xff] %v26
            %v28 = vld [vmem:[%s22 + $0x10] sm:$0xff]
            %29 = vst [vmem:[%s23 + $0x10] sm:$0xff] %v28
            %v30 = vld [vmem:[%s22 + $0x18] sm:$0xff]
            %31 = vst [vmem:[%s23 + $0x18] sm:$0xff] %v30
            %v32 = vld [vmem:[%s22 + $0x20] sm:$0xff]
            %33 = vst [vmem:[%s23 + $0x20] sm:$0xff] %v32
            %v34 = vld [vmem:[%s22 + $0x28] sm:$0xff]
            %35 = vst [vmem:[%s23 + $0x28] sm:$0xff] %v34
            %v36 = vld [vmem:[%s22 + $0x60] sm:$0xff]
            %37 = vst [vmem:[%s23 + $0x30] sm:$0xff] %v36
            %v38 = vld [vmem:[%s22 + $0x68] sm:$0xff]
            %39 = vst [vmem:[%s23 + $0x38] sm:$0xff] %v38
            %v40 = vld [vmem:[%s22 + $0x70] sm:$0xff]
            %41 = vst [vmem:[%s23 + $0x40] sm:$0xff] %v40
            %v42 = vld [vmem:[%s22 + $0x78] sm:$0xff]
            %43 = vst [vmem:[%s23 + $0x48] sm:$0xff] %v42
            %v44 = vld [vmem:[%s22 + $0x80] sm:$0xff]
            %45 = vst [vmem:[%s23 + $0x50] sm:$0xff] %v44
            %v46 = vld [vmem:[%s22 + $0x88] sm:$0xff]
            %47 = vst [vmem:[%s23 + $0x58] sm:$0xff] %v46
            %v48 = vld [vmem:[%s22 + $0xc0] sm:$0xff]
            %49 = vst [vmem:[%s23 + $0x60] sm:$0xff] %v48
            %v50 = vld [vmem:[%s22 + $0xc8] sm:$0xff]
            %51 = vst [vmem:[%s23 + $0x68] sm:$0xff] %v50
            %v52 = vld [vmem:[%s22 + $0xd0] sm:$0xff]
            %53 = vst [vmem:[%s23 + $0x70] sm:$0xff] %v52
            %v54 = vld [vmem:[%s22 + $0xd8] sm:$0xff]
            %55 = vst [vmem:[%s23 + $0x78] sm:$0xff] %v54
            %v56 = vld [vmem:[%s22 + $0xe0] sm:$0xff]
            %57 = vst [vmem:[%s23 + $0x80] sm:$0xff] %v56
            %v58 = vld [vmem:[%s22 + $0xe8] sm:$0xff]
            %59 = vst [vmem:[%s23 + $0x88] sm:$0xff] %v58
            %v60 = vld [vmem:[%s22 + $0x120] sm:$0xff]
            %61 = vst [vmem:[%s23 + $0x90] sm:$0xff] %v60
            %v62 = vld [vmem:[%s22 + $0x128] sm:$0xff]
            %63 = vst [vmem:[%s23 + $0x98] sm:$0xff] %v62
            %v64 = vld [vmem:[%s22 + $0x130] sm:$0xff]
            %65 = vst [vmem:[%s23 + $0xa0] sm:$0xff] %v64
            %v66 = vld [vmem:[%s22 + $0x138] sm:$0xff]
            %67 = vst [vmem:[%s23 + $0xa8] sm:$0xff] %v66
            %v68 = vld [vmem:[%s22 + $0x140] sm:$0xff]
            %69 = vst [vmem:[%s23 + $0xb0] sm:$0xff] %v68
            %v70 = vld [vmem:[%s22 + $0x148] sm:$0xff]
            %71 = vst [vmem:[%s23 + $0xb8] sm:$0xff] %v70
          $region18: #{swin_block4_forward.9} parent=12 // loop_footer
            %s21 = sadd.s32 1, %s17
          $region19: #{swin_block4_forward.9} parent=12 // loop_footer_branch
            %16 = sbr.rel target = $region15
          $region20: #{swin_block4_forward.9} parent=12 // loop_exit
            _
        $region13: #{swin_block4_forward.9} parent=8 // pred_fallthru
          _
        // Predicated region
        $region21: #{swin_block4_forward.9} parent=8 // pred_check
          _
        $region22: #{swin_block4_forward.9} parent=8 // pred_check_branch
          %73 = sbr.rel target = $region24
        $region23: #{swin_block4_forward.9} parent=8 // pred_region
          _
        $region24: #{swin_block4_forward.9} parent=8 // pred_fallthru
          _
      $region9: #{swin_block4_forward.9} parent=4 // pred_fallthru
        _
      %74 = vnop
    $region5: #{swin_block4_forward.9} parent=1 // pred_fallthru
      _
    // Predicated region
    $region25: #{swin_block4_forward.9} parent=1 // pred_check
      _
    $region26: #{swin_block4_forward.9} parent=1 // pred_check_branch
      %76 = sbr.rel (0) target = $region28
    $region27: #{swin_block4_forward.9} parent=1 // pred_region
      _
    $region28: #{swin_block4_forward.9} parent=1 // pred_fallthru
      _
    // Predicated region
    $region29: #{swin_block4_forward.9} parent=1 // pred_check
      _
    $region30: #{swin_block4_forward.9} parent=1 // pred_check_branch
      %78 = sbr.rel (0) target = $region32
    $region31: #{swin_block4_forward.9} parent=1 // pred_region
      _
    $region32: #{swin_block4_forward.9} parent=1 // pred_fallthru
      _
    // Predicated region
    $region33: #{swin_block4_forward.9} parent=1 // pred_check
      _
    $region34: #{swin_block4_forward.9} parent=1 // pred_check_branch
      %80 = sbr.rel (0) target = $region36
    $region35: #{swin_block4_forward.9} parent=1 // pred_region
      _
    $region36: #{swin_block4_forward.9} parent=1 // pred_fallthru
      _
    // Predicated region
    $region37: #{swin_block4_forward.9} parent=1 // pred_check
      _
    $region38: #{swin_block4_forward.9} parent=1 // pred_check_branch
      %82 = sbr.rel (0) target = $region40
    $region39: #{swin_block4_forward.9} parent=1 // pred_region
      _
    $region40: #{swin_block4_forward.9} parent=1 // pred_fallthru
      _
    %v83 = vld [vmem:[#allocation2] sm:$0xff]
    %v84 = vld [vmem:[#allocation2 + $0x8] sm:$0xff]
    %v85 = vld [vmem:[#allocation2 + $0x10] sm:$0xff]
    %v86 = vld [vmem:[#allocation2 + $0x18] sm:$0xff]
    %v87 = vld [vmem:[#allocation2 + $0x20] sm:$0xff]
    %v88 = vld [vmem:[#allocation2 + $0x28] sm:$0xff]
    %v89 = vld [vmem:[#allocation2 + $0x30] sm:$0xff]
    %v90 = vld [vmem:[#allocation2 + $0x38] sm:$0xff]
    %v91 = vld [vmem:[#allocation2 + $0x40] sm:$0xff]
    %v92 = vld [vmem:[#allocation2 + $0x48] sm:$0xff]
    %v93 = vld [vmem:[#allocation2 + $0x50] sm:$0xff]
    %v94 = vld [vmem:[#allocation2 + $0x58] sm:$0xff]
    %v95 = vld [vmem:[#allocation2 + $0x60] sm:$0xff]
    %v96 = vld [vmem:[#allocation2 + $0x68] sm:$0xff]
    %v97 = vld [vmem:[#allocation2 + $0x70] sm:$0xff]
    %v98 = vld [vmem:[#allocation2 + $0x78] sm:$0xff]
    %v99 = vld [vmem:[#allocation2 + $0x80] sm:$0xff]
    %v100 = vld [vmem:[#allocation2 + $0x88] sm:$0xff]
    %v101 = vld [vmem:[#allocation2 + $0x90] sm:$0xff]
    %v102 = vld [vmem:[#allocation2 + $0x98] sm:$0xff]
    %v103 = vld [vmem:[#allocation2 + $0xa0] sm:$0xff]
    %v104 = vld [vmem:[#allocation2 + $0xa8] sm:$0xff]
    %v105 = vld [vmem:[#allocation2 + $0xb0] sm:$0xff]
    %v106 = vld [vmem:[#allocation2 + $0xb8] sm:$0xff]
    %v107 = vld [vmem:[%s2] sm:$0x3f]
    %v109 = vperm.slane %v107, 0
    %v110 = vperm.slane %v107, 1
    %v111 = vperm.slane %v107, 2
    %v112 = vperm.slane %v107, 3
    %v113 = vperm.slane %v107, 4
    %v114 = vperm.slane %v107, 5
    %v121 = vmul.f32 %v83, %v109
    %v122 = vmul.f32 %v84, %v110
    %v123 = vmul.f32 %v85, %v111
    %v124 = vmul.f32 %v86, %v112
    %v125 = vmul.f32 %v87, %v113
    %v126 = vmul.f32 %v88, %v114
    %v127 = vmul.f32 %v89, %v109
    %v128 = vmul.f32 %v90, %v110
    %v129 = vmul.f32 %v91, %v111
    %v130 = vmul.f32 %v92, %v112
    %v131 = vmul.f32 %v93, %v113
    %v132 = vmul.f32 %v94, %v114
    %v133 = vmul.f32 %v95, %v109
    %v134 = vmul.f32 %v96, %v110
    %v135 = vmul.f32 %v97, %v111
    %v136 = vmul.f32 %v98, %v112
    %v137 = vmul.f32 %v99, %v113
    %v138 = vmul.f32 %v100, %v114
    %v139 = vmul.f32 %v101, %v109
    %v140 = vmul.f32 %v102, %v110
    %v141 = vmul.f32 %v103, %v111
    %v142 = vmul.f32 %v104, %v112
    %v143 = vmul.f32 %v105, %v113
    %v144 = vmul.f32 %v106, %v114
    %v145 = vld [vmem:[%s3] sm:$0x3f]
    %v147 = vperm.slane %v145, 0
    %v148 = vperm.slane %v145, 1
    %v149 = vperm.slane %v145, 2
    %v150 = vperm.slane %v145, 3
    %v151 = vperm.slane %v145, 4
    %v152 = vperm.slane %v145, 5
    %v159 = vadd.f32 %v121, %v147
    %v160 = vadd.f32 %v122, %v148
    %v161 = vadd.f32 %v123, %v149
    %v162 = vadd.f32 %v124, %v150
    %v163 = vadd.f32 %v125, %v151
    %v164 = vadd.f32 %v126, %v152
    %v165 = vadd.f32 %v127, %v147
    %v166 = vadd.f32 %v128, %v148
    %v167 = vadd.f32 %v129, %v149
    %v168 = vadd.f32 %v130, %v150
    %v169 = vadd.f32 %v131, %v151
    %v170 = vadd.f32 %v132, %v152
    %v171 = vadd.f32 %v133, %v147
    %v172 = vadd.f32 %v134, %v148
    %v173 = vadd.f32 %v135, %v149
    %v174 = vadd.f32 %v136, %v150
    %v175 = vadd.f32 %v137, %v151
    %v176 = vadd.f32 %v138, %v152
    %v177 = vadd.f32 %v139, %v147
    %v178 = vadd.f32 %v140, %v148
    %v179 = vadd.f32 %v141, %v149
    %v180 = vadd.f32 %v142, %v150
    %v181 = vadd.f32 %v143, %v151
    %v182 = vadd.f32 %v144, %v152
    %v183 = vpack.c.bf16 %v165, %v159
    %v184 = vpack.c.bf16 %v166, %v160
    %v185 = vpack.c.bf16 %v167, %v161
    %v186 = vpack.c.bf16 %v168, %v162
    %v187 = vpack.c.bf16 %v169, %v163
    %v188 = vpack.c.bf16 %v170, %v164
    %v189 = vpack.c.bf16 %v177, %v171
    %v190 = vpack.c.bf16 %v178, %v172
    %v191 = vpack.c.bf16 %v179, %v173
    %v192 = vpack.c.bf16 %v180, %v174
    %v193 = vpack.c.bf16 %v181, %v175
    %v194 = vpack.c.bf16 %v182, %v176
    %v195 = vld [vmem:[%s1] sm:$0xff]
    %v196 = vld [vmem:[%s1 + $0x8] sm:$0xf]
    %v197 = vld [vmem:[%s1 + $0xc] sm:$0xff]
    %v198 = vld [vmem:[%s1 + $0x14] sm:$0xf]
    %v199 = vld [vmem:[%s1 + $0x18] sm:$0xff]
    %v200 = vld [vmem:[%s1 + $0x20] sm:$0xf]
    %v201 = vld [vmem:[%s1 + $0x24] sm:$0xff]
    %v202 = vld [vmem:[%s1 + $0x2c] sm:$0xf]
    %v203 = vld [vmem:[%s1 + $0x30] sm:$0xff]
    %v204 = vld [vmem:[%s1 + $0x38] sm:$0xf]
    %v205 = vld [vmem:[%s1 + $0x3c] sm:$0xff]
    %v206 = vld [vmem:[%s1 + $0x44] sm:$0xf]
    %v207 = vld [vmem:[%s1 + $0x48] sm:$0xff]
    %v208 = vld [vmem:[%s1 + $0x50] sm:$0xf]
    %v209 = vld [vmem:[%s1 + $0x54] sm:$0xff]
    %v210 = vld [vmem:[%s1 + $0x5c] sm:$0xf]
    %v211 = vld [vmem:[%s1 + $0x60] sm:$0xff]
    %v212 = vld [vmem:[%s1 + $0x68] sm:$0xf]
    %v213 = vld [vmem:[%s1 + $0x6c] sm:$0xff]
    %v214 = vld [vmem:[%s1 + $0x74] sm:$0xf]
    %v215 = vld [vmem:[%s1 + $0x78] sm:$0xff]
    %v216 = vld [vmem:[%s1 + $0x80] sm:$0xf]
    %v217 = vld [vmem:[%s1 + $0x84] sm:$0xff]
    %v218 = vld [vmem:[%s1 + $0x8c] sm:$0xf]
    %v219 = vld [vmem:[%s1 + $0x90] sm:$0xff]
    %v220 = vld [vmem:[%s1 + $0x98] sm:$0xf]
    %v221 = vld [vmem:[%s1 + $0x9c] sm:$0xff]
    %v222 = vld [vmem:[%s1 + $0xa4] sm:$0xf]
    %v223 = vld [vmem:[%s1 + $0xa8] sm:$0xff]
    %v224 = vld [vmem:[%s1 + $0xb0] sm:$0xf]
    %v225 = vld [vmem:[%s1 + $0xb4] sm:$0xff]
    %v226 = vld [vmem:[%s1 + $0xbc] sm:$0xf]
    %v227 = vld [vmem:[%s1 + $0xc0] sm:$0xff]
    %v228 = vld [vmem:[%s1 + $0xc8] sm:$0xf]
    %v229 = vld [vmem:[%s1 + $0xcc] sm:$0xff]
    %v230 = vld [vmem:[%s1 + $0xd4] sm:$0xf]
    %v231 = vld [vmem:[%s1 + $0xd8] sm:$0xff]
    %v232 = vld [vmem:[%s1 + $0xe0] sm:$0xf]
    %v233 = vld [vmem:[%s1 + $0xe4] sm:$0xff]
    %v234 = vld [vmem:[%s1 + $0xec] sm:$0xf]
    %v235 = vld [vmem:[%s1 + $0xf0] sm:$0xff]
    %v236 = vld [vmem:[%s1 + $0xf8] sm:$0xf]
    %v237 = vld [vmem:[%s1 + $0xfc] sm:$0xff]
    %v238 = vld [vmem:[%s1 + $0x104] sm:$0xf]
    %v239 = vld [vmem:[%s1 + $0x108] sm:$0xff]
    %v240 = vld [vmem:[%s1 + $0x110] sm:$0xf]
    %v241 = vld [vmem:[%s1 + $0x114] sm:$0xff]
    %v242 = vld [vmem:[%s1 + $0x11c] sm:$0xf]
    %v243 = vld [vmem:[%s1 + $0x120] sm:$0xff]
    %v244 = vld [vmem:[%s1 + $0x128] sm:$0xf]
    %v245 = vld [vmem:[%s1 + $0x12c] sm:$0xff]
    %v246 = vld [vmem:[%s1 + $0x134] sm:$0xf]
    %v247 = vld [vmem:[%s1 + $0x138] sm:$0xff]
    %v248 = vld [vmem:[%s1 + $0x140] sm:$0xf]
    %v249 = vld [vmem:[%s1 + $0x144] sm:$0xff]
    %v250 = vld [vmem:[%s1 + $0x14c] sm:$0xf]
    %v251 = vld [vmem:[%s1 + $0x150] sm:$0xff]
    %v252 = vld [vmem:[%s1 + $0x158] sm:$0xf]
    %v253 = vld [vmem:[%s1 + $0x15c] sm:$0xff]
    %v254 = vld [vmem:[%s1 + $0x164] sm:$0xf]
    %v255 = vld [vmem:[%s1 + $0x168] sm:$0xff]
    %v256 = vld [vmem:[%s1 + $0x170] sm:$0xf]
    %v257 = vld [vmem:[%s1 + $0x174] sm:$0xff]
    %v258 = vld [vmem:[%s1 + $0x17c] sm:$0xf]
    %v259 = vld [vmem:[%s1 + $0x180] sm:$0xff]
    %v260 = vld [vmem:[%s1 + $0x188] sm:$0xf]
    %v261 = vld [vmem:[%s1 + $0x18c] sm:$0xff]
    %v262 = vld [vmem:[%s1 + $0x194] sm:$0xf]
    %v263 = vld [vmem:[%s1 + $0x198] sm:$0xff]
    %v264 = vld [vmem:[%s1 + $0x1a0] sm:$0xf]
    %v265 = vld [vmem:[%s1 + $0x1a4] sm:$0xff]
    %v266 = vld [vmem:[%s1 + $0x1ac] sm:$0xf]
    %v267 = vld [vmem:[%s1 + $0x1b0] sm:$0xff]
    %v268 = vld [vmem:[%s1 + $0x1b8] sm:$0xf]
    %v269 = vld [vmem:[%s1 + $0x1bc] sm:$0xff]
    %v270 = vld [vmem:[%s1 + $0x1c4] sm:$0xf]
    %v271 = vld [vmem:[%s1 + $0x1c8] sm:$0xff]
    %v272 = vld [vmem:[%s1 + $0x1d0] sm:$0xf]
    %v273 = vld [vmem:[%s1 + $0x1d4] sm:$0xff]
    %v274 = vld [vmem:[%s1 + $0x1dc] sm:$0xf]
    %v275 = vld [vmem:[%s1 + $0x1e0] sm:$0xff]
    %v276 = vld [vmem:[%s1 + $0x1e8] sm:$0xf]
    %v277 = vld [vmem:[%s1 + $0x1ec] sm:$0xff]
    %v278 = vld [vmem:[%s1 + $0x1f4] sm:$0xf]
    %v279 = vld [vmem:[%s1 + $0x1f8] sm:$0xff]
    %v280 = vld [vmem:[%s1 + $0x200] sm:$0xf]
    %v281 = vld [vmem:[%s1 + $0x204] sm:$0xff]
    %v282 = vld [vmem:[%s1 + $0x20c] sm:$0xf]
    %v283 = vld [vmem:[%s1 + $0x210] sm:$0xff]
    %v284 = vld [vmem:[%s1 + $0x218] sm:$0xf]
    %v285 = vld [vmem:[%s1 + $0x21c] sm:$0xff]
    %v286 = vld [vmem:[%s1 + $0x224] sm:$0xf]
    %v287 = vld [vmem:[%s1 + $0x228] sm:$0xff]
    %v288 = vld [vmem:[%s1 + $0x230] sm:$0xf]
    %v289 = vld [vmem:[%s1 + $0x234] sm:$0xff]
    %v290 = vld [vmem:[%s1 + $0x23c] sm:$0xf]
    %v291 = vld [vmem:[%s1 + $0x240] sm:$0xff]
    %v292 = vld [vmem:[%s1 + $0x248] sm:$0xf]
    %v293 = vld [vmem:[%s1 + $0x24c] sm:$0xff]
    %v294 = vld [vmem:[%s1 + $0x254] sm:$0xf]
    %v295 = vld [vmem:[%s1 + $0x258] sm:$0xff]
    %v296 = vld [vmem:[%s1 + $0x260] sm:$0xf]
    %v297 = vld [vmem:[%s1 + $0x264] sm:$0xff]
    %v298 = vld [vmem:[%s1 + $0x26c] sm:$0xf]
    %v299 = vld [vmem:[%s1 + $0x270] sm:$0xff]
    %v300 = vld [vmem:[%s1 + $0x278] sm:$0xf]
    %v301 = vld [vmem:[%s1 + $0x27c] sm:$0xff]
    %v302 = vld [vmem:[%s1 + $0x284] sm:$0xf]
    %v303 = vld [vmem:[%s1 + $0x288] sm:$0xff]
    %v304 = vld [vmem:[%s1 + $0x290] sm:$0xf]
    %v305 = vld [vmem:[%s1 + $0x294] sm:$0xff]
    %v306 = vld [vmem:[%s1 + $0x29c] sm:$0xf]
    %v307 = vld [vmem:[%s1 + $0x2a0] sm:$0xff]
    %v308 = vld [vmem:[%s1 + $0x2a8] sm:$0xf]
    %v309 = vld [vmem:[%s1 + $0x2ac] sm:$0xff]
    %v310 = vld [vmem:[%s1 + $0x2b4] sm:$0xf]
    %v311 = vld [vmem:[%s1 + $0x2b8] sm:$0xff]
    %v312 = vld [vmem:[%s1 + $0x2c0] sm:$0xf]
    %v313 = vld [vmem:[%s1 + $0x2c4] sm:$0xff]
    %v314 = vld [vmem:[%s1 + $0x2cc] sm:$0xf]
    %v315 = vld [vmem:[%s1 + $0x2d0] sm:$0xff]
    %v316 = vld [vmem:[%s1 + $0x2d8] sm:$0xf]
    %v317 = vld [vmem:[%s1 + $0x2dc] sm:$0xff]
    %v318 = vld [vmem:[%s1 + $0x2e4] sm:$0xf]
    %v319 = vld [vmem:[%s1 + $0x2e8] sm:$0xff]
    %v320 = vld [vmem:[%s1 + $0x2f0] sm:$0xf]
    %v321 = vld [vmem:[%s1 + $0x2f4] sm:$0xff]
    %v322 = vld [vmem:[%s1 + $0x2fc] sm:$0xf]
    %v323 = vld [vmem:[%s1 + $0x300] sm:$0xff]
    %v324 = vld [vmem:[%s1 + $0x308] sm:$0xf]
    %v325 = vld [vmem:[%s1 + $0x30c] sm:$0xff]
    %v326 = vld [vmem:[%s1 + $0x314] sm:$0xf]
    %v327 = vld [vmem:[%s1 + $0x318] sm:$0xff]
    %v328 = vld [vmem:[%s1 + $0x320] sm:$0xf]
    %v329 = vld [vmem:[%s1 + $0x324] sm:$0xff]
    %v330 = vld [vmem:[%s1 + $0x32c] sm:$0xf]
    %v331 = vld [vmem:[%s1 + $0x330] sm:$0xff]
    %v332 = vld [vmem:[%s1 + $0x338] sm:$0xf]
    %v333 = vld [vmem:[%s1 + $0x33c] sm:$0xff]
    %v334 = vld [vmem:[%s1 + $0x344] sm:$0xf]
    %v335 = vld [vmem:[%s1 + $0x348] sm:$0xff]
    %v336 = vld [vmem:[%s1 + $0x350] sm:$0xf]
    %v337 = vld [vmem:[%s1 + $0x354] sm:$0xff]
    %v338 = vld [vmem:[%s1 + $0x35c] sm:$0xf]
    %v339 = vld [vmem:[%s1 + $0x360] sm:$0xff]
    %v340 = vld [vmem:[%s1 + $0x368] sm:$0xf]
    %v341 = vld [vmem:[%s1 + $0x36c] sm:$0xff]
    %v342 = vld [vmem:[%s1 + $0x374] sm:$0xf]
    %v343 = vld [vmem:[%s1 + $0x378] sm:$0xff]
    %v344 = vld [vmem:[%s1 + $0x380] sm:$0xf]
    %v345 = vld [vmem:[%s1 + $0x384] sm:$0xff]
    %v346 = vld [vmem:[%s1 + $0x38c] sm:$0xf]
    %v347 = vld [vmem:[%s1 + $0x390] sm:$0xff]
    %v348 = vld [vmem:[%s1 + $0x398] sm:$0xf]
    %v349 = vld [vmem:[%s1 + $0x39c] sm:$0xff]
    %v350 = vld [vmem:[%s1 + $0x3a4] sm:$0xf]
    %v351 = vld [vmem:[%s1 + $0x3a8] sm:$0xff]
    %v352 = vld [vmem:[%s1 + $0x3b0] sm:$0xf]
    %v353 = vld [vmem:[%s1 + $0x3b4] sm:$0xff]
    %v354 = vld [vmem:[%s1 + $0x3bc] sm:$0xf]
    %v355 = vld [vmem:[%s1 + $0x3c0] sm:$0xff]
    %v356 = vld [vmem:[%s1 + $0x3c8] sm:$0xf]
    %v357 = vld [vmem:[%s1 + $0x3cc] sm:$0xff]
    %v358 = vld [vmem:[%s1 + $0x3d4] sm:$0xf]
    %v359 = vld [vmem:[%s1 + $0x3d8] sm:$0xff]
    %v360 = vld [vmem:[%s1 + $0x3e0] sm:$0xf]
    %v361 = vld [vmem:[%s1 + $0x3e4] sm:$0xff]
    %v362 = vld [vmem:[%s1 + $0x3ec] sm:$0xf]
    %v363 = vld [vmem:[%s1 + $0x3f0] sm:$0xff]
    %v364 = vld [vmem:[%s1 + $0x3f8] sm:$0xf]
    %v365 = vld [vmem:[%s1 + $0x3fc] sm:$0xff]
    %v366 = vld [vmem:[%s1 + $0x404] sm:$0xf]
    %v367 = vld [vmem:[%s1 + $0x408] sm:$0xff]
    %v368 = vld [vmem:[%s1 + $0x410] sm:$0xf]
    %v369 = vld [vmem:[%s1 + $0x414] sm:$0xff]
    %v370 = vld [vmem:[%s1 + $0x41c] sm:$0xf]
    %v371 = vld [vmem:[%s1 + $0x420] sm:$0xff]
    %v372 = vld [vmem:[%s1 + $0x428] sm:$0xf]
    %v373 = vld [vmem:[%s1 + $0x42c] sm:$0xff]
    %v374 = vld [vmem:[%s1 + $0x434] sm:$0xf]
    %v375 = vld [vmem:[%s1 + $0x438] sm:$0xff]
    %v376 = vld [vmem:[%s1 + $0x440] sm:$0xf]
    %v377 = vld [vmem:[%s1 + $0x444] sm:$0xff]
    %v378 = vld [vmem:[%s1 + $0x44c] sm:$0xf]
    %v379 = vld [vmem:[%s1 + $0x450] sm:$0xff]
    %v380 = vld [vmem:[%s1 + $0x458] sm:$0xf]
    %v381 = vld [vmem:[%s1 + $0x45c] sm:$0xff]
    %v382 = vld [vmem:[%s1 + $0x464] sm:$0xf]
    %v383 = vld [vmem:[%s1 + $0x468] sm:$0xff]
    %v384 = vld [vmem:[%s1 + $0x470] sm:$0xf]
    %v385 = vld [vmem:[%s1 + $0x474] sm:$0xff]
    %v386 = vld [vmem:[%s1 + $0x47c] sm:$0xf]
    %v579 = vunpack.c.l.b16 %v195
    %v580 = vunpack.c.h.b16 %v195
    %v581 = vunpack.c.l.b16 %v196
    %v582 = vunpack.c.l.b16 %v197
    %v583 = vunpack.c.h.b16 %v197
    %v584 = vunpack.c.l.b16 %v198
    %v585 = vunpack.c.l.b16 %v199
    %v586 = vunpack.c.h.b16 %v199
    %v587 = vunpack.c.l.b16 %v200
    %v588 = vunpack.c.l.b16 %v201
    %v589 = vunpack.c.h.b16 %v201
    %v590 = vunpack.c.l.b16 %v202
    %v591 = vunpack.c.l.b16 %v203
    %v592 = vunpack.c.h.b16 %v203
    %v593 = vunpack.c.l.b16 %v204
    %v594 = vunpack.c.l.b16 %v205
    %v595 = vunpack.c.h.b16 %v205
    %v596 = vunpack.c.l.b16 %v206
    %v597 = vunpack.c.l.b16 %v207
    %v598 = vunpack.c.h.b16 %v207
    %v599 = vunpack.c.l.b16 %v208
    %v600 = vunpack.c.l.b16 %v209
    %v601 = vunpack.c.h.b16 %v209
    %v602 = vunpack.c.l.b16 %v210
    %v603 = vunpack.c.l.b16 %v211
    %v604 = vunpack.c.h.b16 %v211
    %v605 = vunpack.c.l.b16 %v212
    %v606 = vunpack.c.l.b16 %v213
    %v607 = vunpack.c.h.b16 %v213
    %v608 = vunpack.c.l.b16 %v214
    %v609 = vunpack.c.l.b16 %v215
    %v610 = vunpack.c.h.b16 %v215
    %v611 = vunpack.c.l.b16 %v216
    %v612 = vunpack.c.l.b16 %v217
    %v613 = vunpack.c.h.b16 %v217
    %v614 = vunpack.c.l.b16 %v218
    %v615 = vunpack.c.l.b16 %v219
    %v616 = vunpack.c.h.b16 %v219
    %v617 = vunpack.c.l.b16 %v220
    %v618 = vunpack.c.l.b16 %v221
    %v619 = vunpack.c.h.b16 %v221
    %v620 = vunpack.c.l.b16 %v222
    %v621 = vunpack.c.l.b16 %v223
    %v622 = vunpack.c.h.b16 %v223
    %v623 = vunpack.c.l.b16 %v224
    %v624 = vunpack.c.l.b16 %v225
    %v625 = vunpack.c.h.b16 %v225
    %v626 = vunpack.c.l.b16 %v226
    %v627 = vunpack.c.l.b16 %v227
    %v628 = vunpack.c.h.b16 %v227
    %v629 = vunpack.c.l.b16 %v228
    %v630 = vunpack.c.l.b16 %v229
    %v631 = vunpack.c.h.b16 %v229
    %v632 = vunpack.c.l.b16 %v230
    %v633 = vunpack.c.l.b16 %v231
    %v634 = vunpack.c.h.b16 %v231
    %v635 = vunpack.c.l.b16 %v232
    %v636 = vunpack.c.l.b16 %v233
    %v637 = vunpack.c.h.b16 %v233
    %v638 = vunpack.c.l.b16 %v234
    %v639 = vunpack.c.l.b16 %v235
    %v640 = vunpack.c.h.b16 %v235
    %v641 = vunpack.c.l.b16 %v236
    %v642 = vunpack.c.l.b16 %v237
    %v643 = vunpack.c.h.b16 %v237
    %v644 = vunpack.c.l.b16 %v238
    %v645 = vunpack.c.l.b16 %v239
    %v646 = vunpack.c.h.b16 %v239
    %v647 = vunpack.c.l.b16 %v240
    %v648 = vunpack.c.l.b16 %v241
    %v649 = vunpack.c.h.b16 %v241
    %v650 = vunpack.c.l.b16 %v242
    %v651 = vunpack.c.l.b16 %v243
    %v652 = vunpack.c.h.b16 %v243
    %v653 = vunpack.c.l.b16 %v244
    %v654 = vunpack.c.l.b16 %v245
    %v655 = vunpack.c.h.b16 %v245
    %v656 = vunpack.c.l.b16 %v246
    %v657 = vunpack.c.l.b16 %v247
    %v658 = vunpack.c.h.b16 %v247
    %v659 = vunpack.c.l.b16 %v248
    %v660 = vunpack.c.l.b16 %v249
    %v661 = vunpack.c.h.b16 %v249
    %v662 = vunpack.c.l.b16 %v250
    %v663 = vunpack.c.l.b16 %v251
    %v664 = vunpack.c.h.b16 %v251
    %v665 = vunpack.c.l.b16 %v252
    %v666 = vunpack.c.l.b16 %v253
    %v667 = vunpack.c.h.b16 %v253
    %v668 = vunpack.c.l.b16 %v254
    %v669 = vunpack.c.l.b16 %v255
    %v670 = vunpack.c.h.b16 %v255
    %v671 = vunpack.c.l.b16 %v256
    %v672 = vunpack.c.l.b16 %v257
    %v673 = vunpack.c.h.b16 %v257
    %v674 = vunpack.c.l.b16 %v258
    %v675 = vunpack.c.l.b16 %v259
    %v676 = vunpack.c.h.b16 %v259
    %v677 = vunpack.c.l.b16 %v260
    %v678 = vunpack.c.l.b16 %v261
    %v679 = vunpack.c.h.b16 %v261
    %v680 = vunpack.c.l.b16 %v262
    %v681 = vunpack.c.l.b16 %v263
    %v682 = vunpack.c.h.b16 %v263
    %v683 = vunpack.c.l.b16 %v264
    %v684 = vunpack.c.l.b16 %v265
    %v685 = vunpack.c.h.b16 %v265
    %v686 = vunpack.c.l.b16 %v266
    %v687 = vunpack.c.l.b16 %v267
    %v688 = vunpack.c.h.b16 %v267
    %v689 = vunpack.c.l.b16 %v268
    %v690 = vunpack.c.l.b16 %v269
    %v691 = vunpack.c.h.b16 %v269
    %v692 = vunpack.c.l.b16 %v270
    %v693 = vunpack.c.l.b16 %v271
    %v694 = vunpack.c.h.b16 %v271
    %v695 = vunpack.c.l.b16 %v272
    %v696 = vunpack.c.l.b16 %v273
    %v697 = vunpack.c.h.b16 %v273
    %v698 = vunpack.c.l.b16 %v274
    %v699 = vunpack.c.l.b16 %v275
    %v700 = vunpack.c.h.b16 %v275
    %v701 = vunpack.c.l.b16 %v276
    %v702 = vunpack.c.l.b16 %v277
    %v703 = vunpack.c.h.b16 %v277
    %v704 = vunpack.c.l.b16 %v278
    %v705 = vunpack.c.l.b16 %v279
    %v706 = vunpack.c.h.b16 %v279
    %v707 = vunpack.c.l.b16 %v280
    %v708 = vunpack.c.l.b16 %v281
    %v709 = vunpack.c.h.b16 %v281
    %v710 = vunpack.c.l.b16 %v282
    %v711 = vunpack.c.l.b16 %v283
    %v712 = vunpack.c.h.b16 %v283
    %v713 = vunpack.c.l.b16 %v284
    %v714 = vunpack.c.l.b16 %v285
    %v715 = vunpack.c.h.b16 %v285
    %v716 = vunpack.c.l.b16 %v286
    %v717 = vunpack.c.l.b16 %v287
    %v718 = vunpack.c.h.b16 %v287
    %v719 = vunpack.c.l.b16 %v288
    %v720 = vunpack.c.l.b16 %v289
    %v721 = vunpack.c.h.b16 %v289
    %v722 = vunpack.c.l.b16 %v290
    %v723 = vunpack.c.l.b16 %v291
    %v724 = vunpack.c.h.b16 %v291
    %v725 = vunpack.c.l.b16 %v292
    %v726 = vunpack.c.l.b16 %v293
    %v727 = vunpack.c.h.b16 %v293
    %v728 = vunpack.c.l.b16 %v294
    %v729 = vunpack.c.l.b16 %v295
    %v730 = vunpack.c.h.b16 %v295
    %v731 = vunpack.c.l.b16 %v296
    %v732 = vunpack.c.l.b16 %v297
    %v733 = vunpack.c.h.b16 %v297
    %v734 = vunpack.c.l.b16 %v298
    %v735 = vunpack.c.l.b16 %v299
    %v736 = vunpack.c.h.b16 %v299
    %v737 = vunpack.c.l.b16 %v300
    %v738 = vunpack.c.l.b16 %v301
    %v739 = vunpack.c.h.b16 %v301
    %v740 = vunpack.c.l.b16 %v302
    %v741 = vunpack.c.l.b16 %v303
    %v742 = vunpack.c.h.b16 %v303
    %v743 = vunpack.c.l.b16 %v304
    %v744 = vunpack.c.l.b16 %v305
    %v745 = vunpack.c.h.b16 %v305
    %v746 = vunpack.c.l.b16 %v306
    %v747 = vunpack.c.l.b16 %v307
    %v748 = vunpack.c.h.b16 %v307
    %v749 = vunpack.c.l.b16 %v308
    %v750 = vunpack.c.l.b16 %v309
    %v751 = vunpack.c.h.b16 %v309
    %v752 = vunpack.c.l.b16 %v310
    %v753 = vunpack.c.l.b16 %v311
    %v754 = vunpack.c.h.b16 %v311
    %v755 = vunpack.c.l.b16 %v312
    %v756 = vunpack.c.l.b16 %v313
    %v757 = vunpack.c.h.b16 %v313
    %v758 = vunpack.c.l.b16 %v314
    %v759 = vunpack.c.l.b16 %v315
    %v760 = vunpack.c.h.b16 %v315
    %v761 = vunpack.c.l.b16 %v316
    %v762 = vunpack.c.l.b16 %v317
    %v763 = vunpack.c.h.b16 %v317
    %v764 = vunpack.c.l.b16 %v318
    %v765 = vunpack.c.l.b16 %v319
    %v766 = vunpack.c.h.b16 %v319
    %v767 = vunpack.c.l.b16 %v320
    %v768 = vunpack.c.l.b16 %v321
    %v769 = vunpack.c.h.b16 %v321
    %v770 = vunpack.c.l.b16 %v322
    %v771 = vunpack.c.l.b16 %v323
    %v772 = vunpack.c.h.b16 %v323
    %v773 = vunpack.c.l.b16 %v324
    %v774 = vunpack.c.l.b16 %v325
    %v775 = vunpack.c.h.b16 %v325
    %v776 = vunpack.c.l.b16 %v326
    %v777 = vunpack.c.l.b16 %v327
    %v778 = vunpack.c.h.b16 %v327
    %v779 = vunpack.c.l.b16 %v328
    %v780 = vunpack.c.l.b16 %v329
    %v781 = vunpack.c.h.b16 %v329
    %v782 = vunpack.c.l.b16 %v330
    %v783 = vunpack.c.l.b16 %v331
    %v784 = vunpack.c.h.b16 %v331
    %v785 = vunpack.c.l.b16 %v332
    %v786 = vunpack.c.l.b16 %v333
    %v787 = vunpack.c.h.b16 %v333
    %v788 = vunpack.c.l.b16 %v334
    %v789 = vunpack.c.l.b16 %v335
    %v790 = vunpack.c.h.b16 %v335
    %v791 = vunpack.c.l.b16 %v336
    %v792 = vunpack.c.l.b16 %v337
    %v793 = vunpack.c.h.b16 %v337
    %v794 = vunpack.c.l.b16 %v338
    %v795 = vunpack.c.l.b16 %v339
    %v796 = vunpack.c.h.b16 %v339
    %v797 = vunpack.c.l.b16 %v340
    %v798 = vunpack.c.l.b16 %v341
    %v799 = vunpack.c.h.b16 %v341
    %v800 = vunpack.c.l.b16 %v342
    %v801 = vunpack.c.l.b16 %v343
    %v802 = vunpack.c.h.b16 %v343
    %v803 = vunpack.c.l.b16 %v344
    %v804 = vunpack.c.l.b16 %v345
    %v805 = vunpack.c.h.b16 %v345
    %v806 = vunpack.c.l.b16 %v346
    %v807 = vunpack.c.l.b16 %v347
    %v808 = vunpack.c.h.b16 %v347
    %v809 = vunpack.c.l.b16 %v348
    %v810 = vunpack.c.l.b16 %v349
    %v811 = vunpack.c.h.b16 %v349
    %v812 = vunpack.c.l.b16 %v350
    %v813 = vunpack.c.l.b16 %v351
    %v814 = vunpack.c.h.b16 %v351
    %v815 = vunpack.c.l.b16 %v352
    %v816 = vunpack.c.l.b16 %v353
    %v817 = vunpack.c.h.b16 %v353
    %v818 = vunpack.c.l.b16 %v354
    %v819 = vunpack.c.l.b16 %v355
    %v820 = vunpack.c.h.b16 %v355
    %v821 = vunpack.c.l.b16 %v356
    %v822 = vunpack.c.l.b16 %v357
    %v823 = vunpack.c.h.b16 %v357
    %v824 = vunpack.c.l.b16 %v358
    %v825 = vunpack.c.l.b16 %v359
    %v826 = vunpack.c.h.b16 %v359
    %v827 = vunpack.c.l.b16 %v360
    %v828 = vunpack.c.l.b16 %v361
    %v829 = vunpack.c.h.b16 %v361
    %v830 = vunpack.c.l.b16 %v362
    %v831 = vunpack.c.l.b16 %v363
    %v832 = vunpack.c.h.b16 %v363
    %v833 = vunpack.c.l.b16 %v364
    %v834 = vunpack.c.l.b16 %v365
    %v835 = vunpack.c.h.b16 %v365
    %v836 = vunpack.c.l.b16 %v366
    %v837 = vunpack.c.l.b16 %v367
    %v838 = vunpack.c.h.b16 %v367
    %v839 = vunpack.c.l.b16 %v368
    %v840 = vunpack.c.l.b16 %v369
    %v841 = vunpack.c.h.b16 %v369
    %v842 = vunpack.c.l.b16 %v370
    %v843 = vunpack.c.l.b16 %v371
    %v844 = vunpack.c.h.b16 %v371
    %v845 = vunpack.c.l.b16 %v372
    %v846 = vunpack.c.l.b16 %v373
    %v847 = vunpack.c.h.b16 %v373
    %v848 = vunpack.c.l.b16 %v374
    %v849 = vunpack.c.l.b16 %v375
    %v850 = vunpack.c.h.b16 %v375
    %v851 = vunpack.c.l.b16 %v376
    %v852 = vunpack.c.l.b16 %v377
    %v853 = vunpack.c.h.b16 %v377
    %v854 = vunpack.c.l.b16 %v378
    %v855 = vunpack.c.l.b16 %v379
    %v856 = vunpack.c.h.b16 %v379
    %v857 = vunpack.c.l.b16 %v380
    %v858 = vunpack.c.l.b16 %v381
    %v859 = vunpack.c.h.b16 %v381
    %v860 = vunpack.c.l.b16 %v382
    %v861 = vunpack.c.l.b16 %v383
    %v862 = vunpack.c.h.b16 %v383
    %v863 = vunpack.c.l.b16 %v384
    %v864 = vunpack.c.l.b16 %v385
    %v865 = vunpack.c.h.b16 %v385
    %v866 = vunpack.c.l.b16 %v386
    %v867 = vpack.c.b16 %v582, %v579
    %v868 = vpack.c.b16 %v583, %v580
    %v869 = vpack.c.b16 %v584, %v581
    %v870 = vpack.c.b16 %v588, %v585
    %v871 = vpack.c.b16 %v589, %v586
    %v872 = vpack.c.b16 %v590, %v587
    %v873 = vpack.c.b16 %v594, %v591
    %v874 = vpack.c.b16 %v595, %v592
    %v875 = vpack.c.b16 %v596, %v593
    %v876 = vpack.c.b16 %v600, %v597
    %v877 = vpack.c.b16 %v601, %v598
    %v878 = vpack.c.b16 %v602, %v599
    %v879 = vpack.c.b16 %v606, %v603
    %v880 = vpack.c.b16 %v607, %v604
    %v881 = vpack.c.b16 %v608, %v605
    %v882 = vpack.c.b16 %v612, %v609
    %v883 = vpack.c.b16 %v613, %v610
    %v884 = vpack.c.b16 %v614, %v611
    %v885 = vpack.c.b16 %v618, %v615
    %v886 = vpack.c.b16 %v619, %v616
    %v887 = vpack.c.b16 %v620, %v617
    %v888 = vpack.c.b16 %v624, %v621
    %v889 = vpack.c.b16 %v625, %v622
    %v890 = vpack.c.b16 %v626, %v623
    %v891 = vpack.c.b16 %v630, %v627
    %v892 = vpack.c.b16 %v631, %v628
    %v893 = vpack.c.b16 %v632, %v629
    %v894 = vpack.c.b16 %v636, %v633
    %v895 = vpack.c.b16 %v637, %v634
    %v896 = vpack.c.b16 %v638, %v635
    %v897 = vpack.c.b16 %v642, %v639
    %v898 = vpack.c.b16 %v643, %v640
    %v899 = vpack.c.b16 %v644, %v641
    %v900 = vpack.c.b16 %v648, %v645
    %v901 = vpack.c.b16 %v649, %v646
    %v902 = vpack.c.b16 %v650, %v647
    %v903 = vpack.c.b16 %v654, %v651
    %v904 = vpack.c.b16 %v655, %v652
    %v905 = vpack.c.b16 %v656, %v653
    %v906 = vpack.c.b16 %v660, %v657
    %v907 = vpack.c.b16 %v661, %v658
    %v908 = vpack.c.b16 %v662, %v659
    %v909 = vpack.c.b16 %v666, %v663
    %v910 = vpack.c.b16 %v667, %v664
    %v911 = vpack.c.b16 %v668, %v665
    %v912 = vpack.c.b16 %v672, %v669
    %v913 = vpack.c.b16 %v673, %v670
    %v914 = vpack.c.b16 %v674, %v671
    %v915 = vpack.c.b16 %v678, %v675
    %v916 = vpack.c.b16 %v679, %v676
    %v917 = vpack.c.b16 %v680, %v677
    %v918 = vpack.c.b16 %v684, %v681
    %v919 = vpack.c.b16 %v685, %v682
    %v920 = vpack.c.b16 %v686, %v683
    %v921 = vpack.c.b16 %v690, %v687
    %v922 = vpack.c.b16 %v691, %v688
    %v923 = vpack.c.b16 %v692, %v689
    %v924 = vpack.c.b16 %v696, %v693
    %v925 = vpack.c.b16 %v697, %v694
    %v926 = vpack.c.b16 %v698, %v695
    %v927 = vpack.c.b16 %v702, %v699
    %v928 = vpack.c.b16 %v703, %v700
    %v929 = vpack.c.b16 %v704, %v701
    %v930 = vpack.c.b16 %v708, %v705
    %v931 = vpack.c.b16 %v709, %v706
    %v932 = vpack.c.b16 %v710, %v707
    %v933 = vpack.c.b16 %v714, %v711
    %v934 = vpack.c.b16 %v715, %v712
    %v935 = vpack.c.b16 %v716, %v713
    %v936 = vpack.c.b16 %v720, %v717
    %v937 = vpack.c.b16 %v721, %v718
    %v938 = vpack.c.b16 %v722, %v719
    %v939 = vpack.c.b16 %v726, %v723
    %v940 = vpack.c.b16 %v727, %v724
    %v941 = vpack.c.b16 %v728, %v725
    %v942 = vpack.c.b16 %v732, %v729
    %v943 = vpack.c.b16 %v733, %v730
    %v944 = vpack.c.b16 %v734, %v731
    %v945 = vpack.c.b16 %v738, %v735
    %v946 = vpack.c.b16 %v739, %v736
    %v947 = vpack.c.b16 %v740, %v737
    %v948 = vpack.c.b16 %v744, %v741
    %v949 = vpack.c.b16 %v745, %v742
    %v950 = vpack.c.b16 %v746, %v743
    %v951 = vpack.c.b16 %v750, %v747
    %v952 = vpack.c.b16 %v751, %v748
    %v953 = vpack.c.b16 %v752, %v749
    %v954 = vpack.c.b16 %v756, %v753
    %v955 = vpack.c.b16 %v757, %v754
    %v956 = vpack.c.b16 %v758, %v755
    %v957 = vpack.c.b16 %v762, %v759
    %v958 = vpack.c.b16 %v763, %v760
    %v959 = vpack.c.b16 %v764, %v761
    %v960 = vpack.c.b16 %v768, %v765
    %v961 = vpack.c.b16 %v769, %v766
    %v962 = vpack.c.b16 %v770, %v767
    %v963 = vpack.c.b16 %v774, %v771
    %v964 = vpack.c.b16 %v775, %v772
    %v965 = vpack.c.b16 %v776, %v773
    %v966 = vpack.c.b16 %v780, %v777
    %v967 = vpack.c.b16 %v781, %v778
    %v968 = vpack.c.b16 %v782, %v779
    %v969 = vpack.c.b16 %v786, %v783
    %v970 = vpack.c.b16 %v787, %v784
    %v971 = vpack.c.b16 %v788, %v785
    %v972 = vpack.c.b16 %v792, %v789
    %v973 = vpack.c.b16 %v793, %v790
    %v974 = vpack.c.b16 %v794, %v791
    %v975 = vpack.c.b16 %v798, %v795
    %v976 = vpack.c.b16 %v799, %v796
    %v977 = vpack.c.b16 %v800, %v797
    %v978 = vpack.c.b16 %v804, %v801
    %v979 = vpack.c.b16 %v805, %v802
    %v980 = vpack.c.b16 %v806, %v803
    %v981 = vpack.c.b16 %v810, %v807
    %v982 = vpack.c.b16 %v811, %v808
    %v983 = vpack.c.b16 %v812, %v809
    %v984 = vpack.c.b16 %v816, %v813
    %v985 = vpack.c.b16 %v817, %v814
    %v986 = vpack.c.b16 %v818, %v815
    %v987 = vpack.c.b16 %v822, %v819
    %v988 = vpack.c.b16 %v823, %v820
    %v989 = vpack.c.b16 %v824, %v821
    %v990 = vpack.c.b16 %v828, %v825
    %v991 = vpack.c.b16 %v829, %v826
    %v992 = vpack.c.b16 %v830, %v827
    %v993 = vpack.c.b16 %v834, %v831
    %v994 = vpack.c.b16 %v835, %v832
    %v995 = vpack.c.b16 %v836, %v833
    %v996 = vpack.c.b16 %v840, %v837
    %v997 = vpack.c.b16 %v841, %v838
    %v998 = vpack.c.b16 %v842, %v839
    %v999 = vpack.c.b16 %v846, %v843
    %v1000 = vpack.c.b16 %v847, %v844
    %v1001 = vpack.c.b16 %v848, %v845
    %v1002 = vpack.c.b16 %v852, %v849
    %v1003 = vpack.c.b16 %v853, %v850
    %v1004 = vpack.c.b16 %v854, %v851
    %v1005 = vpack.c.b16 %v858, %v855
    %v1006 = vpack.c.b16 %v859, %v856
    %v1007 = vpack.c.b16 %v860, %v857
    %v1008 = vpack.c.b16 %v864, %v861
    %v1009 = vpack.c.b16 %v865, %v862
    %v1010 = vpack.c.b16 %v866, %v863
    %1155 = vmatpush.bf16.msra.mxu0 %v888
    %1156 = vmatpush.bf16.msra.mxu0 %v885
    %1157 = vmatpush.bf16.msra.mxu0 %v882
    %1158 = vmatpush.bf16.msra.mxu0 %v879
    %1159 = vmatpush.bf16.msra.mxu0 %v876
    %1160 = vmatpush.bf16.msra.mxu0 %v873
    %1161 = vmatpush.bf16.msra.mxu0 %v870
    %1162 = vmatpush.bf16.msra.mxu0 %v867
    %1163 = vmatmul.bf16.gmra.mxu0 %v183
    %v1164 = vpop.f32.mrf.mxu0
    %v1165 = vadd.f32 0.0, %v1164
    %v1166 = vpop.f32.mrf.mxu0
    %v1167 = vadd.f32 0.0, %v1166
    %1168 = vmatmul.bf16.gmra.mxu0 %v189
    %v1169 = vpop.f32.mrf.mxu0
    %v1170 = vadd.f32 0.0, %v1169
    %v1171 = vpop.f32.mrf.mxu0
    %v1172 = vadd.f32 0.0, %v1171
    %1173 = vdwg.mxu0
    %1174 = vmatpush.bf16.msra.mxu0 %v912
    %1175 = vmatpush.bf16.msra.mxu0 %v909
    %1176 = vmatpush.bf16.msra.mxu0 %v906
    %1177 = vmatpush.bf16.msra.mxu0 %v903
    %1178 = vmatpush.bf16.msra.mxu0 %v900
    %1179 = vmatpush.bf16.msra.mxu0 %v897
    %1180 = vmatpush.bf16.msra.mxu0 %v894
    %1181 = vmatpush.bf16.msra.mxu0 %v891
    %1182 = vmatmul.bf16.gmra.mxu0 %v184
    %v1183 = vpop.f32.mrf.mxu0
    %v1184 = vadd.f32 %v1165, %v1183
    %v1185 = vpop.f32.mrf.mxu0
    %v1186 = vadd.f32 %v1167, %v1185
    %1187 = vmatmul.bf16.gmra.mxu0 %v190
    %v1188 = vpop.f32.mrf.mxu0
    %v1189 = vadd.f32 %v1170, %v1188
    %v1190 = vpop.f32.mrf.mxu0
    %v1191 = vadd.f32 %v1172, %v1190
    %1192 = vdwg.mxu0
    %1193 = vmatpush.bf16.msra.mxu0 %v936
    %1194 = vmatpush.bf16.msra.mxu0 %v933
    %1195 = vmatpush.bf16.msra.mxu0 %v930
    %1196 = vmatpush.bf16.msra.mxu0 %v927
    %1197 = vmatpush.bf16.msra.mxu0 %v924
    %1198 = vmatpush.bf16.msra.mxu0 %v921
    %1199 = vmatpush.bf16.msra.mxu0 %v918
    %1200 = vmatpush.bf16.msra.mxu0 %v915
    %1201 = vmatmul.bf16.gmra.mxu0 %v185
    %v1202 = vpop.f32.mrf.mxu0
    %v1203 = vadd.f32 %v1184, %v1202
    %v1204 = vpop.f32.mrf.mxu0
    %v1205 = vadd.f32 %v1186, %v1204
    %1206 = vmatmul.bf16.gmra.mxu0 %v191
    %v1207 = vpop.f32.mrf.mxu0
    %v1208 = vadd.f32 %v1189, %v1207
    %v1209 = vpop.f32.mrf.mxu0
    %v1210 = vadd.f32 %v1191, %v1209
    %1211 = vdwg.mxu0
    %1212 = vmatpush.bf16.msra.mxu0 %v960
    %1213 = vmatpush.bf16.msra.mxu0 %v957
    %1214 = vmatpush.bf16.msra.mxu0 %v954
    %1215 = vmatpush.bf16.msra.mxu0 %v951
    %1216 = vmatpush.bf16.msra.mxu0 %v948
    %1217 = vmatpush.bf16.msra.mxu0 %v945
    %1218 = vmatpush.bf16.msra.mxu0 %v942
    %1219 = vmatpush.bf16.msra.mxu0 %v939
    %1220 = vmatmul.bf16.gmra.mxu0 %v186
    %v1221 = vpop.f32.mrf.mxu0
    %v1222 = vadd.f32 %v1203, %v1221
    %v1223 = vpop.f32.mrf.mxu0
    %v1224 = vadd.f32 %v1205, %v1223
    %1225 = vmatmul.bf16.gmra.mxu0 %v192
    %v1226 = vpop.f32.mrf.mxu0
    %v1227 = vadd.f32 %v1208, %v1226
    %v1228 = vpop.f32.mrf.mxu0
    %v1229 = vadd.f32 %v1210, %v1228
    %1230 = vdwg.mxu0
    %1231 = vmatpush.bf16.msra.mxu0 %v984
    %1232 = vmatpush.bf16.msra.mxu0 %v981
    %1233 = vmatpush.bf16.msra.mxu0 %v978
    %1234 = vmatpush.bf16.msra.mxu0 %v975
    %1235 = vmatpush.bf16.msra.mxu0 %v972
    %1236 = vmatpush.bf16.msra.mxu0 %v969
    %1237 = vmatpush.bf16.msra.mxu0 %v966
    %1238 = vmatpush.bf16.msra.mxu0 %v963
    %1239 = vmatmul.bf16.gmra.mxu0 %v187
    %v1240 = vpop.f32.mrf.mxu0
    %v1241 = vadd.f32 %v1222, %v1240
    %v1242 = vpop.f32.mrf.mxu0
    %v1243 = vadd.f32 %v1224, %v1242
    %1244 = vmatmul.bf16.gmra.mxu0 %v193
    %v1245 = vpop.f32.mrf.mxu0
    %v1246 = vadd.f32 %v1227, %v1245
    %v1247 = vpop.f32.mrf.mxu0
    %v1248 = vadd.f32 %v1229, %v1247
    %1249 = vdwg.mxu0
    %1250 = vmatpush.bf16.msra.mxu0 %v1008
    %1251 = vmatpush.bf16.msra.mxu0 %v1005
    %1252 = vmatpush.bf16.msra.mxu0 %v1002
    %1253 = vmatpush.bf16.msra.mxu0 %v999
    %1254 = vmatpush.bf16.msra.mxu0 %v996
    %1255 = vmatpush.bf16.msra.mxu0 %v993
    %1256 = vmatpush.bf16.msra.mxu0 %v990
    %1257 = vmatpush.bf16.msra.mxu0 %v987
    %1258 = vmatmul.bf16.gmra.mxu0 %v188
    %v1259 = vpop.f32.mrf.mxu0
    %v1260 = vadd.f32 %v1241, %v1259
    %v1261 = vpop.f32.mrf.mxu0
    %v1262 = vadd.f32 %v1243, %v1261
    %1263 = vmatmul.bf16.gmra.mxu0 %v194
    %v1264 = vpop.f32.mrf.mxu0
    %v1265 = vadd.f32 %v1246, %v1264
    %v1266 = vpop.f32.mrf.mxu0
    %v1267 = vadd.f32 %v1248, %v1266
    %1268 = vdwg.mxu0
    %1269 = vmatpush.bf16.msra.mxu0 %v889
    %1270 = vmatpush.bf16.msra.mxu0 %v886
    %1271 = vmatpush.bf16.msra.mxu0 %v883
    %1272 = vmatpush.bf16.msra.mxu0 %v880
    %1273 = vmatpush.bf16.msra.mxu0 %v877
    %1274 = vmatpush.bf16.msra.mxu0 %v874
    %1275 = vmatpush.bf16.msra.mxu0 %v871
    %1276 = vmatpush.bf16.msra.mxu0 %v868
    %1277 = vmatmul.bf16.gmra.mxu0 %v183
    %v1278 = vpop.f32.mrf.mxu0
    %v1279 = vadd.f32 0.0, %v1278
    %v1280 = vpop.f32.mrf.mxu0
    %v1281 = vadd.f32 0.0, %v1280
    %1282 = vmatmul.bf16.gmra.mxu0 %v189
    %v1283 = vpop.f32.mrf.mxu0
    %v1284 = vadd.f32 0.0, %v1283
    %v1285 = vpop.f32.mrf.mxu0
    %v1286 = vadd.f32 0.0, %v1285
    %1287 = vdwg.mxu0
    %1288 = vmatpush.bf16.msra.mxu0 %v913
    %1289 = vmatpush.bf16.msra.mxu0 %v910
    %1290 = vmatpush.bf16.msra.mxu0 %v907
    %1291 = vmatpush.bf16.msra.mxu0 %v904
    %1292 = vmatpush.bf16.msra.mxu0 %v901
    %1293 = vmatpush.bf16.msra.mxu0 %v898
    %1294 = vmatpush.bf16.msra.mxu0 %v895
    %1295 = vmatpush.bf16.msra.mxu0 %v892
    %1296 = vmatmul.bf16.gmra.mxu0 %v184
    %v1297 = vpop.f32.mrf.mxu0
    %v1298 = vadd.f32 %v1279, %v1297
    %v1299 = vpop.f32.mrf.mxu0
    %v1300 = vadd.f32 %v1281, %v1299
    %1301 = vmatmul.bf16.gmra.mxu0 %v190
    %v1302 = vpop.f32.mrf.mxu0
    %v1303 = vadd.f32 %v1284, %v1302
    %v1304 = vpop.f32.mrf.mxu0
    %v1305 = vadd.f32 %v1286, %v1304
    %1306 = vdwg.mxu0
    %1307 = vmatpush.bf16.msra.mxu0 %v937
    %1308 = vmatpush.bf16.msra.mxu0 %v934
    %1309 = vmatpush.bf16.msra.mxu0 %v931
    %1310 = vmatpush.bf16.msra.mxu0 %v928
    %1311 = vmatpush.bf16.msra.mxu0 %v925
    %1312 = vmatpush.bf16.msra.mxu0 %v922
    %1313 = vmatpush.bf16.msra.mxu0 %v919
    %1314 = vmatpush.bf16.msra.mxu0 %v916
    %1315 = vmatmul.bf16.gmra.mxu0 %v185
    %v1316 = vpop.f32.mrf.mxu0
    %v1317 = vadd.f32 %v1298, %v1316
    %v1318 = vpop.f32.mrf.mxu0
    %v1319 = vadd.f32 %v1300, %v1318
    %1320 = vmatmul.bf16.gmra.mxu0 %v191
    %v1321 = vpop.f32.mrf.mxu0
    %v1322 = vadd.f32 %v1303, %v1321
    %v1323 = vpop.f32.mrf.mxu0
    %v1324 = vadd.f32 %v1305, %v1323
    %1325 = vdwg.mxu0
    %1326 = vmatpush.bf16.msra.mxu0 %v961
    %1327 = vmatpush.bf16.msra.mxu0 %v958
    %1328 = vmatpush.bf16.msra.mxu0 %v955
    %1329 = vmatpush.bf16.msra.mxu0 %v952
    %1330 = vmatpush.bf16.msra.mxu0 %v949
    %1331 = vmatpush.bf16.msra.mxu0 %v946
    %1332 = vmatpush.bf16.msra.mxu0 %v943
    %1333 = vmatpush.bf16.msra.mxu0 %v940
    %1334 = vmatmul.bf16.gmra.mxu0 %v186
    %v1335 = vpop.f32.mrf.mxu0
    %v1336 = vadd.f32 %v1317, %v1335
    %v1337 = vpop.f32.mrf.mxu0
    %v1338 = vadd.f32 %v1319, %v1337
    %1339 = vmatmul.bf16.gmra.mxu0 %v192
    %v1340 = vpop.f32.mrf.mxu0
    %v1341 = vadd.f32 %v1322, %v1340
    %v1342 = vpop.f32.mrf.mxu0
    %v1343 = vadd.f32 %v1324, %v1342
    %1344 = vdwg.mxu0
    %1345 = vmatpush.bf16.msra.mxu0 %v985
    %1346 = vmatpush.bf16.msra.mxu0 %v982
    %1347 = vmatpush.bf16.msra.mxu0 %v979
    %1348 = vmatpush.bf16.msra.mxu0 %v976
    %1349 = vmatpush.bf16.msra.mxu0 %v973
    %1350 = vmatpush.bf16.msra.mxu0 %v970
    %1351 = vmatpush.bf16.msra.mxu0 %v967
    %1352 = vmatpush.bf16.msra.mxu0 %v964
    %1353 = vmatmul.bf16.gmra.mxu0 %v187
    %v1354 = vpop.f32.mrf.mxu0
    %v1355 = vadd.f32 %v1336, %v1354
    %v1356 = vpop.f32.mrf.mxu0
    %v1357 = vadd.f32 %v1338, %v1356
    %1358 = vmatmul.bf16.gmra.mxu0 %v193
    %v1359 = vpop.f32.mrf.mxu0
    %v1360 = vadd.f32 %v1341, %v1359
    %v1361 = vpop.f32.mrf.mxu0
    %v1362 = vadd.f32 %v1343, %v1361
    %1363 = vdwg.mxu0
    %1364 = vmatpush.bf16.msra.mxu0 %v1009
    %1365 = vmatpush.bf16.msra.mxu0 %v1006
    %1366 = vmatpush.bf16.msra.mxu0 %v1003
    %1367 = vmatpush.bf16.msra.mxu0 %v1000
    %1368 = vmatpush.bf16.msra.mxu0 %v997
    %1369 = vmatpush.bf16.msra.mxu0 %v994
    %1370 = vmatpush.bf16.msra.mxu0 %v991
    %1371 = vmatpush.bf16.msra.mxu0 %v988
    %1372 = vmatmul.bf16.gmra.mxu0 %v188
    %v1373 = vpop.f32.mrf.mxu0
    %v1374 = vadd.f32 %v1355, %v1373
    %v1375 = vpop.f32.mrf.mxu0
    %v1376 = vadd.f32 %v1357, %v1375
    %1377 = vmatmul.bf16.gmra.mxu0 %v194
    %v1378 = vpop.f32.mrf.mxu0
    %v1379 = vadd.f32 %v1360, %v1378
    %v1380 = vpop.f32.mrf.mxu0
    %v1381 = vadd.f32 %v1362, %v1380
    %1382 = vdwg.mxu0
    %1383 = vmatpush.bf16.msra.mxu0 %v890
    %1384 = vmatpush.bf16.msra.mxu0 %v887
    %1385 = vmatpush.bf16.msra.mxu0 %v884
    %1386 = vmatpush.bf16.msra.mxu0 %v881
    %1387 = vmatpush.bf16.msra.mxu0 %v878
    %1388 = vmatpush.bf16.msra.mxu0 %v875
    %1389 = vmatpush.bf16.msra.mxu0 %v872
    %1390 = vmatpush.bf16.msra.mxu0 %v869
    %1391 = vmatmul.bf16.gmra.mxu0 %v183
    %v1392 = vpop.f32.mrf.mxu0
    %v1393 = vadd.f32 0.0, %v1392
    %v1394 = vpop.f32.mrf.mxu0
    %v1395 = vadd.f32 0.0, %v1394
    %1396 = vmatmul.bf16.gmra.mxu0 %v189
    %v1397 = vpop.f32.mrf.mxu0
    %v1398 = vadd.f32 0.0, %v1397
    %v1399 = vpop.f32.mrf.mxu0
    %v1400 = vadd.f32 0.0, %v1399
    %1401 = vdwg.mxu0
    %1402 = vmatpush.bf16.msra.mxu0 %v914
    %1403 = vmatpush.bf16.msra.mxu0 %v911
    %1404 = vmatpush.bf16.msra.mxu0 %v908
    %1405 = vmatpush.bf16.msra.mxu0 %v905
    %1406 = vmatpush.bf16.msra.mxu0 %v902
    %1407 = vmatpush.bf16.msra.mxu0 %v899
    %1408 = vmatpush.bf16.msra.mxu0 %v896
    %1409 = vmatpush.bf16.msra.mxu0 %v893
    %1410 = vmatmul.bf16.gmra.mxu0 %v184
    %v1411 = vpop.f32.mrf.mxu0
    %v1412 = vadd.f32 %v1393, %v1411
    %v1413 = vpop.f32.mrf.mxu0
    %v1414 = vadd.f32 %v1395, %v1413
    %1415 = vmatmul.bf16.gmra.mxu0 %v190
    %v1416 = vpop.f32.mrf.mxu0
    %v1417 = vadd.f32 %v1398, %v1416
    %v1418 = vpop.f32.mrf.mxu0
    %v1419 = vadd.f32 %v1400, %v1418
    %1420 = vdwg.mxu0
    %1421 = vmatpush.bf16.msra.mxu0 %v938
    %1422 = vmatpush.bf16.msra.mxu0 %v935
    %1423 = vmatpush.bf16.msra.mxu0 %v932
    %1424 = vmatpush.bf16.msra.mxu0 %v929
    %1425 = vmatpush.bf16.msra.mxu0 %v926
    %1426 = vmatpush.bf16.msra.mxu0 %v923
    %1427 = vmatpush.bf16.msra.mxu0 %v920
    %1428 = vmatpush.bf16.msra.mxu0 %v917
    %1429 = vmatmul.bf16.gmra.mxu0 %v185
    %v1430 = vpop.f32.mrf.mxu0
    %v1431 = vadd.f32 %v1412, %v1430
    %v1432 = vpop.f32.mrf.mxu0
    %v1433 = vadd.f32 %v1414, %v1432
    %1434 = vmatmul.bf16.gmra.mxu0 %v191
    %v1435 = vpop.f32.mrf.mxu0
    %v1436 = vadd.f32 %v1417, %v1435
    %v1437 = vpop.f32.mrf.mxu0
    %v1438 = vadd.f32 %v1419, %v1437
    %1439 = vdwg.mxu0
    %1440 = vmatpush.bf16.msra.mxu0 %v962
    %1441 = vmatpush.bf16.msra.mxu0 %v959
    %1442 = vmatpush.bf16.msra.mxu0 %v956
    %1443 = vmatpush.bf16.msra.mxu0 %v953
    %1444 = vmatpush.bf16.msra.mxu0 %v950
    %1445 = vmatpush.bf16.msra.mxu0 %v947
    %1446 = vmatpush.bf16.msra.mxu0 %v944
    %1447 = vmatpush.bf16.msra.mxu0 %v941
    %1448 = vmatmul.bf16.gmra.mxu0 %v186
    %v1449 = vpop.f32.mrf.mxu0
    %v1450 = vadd.f32 %v1431, %v1449
    %v1451 = vpop.f32.mrf.mxu0
    %v1452 = vadd.f32 %v1433, %v1451
    %1453 = vmatmul.bf16.gmra.mxu0 %v192
    %v1454 = vpop.f32.mrf.mxu0
    %v1455 = vadd.f32 %v1436, %v1454
    %v1456 = vpop.f32.mrf.mxu0
    %v1457 = vadd.f32 %v1438, %v1456
    %1458 = vdwg.mxu0
    %1459 = vmatpush.bf16.msra.mxu0 %v986
    %1460 = vmatpush.bf16.msra.mxu0 %v983
    %1461 = vmatpush.bf16.msra.mxu0 %v980
    %1462 = vmatpush.bf16.msra.mxu0 %v977
    %1463 = vmatpush.bf16.msra.mxu0 %v974
    %1464 = vmatpush.bf16.msra.mxu0 %v971
    %1465 = vmatpush.bf16.msra.mxu0 %v968
    %1466 = vmatpush.bf16.msra.mxu0 %v965
    %1467 = vmatmul.bf16.gmra.mxu0 %v187
    %v1468 = vpop.f32.mrf.mxu0
    %v1469 = vadd.f32 %v1450, %v1468
    %v1470 = vpop.f32.mrf.mxu0
    %v1471 = vadd.f32 %v1452, %v1470
    %1472 = vmatmul.bf16.gmra.mxu0 %v193
    %v1473 = vpop.f32.mrf.mxu0
    %v1474 = vadd.f32 %v1455, %v1473
    %v1475 = vpop.f32.mrf.mxu0
    %v1476 = vadd.f32 %v1457, %v1475
    %1477 = vdwg.mxu0
    %1478 = vmatpush.bf16.msra.mxu0 %v1010
    %1479 = vmatpush.bf16.msra.mxu0 %v1007
    %1480 = vmatpush.bf16.msra.mxu0 %v1004
    %1481 = vmatpush.bf16.msra.mxu0 %v1001
    %1482 = vmatpush.bf16.msra.mxu0 %v998
    %1483 = vmatpush.bf16.msra.mxu0 %v995
    %1484 = vmatpush.bf16.msra.mxu0 %v992
    %1485 = vmatpush.bf16.msra.mxu0 %v989
    %1486 = vmatmul.bf16.gmra.mxu0 %v188
    %v1487 = vpop.f32.mrf.mxu0
    %v1488 = vadd.f32 %v1469, %v1487
    %v1489 = vpop.f32.mrf.mxu0
    %v1490 = vadd.f32 %v1471, %v1489
    %1491 = vmatmul.bf16.gmra.mxu0 %v194
    %v1492 = vpop.f32.mrf.mxu0
    %v1493 = vadd.f32 %v1474, %v1492
    %v1494 = vpop.f32.mrf.mxu0
    %v1495 = vadd.f32 %v1476, %v1494
    %1496 = vdwg.mxu0
    %1497 = vst [vmem:[%s4] sm:$0xff] %v1260
    %1498 = vst [vmem:[%s4 + $0x8] sm:$0xff] %v1374
    %1499 = vst [vmem:[%s4 + $0x10] sm:$0xff] %v1488
    %1500 = vst [vmem:[%s4 + $0x18] sm:$0xff] %v1262
    %1501 = vst [vmem:[%s4 + $0x20] sm:$0xff] %v1376
    %1502 = vst [vmem:[%s4 + $0x28] sm:$0xff] %v1490
    %1503 = vst [vmem:[%s4 + $0x30] sm:$0xff] %v1265
    %1504 = vst [vmem:[%s4 + $0x38] sm:$0xff] %v1379
    %1505 = vst [vmem:[%s4 + $0x40] sm:$0xff] %v1493
    %1506 = vst [vmem:[%s4 + $0x48] sm:$0xff] %v1267
    %1507 = vst [vmem:[%s4 + $0x50] sm:$0xff] %v1381
    %1508 = vst [vmem:[%s4 + $0x58] sm:$0xff] %v1495
    // Predicated region
    $region41: #{swin_block4_forward.9} parent=1 // pred_check
      _
    $region42: #{swin_block4_forward.9} parent=1 // pred_check_branch
      %1510 = sbr.rel (0) target = $region44
    $region43: #{swin_block4_forward.9} parent=1 // pred_region
      _
    $region44: #{swin_block4_forward.9} parent=1 // pred_fallthru
      _
    // Predicated region
    $region45: #{swin_block4_forward.9} parent=1 // pred_check
      _
    $region46: #{swin_block4_forward.9} parent=1 // pred_check_branch
      %1512 = sbr.rel (0) target = $region48
    $region47: #{swin_block4_forward.9} parent=1 // pred_region
      _
    $region48: #{swin_block4_forward.9} parent=1 // pred_fallthru
      _

// kernel: swin_block4_forward.8
$region0: #{swin_block4_forward.8}
  #allocation0 [shape = 'u32[]', space=smem, size = 0x4, offset = 0x4, fixed_abs, tag = 'smem constant byte address 0x4 - core index']
  #allocation1 [shape = 'u32[72,128]{1,0:T(1,128)}', space=vmem, size = 0x9000, scoped, tag = 'internal scratch']
  %s0 = inlined_call_operand.vmem [shape: f32[32,1536], index: 0, kind: input, shape index: {}]
  %s1 = inlined_call_operand.vmem [shape: bf16[768,384], index: 1, kind: input, shape index: {}]
  %s2 = inlined_call_operand.vmem [shape: f32[1,768], index: 2, kind: input, shape index: {}]
  %s3 = inlined_call_operand.vmem [shape: f32[1,768], index: 3, kind: input, shape index: {}]
  %s4 = inlined_call_operand.vmem [shape: f32[32,384], index: 4, kind: output, shape index: {}]
  %s5 = sld [smem:[#allocation0]]
  $region49: #{swin_block4_forward.8} parent=0
    _
  %s7 = ssub.s32 1, %s5
  %s8 = scalar_select 0, %s7, %s5
  $region1: #{swin_block4_forward.8} parent=0
    #allocation2 [shape = 'u8[98304]{0}', space=vmem, size = 0x18000, scoped, tag = 'input window, operand 0, single buffered']
    // Predicated region
    $region2: #{swin_block4_forward.8} parent=1 // pred_check
      _
    $region3: #{swin_block4_forward.8} parent=1 // pred_check_branch
      %10 = sbr.rel (0) target = $region5
    $region4: #{swin_block4_forward.8} parent=1 // pred_region
      // Predicated region
      $region6: #{swin_block4_forward.8} parent=4 // pred_check
        _
      $region7: #{swin_block4_forward.8} parent=4 // pred_check_branch
        %12 = sbr.rel (0) target = $region9
      $region8: #{swin_block4_forward.8} parent=4 // pred_region
        // Predicated region
        $region10: #{swin_block4_forward.8} parent=8 // pred_check
          _
        $region11: #{swin_block4_forward.8} parent=8 // pred_check_branch
          %14 = sbr.rel (0) target = $region13
        $region12: #{swin_block4_forward.8} parent=8 // pred_region
          loop: start=0, step=1, limit=1
          $region14: #{swin_block4_forward.8} parent=12 // loop_pre_header
            _
          $region15: #{swin_block4_forward.8} parent=12 // loop_header
            %s16 = sphi 0, %s20
            %p17 = scmp.ge.s32.totalorder %s16, 1
            %s21 = sphi %s0, %s0
            %s22 = sphi [#allocation2], [#allocation2]
          $region16: #{swin_block4_forward.8} parent=12 // loop_header_branch
            %19 = sbr.rel (%p17) target = $region20
          $region17: #{swin_block4_forward.8} parent=12 // loop_body
            %v23 = vld [vmem:[%s21] sm:$0xff]
            %24 = vst [vmem:[%s22] sm:$0xff] %v23
            %v25 = vld [vmem:[%s21 + $0x8] sm:$0xff]
            %26 = vst [vmem:[%s22 + $0x8] sm:$0xff] %v25
            %v27 = vld [vmem:[%s21 + $0x10] sm:$0xff]
            %28 = vst [vmem:[%s22 + $0x10] sm:$0xff] %v27
            %v29 = vld [vmem:[%s21 + $0x18] sm:$0xff]
            %30 = vst [vmem:[%s22 + $0x18] sm:$0xff] %v29
            %v31 = vld [vmem:[%s21 + $0x20] sm:$0xff]
            %32 = vst [vmem:[%s22 + $0x20] sm:$0xff] %v31
            %v33 = vld [vmem:[%s21 + $0x28] sm:$0xff]
            %34 = vst [vmem:[%s22 + $0x28] sm:$0xff] %v33
            %v35 = vld [vmem:[%s21 + $0x60] sm:$0xff]
            %36 = vst [vmem:[%s22 + $0x30] sm:$0xff] %v35
            %v37 = vld [vmem:[%s21 + $0x68] sm:$0xff]
            %38 = vst [vmem:[%s22 + $0x38] sm:$0xff] %v37
            %v39 = vld [vmem:[%s21 + $0x70] sm:$0xff]
            %40 = vst [vmem:[%s22 + $0x40] sm:$0xff] %v39
            %v41 = vld [vmem:[%s21 + $0x78] sm:$0xff]
            %42 = vst [vmem:[%s22 + $0x48] sm:$0xff] %v41
            %v43 = vld [vmem:[%s21 + $0x80] sm:$0xff]
            %44 = vst [vmem:[%s22 + $0x50] sm:$0xff] %v43
            %v45 = vld [vmem:[%s21 + $0x88] sm:$0xff]
            %46 = vst [vmem:[%s22 + $0x58] sm:$0xff] %v45
            %v47 = vld [vmem:[%s21 + $0xc0] sm:$0xff]
            %48 = vst [vmem:[%s22 + $0x60] sm:$0xff] %v47
            %v49 = vld [vmem:[%s21 + $0xc8] sm:$0xff]
            %50 = vst [vmem:[%s22 + $0x68] sm:$0xff] %v49
            %v51 = vld [vmem:[%s21 + $0xd0] sm:$0xff]
            %52 = vst [vmem:[%s22 + $0x70] sm:$0xff] %v51
            %v53 = vld [vmem:[%s21 + $0xd8] sm:$0xff]
            %54 = vst [vmem:[%s22 + $0x78] sm:$0xff] %v53
            %v55 = vld [vmem:[%s21 + $0xe0] sm:$0xff]
            %56 = vst [vmem:[%s22 + $0x80] sm:$0xff] %v55
            %v57 = vld [vmem:[%s21 + $0xe8] sm:$0xff]
            %58 = vst [vmem:[%s22 + $0x88] sm:$0xff] %v57
            %v59 = vld [vmem:[%s21 + $0x120] sm:$0xff]
            %60 = vst [vmem:[%s22 + $0x90] sm:$0xff] %v59
            %v61 = vld [vmem:[%s21 + $0x128] sm:$0xff]
            %62 = vst [vmem:[%s22 + $0x98] sm:$0xff] %v61
            %v63 = vld [vmem:[%s21 + $0x130] sm:$0xff]
            %64 = vst [vmem:[%s22 + $0xa0] sm:$0xff] %v63
            %v65 = vld [vmem:[%s21 + $0x138] sm:$0xff]
            %66 = vst [vmem:[%s22 + $0xa8] sm:$0xff] %v65
            %v67 = vld [vmem:[%s21 + $0x140] sm:$0xff]
            %68 = vst [vmem:[%s22 + $0xb0] sm:$0xff] %v67
            %v69 = vld [vmem:[%s21 + $0x148] sm:$0xff]
            %70 = vst [vmem:[%s22 + $0xb8] sm:$0xff] %v69
          $region18: #{swin_block4_forward.8} parent=12 // loop_footer
            %s20 = sadd.s32 1, %s16
          $region19: #{swin_block4_forward.8} parent=12 // loop_footer_branch
            %15 = sbr.rel target = $region15
          $region20: #{swin_block4_forward.8} parent=12 // loop_exit
            _
        $region13: #{swin_block4_forward.8} parent=8 // pred_fallthru
          _
        // Predicated region
        $region21: #{swin_block4_forward.8} parent=8 // pred_check
          _
        $region22: #{swin_block4_forward.8} parent=8 // pred_check_branch
          %72 = sbr.rel target = $region24
        $region23: #{swin_block4_forward.8} parent=8 // pred_region
          _
        $region24: #{swin_block4_forward.8} parent=8 // pred_fallthru
          _
      $region9: #{swin_block4_forward.8} parent=4 // pred_fallthru
        _
      %73 = vnop
    $region5: #{swin_block4_forward.8} parent=1 // pred_fallthru
      _
    // Predicated region
    $region25: #{swin_block4_forward.8} parent=1 // pred_check
      _
    $region26: #{swin_block4_forward.8} parent=1 // pred_check_branch
      %75 = sbr.rel (0) target = $region28
    $region27: #{swin_block4_forward.8} parent=1 // pred_region
      _
    $region28: #{swin_block4_forward.8} parent=1 // pred_fallthru
      _
    // Predicated region
    $region29: #{swin_block4_forward.8} parent=1 // pred_check
      _
    $region30: #{swin_block4_forward.8} parent=1 // pred_check_branch
      %77 = sbr.rel (0) target = $region32
    $region31: #{swin_block4_forward.8} parent=1 // pred_region
      _
    $region32: #{swin_block4_forward.8} parent=1 // pred_fallthru
      _
    // Predicated region
    $region33: #{swin_block4_forward.8} parent=1 // pred_check
      _
    $region34: #{swin_block4_forward.8} parent=1 // pred_check_branch
      %79 = sbr.rel (0) target = $region36
    $region35: #{swin_block4_forward.8} parent=1 // pred_region
      _
    $region36: #{swin_block4_forward.8} parent=1 // pred_fallthru
      _
    // Predicated region
    $region37: #{swin_block4_forward.8} parent=1 // pred_check
      _
    $region38: #{swin_block4_forward.8} parent=1 // pred_check_branch
      %81 = sbr.rel (0) target = $region40
    $region39: #{swin_block4_forward.8} parent=1 // pred_region
      _
    $region40: #{swin_block4_forward.8} parent=1 // pred_fallthru
      _
    %v82 = vld [vmem:[#allocation2] sm:$0xff]
    %v83 = vld [vmem:[#allocation2 + $0x8] sm:$0xff]
    %v84 = vld [vmem:[#allocation2 + $0x10] sm:$0xff]
    %v85 = vld [vmem:[#allocation2 + $0x18] sm:$0xff]
    %v86 = vld [vmem:[#allocation2 + $0x20] sm:$0xff]
    %v87 = vld [vmem:[#allocation2 + $0x28] sm:$0xff]
    %v88 = vld [vmem:[#allocation2 + $0x30] sm:$0xff]
    %v89 = vld [vmem:[#allocation2 + $0x38] sm:$0xff]
    %v90 = vld [vmem:[#allocation2 + $0x40] sm:$0xff]
    %v91 = vld [vmem:[#allocation2 + $0x48] sm:$0xff]
    %v92 = vld [vmem:[#allocation2 + $0x50] sm:$0xff]
    %v93 = vld [vmem:[#allocation2 + $0x58] sm:$0xff]
    %v94 = vld [vmem:[#allocation2 + $0x60] sm:$0xff]
    %v95 = vld [vmem:[#allocation2 + $0x68] sm:$0xff]
    %v96 = vld [vmem:[#allocation2 + $0x70] sm:$0xff]
    %v97 = vld [vmem:[#allocation2 + $0x78] sm:$0xff]
    %v98 = vld [vmem:[#allocation2 + $0x80] sm:$0xff]
    %v99 = vld [vmem:[#allocation2 + $0x88] sm:$0xff]
    %v100 = vld [vmem:[#allocation2 + $0x90] sm:$0xff]
    %v101 = vld [vmem:[#allocation2 + $0x98] sm:$0xff]
    %v102 = vld [vmem:[#allocation2 + $0xa0] sm:$0xff]
    %v103 = vld [vmem:[#allocation2 + $0xa8] sm:$0xff]
    %v104 = vld [vmem:[#allocation2 + $0xb0] sm:$0xff]
    %v105 = vld [vmem:[#allocation2 + $0xb8] sm:$0xff]
    %v106 = vld [vmem:[%s2] sm:$0x3f]
    %v108 = vperm.slane %v106, 0
    %v109 = vperm.slane %v106, 1
    %v110 = vperm.slane %v106, 2
    %v111 = vperm.slane %v106, 3
    %v112 = vperm.slane %v106, 4
    %v113 = vperm.slane %v106, 5
    %v120 = vmul.f32 %v82, %v108
    %v121 = vmul.f32 %v83, %v109
    %v122 = vmul.f32 %v84, %v110
    %v123 = vmul.f32 %v85, %v111
    %v124 = vmul.f32 %v86, %v112
    %v125 = vmul.f32 %v87, %v113
    %v126 = vmul.f32 %v88, %v108
    %v127 = vmul.f32 %v89, %v109
    %v128 = vmul.f32 %v90, %v110
    %v129 = vmul.f32 %v91, %v111
    %v130 = vmul.f32 %v92, %v112
    %v131 = vmul.f32 %v93, %v113
    %v132 = vmul.f32 %v94, %v108
    %v133 = vmul.f32 %v95, %v109
    %v134 = vmul.f32 %v96, %v110
    %v135 = vmul.f32 %v97, %v111
    %v136 = vmul.f32 %v98, %v112
    %v137 = vmul.f32 %v99, %v113
    %v138 = vmul.f32 %v100, %v108
    %v139 = vmul.f32 %v101, %v109
    %v140 = vmul.f32 %v102, %v110
    %v141 = vmul.f32 %v103, %v111
    %v142 = vmul.f32 %v104, %v112
    %v143 = vmul.f32 %v105, %v113
    %v144 = vld [vmem:[%s3] sm:$0x3f]
    %v146 = vperm.slane %v144, 0
    %v147 = vperm.slane %v144, 1
    %v148 = vperm.slane %v144, 2
    %v149 = vperm.slane %v144, 3
    %v150 = vperm.slane %v144, 4
    %v151 = vperm.slane %v144, 5
    %v158 = vadd.f32 %v120, %v146
    %v159 = vadd.f32 %v121, %v147
    %v160 = vadd.f32 %v122, %v148
    %v161 = vadd.f32 %v123, %v149
    %v162 = vadd.f32 %v124, %v150
    %v163 = vadd.f32 %v125, %v151
    %v164 = vadd.f32 %v126, %v146
    %v165 = vadd.f32 %v127, %v147
    %v166 = vadd.f32 %v128, %v148
    %v167 = vadd.f32 %v129, %v149
    %v168 = vadd.f32 %v130, %v150
    %v169 = vadd.f32 %v131, %v151
    %v170 = vadd.f32 %v132, %v146
    %v171 = vadd.f32 %v133, %v147
    %v172 = vadd.f32 %v134, %v148
    %v173 = vadd.f32 %v135, %v149
    %v174 = vadd.f32 %v136, %v150
    %v175 = vadd.f32 %v137, %v151
    %v176 = vadd.f32 %v138, %v146
    %v177 = vadd.f32 %v139, %v147
    %v178 = vadd.f32 %v140, %v148
    %v179 = vadd.f32 %v141, %v149
    %v180 = vadd.f32 %v142, %v150
    %v181 = vadd.f32 %v143, %v151
    %v182 = vpack.c.bf16 %v164, %v158
    %v183 = vpack.c.bf16 %v165, %v159
    %v184 = vpack.c.bf16 %v166, %v160
    %v185 = vpack.c.bf16 %v167, %v161
    %v186 = vpack.c.bf16 %v168, %v162
    %v187 = vpack.c.bf16 %v169, %v163
    %v188 = vpack.c.bf16 %v176, %v170
    %v189 = vpack.c.bf16 %v177, %v171
    %v190 = vpack.c.bf16 %v178, %v172
    %v191 = vpack.c.bf16 %v179, %v173
    %v192 = vpack.c.bf16 %v180, %v174
    %v193 = vpack.c.bf16 %v181, %v175
    %v194 = vld [vmem:[%s1] sm:$0xff]
    %v195 = vld [vmem:[%s1 + $0x8] sm:$0xf]
    %v196 = vld [vmem:[%s1 + $0xc] sm:$0xff]
    %v197 = vld [vmem:[%s1 + $0x14] sm:$0xf]
    %v198 = vld [vmem:[%s1 + $0x18] sm:$0xff]
    %v199 = vld [vmem:[%s1 + $0x20] sm:$0xf]
    %v200 = vld [vmem:[%s1 + $0x24] sm:$0xff]
    %v201 = vld [vmem:[%s1 + $0x2c] sm:$0xf]
    %v202 = vld [vmem:[%s1 + $0x30] sm:$0xff]
    %v203 = vld [vmem:[%s1 + $0x38] sm:$0xf]
    %v204 = vld [vmem:[%s1 + $0x3c] sm:$0xff]
    %v205 = vld [vmem:[%s1 + $0x44] sm:$0xf]
    %v206 = vld [vmem:[%s1 + $0x48] sm:$0xff]
    %v207 = vld [vmem:[%s1 + $0x50] sm:$0xf]
    %v208 = vld [vmem:[%s1 + $0x54] sm:$0xff]
    %v209 = vld [vmem:[%s1 + $0x5c] sm:$0xf]
    %v210 = vld [vmem:[%s1 + $0x60] sm:$0xff]
    %v211 = vld [vmem:[%s1 + $0x68] sm:$0xf]
    %v212 = vld [vmem:[%s1 + $0x6c] sm:$0xff]
    %v213 = vld [vmem:[%s1 + $0x74] sm:$0xf]
    %v214 = vld [vmem:[%s1 + $0x78] sm:$0xff]
    %v215 = vld [vmem:[%s1 + $0x80] sm:$0xf]
    %v216 = vld [vmem:[%s1 + $0x84] sm:$0xff]
    %v217 = vld [vmem:[%s1 + $0x8c] sm:$0xf]
    %v218 = vld [vmem:[%s1 + $0x90] sm:$0xff]
    %v219 = vld [vmem:[%s1 + $0x98] sm:$0xf]
    %v220 = vld [vmem:[%s1 + $0x9c] sm:$0xff]
    %v221 = vld [vmem:[%s1 + $0xa4] sm:$0xf]
    %v222 = vld [vmem:[%s1 + $0xa8] sm:$0xff]
    %v223 = vld [vmem:[%s1 + $0xb0] sm:$0xf]
    %v224 = vld [vmem:[%s1 + $0xb4] sm:$0xff]
    %v225 = vld [vmem:[%s1 + $0xbc] sm:$0xf]
    %v226 = vld [vmem:[%s1 + $0xc0] sm:$0xff]
    %v227 = vld [vmem:[%s1 + $0xc8] sm:$0xf]
    %v228 = vld [vmem:[%s1 + $0xcc] sm:$0xff]
    %v229 = vld [vmem:[%s1 + $0xd4] sm:$0xf]
    %v230 = vld [vmem:[%s1 + $0xd8] sm:$0xff]
    %v231 = vld [vmem:[%s1 + $0xe0] sm:$0xf]
    %v232 = vld [vmem:[%s1 + $0xe4] sm:$0xff]
    %v233 = vld [vmem:[%s1 + $0xec] sm:$0xf]
    %v234 = vld [vmem:[%s1 + $0xf0] sm:$0xff]
    %v235 = vld [vmem:[%s1 + $0xf8] sm:$0xf]
    %v236 = vld [vmem:[%s1 + $0xfc] sm:$0xff]
    %v237 = vld [vmem:[%s1 + $0x104] sm:$0xf]
    %v238 = vld [vmem:[%s1 + $0x108] sm:$0xff]
    %v239 = vld [vmem:[%s1 + $0x110] sm:$0xf]
    %v240 = vld [vmem:[%s1 + $0x114] sm:$0xff]
    %v241 = vld [vmem:[%s1 + $0x11c] sm:$0xf]
    %v242 = vld [vmem:[%s1 + $0x120] sm:$0xff]
    %v243 = vld [vmem:[%s1 + $0x128] sm:$0xf]
    %v244 = vld [vmem:[%s1 + $0x12c] sm:$0xff]
    %v245 = vld [vmem:[%s1 + $0x134] sm:$0xf]
    %v246 = vld [vmem:[%s1 + $0x138] sm:$0xff]
    %v247 = vld [vmem:[%s1 + $0x140] sm:$0xf]
    %v248 = vld [vmem:[%s1 + $0x144] sm:$0xff]
    %v249 = vld [vmem:[%s1 + $0x14c] sm:$0xf]
    %v250 = vld [vmem:[%s1 + $0x150] sm:$0xff]
    %v251 = vld [vmem:[%s1 + $0x158] sm:$0xf]
    %v252 = vld [vmem:[%s1 + $0x15c] sm:$0xff]
    %v253 = vld [vmem:[%s1 + $0x164] sm:$0xf]
    %v254 = vld [vmem:[%s1 + $0x168] sm:$0xff]
    %v255 = vld [vmem:[%s1 + $0x170] sm:$0xf]
    %v256 = vld [vmem:[%s1 + $0x174] sm:$0xff]
    %v257 = vld [vmem:[%s1 + $0x17c] sm:$0xf]
    %v258 = vld [vmem:[%s1 + $0x180] sm:$0xff]
    %v259 = vld [vmem:[%s1 + $0x188] sm:$0xf]
    %v260 = vld [vmem:[%s1 + $0x18c] sm:$0xff]
    %v261 = vld [vmem:[%s1 + $0x194] sm:$0xf]
    %v262 = vld [vmem:[%s1 + $0x198] sm:$0xff]
    %v263 = vld [vmem:[%s1 + $0x1a0] sm:$0xf]
    %v264 = vld [vmem:[%s1 + $0x1a4] sm:$0xff]
    %v265 = vld [vmem:[%s1 + $0x1ac] sm:$0xf]
    %v266 = vld [vmem:[%s1 + $0x1b0] sm:$0xff]
    %v267 = vld [vmem:[%s1 + $0x1b8] sm:$0xf]
    %v268 = vld [vmem:[%s1 + $0x1bc] sm:$0xff]
    %v269 = vld [vmem:[%s1 + $0x1c4] sm:$0xf]
    %v270 = vld [vmem:[%s1 + $0x1c8] sm:$0xff]
    %v271 = vld [vmem:[%s1 + $0x1d0] sm:$0xf]
    %v272 = vld [vmem:[%s1 + $0x1d4] sm:$0xff]
    %v273 = vld [vmem:[%s1 + $0x1dc] sm:$0xf]
    %v274 = vld [vmem:[%s1 + $0x1e0] sm:$0xff]
    %v275 = vld [vmem:[%s1 + $0x1e8] sm:$0xf]
    %v276 = vld [vmem:[%s1 + $0x1ec] sm:$0xff]
    %v277 = vld [vmem:[%s1 + $0x1f4] sm:$0xf]
    %v278 = vld [vmem:[%s1 + $0x1f8] sm:$0xff]
    %v279 = vld [vmem:[%s1 + $0x200] sm:$0xf]
    %v280 = vld [vmem:[%s1 + $0x204] sm:$0xff]
    %v281 = vld [vmem:[%s1 + $0x20c] sm:$0xf]
    %v282 = vld [vmem:[%s1 + $0x210] sm:$0xff]
    %v283 = vld [vmem:[%s1 + $0x218] sm:$0xf]
    %v284 = vld [vmem:[%s1 + $0x21c] sm:$0xff]
    %v285 = vld [vmem:[%s1 + $0x224] sm:$0xf]
    %v286 = vld [vmem:[%s1 + $0x228] sm:$0xff]
    %v287 = vld [vmem:[%s1 + $0x230] sm:$0xf]
    %v288 = vld [vmem:[%s1 + $0x234] sm:$0xff]
    %v289 = vld [vmem:[%s1 + $0x23c] sm:$0xf]
    %v290 = vld [vmem:[%s1 + $0x240] sm:$0xff]
    %v291 = vld [vmem:[%s1 + $0x248] sm:$0xf]
    %v292 = vld [vmem:[%s1 + $0x24c] sm:$0xff]
    %v293 = vld [vmem:[%s1 + $0x254] sm:$0xf]
    %v294 = vld [vmem:[%s1 + $0x258] sm:$0xff]
    %v295 = vld [vmem:[%s1 + $0x260] sm:$0xf]
    %v296 = vld [vmem:[%s1 + $0x264] sm:$0xff]
    %v297 = vld [vmem:[%s1 + $0x26c] sm:$0xf]
    %v298 = vld [vmem:[%s1 + $0x270] sm:$0xff]
    %v299 = vld [vmem:[%s1 + $0x278] sm:$0xf]
    %v300 = vld [vmem:[%s1 + $0x27c] sm:$0xff]
    %v301 = vld [vmem:[%s1 + $0x284] sm:$0xf]
    %v302 = vld [vmem:[%s1 + $0x288] sm:$0xff]
    %v303 = vld [vmem:[%s1 + $0x290] sm:$0xf]
    %v304 = vld [vmem:[%s1 + $0x294] sm:$0xff]
    %v305 = vld [vmem:[%s1 + $0x29c] sm:$0xf]
    %v306 = vld [vmem:[%s1 + $0x2a0] sm:$0xff]
    %v307 = vld [vmem:[%s1 + $0x2a8] sm:$0xf]
    %v308 = vld [vmem:[%s1 + $0x2ac] sm:$0xff]
    %v309 = vld [vmem:[%s1 + $0x2b4] sm:$0xf]
    %v310 = vld [vmem:[%s1 + $0x2b8] sm:$0xff]
    %v311 = vld [vmem:[%s1 + $0x2c0] sm:$0xf]
    %v312 = vld [vmem:[%s1 + $0x2c4] sm:$0xff]
    %v313 = vld [vmem:[%s1 + $0x2cc] sm:$0xf]
    %v314 = vld [vmem:[%s1 + $0x2d0] sm:$0xff]
    %v315 = vld [vmem:[%s1 + $0x2d8] sm:$0xf]
    %v316 = vld [vmem:[%s1 + $0x2dc] sm:$0xff]
    %v317 = vld [vmem:[%s1 + $0x2e4] sm:$0xf]
    %v318 = vld [vmem:[%s1 + $0x2e8] sm:$0xff]
    %v319 = vld [vmem:[%s1 + $0x2f0] sm:$0xf]
    %v320 = vld [vmem:[%s1 + $0x2f4] sm:$0xff]
    %v321 = vld [vmem:[%s1 + $0x2fc] sm:$0xf]
    %v322 = vld [vmem:[%s1 + $0x300] sm:$0xff]
    %v323 = vld [vmem:[%s1 + $0x308] sm:$0xf]
    %v324 = vld [vmem:[%s1 + $0x30c] sm:$0xff]
    %v325 = vld [vmem:[%s1 + $0x314] sm:$0xf]
    %v326 = vld [vmem:[%s1 + $0x318] sm:$0xff]
    %v327 = vld [vmem:[%s1 + $0x320] sm:$0xf]
    %v328 = vld [vmem:[%s1 + $0x324] sm:$0xff]
    %v329 = vld [vmem:[%s1 + $0x32c] sm:$0xf]
    %v330 = vld [vmem:[%s1 + $0x330] sm:$0xff]
    %v331 = vld [vmem:[%s1 + $0x338] sm:$0xf]
    %v332 = vld [vmem:[%s1 + $0x33c] sm:$0xff]
    %v333 = vld [vmem:[%s1 + $0x344] sm:$0xf]
    %v334 = vld [vmem:[%s1 + $0x348] sm:$0xff]
    %v335 = vld [vmem:[%s1 + $0x350] sm:$0xf]
    %v336 = vld [vmem:[%s1 + $0x354] sm:$0xff]
    %v337 = vld [vmem:[%s1 + $0x35c] sm:$0xf]
    %v338 = vld [vmem:[%s1 + $0x360] sm:$0xff]
    %v339 = vld [vmem:[%s1 + $0x368] sm:$0xf]
    %v340 = vld [vmem:[%s1 + $0x36c] sm:$0xff]
    %v341 = vld [vmem:[%s1 + $0x374] sm:$0xf]
    %v342 = vld [vmem:[%s1 + $0x378] sm:$0xff]
    %v343 = vld [vmem:[%s1 + $0x380] sm:$0xf]
    %v344 = vld [vmem:[%s1 + $0x384] sm:$0xff]
    %v345 = vld [vmem:[%s1 + $0x38c] sm:$0xf]
    %v346 = vld [vmem:[%s1 + $0x390] sm:$0xff]
    %v347 = vld [vmem:[%s1 + $0x398] sm:$0xf]
    %v348 = vld [vmem:[%s1 + $0x39c] sm:$0xff]
    %v349 = vld [vmem:[%s1 + $0x3a4] sm:$0xf]
    %v350 = vld [vmem:[%s1 + $0x3a8] sm:$0xff]
    %v351 = vld [vmem:[%s1 + $0x3b0] sm:$0xf]
    %v352 = vld [vmem:[%s1 + $0x3b4] sm:$0xff]
    %v353 = vld [vmem:[%s1 + $0x3bc] sm:$0xf]
    %v354 = vld [vmem:[%s1 + $0x3c0] sm:$0xff]
    %v355 = vld [vmem:[%s1 + $0x3c8] sm:$0xf]
    %v356 = vld [vmem:[%s1 + $0x3cc] sm:$0xff]
    %v357 = vld [vmem:[%s1 + $0x3d4] sm:$0xf]
    %v358 = vld [vmem:[%s1 + $0x3d8] sm:$0xff]
    %v359 = vld [vmem:[%s1 + $0x3e0] sm:$0xf]
    %v360 = vld [vmem:[%s1 + $0x3e4] sm:$0xff]
    %v361 = vld [vmem:[%s1 + $0x3ec] sm:$0xf]
    %v362 = vld [vmem:[%s1 + $0x3f0] sm:$0xff]
    %v363 = vld [vmem:[%s1 + $0x3f8] sm:$0xf]
    %v364 = vld [vmem:[%s1 + $0x3fc] sm:$0xff]
    %v365 = vld [vmem:[%s1 + $0x404] sm:$0xf]
    %v366 = vld [vmem:[%s1 + $0x408] sm:$0xff]
    %v367 = vld [vmem:[%s1 + $0x410] sm:$0xf]
    %v368 = vld [vmem:[%s1 + $0x414] sm:$0xff]
    %v369 = vld [vmem:[%s1 + $0x41c] sm:$0xf]
    %v370 = vld [vmem:[%s1 + $0x420] sm:$0xff]
    %v371 = vld [vmem:[%s1 + $0x428] sm:$0xf]
    %v372 = vld [vmem:[%s1 + $0x42c] sm:$0xff]
    %v373 = vld [vmem:[%s1 + $0x434] sm:$0xf]
    %v374 = vld [vmem:[%s1 + $0x438] sm:$0xff]
    %v375 = vld [vmem:[%s1 + $0x440] sm:$0xf]
    %v376 = vld [vmem:[%s1 + $0x444] sm:$0xff]
    %v377 = vld [vmem:[%s1 + $0x44c] sm:$0xf]
    %v378 = vld [vmem:[%s1 + $0x450] sm:$0xff]
    %v379 = vld [vmem:[%s1 + $0x458] sm:$0xf]
    %v380 = vld [vmem:[%s1 + $0x45c] sm:$0xff]
    %v381 = vld [vmem:[%s1 + $0x464] sm:$0xf]
    %v382 = vld [vmem:[%s1 + $0x468] sm:$0xff]
    %v383 = vld [vmem:[%s1 + $0x470] sm:$0xf]
    %v384 = vld [vmem:[%s1 + $0x474] sm:$0xff]
    %v385 = vld [vmem:[%s1 + $0x47c] sm:$0xf]
    %v578 = vunpack.c.l.b16 %v194
    %v579 = vunpack.c.h.b16 %v194
    %v580 = vunpack.c.l.b16 %v195
    %v581 = vunpack.c.l.b16 %v196
    %v582 = vunpack.c.h.b16 %v196
    %v583 = vunpack.c.l.b16 %v197
    %v584 = vunpack.c.l.b16 %v198
    %v585 = vunpack.c.h.b16 %v198
    %v586 = vunpack.c.l.b16 %v199
    %v587 = vunpack.c.l.b16 %v200
    %v588 = vunpack.c.h.b16 %v200
    %v589 = vunpack.c.l.b16 %v201
    %v590 = vunpack.c.l.b16 %v202
    %v591 = vunpack.c.h.b16 %v202
    %v592 = vunpack.c.l.b16 %v203
    %v593 = vunpack.c.l.b16 %v204
    %v594 = vunpack.c.h.b16 %v204
    %v595 = vunpack.c.l.b16 %v205
    %v596 = vunpack.c.l.b16 %v206
    %v597 = vunpack.c.h.b16 %v206
    %v598 = vunpack.c.l.b16 %v207
    %v599 = vunpack.c.l.b16 %v208
    %v600 = vunpack.c.h.b16 %v208
    %v601 = vunpack.c.l.b16 %v209
    %v602 = vunpack.c.l.b16 %v210
    %v603 = vunpack.c.h.b16 %v210
    %v604 = vunpack.c.l.b16 %v211
    %v605 = vunpack.c.l.b16 %v212
    %v606 = vunpack.c.h.b16 %v212
    %v607 = vunpack.c.l.b16 %v213
    %v608 = vunpack.c.l.b16 %v214
    %v609 = vunpack.c.h.b16 %v214
    %v610 = vunpack.c.l.b16 %v215
    %v611 = vunpack.c.l.b16 %v216
    %v612 = vunpack.c.h.b16 %v216
    %v613 = vunpack.c.l.b16 %v217
    %v614 = vunpack.c.l.b16 %v218
    %v615 = vunpack.c.h.b16 %v218
    %v616 = vunpack.c.l.b16 %v219
    %v617 = vunpack.c.l.b16 %v220
    %v618 = vunpack.c.h.b16 %v220
    %v619 = vunpack.c.l.b16 %v221
    %v620 = vunpack.c.l.b16 %v222
    %v621 = vunpack.c.h.b16 %v222
    %v622 = vunpack.c.l.b16 %v223
    %v623 = vunpack.c.l.b16 %v224
    %v624 = vunpack.c.h.b16 %v224
    %v625 = vunpack.c.l.b16 %v225
    %v626 = vunpack.c.l.b16 %v226
    %v627 = vunpack.c.h.b16 %v226
    %v628 = vunpack.c.l.b16 %v227
    %v629 = vunpack.c.l.b16 %v228
    %v630 = vunpack.c.h.b16 %v228
    %v631 = vunpack.c.l.b16 %v229
    %v632 = vunpack.c.l.b16 %v230
    %v633 = vunpack.c.h.b16 %v230
    %v634 = vunpack.c.l.b16 %v231
    %v635 = vunpack.c.l.b16 %v232
    %v636 = vunpack.c.h.b16 %v232
    %v637 = vunpack.c.l.b16 %v233
    %v638 = vunpack.c.l.b16 %v234
    %v639 = vunpack.c.h.b16 %v234
    %v640 = vunpack.c.l.b16 %v235
    %v641 = vunpack.c.l.b16 %v236
    %v642 = vunpack.c.h.b16 %v236
    %v643 = vunpack.c.l.b16 %v237
    %v644 = vunpack.c.l.b16 %v238
    %v645 = vunpack.c.h.b16 %v238
    %v646 = vunpack.c.l.b16 %v239
    %v647 = vunpack.c.l.b16 %v240
    %v648 = vunpack.c.h.b16 %v240
    %v649 = vunpack.c.l.b16 %v241
    %v650 = vunpack.c.l.b16 %v242
    %v651 = vunpack.c.h.b16 %v242
    %v652 = vunpack.c.l.b16 %v243
    %v653 = vunpack.c.l.b16 %v244
    %v654 = vunpack.c.h.b16 %v244
    %v655 = vunpack.c.l.b16 %v245
    %v656 = vunpack.c.l.b16 %v246
    %v657 = vunpack.c.h.b16 %v246
    %v658 = vunpack.c.l.b16 %v247
    %v659 = vunpack.c.l.b16 %v248
    %v660 = vunpack.c.h.b16 %v248
    %v661 = vunpack.c.l.b16 %v249
    %v662 = vunpack.c.l.b16 %v250
    %v663 = vunpack.c.h.b16 %v250
    %v664 = vunpack.c.l.b16 %v251
    %v665 = vunpack.c.l.b16 %v252
    %v666 = vunpack.c.h.b16 %v252
    %v667 = vunpack.c.l.b16 %v253
    %v668 = vunpack.c.l.b16 %v254
    %v669 = vunpack.c.h.b16 %v254
    %v670 = vunpack.c.l.b16 %v255
    %v671 = vunpack.c.l.b16 %v256
    %v672 = vunpack.c.h.b16 %v256
    %v673 = vunpack.c.l.b16 %v257
    %v674 = vunpack.c.l.b16 %v258
    %v675 = vunpack.c.h.b16 %v258
    %v676 = vunpack.c.l.b16 %v259
    %v677 = vunpack.c.l.b16 %v260
    %v678 = vunpack.c.h.b16 %v260
    %v679 = vunpack.c.l.b16 %v261
    %v680 = vunpack.c.l.b16 %v262
    %v681 = vunpack.c.h.b16 %v262
    %v682 = vunpack.c.l.b16 %v263
    %v683 = vunpack.c.l.b16 %v264
    %v684 = vunpack.c.h.b16 %v264
    %v685 = vunpack.c.l.b16 %v265
    %v686 = vunpack.c.l.b16 %v266
    %v687 = vunpack.c.h.b16 %v266
    %v688 = vunpack.c.l.b16 %v267
    %v689 = vunpack.c.l.b16 %v268
    %v690 = vunpack.c.h.b16 %v268
    %v691 = vunpack.c.l.b16 %v269
    %v692 = vunpack.c.l.b16 %v270
    %v693 = vunpack.c.h.b16 %v270
    %v694 = vunpack.c.l.b16 %v271
    %v695 = vunpack.c.l.b16 %v272
    %v696 = vunpack.c.h.b16 %v272
    %v697 = vunpack.c.l.b16 %v273
    %v698 = vunpack.c.l.b16 %v274
    %v699 = vunpack.c.h.b16 %v274
    %v700 = vunpack.c.l.b16 %v275
    %v701 = vunpack.c.l.b16 %v276
    %v702 = vunpack.c.h.b16 %v276
    %v703 = vunpack.c.l.b16 %v277
    %v704 = vunpack.c.l.b16 %v278
    %v705 = vunpack.c.h.b16 %v278
    %v706 = vunpack.c.l.b16 %v279
    %v707 = vunpack.c.l.b16 %v280
    %v708 = vunpack.c.h.b16 %v280
    %v709 = vunpack.c.l.b16 %v281
    %v710 = vunpack.c.l.b16 %v282
    %v711 = vunpack.c.h.b16 %v282
    %v712 = vunpack.c.l.b16 %v283
    %v713 = vunpack.c.l.b16 %v284
    %v714 = vunpack.c.h.b16 %v284
    %v715 = vunpack.c.l.b16 %v285
    %v716 = vunpack.c.l.b16 %v286
    %v717 = vunpack.c.h.b16 %v286
    %v718 = vunpack.c.l.b16 %v287
    %v719 = vunpack.c.l.b16 %v288
    %v720 = vunpack.c.h.b16 %v288
    %v721 = vunpack.c.l.b16 %v289
    %v722 = vunpack.c.l.b16 %v290
    %v723 = vunpack.c.h.b16 %v290
    %v724 = vunpack.c.l.b16 %v291
    %v725 = vunpack.c.l.b16 %v292
    %v726 = vunpack.c.h.b16 %v292
    %v727 = vunpack.c.l.b16 %v293
    %v728 = vunpack.c.l.b16 %v294
    %v729 = vunpack.c.h.b16 %v294
    %v730 = vunpack.c.l.b16 %v295
    %v731 = vunpack.c.l.b16 %v296
    %v732 = vunpack.c.h.b16 %v296
    %v733 = vunpack.c.l.b16 %v297
    %v734 = vunpack.c.l.b16 %v298
    %v735 = vunpack.c.h.b16 %v298
    %v736 = vunpack.c.l.b16 %v299
    %v737 = vunpack.c.l.b16 %v300
    %v738 = vunpack.c.h.b16 %v300
    %v739 = vunpack.c.l.b16 %v301
    %v740 = vunpack.c.l.b16 %v302
    %v741 = vunpack.c.h.b16 %v302
    %v742 = vunpack.c.l.b16 %v303
    %v743 = vunpack.c.l.b16 %v304
    %v744 = vunpack.c.h.b16 %v304
    %v745 = vunpack.c.l.b16 %v305
    %v746 = vunpack.c.l.b16 %v306
    %v747 = vunpack.c.h.b16 %v306
    %v748 = vunpack.c.l.b16 %v307
    %v749 = vunpack.c.l.b16 %v308
    %v750 = vunpack.c.h.b16 %v308
    %v751 = vunpack.c.l.b16 %v309
    %v752 = vunpack.c.l.b16 %v310
    %v753 = vunpack.c.h.b16 %v310
    %v754 = vunpack.c.l.b16 %v311
    %v755 = vunpack.c.l.b16 %v312
    %v756 = vunpack.c.h.b16 %v312
    %v757 = vunpack.c.l.b16 %v313
    %v758 = vunpack.c.l.b16 %v314
    %v759 = vunpack.c.h.b16 %v314
    %v760 = vunpack.c.l.b16 %v315
    %v761 = vunpack.c.l.b16 %v316
    %v762 = vunpack.c.h.b16 %v316
    %v763 = vunpack.c.l.b16 %v317
    %v764 = vunpack.c.l.b16 %v318
    %v765 = vunpack.c.h.b16 %v318
    %v766 = vunpack.c.l.b16 %v319
    %v767 = vunpack.c.l.b16 %v320
    %v768 = vunpack.c.h.b16 %v320
    %v769 = vunpack.c.l.b16 %v321
    %v770 = vunpack.c.l.b16 %v322
    %v771 = vunpack.c.h.b16 %v322
    %v772 = vunpack.c.l.b16 %v323
    %v773 = vunpack.c.l.b16 %v324
    %v774 = vunpack.c.h.b16 %v324
    %v775 = vunpack.c.l.b16 %v325
    %v776 = vunpack.c.l.b16 %v326
    %v777 = vunpack.c.h.b16 %v326
    %v778 = vunpack.c.l.b16 %v327
    %v779 = vunpack.c.l.b16 %v328
    %v780 = vunpack.c.h.b16 %v328
    %v781 = vunpack.c.l.b16 %v329
    %v782 = vunpack.c.l.b16 %v330
    %v783 = vunpack.c.h.b16 %v330
    %v784 = vunpack.c.l.b16 %v331
    %v785 = vunpack.c.l.b16 %v332
    %v786 = vunpack.c.h.b16 %v332
    %v787 = vunpack.c.l.b16 %v333
    %v788 = vunpack.c.l.b16 %v334
    %v789 = vunpack.c.h.b16 %v334
    %v790 = vunpack.c.l.b16 %v335
    %v791 = vunpack.c.l.b16 %v336
    %v792 = vunpack.c.h.b16 %v336
    %v793 = vunpack.c.l.b16 %v337
    %v794 = vunpack.c.l.b16 %v338
    %v795 = vunpack.c.h.b16 %v338
    %v796 = vunpack.c.l.b16 %v339
    %v797 = vunpack.c.l.b16 %v340
    %v798 = vunpack.c.h.b16 %v340
    %v799 = vunpack.c.l.b16 %v341
    %v800 = vunpack.c.l.b16 %v342
    %v801 = vunpack.c.h.b16 %v342
    %v802 = vunpack.c.l.b16 %v343
    %v803 = vunpack.c.l.b16 %v344
    %v804 = vunpack.c.h.b16 %v344
    %v805 = vunpack.c.l.b16 %v345
    %v806 = vunpack.c.l.b16 %v346
    %v807 = vunpack.c.h.b16 %v346
    %v808 = vunpack.c.l.b16 %v347
    %v809 = vunpack.c.l.b16 %v348
    %v810 = vunpack.c.h.b16 %v348
    %v811 = vunpack.c.l.b16 %v349
    %v812 = vunpack.c.l.b16 %v350
    %v813 = vunpack.c.h.b16 %v350
    %v814 = vunpack.c.l.b16 %v351
    %v815 = vunpack.c.l.b16 %v352
    %v816 = vunpack.c.h.b16 %v352
    %v817 = vunpack.c.l.b16 %v353
    %v818 = vunpack.c.l.b16 %v354
    %v819 = vunpack.c.h.b16 %v354
    %v820 = vunpack.c.l.b16 %v355
    %v821 = vunpack.c.l.b16 %v356
    %v822 = vunpack.c.h.b16 %v356
    %v823 = vunpack.c.l.b16 %v357
    %v824 = vunpack.c.l.b16 %v358
    %v825 = vunpack.c.h.b16 %v358
    %v826 = vunpack.c.l.b16 %v359
    %v827 = vunpack.c.l.b16 %v360
    %v828 = vunpack.c.h.b16 %v360
    %v829 = vunpack.c.l.b16 %v361
    %v830 = vunpack.c.l.b16 %v362
    %v831 = vunpack.c.h.b16 %v362
    %v832 = vunpack.c.l.b16 %v363
    %v833 = vunpack.c.l.b16 %v364
    %v834 = vunpack.c.h.b16 %v364
    %v835 = vunpack.c.l.b16 %v365
    %v836 = vunpack.c.l.b16 %v366
    %v837 = vunpack.c.h.b16 %v366
    %v838 = vunpack.c.l.b16 %v367
    %v839 = vunpack.c.l.b16 %v368
    %v840 = vunpack.c.h.b16 %v368
    %v841 = vunpack.c.l.b16 %v369
    %v842 = vunpack.c.l.b16 %v370
    %v843 = vunpack.c.h.b16 %v370
    %v844 = vunpack.c.l.b16 %v371
    %v845 = vunpack.c.l.b16 %v372
    %v846 = vunpack.c.h.b16 %v372
    %v847 = vunpack.c.l.b16 %v373
    %v848 = vunpack.c.l.b16 %v374
    %v849 = vunpack.c.h.b16 %v374
    %v850 = vunpack.c.l.b16 %v375
    %v851 = vunpack.c.l.b16 %v376
    %v852 = vunpack.c.h.b16 %v376
    %v853 = vunpack.c.l.b16 %v377
    %v854 = vunpack.c.l.b16 %v378
    %v855 = vunpack.c.h.b16 %v378
    %v856 = vunpack.c.l.b16 %v379
    %v857 = vunpack.c.l.b16 %v380
    %v858 = vunpack.c.h.b16 %v380
    %v859 = vunpack.c.l.b16 %v381
    %v860 = vunpack.c.l.b16 %v382
    %v861 = vunpack.c.h.b16 %v382
    %v862 = vunpack.c.l.b16 %v383
    %v863 = vunpack.c.l.b16 %v384
    %v864 = vunpack.c.h.b16 %v384
    %v865 = vunpack.c.l.b16 %v385
    %v866 = vpack.c.b16 %v581, %v578
    %v867 = vpack.c.b16 %v582, %v579
    %v868 = vpack.c.b16 %v583, %v580
    %v869 = vpack.c.b16 %v587, %v584
    %v870 = vpack.c.b16 %v588, %v585
    %v871 = vpack.c.b16 %v589, %v586
    %v872 = vpack.c.b16 %v593, %v590
    %v873 = vpack.c.b16 %v594, %v591
    %v874 = vpack.c.b16 %v595, %v592
    %v875 = vpack.c.b16 %v599, %v596
    %v876 = vpack.c.b16 %v600, %v597
    %v877 = vpack.c.b16 %v601, %v598
    %v878 = vpack.c.b16 %v605, %v602
    %v879 = vpack.c.b16 %v606, %v603
    %v880 = vpack.c.b16 %v607, %v604
    %v881 = vpack.c.b16 %v611, %v608
    %v882 = vpack.c.b16 %v612, %v609
    %v883 = vpack.c.b16 %v613, %v610
    %v884 = vpack.c.b16 %v617, %v614
    %v885 = vpack.c.b16 %v618, %v615
    %v886 = vpack.c.b16 %v619, %v616
    %v887 = vpack.c.b16 %v623, %v620
    %v888 = vpack.c.b16 %v624, %v621
    %v889 = vpack.c.b16 %v625, %v622
    %v890 = vpack.c.b16 %v629, %v626
    %v891 = vpack.c.b16 %v630, %v627
    %v892 = vpack.c.b16 %v631, %v628
    %v893 = vpack.c.b16 %v635, %v632
    %v894 = vpack.c.b16 %v636, %v633
    %v895 = vpack.c.b16 %v637, %v634
    %v896 = vpack.c.b16 %v641, %v638
    %v897 = vpack.c.b16 %v642, %v639
    %v898 = vpack.c.b16 %v643, %v640
    %v899 = vpack.c.b16 %v647, %v644
    %v900 = vpack.c.b16 %v648, %v645
    %v901 = vpack.c.b16 %v649, %v646
    %v902 = vpack.c.b16 %v653, %v650
    %v903 = vpack.c.b16 %v654, %v651
    %v904 = vpack.c.b16 %v655, %v652
    %v905 = vpack.c.b16 %v659, %v656
    %v906 = vpack.c.b16 %v660, %v657
    %v907 = vpack.c.b16 %v661, %v658
    %v908 = vpack.c.b16 %v665, %v662
    %v909 = vpack.c.b16 %v666, %v663
    %v910 = vpack.c.b16 %v667, %v664
    %v911 = vpack.c.b16 %v671, %v668
    %v912 = vpack.c.b16 %v672, %v669
    %v913 = vpack.c.b16 %v673, %v670
    %v914 = vpack.c.b16 %v677, %v674
    %v915 = vpack.c.b16 %v678, %v675
    %v916 = vpack.c.b16 %v679, %v676
    %v917 = vpack.c.b16 %v683, %v680
    %v918 = vpack.c.b16 %v684, %v681
    %v919 = vpack.c.b16 %v685, %v682
    %v920 = vpack.c.b16 %v689, %v686
    %v921 = vpack.c.b16 %v690, %v687
    %v922 = vpack.c.b16 %v691, %v688
    %v923 = vpack.c.b16 %v695, %v692
    %v924 = vpack.c.b16 %v696, %v693
    %v925 = vpack.c.b16 %v697, %v694
    %v926 = vpack.c.b16 %v701, %v698
    %v927 = vpack.c.b16 %v702, %v699
    %v928 = vpack.c.b16 %v703, %v700
    %v929 = vpack.c.b16 %v707, %v704
    %v930 = vpack.c.b16 %v708, %v705
    %v931 = vpack.c.b16 %v709, %v706
    %v932 = vpack.c.b16 %v713, %v710
    %v933 = vpack.c.b16 %v714, %v711
    %v934 = vpack.c.b16 %v715, %v712
    %v935 = vpack.c.b16 %v719, %v716
    %v936 = vpack.c.b16 %v720, %v717
    %v937 = vpack.c.b16 %v721, %v718
    %v938 = vpack.c.b16 %v725, %v722
    %v939 = vpack.c.b16 %v726, %v723
    %v940 = vpack.c.b16 %v727, %v724
    %v941 = vpack.c.b16 %v731, %v728
    %v942 = vpack.c.b16 %v732, %v729
    %v943 = vpack.c.b16 %v733, %v730
    %v944 = vpack.c.b16 %v737, %v734
    %v945 = vpack.c.b16 %v738, %v735
    %v946 = vpack.c.b16 %v739, %v736
    %v947 = vpack.c.b16 %v743, %v740
    %v948 = vpack.c.b16 %v744, %v741
    %v949 = vpack.c.b16 %v745, %v742
    %v950 = vpack.c.b16 %v749, %v746
    %v951 = vpack.c.b16 %v750, %v747
    %v952 = vpack.c.b16 %v751, %v748
    %v953 = vpack.c.b16 %v755, %v752
    %v954 = vpack.c.b16 %v756, %v753
    %v955 = vpack.c.b16 %v757, %v754
    %v956 = vpack.c.b16 %v761, %v758
    %v957 = vpack.c.b16 %v762, %v759
    %v958 = vpack.c.b16 %v763, %v760
    %v959 = vpack.c.b16 %v767, %v764
    %v960 = vpack.c.b16 %v768, %v765
    %v961 = vpack.c.b16 %v769, %v766
    %v962 = vpack.c.b16 %v773, %v770
    %v963 = vpack.c.b16 %v774, %v771
    %v964 = vpack.c.b16 %v775, %v772
    %v965 = vpack.c.b16 %v779, %v776
    %v966 = vpack.c.b16 %v780, %v777
    %v967 = vpack.c.b16 %v781, %v778
    %v968 = vpack.c.b16 %v785, %v782
    %v969 = vpack.c.b16 %v786, %v783
    %v970 = vpack.c.b16 %v787, %v784
    %v971 = vpack.c.b16 %v791, %v788
    %v972 = vpack.c.b16 %v792, %v789
    %v973 = vpack.c.b16 %v793, %v790
    %v974 = vpack.c.b16 %v797, %v794
    %v975 = vpack.c.b16 %v798, %v795
    %v976 = vpack.c.b16 %v799, %v796
    %v977 = vpack.c.b16 %v803, %v800
    %v978 = vpack.c.b16 %v804, %v801
    %v979 = vpack.c.b16 %v805, %v802
    %v980 = vpack.c.b16 %v809, %v806
    %v981 = vpack.c.b16 %v810, %v807
    %v982 = vpack.c.b16 %v811, %v808
    %v983 = vpack.c.b16 %v815, %v812
    %v984 = vpack.c.b16 %v816, %v813
    %v985 = vpack.c.b16 %v817, %v814
    %v986 = vpack.c.b16 %v821, %v818
    %v987 = vpack.c.b16 %v822, %v819
    %v988 = vpack.c.b16 %v823, %v820
    %v989 = vpack.c.b16 %v827, %v824
    %v990 = vpack.c.b16 %v828, %v825
    %v991 = vpack.c.b16 %v829, %v826
    %v992 = vpack.c.b16 %v833, %v830
    %v993 = vpack.c.b16 %v834, %v831
    %v994 = vpack.c.b16 %v835, %v832
    %v995 = vpack.c.b16 %v839, %v836
    %v996 = vpack.c.b16 %v840, %v837
    %v997 = vpack.c.b16 %v841, %v838
    %v998 = vpack.c.b16 %v845, %v842
    %v999 = vpack.c.b16 %v846, %v843
    %v1000 = vpack.c.b16 %v847, %v844
    %v1001 = vpack.c.b16 %v851, %v848
    %v1002 = vpack.c.b16 %v852, %v849
    %v1003 = vpack.c.b16 %v853, %v850
    %v1004 = vpack.c.b16 %v857, %v854
    %v1005 = vpack.c.b16 %v858, %v855
    %v1006 = vpack.c.b16 %v859, %v856
    %v1007 = vpack.c.b16 %v863, %v860
    %v1008 = vpack.c.b16 %v864, %v861
    %v1009 = vpack.c.b16 %v865, %v862
    %1154 = vmatpush.bf16.msra.mxu0 %v887
    %1155 = vmatpush.bf16.msra.mxu0 %v884
    %1156 = vmatpush.bf16.msra.mxu0 %v881
    %1157 = vmatpush.bf16.msra.mxu0 %v878
    %1158 = vmatpush.bf16.msra.mxu0 %v875
    %1159 = vmatpush.bf16.msra.mxu0 %v872
    %1160 = vmatpush.bf16.msra.mxu0 %v869
    %1161 = vmatpush.bf16.msra.mxu0 %v866
    %1162 = vmatmul.bf16.gmra.mxu0 %v182
    %v1163 = vpop.f32.mrf.mxu0
    %v1164 = vadd.f32 0.0, %v1163
    %v1165 = vpop.f32.mrf.mxu0
    %v1166 = vadd.f32 0.0, %v1165
    %1167 = vmatmul.bf16.gmra.mxu0 %v188
    %v1168 = vpop.f32.mrf.mxu0
    %v1169 = vadd.f32 0.0, %v1168
    %v1170 = vpop.f32.mrf.mxu0
    %v1171 = vadd.f32 0.0, %v1170
    %1172 = vdwg.mxu0
    %1173 = vmatpush.bf16.msra.mxu0 %v911
    %1174 = vmatpush.bf16.msra.mxu0 %v908
    %1175 = vmatpush.bf16.msra.mxu0 %v905
    %1176 = vmatpush.bf16.msra.mxu0 %v902
    %1177 = vmatpush.bf16.msra.mxu0 %v899
    %1178 = vmatpush.bf16.msra.mxu0 %v896
    %1179 = vmatpush.bf16.msra.mxu0 %v893
    %1180 = vmatpush.bf16.msra.mxu0 %v890
    %1181 = vmatmul.bf16.gmra.mxu0 %v183
    %v1182 = vpop.f32.mrf.mxu0
    %v1183 = vadd.f32 %v1164, %v1182
    %v1184 = vpop.f32.mrf.mxu0
    %v1185 = vadd.f32 %v1166, %v1184
    %1186 = vmatmul.bf16.gmra.mxu0 %v189
    %v1187 = vpop.f32.mrf.mxu0
    %v1188 = vadd.f32 %v1169, %v1187
    %v1189 = vpop.f32.mrf.mxu0
    %v1190 = vadd.f32 %v1171, %v1189
    %1191 = vdwg.mxu0
    %1192 = vmatpush.bf16.msra.mxu0 %v935
    %1193 = vmatpush.bf16.msra.mxu0 %v932
    %1194 = vmatpush.bf16.msra.mxu0 %v929
    %1195 = vmatpush.bf16.msra.mxu0 %v926
    %1196 = vmatpush.bf16.msra.mxu0 %v923
    %1197 = vmatpush.bf16.msra.mxu0 %v920
    %1198 = vmatpush.bf16.msra.mxu0 %v917
    %1199 = vmatpush.bf16.msra.mxu0 %v914
    %1200 = vmatmul.bf16.gmra.mxu0 %v184
    %v1201 = vpop.f32.mrf.mxu0
    %v1202 = vadd.f32 %v1183, %v1201
    %v1203 = vpop.f32.mrf.mxu0
    %v1204 = vadd.f32 %v1185, %v1203
    %1205 = vmatmul.bf16.gmra.mxu0 %v190
    %v1206 = vpop.f32.mrf.mxu0
    %v1207 = vadd.f32 %v1188, %v1206
    %v1208 = vpop.f32.mrf.mxu0
    %v1209 = vadd.f32 %v1190, %v1208
    %1210 = vdwg.mxu0
    %1211 = vmatpush.bf16.msra.mxu0 %v959
    %1212 = vmatpush.bf16.msra.mxu0 %v956
    %1213 = vmatpush.bf16.msra.mxu0 %v953
    %1214 = vmatpush.bf16.msra.mxu0 %v950
    %1215 = vmatpush.bf16.msra.mxu0 %v947
    %1216 = vmatpush.bf16.msra.mxu0 %v944
    %1217 = vmatpush.bf16.msra.mxu0 %v941
    %1218 = vmatpush.bf16.msra.mxu0 %v938
    %1219 = vmatmul.bf16.gmra.mxu0 %v185
    %v1220 = vpop.f32.mrf.mxu0
    %v1221 = vadd.f32 %v1202, %v1220
    %v1222 = vpop.f32.mrf.mxu0
    %v1223 = vadd.f32 %v1204, %v1222
    %1224 = vmatmul.bf16.gmra.mxu0 %v191
    %v1225 = vpop.f32.mrf.mxu0
    %v1226 = vadd.f32 %v1207, %v1225
    %v1227 = vpop.f32.mrf.mxu0
    %v1228 = vadd.f32 %v1209, %v1227
    %1229 = vdwg.mxu0
    %1230 = vmatpush.bf16.msra.mxu0 %v983
    %1231 = vmatpush.bf16.msra.mxu0 %v980
    %1232 = vmatpush.bf16.msra.mxu0 %v977
    %1233 = vmatpush.bf16.msra.mxu0 %v974
    %1234 = vmatpush.bf16.msra.mxu0 %v971
    %1235 = vmatpush.bf16.msra.mxu0 %v968
    %1236 = vmatpush.bf16.msra.mxu0 %v965
    %1237 = vmatpush.bf16.msra.mxu0 %v962
    %1238 = vmatmul.bf16.gmra.mxu0 %v186
    %v1239 = vpop.f32.mrf.mxu0
    %v1240 = vadd.f32 %v1221, %v1239
    %v1241 = vpop.f32.mrf.mxu0
    %v1242 = vadd.f32 %v1223, %v1241
    %1243 = vmatmul.bf16.gmra.mxu0 %v192
    %v1244 = vpop.f32.mrf.mxu0
    %v1245 = vadd.f32 %v1226, %v1244
    %v1246 = vpop.f32.mrf.mxu0
    %v1247 = vadd.f32 %v1228, %v1246
    %1248 = vdwg.mxu0
    %1249 = vmatpush.bf16.msra.mxu0 %v1007
    %1250 = vmatpush.bf16.msra.mxu0 %v1004
    %1251 = vmatpush.bf16.msra.mxu0 %v1001
    %1252 = vmatpush.bf16.msra.mxu0 %v998
    %1253 = vmatpush.bf16.msra.mxu0 %v995
    %1254 = vmatpush.bf16.msra.mxu0 %v992
    %1255 = vmatpush.bf16.msra.mxu0 %v989
    %1256 = vmatpush.bf16.msra.mxu0 %v986
    %1257 = vmatmul.bf16.gmra.mxu0 %v187
    %v1258 = vpop.f32.mrf.mxu0
    %v1259 = vadd.f32 %v1240, %v1258
    %v1260 = vpop.f32.mrf.mxu0
    %v1261 = vadd.f32 %v1242, %v1260
    %1262 = vmatmul.bf16.gmra.mxu0 %v193
    %v1263 = vpop.f32.mrf.mxu0
    %v1264 = vadd.f32 %v1245, %v1263
    %v1265 = vpop.f32.mrf.mxu0
    %v1266 = vadd.f32 %v1247, %v1265
    %1267 = vdwg.mxu0
    %1268 = vmatpush.bf16.msra.mxu0 %v888
    %1269 = vmatpush.bf16.msra.mxu0 %v885
    %1270 = vmatpush.bf16.msra.mxu0 %v882
    %1271 = vmatpush.bf16.msra.mxu0 %v879
    %1272 = vmatpush.bf16.msra.mxu0 %v876
    %1273 = vmatpush.bf16.msra.mxu0 %v873
    %1274 = vmatpush.bf16.msra.mxu0 %v870
    %1275 = vmatpush.bf16.msra.mxu0 %v867
    %1276 = vmatmul.bf16.gmra.mxu0 %v182
    %v1277 = vpop.f32.mrf.mxu0
    %v1278 = vadd.f32 0.0, %v1277
    %v1279 = vpop.f32.mrf.mxu0
    %v1280 = vadd.f32 0.0, %v1279
    %1281 = vmatmul.bf16.gmra.mxu0 %v188
    %v1282 = vpop.f32.mrf.mxu0
    %v1283 = vadd.f32 0.0, %v1282
    %v1284 = vpop.f32.mrf.mxu0
    %v1285 = vadd.f32 0.0, %v1284
    %1286 = vdwg.mxu0
    %1287 = vmatpush.bf16.msra.mxu0 %v912
    %1288 = vmatpush.bf16.msra.mxu0 %v909
    %1289 = vmatpush.bf16.msra.mxu0 %v906
    %1290 = vmatpush.bf16.msra.mxu0 %v903
    %1291 = vmatpush.bf16.msra.mxu0 %v900
    %1292 = vmatpush.bf16.msra.mxu0 %v897
    %1293 = vmatpush.bf16.msra.mxu0 %v894
    %1294 = vmatpush.bf16.msra.mxu0 %v891
    %1295 = vmatmul.bf16.gmra.mxu0 %v183
    %v1296 = vpop.f32.mrf.mxu0
    %v1297 = vadd.f32 %v1278, %v1296
    %v1298 = vpop.f32.mrf.mxu0
    %v1299 = vadd.f32 %v1280, %v1298
    %1300 = vmatmul.bf16.gmra.mxu0 %v189
    %v1301 = vpop.f32.mrf.mxu0
    %v1302 = vadd.f32 %v1283, %v1301
    %v1303 = vpop.f32.mrf.mxu0
    %v1304 = vadd.f32 %v1285, %v1303
    %1305 = vdwg.mxu0
    %1306 = vmatpush.bf16.msra.mxu0 %v936
    %1307 = vmatpush.bf16.msra.mxu0 %v933
    %1308 = vmatpush.bf16.msra.mxu0 %v930
    %1309 = vmatpush.bf16.msra.mxu0 %v927
    %1310 = vmatpush.bf16.msra.mxu0 %v924
    %1311 = vmatpush.bf16.msra.mxu0 %v921
    %1312 = vmatpush.bf16.msra.mxu0 %v918
    %1313 = vmatpush.bf16.msra.mxu0 %v915
    %1314 = vmatmul.bf16.gmra.mxu0 %v184
    %v1315 = vpop.f32.mrf.mxu0
    %v1316 = vadd.f32 %v1297, %v1315
    %v1317 = vpop.f32.mrf.mxu0
    %v1318 = vadd.f32 %v1299, %v1317
    %1319 = vmatmul.bf16.gmra.mxu0 %v190
    %v1320 = vpop.f32.mrf.mxu0
    %v1321 = vadd.f32 %v1302, %v1320
    %v1322 = vpop.f32.mrf.mxu0
    %v1323 = vadd.f32 %v1304, %v1322
    %1324 = vdwg.mxu0
    %1325 = vmatpush.bf16.msra.mxu0 %v960
    %1326 = vmatpush.bf16.msra.mxu0 %v957
    %1327 = vmatpush.bf16.msra.mxu0 %v954
    %1328 = vmatpush.bf16.msra.mxu0 %v951
    %1329 = vmatpush.bf16.msra.mxu0 %v948
    %1330 = vmatpush.bf16.msra.mxu0 %v945
    %1331 = vmatpush.bf16.msra.mxu0 %v942
    %1332 = vmatpush.bf16.msra.mxu0 %v939
    %1333 = vmatmul.bf16.gmra.mxu0 %v185
    %v1334 = vpop.f32.mrf.mxu0
    %v1335 = vadd.f32 %v1316, %v1334
    %v1336 = vpop.f32.mrf.mxu0
    %v1337 = vadd.f32 %v1318, %v1336
    %1338 = vmatmul.bf16.gmra.mxu0 %v191
    %v1339 = vpop.f32.mrf.mxu0
    %v1340 = vadd.f32 %v1321, %v1339
    %v1341 = vpop.f32.mrf.mxu0
    %v1342 = vadd.f32 %v1323, %v1341
    %1343 = vdwg.mxu0
    %1344 = vmatpush.bf16.msra.mxu0 %v984
    %1345 = vmatpush.bf16.msra.mxu0 %v981
    %1346 = vmatpush.bf16.msra.mxu0 %v978
    %1347 = vmatpush.bf16.msra.mxu0 %v975
    %1348 = vmatpush.bf16.msra.mxu0 %v972
    %1349 = vmatpush.bf16.msra.mxu0 %v969
    %1350 = vmatpush.bf16.msra.mxu0 %v966
    %1351 = vmatpush.bf16.msra.mxu0 %v963
    %1352 = vmatmul.bf16.gmra.mxu0 %v186
    %v1353 = vpop.f32.mrf.mxu0
    %v1354 = vadd.f32 %v1335, %v1353
    %v1355 = vpop.f32.mrf.mxu0
    %v1356 = vadd.f32 %v1337, %v1355
    %1357 = vmatmul.bf16.gmra.mxu0 %v192
    %v1358 = vpop.f32.mrf.mxu0
    %v1359 = vadd.f32 %v1340, %v1358
    %v1360 = vpop.f32.mrf.mxu0
    %v1361 = vadd.f32 %v1342, %v1360
    %1362 = vdwg.mxu0
    %1363 = vmatpush.bf16.msra.mxu0 %v1008
    %1364 = vmatpush.bf16.msra.mxu0 %v1005
    %1365 = vmatpush.bf16.msra.mxu0 %v1002
    %1366 = vmatpush.bf16.msra.mxu0 %v999
    %1367 = vmatpush.bf16.msra.mxu0 %v996
    %1368 = vmatpush.bf16.msra.mxu0 %v993
    %1369 = vmatpush.bf16.msra.mxu0 %v990
    %1370 = vmatpush.bf16.msra.mxu0 %v987
    %1371 = vmatmul.bf16.gmra.mxu0 %v187
    %v1372 = vpop.f32.mrf.mxu0
    %v1373 = vadd.f32 %v1354, %v1372
    %v1374 = vpop.f32.mrf.mxu0
    %v1375 = vadd.f32 %v1356, %v1374
    %1376 = vmatmul.bf16.gmra.mxu0 %v193
    %v1377 = vpop.f32.mrf.mxu0
    %v1378 = vadd.f32 %v1359, %v1377
    %v1379 = vpop.f32.mrf.mxu0
    %v1380 = vadd.f32 %v1361, %v1379
    %1381 = vdwg.mxu0
    %1382 = vmatpush.bf16.msra.mxu0 %v889
    %1383 = vmatpush.bf16.msra.mxu0 %v886
    %1384 = vmatpush.bf16.msra.mxu0 %v883
    %1385 = vmatpush.bf16.msra.mxu0 %v880
    %1386 = vmatpush.bf16.msra.mxu0 %v877
    %1387 = vmatpush.bf16.msra.mxu0 %v874
    %1388 = vmatpush.bf16.msra.mxu0 %v871
    %1389 = vmatpush.bf16.msra.mxu0 %v868
    %1390 = vmatmul.bf16.gmra.mxu0 %v182
    %v1391 = vpop.f32.mrf.mxu0
    %v1392 = vadd.f32 0.0, %v1391
    %v1393 = vpop.f32.mrf.mxu0
    %v1394 = vadd.f32 0.0, %v1393
    %1395 = vmatmul.bf16.gmra.mxu0 %v188
    %v1396 = vpop.f32.mrf.mxu0
    %v1397 = vadd.f32 0.0, %v1396
    %v1398 = vpop.f32.mrf.mxu0
    %v1399 = vadd.f32 0.0, %v1398
    %1400 = vdwg.mxu0
    %1401 = vmatpush.bf16.msra.mxu0 %v913
    %1402 = vmatpush.bf16.msra.mxu0 %v910
    %1403 = vmatpush.bf16.msra.mxu0 %v907
    %1404 = vmatpush.bf16.msra.mxu0 %v904
    %1405 = vmatpush.bf16.msra.mxu0 %v901
    %1406 = vmatpush.bf16.msra.mxu0 %v898
    %1407 = vmatpush.bf16.msra.mxu0 %v895
    %1408 = vmatpush.bf16.msra.mxu0 %v892
    %1409 = vmatmul.bf16.gmra.mxu0 %v183
    %v1410 = vpop.f32.mrf.mxu0
    %v1411 = vadd.f32 %v1392, %v1410
    %v1412 = vpop.f32.mrf.mxu0
    %v1413 = vadd.f32 %v1394, %v1412
    %1414 = vmatmul.bf16.gmra.mxu0 %v189
    %v1415 = vpop.f32.mrf.mxu0
    %v1416 = vadd.f32 %v1397, %v1415
    %v1417 = vpop.f32.mrf.mxu0
    %v1418 = vadd.f32 %v1399, %v1417
    %1419 = vdwg.mxu0
    %1420 = vmatpush.bf16.msra.mxu0 %v937
    %1421 = vmatpush.bf16.msra.mxu0 %v934
    %1422 = vmatpush.bf16.msra.mxu0 %v931
    %1423 = vmatpush.bf16.msra.mxu0 %v928
    %1424 = vmatpush.bf16.msra.mxu0 %v925
    %1425 = vmatpush.bf16.msra.mxu0 %v922
    %1426 = vmatpush.bf16.msra.mxu0 %v919
    %1427 = vmatpush.bf16.msra.mxu0 %v916
    %1428 = vmatmul.bf16.gmra.mxu0 %v184
    %v1429 = vpop.f32.mrf.mxu0
    %v1430 = vadd.f32 %v1411, %v1429
    %v1431 = vpop.f32.mrf.mxu0
    %v1432 = vadd.f32 %v1413, %v1431
    %1433 = vmatmul.bf16.gmra.mxu0 %v190
    %v1434 = vpop.f32.mrf.mxu0
    %v1435 = vadd.f32 %v1416, %v1434
    %v1436 = vpop.f32.mrf.mxu0
    %v1437 = vadd.f32 %v1418, %v1436
    %1438 = vdwg.mxu0
    %1439 = vmatpush.bf16.msra.mxu0 %v961
    %1440 = vmatpush.bf16.msra.mxu0 %v958
    %1441 = vmatpush.bf16.msra.mxu0 %v955
    %1442 = vmatpush.bf16.msra.mxu0 %v952
    %1443 = vmatpush.bf16.msra.mxu0 %v949
    %1444 = vmatpush.bf16.msra.mxu0 %v946
    %1445 = vmatpush.bf16.msra.mxu0 %v943
    %1446 = vmatpush.bf16.msra.mxu0 %v940
    %1447 = vmatmul.bf16.gmra.mxu0 %v185
    %v1448 = vpop.f32.mrf.mxu0
    %v1449 = vadd.f32 %v1430, %v1448
    %v1450 = vpop.f32.mrf.mxu0
    %v1451 = vadd.f32 %v1432, %v1450
    %1452 = vmatmul.bf16.gmra.mxu0 %v191
    %v1453 = vpop.f32.mrf.mxu0
    %v1454 = vadd.f32 %v1435, %v1453
    %v1455 = vpop.f32.mrf.mxu0
    %v1456 = vadd.f32 %v1437, %v1455
    %1457 = vdwg.mxu0
    %1458 = vmatpush.bf16.msra.mxu0 %v985
    %1459 = vmatpush.bf16.msra.mxu0 %v982
    %1460 = vmatpush.bf16.msra.mxu0 %v979
    %1461 = vmatpush.bf16.msra.mxu0 %v976
    %1462 = vmatpush.bf16.msra.mxu0 %v973
    %1463 = vmatpush.bf16.msra.mxu0 %v970
    %1464 = vmatpush.bf16.msra.mxu0 %v967
    %1465 = vmatpush.bf16.msra.mxu0 %v964
    %1466 = vmatmul.bf16.gmra.mxu0 %v186
    %v1467 = vpop.f32.mrf.mxu0
    %v1468 = vadd.f32 %v1449, %v1467
    %v1469 = vpop.f32.mrf.mxu0
    %v1470 = vadd.f32 %v1451, %v1469
    %1471 = vmatmul.bf16.gmra.mxu0 %v192
    %v1472 = vpop.f32.mrf.mxu0
    %v1473 = vadd.f32 %v1454, %v1472
    %v1474 = vpop.f32.mrf.mxu0
    %v1475 = vadd.f32 %v1456, %v1474
    %1476 = vdwg.mxu0
    %1477 = vmatpush.bf16.msra.mxu0 %v1009
    %1478 = vmatpush.bf16.msra.mxu0 %v1006
    %1479 = vmatpush.bf16.msra.mxu0 %v1003
    %1480 = vmatpush.bf16.msra.mxu0 %v1000
    %1481 = vmatpush.bf16.msra.mxu0 %v997
    %1482 = vmatpush.bf16.msra.mxu0 %v994
    %1483 = vmatpush.bf16.msra.mxu0 %v991
    %1484 = vmatpush.bf16.msra.mxu0 %v988
    %1485 = vmatmul.bf16.gmra.mxu0 %v187
    %v1486 = vpop.f32.mrf.mxu0
    %v1487 = vadd.f32 %v1468, %v1486
    %v1488 = vpop.f32.mrf.mxu0
    %v1489 = vadd.f32 %v1470, %v1488
    %1490 = vmatmul.bf16.gmra.mxu0 %v193
    %v1491 = vpop.f32.mrf.mxu0
    %v1492 = vadd.f32 %v1473, %v1491
    %v1493 = vpop.f32.mrf.mxu0
    %v1494 = vadd.f32 %v1475, %v1493
    %1495 = vdwg.mxu0
    %1496 = vst [vmem:[%s4] sm:$0xff] %v1259
    %1497 = vst [vmem:[%s4 + $0x8] sm:$0xff] %v1373
    %1498 = vst [vmem:[%s4 + $0x10] sm:$0xff] %v1487
    %1499 = vst [vmem:[%s4 + $0x18] sm:$0xff] %v1261
    %1500 = vst [vmem:[%s4 + $0x20] sm:$0xff] %v1375
    %1501 = vst [vmem:[%s4 + $0x28] sm:$0xff] %v1489
    %1502 = vst [vmem:[%s4 + $0x30] sm:$0xff] %v1264
    %1503 = vst [vmem:[%s4 + $0x38] sm:$0xff] %v1378
    %1504 = vst [vmem:[%s4 + $0x40] sm:$0xff] %v1492
    %1505 = vst [vmem:[%s4 + $0x48] sm:$0xff] %v1266
    %1506 = vst [vmem:[%s4 + $0x50] sm:$0xff] %v1380
    %1507 = vst [vmem:[%s4 + $0x58] sm:$0xff] %v1494
    // Predicated region
    $region41: #{swin_block4_forward.8} parent=1 // pred_check
      _
    $region42: #{swin_block4_forward.8} parent=1 // pred_check_branch
      %1509 = sbr.rel (0) target = $region44
    $region43: #{swin_block4_forward.8} parent=1 // pred_region
      _
    $region44: #{swin_block4_forward.8} parent=1 // pred_fallthru
      _
    // Predicated region
    $region45: #{swin_block4_forward.8} parent=1 // pred_check
      _
    $region46: #{swin_block4_forward.8} parent=1 // pred_check_branch
      %1511 = sbr.rel (0) target = $region48
    $region47: #{swin_block4_forward.8} parent=1 // pred_region
      _
    $region48: #{swin_block4_forward.8} parent=1 // pred_fallthru
      _

// kernel: swin_block4_forward.10
$region0: #{swin_block4_forward.10}
  #allocation0 [shape = 'u32[]', space=smem, size = 0x4, offset = 0x4, fixed_abs, tag = 'smem constant byte address 0x4 - core index']
  #allocation1 [shape = 'u32[72,128]{1,0:T(1,128)}', space=vmem, size = 0x9000, scoped, tag = 'internal scratch']
  %s0 = inlined_call_operand.vmem [shape: f32[32,128], index: 0, kind: input, shape index: {}]
  %s1 = inlined_call_operand.vmem [shape: bf16[128,768], index: 1, kind: input, shape index: {}]
  %s2 = inlined_call_operand.vmem [shape: f32[1,768], index: 2, kind: input, shape index: {}]
  %s3 = inlined_call_operand.vmem [shape: f32[32,1536], index: 3, kind: input, shape index: {}]
  %s4 = inlined_call_operand.vmem [shape: f32[1,768], index: 4, kind: input, shape index: {}]
  %s5 = inlined_call_operand.vmem [shape: f32[1,768], index: 5, kind: input, shape index: {}]
  %s6 = inlined_call_operand.vmem [shape: f32[32,1536], index: 6, kind: output, shape index: {}]
  %s7 = sld [smem:[#allocation0]]
  $region34: #{swin_block4_forward.10} parent=0
    _
  %s9 = ssub.s32 1, %s7
  %s10 = scalar_select 0, %s9, %s7
  // Predicated region
  $region2: #{swin_block4_forward.10} parent=0 // pred_check
    _
  $region3: #{swin_block4_forward.10} parent=0 // pred_check_branch
    %12 = sbr.rel (0) target = $region5
  $region4: #{swin_block4_forward.10} parent=0 // pred_region
    _
  $region5: #{swin_block4_forward.10} parent=0 // pred_fallthru
    _
  // Predicated region
  $region6: #{swin_block4_forward.10} parent=0 // pred_check
    _
  $region7: #{swin_block4_forward.10} parent=0 // pred_check_branch
    %14 = sbr.rel (0) target = $region9
  $region8: #{swin_block4_forward.10} parent=0 // pred_region
    _
  $region9: #{swin_block4_forward.10} parent=0 // pred_fallthru
    _
  // Predicated region
  $region10: #{swin_block4_forward.10} parent=0 // pred_check
    _
  $region11: #{swin_block4_forward.10} parent=0 // pred_check_branch
    %16 = sbr.rel (0) target = $region13
  $region12: #{swin_block4_forward.10} parent=0 // pred_region
    _
  $region13: #{swin_block4_forward.10} parent=0 // pred_fallthru
    _
  // Predicated region
  $region14: #{swin_block4_forward.10} parent=0 // pred_check
    _
  $region15: #{swin_block4_forward.10} parent=0 // pred_check_branch
    %18 = sbr.rel (0) target = $region17
  $region16: #{swin_block4_forward.10} parent=0 // pred_region
    _
  $region17: #{swin_block4_forward.10} parent=0 // pred_fallthru
    _
  // Predicated region
  $region18: #{swin_block4_forward.10} parent=0 // pred_check
    _
  $region19: #{swin_block4_forward.10} parent=0 // pred_check_branch
    %20 = sbr.rel (0) target = $region21
  $region20: #{swin_block4_forward.10} parent=0 // pred_region
    _
  $region21: #{swin_block4_forward.10} parent=0 // pred_fallthru
    _
  // Predicated region
  $region22: #{swin_block4_forward.10} parent=0 // pred_check
    _
  $region23: #{swin_block4_forward.10} parent=0 // pred_check_branch
    %22 = sbr.rel (0) target = $region25
  $region24: #{swin_block4_forward.10} parent=0 // pred_region
    _
  $region25: #{swin_block4_forward.10} parent=0 // pred_fallthru
    _
  %v23 = vld [vmem:[%s0] sm:$0xff]
  %v24 = vld [vmem:[%s0 + $0x8] sm:$0xff]
  %v25 = vld [vmem:[%s0 + $0x10] sm:$0xff]
  %v26 = vld [vmem:[%s0 + $0x18] sm:$0xff]
  %v27 = vpack.c.bf16 %v24, %v23
  %v28 = vpack.c.bf16 %v26, %v25
  %v29 = vld [vmem:[%s1] sm:$0xff]
  %v30 = vld [vmem:[%s1 + $0x8] sm:$0xff]
  %v31 = vld [vmem:[%s1 + $0x10] sm:$0xff]
  %v32 = vld [vmem:[%s1 + $0x18] sm:$0xff]
  %v33 = vld [vmem:[%s1 + $0x20] sm:$0xff]
  %v34 = vld [vmem:[%s1 + $0x28] sm:$0xff]
  %v35 = vld [vmem:[%s1 + $0x30] sm:$0xff]
  %v36 = vld [vmem:[%s1 + $0x38] sm:$0xff]
  %v37 = vld [vmem:[%s1 + $0x40] sm:$0xff]
  %v38 = vld [vmem:[%s1 + $0x48] sm:$0xff]
  %v39 = vld [vmem:[%s1 + $0x50] sm:$0xff]
  %v40 = vld [vmem:[%s1 + $0x58] sm:$0xff]
  %v41 = vld [vmem:[%s1 + $0x60] sm:$0xff]
  %v42 = vld [vmem:[%s1 + $0x68] sm:$0xff]
  %v43 = vld [vmem:[%s1 + $0x70] sm:$0xff]
  %v44 = vld [vmem:[%s1 + $0x78] sm:$0xff]
  %v45 = vld [vmem:[%s1 + $0x80] sm:$0xff]
  %v46 = vld [vmem:[%s1 + $0x88] sm:$0xff]
  %v47 = vld [vmem:[%s1 + $0x90] sm:$0xff]
  %v48 = vld [vmem:[%s1 + $0x98] sm:$0xff]
  %v49 = vld [vmem:[%s1 + $0xa0] sm:$0xff]
  %v50 = vld [vmem:[%s1 + $0xa8] sm:$0xff]
  %v51 = vld [vmem:[%s1 + $0xb0] sm:$0xff]
  %v52 = vld [vmem:[%s1 + $0xb8] sm:$0xff]
  %v53 = vld [vmem:[%s1 + $0xc0] sm:$0xff]
  %v54 = vld [vmem:[%s1 + $0xc8] sm:$0xff]
  %v55 = vld [vmem:[%s1 + $0xd0] sm:$0xff]
  %v56 = vld [vmem:[%s1 + $0xd8] sm:$0xff]
  %v57 = vld [vmem:[%s1 + $0xe0] sm:$0xff]
  %v58 = vld [vmem:[%s1 + $0xe8] sm:$0xff]
  %v59 = vld [vmem:[%s1 + $0xf0] sm:$0xff]
  %v60 = vld [vmem:[%s1 + $0xf8] sm:$0xff]
  %v61 = vld [vmem:[%s1 + $0x100] sm:$0xff]
  %v62 = vld [vmem:[%s1 + $0x108] sm:$0xff]
  %v63 = vld [vmem:[%s1 + $0x110] sm:$0xff]
  %v64 = vld [vmem:[%s1 + $0x118] sm:$0xff]
  %v65 = vld [vmem:[%s1 + $0x120] sm:$0xff]
  %v66 = vld [vmem:[%s1 + $0x128] sm:$0xff]
  %v67 = vld [vmem:[%s1 + $0x130] sm:$0xff]
  %v68 = vld [vmem:[%s1 + $0x138] sm:$0xff]
  %v69 = vld [vmem:[%s1 + $0x140] sm:$0xff]
  %v70 = vld [vmem:[%s1 + $0x148] sm:$0xff]
  %v71 = vld [vmem:[%s1 + $0x150] sm:$0xff]
  %v72 = vld [vmem:[%s1 + $0x158] sm:$0xff]
  %v73 = vld [vmem:[%s1 + $0x160] sm:$0xff]
  %v74 = vld [vmem:[%s1 + $0x168] sm:$0xff]
  %v75 = vld [vmem:[%s1 + $0x170] sm:$0xff]
  %v76 = vld [vmem:[%s1 + $0x178] sm:$0xff]
  %v77 = vld [vmem:[%s2] sm:$0x3f]
  %v79 = vperm.slane %v77, 0
  %v80 = vperm.slane %v77, 1
  %v81 = vperm.slane %v77, 2
  %v82 = vperm.slane %v77, 3
  %v83 = vperm.slane %v77, 4
  %v84 = vperm.slane %v77, 5
  %v139 = vunpack.c.l.b16 %v29
  %v140 = vunpack.c.h.b16 %v29
  %v141 = vunpack.c.l.b16 %v30
  %v142 = vunpack.c.h.b16 %v30
  %v143 = vunpack.c.l.b16 %v31
  %v144 = vunpack.c.h.b16 %v31
  %v145 = vunpack.c.l.b16 %v32
  %v146 = vunpack.c.h.b16 %v32
  %v147 = vunpack.c.l.b16 %v33
  %v148 = vunpack.c.h.b16 %v33
  %v149 = vunpack.c.l.b16 %v34
  %v150 = vunpack.c.h.b16 %v34
  %v151 = vunpack.c.l.b16 %v35
  %v152 = vunpack.c.h.b16 %v35
  %v153 = vunpack.c.l.b16 %v36
  %v154 = vunpack.c.h.b16 %v36
  %v155 = vunpack.c.l.b16 %v37
  %v156 = vunpack.c.h.b16 %v37
  %v157 = vunpack.c.l.b16 %v38
  %v158 = vunpack.c.h.b16 %v38
  %v159 = vunpack.c.l.b16 %v39
  %v160 = vunpack.c.h.b16 %v39
  %v161 = vunpack.c.l.b16 %v40
  %v162 = vunpack.c.h.b16 %v40
  %v163 = vunpack.c.l.b16 %v41
  %v164 = vunpack.c.h.b16 %v41
  %v165 = vunpack.c.l.b16 %v42
  %v166 = vunpack.c.h.b16 %v42
  %v167 = vunpack.c.l.b16 %v43
  %v168 = vunpack.c.h.b16 %v43
  %v169 = vunpack.c.l.b16 %v44
  %v170 = vunpack.c.h.b16 %v44
  %v171 = vunpack.c.l.b16 %v45
  %v172 = vunpack.c.h.b16 %v45
  %v173 = vunpack.c.l.b16 %v46
  %v174 = vunpack.c.h.b16 %v46
  %v175 = vunpack.c.l.b16 %v47
  %v176 = vunpack.c.h.b16 %v47
  %v177 = vunpack.c.l.b16 %v48
  %v178 = vunpack.c.h.b16 %v48
  %v179 = vunpack.c.l.b16 %v49
  %v180 = vunpack.c.h.b16 %v49
  %v181 = vunpack.c.l.b16 %v50
  %v182 = vunpack.c.h.b16 %v50
  %v183 = vunpack.c.l.b16 %v51
  %v184 = vunpack.c.h.b16 %v51
  %v185 = vunpack.c.l.b16 %v52
  %v186 = vunpack.c.h.b16 %v52
  %v187 = vunpack.c.l.b16 %v53
  %v188 = vunpack.c.h.b16 %v53
  %v189 = vunpack.c.l.b16 %v54
  %v190 = vunpack.c.h.b16 %v54
  %v191 = vunpack.c.l.b16 %v55
  %v192 = vunpack.c.h.b16 %v55
  %v193 = vunpack.c.l.b16 %v56
  %v194 = vunpack.c.h.b16 %v56
  %v195 = vunpack.c.l.b16 %v57
  %v196 = vunpack.c.h.b16 %v57
  %v197 = vunpack.c.l.b16 %v58
  %v198 = vunpack.c.h.b16 %v58
  %v199 = vunpack.c.l.b16 %v59
  %v200 = vunpack.c.h.b16 %v59
  %v201 = vunpack.c.l.b16 %v60
  %v202 = vunpack.c.h.b16 %v60
  %v203 = vunpack.c.l.b16 %v61
  %v204 = vunpack.c.h.b16 %v61
  %v205 = vunpack.c.l.b16 %v62
  %v206 = vunpack.c.h.b16 %v62
  %v207 = vunpack.c.l.b16 %v63
  %v208 = vunpack.c.h.b16 %v63
  %v209 = vunpack.c.l.b16 %v64
  %v210 = vunpack.c.h.b16 %v64
  %v211 = vunpack.c.l.b16 %v65
  %v212 = vunpack.c.h.b16 %v65
  %v213 = vunpack.c.l.b16 %v66
  %v214 = vunpack.c.h.b16 %v66
  %v215 = vunpack.c.l.b16 %v67
  %v216 = vunpack.c.h.b16 %v67
  %v217 = vunpack.c.l.b16 %v68
  %v218 = vunpack.c.h.b16 %v68
  %v219 = vunpack.c.l.b16 %v69
  %v220 = vunpack.c.h.b16 %v69
  %v221 = vunpack.c.l.b16 %v70
  %v222 = vunpack.c.h.b16 %v70
  %v223 = vunpack.c.l.b16 %v71
  %v224 = vunpack.c.h.b16 %v71
  %v225 = vunpack.c.l.b16 %v72
  %v226 = vunpack.c.h.b16 %v72
  %v227 = vunpack.c.l.b16 %v73
  %v228 = vunpack.c.h.b16 %v73
  %v229 = vunpack.c.l.b16 %v74
  %v230 = vunpack.c.h.b16 %v74
  %v231 = vunpack.c.l.b16 %v75
  %v232 = vunpack.c.h.b16 %v75
  %v233 = vunpack.c.l.b16 %v76
  %v234 = vunpack.c.h.b16 %v76
  %v235 = vpack.c.b16 %v145, %v139
  %v236 = vpack.c.b16 %v146, %v140
  %v237 = vpack.c.b16 %v147, %v141
  %v238 = vpack.c.b16 %v148, %v142
  %v239 = vpack.c.b16 %v149, %v143
  %v240 = vpack.c.b16 %v150, %v144
  %v241 = vpack.c.b16 %v157, %v151
  %v242 = vpack.c.b16 %v158, %v152
  %v243 = vpack.c.b16 %v159, %v153
  %v244 = vpack.c.b16 %v160, %v154
  %v245 = vpack.c.b16 %v161, %v155
  %v246 = vpack.c.b16 %v162, %v156
  %v247 = vpack.c.b16 %v169, %v163
  %v248 = vpack.c.b16 %v170, %v164
  %v249 = vpack.c.b16 %v171, %v165
  %v250 = vpack.c.b16 %v172, %v166
  %v251 = vpack.c.b16 %v173, %v167
  %v252 = vpack.c.b16 %v174, %v168
  %v253 = vpack.c.b16 %v181, %v175
  %v254 = vpack.c.b16 %v182, %v176
  %v255 = vpack.c.b16 %v183, %v177
  %v256 = vpack.c.b16 %v184, %v178
  %v257 = vpack.c.b16 %v185, %v179
  %v258 = vpack.c.b16 %v186, %v180
  %v259 = vpack.c.b16 %v193, %v187
  %v260 = vpack.c.b16 %v194, %v188
  %v261 = vpack.c.b16 %v195, %v189
  %v262 = vpack.c.b16 %v196, %v190
  %v263 = vpack.c.b16 %v197, %v191
  %v264 = vpack.c.b16 %v198, %v192
  %v265 = vpack.c.b16 %v205, %v199
  %v266 = vpack.c.b16 %v206, %v200
  %v267 = vpack.c.b16 %v207, %v201
  %v268 = vpack.c.b16 %v208, %v202
  %v269 = vpack.c.b16 %v209, %v203
  %v270 = vpack.c.b16 %v210, %v204
  %v271 = vpack.c.b16 %v217, %v211
  %v272 = vpack.c.b16 %v218, %v212
  %v273 = vpack.c.b16 %v219, %v213
  %v274 = vpack.c.b16 %v220, %v214
  %v275 = vpack.c.b16 %v221, %v215
  %v276 = vpack.c.b16 %v222, %v216
  %v277 = vpack.c.b16 %v229, %v223
  %v278 = vpack.c.b16 %v230, %v224
  %v279 = vpack.c.b16 %v231, %v225
  %v280 = vpack.c.b16 %v232, %v226
  %v281 = vpack.c.b16 %v233, %v227
  %v282 = vpack.c.b16 %v234, %v228
  %331 = vmatpush.bf16.msra.mxu0 %v277
  %332 = vmatpush.bf16.msra.mxu0 %v271
  %333 = vmatpush.bf16.msra.mxu0 %v265
  %334 = vmatpush.bf16.msra.mxu0 %v259
  %335 = vmatpush.bf16.msra.mxu0 %v253
  %336 = vmatpush.bf16.msra.mxu0 %v247
  %337 = vmatpush.bf16.msra.mxu0 %v241
  %338 = vmatpush.bf16.msra.mxu0 %v235
  %339 = vmatmul.bf16.gmra.mxu0 %v27
  %v340 = vpop.f32.mrf.mxu0
  %v341 = vadd.f32 %v79, %v340
  %v342 = vpop.f32.mrf.mxu0
  %v343 = vadd.f32 %v79, %v342
  %344 = vmatmul.bf16.gmra.mxu0 %v28
  %v345 = vpop.f32.mrf.mxu0
  %v346 = vadd.f32 %v79, %v345
  %v347 = vpop.f32.mrf.mxu0
  %v348 = vadd.f32 %v79, %v347
  %349 = vdwg.mxu0
  %350 = vmatpush.bf16.msra.mxu0 %v278
  %351 = vmatpush.bf16.msra.mxu0 %v272
  %352 = vmatpush.bf16.msra.mxu0 %v266
  %353 = vmatpush.bf16.msra.mxu0 %v260
  %354 = vmatpush.bf16.msra.mxu0 %v254
  %355 = vmatpush.bf16.msra.mxu0 %v248
  %356 = vmatpush.bf16.msra.mxu0 %v242
  %357 = vmatpush.bf16.msra.mxu0 %v236
  %358 = vmatmul.bf16.gmra.mxu0 %v27
  %v359 = vpop.f32.mrf.mxu0
  %v360 = vadd.f32 %v80, %v359
  %v361 = vpop.f32.mrf.mxu0
  %v362 = vadd.f32 %v80, %v361
  %363 = vmatmul.bf16.gmra.mxu0 %v28
  %v364 = vpop.f32.mrf.mxu0
  %v365 = vadd.f32 %v80, %v364
  %v366 = vpop.f32.mrf.mxu0
  %v367 = vadd.f32 %v80, %v366
  %368 = vdwg.mxu0
  %369 = vmatpush.bf16.msra.mxu0 %v279
  %370 = vmatpush.bf16.msra.mxu0 %v273
  %371 = vmatpush.bf16.msra.mxu0 %v267
  %372 = vmatpush.bf16.msra.mxu0 %v261
  %373 = vmatpush.bf16.msra.mxu0 %v255
  %374 = vmatpush.bf16.msra.mxu0 %v249
  %375 = vmatpush.bf16.msra.mxu0 %v243
  %376 = vmatpush.bf16.msra.mxu0 %v237
  %377 = vmatmul.bf16.gmra.mxu0 %v27
  %v378 = vpop.f32.mrf.mxu0
  %v379 = vadd.f32 %v81, %v378
  %v380 = vpop.f32.mrf.mxu0
  %v381 = vadd.f32 %v81, %v380
  %382 = vmatmul.bf16.gmra.mxu0 %v28
  %v383 = vpop.f32.mrf.mxu0
  %v384 = vadd.f32 %v81, %v383
  %v385 = vpop.f32.mrf.mxu0
  %v386 = vadd.f32 %v81, %v385
  %387 = vdwg.mxu0
  %388 = vmatpush.bf16.msra.mxu0 %v280
  %389 = vmatpush.bf16.msra.mxu0 %v274
  %390 = vmatpush.bf16.msra.mxu0 %v268
  %391 = vmatpush.bf16.msra.mxu0 %v262
  %392 = vmatpush.bf16.msra.mxu0 %v256
  %393 = vmatpush.bf16.msra.mxu0 %v250
  %394 = vmatpush.bf16.msra.mxu0 %v244
  %395 = vmatpush.bf16.msra.mxu0 %v238
  %396 = vmatmul.bf16.gmra.mxu0 %v27
  %v397 = vpop.f32.mrf.mxu0
  %v398 = vadd.f32 %v82, %v397
  %v399 = vpop.f32.mrf.mxu0
  %v400 = vadd.f32 %v82, %v399
  %401 = vmatmul.bf16.gmra.mxu0 %v28
  %v402 = vpop.f32.mrf.mxu0
  %v403 = vadd.f32 %v82, %v402
  %v404 = vpop.f32.mrf.mxu0
  %v405 = vadd.f32 %v82, %v404
  %406 = vdwg.mxu0
  %407 = vmatpush.bf16.msra.mxu0 %v281
  %408 = vmatpush.bf16.msra.mxu0 %v275
  %409 = vmatpush.bf16.msra.mxu0 %v269
  %410 = vmatpush.bf16.msra.mxu0 %v263
  %411 = vmatpush.bf16.msra.mxu0 %v257
  %412 = vmatpush.bf16.msra.mxu0 %v251
  %413 = vmatpush.bf16.msra.mxu0 %v245
  %414 = vmatpush.bf16.msra.mxu0 %v239
  %415 = vmatmul.bf16.gmra.mxu0 %v27
  %v416 = vpop.f32.mrf.mxu0
  %v417 = vadd.f32 %v83, %v416
  %v418 = vpop.f32.mrf.mxu0
  %v419 = vadd.f32 %v83, %v418
  %420 = vmatmul.bf16.gmra.mxu0 %v28
  %v421 = vpop.f32.mrf.mxu0
  %v422 = vadd.f32 %v83, %v421
  %v423 = vpop.f32.mrf.mxu0
  %v424 = vadd.f32 %v83, %v423
  %425 = vdwg.mxu0
  %426 = vmatpush.bf16.msra.mxu0 %v282
  %427 = vmatpush.bf16.msra.mxu0 %v276
  %428 = vmatpush.bf16.msra.mxu0 %v270
  %429 = vmatpush.bf16.msra.mxu0 %v264
  %430 = vmatpush.bf16.msra.mxu0 %v258
  %431 = vmatpush.bf16.msra.mxu0 %v252
  %432 = vmatpush.bf16.msra.mxu0 %v246
  %433 = vmatpush.bf16.msra.mxu0 %v240
  %434 = vmatmul.bf16.gmra.mxu0 %v27
  %v435 = vpop.f32.mrf.mxu0
  %v436 = vadd.f32 %v84, %v435
  %v437 = vpop.f32.mrf.mxu0
  %v438 = vadd.f32 %v84, %v437
  %439 = vmatmul.bf16.gmra.mxu0 %v28
  %v440 = vpop.f32.mrf.mxu0
  %v441 = vadd.f32 %v84, %v440
  %v442 = vpop.f32.mrf.mxu0
  %v443 = vadd.f32 %v84, %v442
  %444 = vdwg.mxu0
  %v445 = vld [vmem:[%s3] sm:$0xff]
  %v446 = vld [vmem:[%s3 + $0x8] sm:$0xff]
  %v447 = vld [vmem:[%s3 + $0x10] sm:$0xff]
  %v448 = vld [vmem:[%s3 + $0x18] sm:$0xff]
  %v449 = vld [vmem:[%s3 + $0x20] sm:$0xff]
  %v450 = vld [vmem:[%s3 + $0x28] sm:$0xff]
  %v451 = vld [vmem:[%s3 + $0x30] sm:$0xff]
  %v452 = vld [vmem:[%s3 + $0x38] sm:$0xff]
  %v453 = vld [vmem:[%s3 + $0x40] sm:$0xff]
  %v454 = vld [vmem:[%s3 + $0x48] sm:$0xff]
  %v455 = vld [vmem:[%s3 + $0x50] sm:$0xff]
  %v456 = vld [vmem:[%s3 + $0x58] sm:$0xff]
  %v457 = vld [vmem:[%s3 + $0x60] sm:$0xff]
  %v458 = vld [vmem:[%s3 + $0x68] sm:$0xff]
  %v459 = vld [vmem:[%s3 + $0x70] sm:$0xff]
  %v460 = vld [vmem:[%s3 + $0x78] sm:$0xff]
  %v461 = vld [vmem:[%s3 + $0x80] sm:$0xff]
  %v462 = vld [vmem:[%s3 + $0x88] sm:$0xff]
  %v463 = vld [vmem:[%s3 + $0x90] sm:$0xff]
  %v464 = vld [vmem:[%s3 + $0x98] sm:$0xff]
  %v465 = vld [vmem:[%s3 + $0xa0] sm:$0xff]
  %v466 = vld [vmem:[%s3 + $0xa8] sm:$0xff]
  %v467 = vld [vmem:[%s3 + $0xb0] sm:$0xff]
  %v468 = vld [vmem:[%s3 + $0xb8] sm:$0xff]
  %v469 = vld [vmem:[%s3 + $0xc0] sm:$0xff]
  %v470 = vld [vmem:[%s3 + $0xc8] sm:$0xff]
  %v471 = vld [vmem:[%s3 + $0xd0] sm:$0xff]
  %v472 = vld [vmem:[%s3 + $0xd8] sm:$0xff]
  %v473 = vld [vmem:[%s3 + $0xe0] sm:$0xff]
  %v474 = vld [vmem:[%s3 + $0xe8] sm:$0xff]
  %v475 = vld [vmem:[%s3 + $0xf0] sm:$0xff]
  %v476 = vld [vmem:[%s3 + $0xf8] sm:$0xff]
  %v477 = vld [vmem:[%s3 + $0x100] sm:$0xff]
  %v478 = vld [vmem:[%s3 + $0x108] sm:$0xff]
  %v479 = vld [vmem:[%s3 + $0x110] sm:$0xff]
  %v480 = vld [vmem:[%s3 + $0x118] sm:$0xff]
  %v481 = vld [vmem:[%s3 + $0x120] sm:$0xff]
  %v482 = vld [vmem:[%s3 + $0x128] sm:$0xff]
  %v483 = vld [vmem:[%s3 + $0x130] sm:$0xff]
  %v484 = vld [vmem:[%s3 + $0x138] sm:$0xff]
  %v485 = vld [vmem:[%s3 + $0x140] sm:$0xff]
  %v486 = vld [vmem:[%s3 + $0x148] sm:$0xff]
  %v487 = vld [vmem:[%s3 + $0x150] sm:$0xff]
  %v488 = vld [vmem:[%s3 + $0x158] sm:$0xff]
  %v489 = vld [vmem:[%s3 + $0x160] sm:$0xff]
  %v490 = vld [vmem:[%s3 + $0x168] sm:$0xff]
  %v491 = vld [vmem:[%s3 + $0x170] sm:$0xff]
  %v492 = vld [vmem:[%s3 + $0x178] sm:$0xff]
  %v493 = vadd.f32 %v341, %v445
  %v494 = vadd.f32 %v360, %v446
  %v495 = vadd.f32 %v379, %v447
  %v496 = vadd.f32 %v398, %v448
  %v497 = vadd.f32 %v417, %v449
  %v498 = vadd.f32 %v436, %v450
  %v499 = vadd.f32 %v343, %v457
  %v500 = vadd.f32 %v362, %v458
  %v501 = vadd.f32 %v381, %v459
  %v502 = vadd.f32 %v400, %v460
  %v503 = vadd.f32 %v419, %v461
  %v504 = vadd.f32 %v438, %v462
  %v505 = vadd.f32 %v346, %v469
  %v506 = vadd.f32 %v365, %v470
  %v507 = vadd.f32 %v384, %v471
  %v508 = vadd.f32 %v403, %v472
  %v509 = vadd.f32 %v422, %v473
  %v510 = vadd.f32 %v441, %v474
  %v511 = vadd.f32 %v348, %v481
  %v512 = vadd.f32 %v367, %v482
  %v513 = vadd.f32 %v386, %v483
  %v514 = vadd.f32 %v405, %v484
  %v515 = vadd.f32 %v424, %v485
  %v516 = vadd.f32 %v443, %v486
  %517 = vst [vmem:[%s6] sm:$0xff] %v493
  %518 = vst [vmem:[%s6 + $0x8] sm:$0xff] %v494
  %519 = vst [vmem:[%s6 + $0x10] sm:$0xff] %v495
  %520 = vst [vmem:[%s6 + $0x18] sm:$0xff] %v496
  %521 = vst [vmem:[%s6 + $0x20] sm:$0xff] %v497
  %522 = vst [vmem:[%s6 + $0x28] sm:$0xff] %v498
  %523 = vst [vmem:[%s6 + $0x60] sm:$0xff] %v499
  %524 = vst [vmem:[%s6 + $0x68] sm:$0xff] %v500
  %525 = vst [vmem:[%s6 + $0x70] sm:$0xff] %v501
  %526 = vst [vmem:[%s6 + $0x78] sm:$0xff] %v502
  %527 = vst [vmem:[%s6 + $0x80] sm:$0xff] %v503
  %528 = vst [vmem:[%s6 + $0x88] sm:$0xff] %v504
  %529 = vst [vmem:[%s6 + $0xc0] sm:$0xff] %v505
  %530 = vst [vmem:[%s6 + $0xc8] sm:$0xff] %v506
  %531 = vst [vmem:[%s6 + $0xd0] sm:$0xff] %v507
  %532 = vst [vmem:[%s6 + $0xd8] sm:$0xff] %v508
  %533 = vst [vmem:[%s6 + $0xe0] sm:$0xff] %v509
  %534 = vst [vmem:[%s6 + $0xe8] sm:$0xff] %v510
  %535 = vst [vmem:[%s6 + $0x120] sm:$0xff] %v511
  %536 = vst [vmem:[%s6 + $0x128] sm:$0xff] %v512
  %537 = vst [vmem:[%s6 + $0x130] sm:$0xff] %v513
  %538 = vst [vmem:[%s6 + $0x138] sm:$0xff] %v514
  %539 = vst [vmem:[%s6 + $0x140] sm:$0xff] %v515
  %540 = vst [vmem:[%s6 + $0x148] sm:$0xff] %v516
  %v541 = vld [vmem:[%s4] sm:$0x3f]
  %v542 = vadd.f32 %v541, 1.0
  %v544 = vperm.slane %v542, 0
  %v545 = vperm.slane %v542, 1
  %v546 = vperm.slane %v542, 2
  %v547 = vperm.slane %v542, 3
  %v548 = vperm.slane %v542, 4
  %v549 = vperm.slane %v542, 5
  %v556 = vmul.f32 %v451, %v544
  %v557 = vmul.f32 %v452, %v545
  %v558 = vmul.f32 %v453, %v546
  %v559 = vmul.f32 %v454, %v547
  %v560 = vmul.f32 %v455, %v548
  %v561 = vmul.f32 %v456, %v549
  %v562 = vmul.f32 %v463, %v544
  %v563 = vmul.f32 %v464, %v545
  %v564 = vmul.f32 %v465, %v546
  %v565 = vmul.f32 %v466, %v547
  %v566 = vmul.f32 %v467, %v548
  %v567 = vmul.f32 %v468, %v549
  %v568 = vmul.f32 %v475, %v544
  %v569 = vmul.f32 %v476, %v545
  %v570 = vmul.f32 %v477, %v546
  %v571 = vmul.f32 %v478, %v547
  %v572 = vmul.f32 %v479, %v548
  %v573 = vmul.f32 %v480, %v549
  %v574 = vmul.f32 %v487, %v544
  %v575 = vmul.f32 %v488, %v545
  %v576 = vmul.f32 %v489, %v546
  %v577 = vmul.f32 %v490, %v547
  %v578 = vmul.f32 %v491, %v548
  %v579 = vmul.f32 %v492, %v549
  %v580 = vld [vmem:[%s5] sm:$0x3f]
  %v582 = vperm.slane %v580, 0
  %v583 = vperm.slane %v580, 1
  %v584 = vperm.slane %v580, 2
  %v585 = vperm.slane %v580, 3
  %v586 = vperm.slane %v580, 4
  %v587 = vperm.slane %v580, 5
  %v594 = vadd.f32 %v556, %v582
  %v595 = vadd.f32 %v557, %v583
  %v596 = vadd.f32 %v558, %v584
  %v597 = vadd.f32 %v559, %v585
  %v598 = vadd.f32 %v560, %v586
  %v599 = vadd.f32 %v561, %v587
  %v600 = vadd.f32 %v562, %v582
  %v601 = vadd.f32 %v563, %v583
  %v602 = vadd.f32 %v564, %v584
  %v603 = vadd.f32 %v565, %v585
  %v604 = vadd.f32 %v566, %v586
  %v605 = vadd.f32 %v567, %v587
  %v606 = vadd.f32 %v568, %v582
  %v607 = vadd.f32 %v569, %v583
  %v608 = vadd.f32 %v570, %v584
  %v609 = vadd.f32 %v571, %v585
  %v610 = vadd.f32 %v572, %v586
  %v611 = vadd.f32 %v573, %v587
  %v612 = vadd.f32 %v574, %v582
  %v613 = vadd.f32 %v575, %v583
  %v614 = vadd.f32 %v576, %v584
  %v615 = vadd.f32 %v577, %v585
  %v616 = vadd.f32 %v578, %v586
  %v617 = vadd.f32 %v579, %v587
  %618 = vst [vmem:[%s6 + $0x30] sm:$0xff] %v594
  %619 = vst [vmem:[%s6 + $0x38] sm:$0xff] %v595
  %620 = vst [vmem:[%s6 + $0x40] sm:$0xff] %v596
  %621 = vst [vmem:[%s6 + $0x48] sm:$0xff] %v597
  %622 = vst [vmem:[%s6 + $0x50] sm:$0xff] %v598
  %623 = vst [vmem:[%s6 + $0x58] sm:$0xff] %v599
  %624 = vst [vmem:[%s6 + $0x90] sm:$0xff] %v600
  %625 = vst [vmem:[%s6 + $0x98] sm:$0xff] %v601
  %626 = vst [vmem:[%s6 + $0xa0] sm:$0xff] %v602
  %627 = vst [vmem:[%s6 + $0xa8] sm:$0xff] %v603
  %628 = vst [vmem:[%s6 + $0xb0] sm:$0xff] %v604
  %629 = vst [vmem:[%s6 + $0xb8] sm:$0xff] %v605
  %630 = vst [vmem:[%s6 + $0xf0] sm:$0xff] %v606
  %631 = vst [vmem:[%s6 + $0xf8] sm:$0xff] %v607
  %632 = vst [vmem:[%s6 + $0x100] sm:$0xff] %v608
  %633 = vst [vmem:[%s6 + $0x108] sm:$0xff] %v609
  %634 = vst [vmem:[%s6 + $0x110] sm:$0xff] %v610
  %635 = vst [vmem:[%s6 + $0x118] sm:$0xff] %v611
  %636 = vst [vmem:[%s6 + $0x150] sm:$0xff] %v612
  %637 = vst [vmem:[%s6 + $0x158] sm:$0xff] %v613
  %638 = vst [vmem:[%s6 + $0x160] sm:$0xff] %v614
  %639 = vst [vmem:[%s6 + $0x168] sm:$0xff] %v615
  %640 = vst [vmem:[%s6 + $0x170] sm:$0xff] %v616
  %641 = vst [vmem:[%s6 + $0x178] sm:$0xff] %v617
  // Predicated region
  $region26: #{swin_block4_forward.10} parent=0 // pred_check
    _
  $region27: #{swin_block4_forward.10} parent=0 // pred_check_branch
    %643 = sbr.rel (0) target = $region29
  $region28: #{swin_block4_forward.10} parent=0 // pred_region
    _
  $region29: #{swin_block4_forward.10} parent=0 // pred_fallthru
    _
  // Predicated region
  $region30: #{swin_block4_forward.10} parent=0 // pred_check
    _
  $region31: #{swin_block4_forward.10} parent=0 // pred_check_branch
    %645 = sbr.rel (0) target = $region33
  $region32: #{swin_block4_forward.10} parent=0 // pred_region
    _
  $region33: #{swin_block4_forward.10} parent=0 // pred_fallthru
    _

// kernel: swin_block4_forward.13
$region0: #{swin_block4_forward.13}
  #allocation0 [shape = 'u32[]', space=smem, size = 0x4, offset = 0x4, fixed_abs, tag = 'smem constant byte address 0x4 - core index']
  #allocation1 [shape = 'u32[72,128]{1,0:T(1,128)}', space=vmem, size = 0x9000, scoped, tag = 'internal scratch']
  %s0 = inlined_call_operand.vmem [shape: f32[32,256], index: 0, kind: input, shape index: {}]
  %s1 = inlined_call_operand.vmem [shape: bf16[256,1536], index: 1, kind: input, shape index: {}]
  %s2 = inlined_call_operand.vmem [shape: f32[1,1536], index: 2, kind: input, shape index: {}]
  %s3 = inlined_call_operand.vmem [shape: f32[32,1536], index: 3, kind: input, shape index: {}]
  %s4 = inlined_call_operand.vmem [shape: f32[32,1536], index: 4, kind: output, shape index: {}]
  %s5 = sld [smem:[#allocation0]]
  $region26: #{swin_block4_forward.13} parent=0
    _
  %s7 = ssub.s32 1, %s5
  %s8 = scalar_select 0, %s7, %s5
  // Predicated region
  $region2: #{swin_block4_forward.13} parent=0 // pred_check
    _
  $region3: #{swin_block4_forward.13} parent=0 // pred_check_branch
    %10 = sbr.rel (0) target = $region5
  $region4: #{swin_block4_forward.13} parent=0 // pred_region
    _
  $region5: #{swin_block4_forward.13} parent=0 // pred_fallthru
    _
  // Predicated region
  $region6: #{swin_block4_forward.13} parent=0 // pred_check
    _
  $region7: #{swin_block4_forward.13} parent=0 // pred_check_branch
    %12 = sbr.rel (0) target = $region9
  $region8: #{swin_block4_forward.13} parent=0 // pred_region
    _
  $region9: #{swin_block4_forward.13} parent=0 // pred_fallthru
    _
  // Predicated region
  $region10: #{swin_block4_forward.13} parent=0 // pred_check
    _
  $region11: #{swin_block4_forward.13} parent=0 // pred_check_branch
    %14 = sbr.rel (0) target = $region13
  $region12: #{swin_block4_forward.13} parent=0 // pred_region
    _
  $region13: #{swin_block4_forward.13} parent=0 // pred_fallthru
    _
  // Predicated region
  $region14: #{swin_block4_forward.13} parent=0 // pred_check
    _
  $region15: #{swin_block4_forward.13} parent=0 // pred_check_branch
    %16 = sbr.rel (0) target = $region17
  $region16: #{swin_block4_forward.13} parent=0 // pred_region
    _
  $region17: #{swin_block4_forward.13} parent=0 // pred_fallthru
    _
  %v17 = vld [vmem:[%s0] sm:$0xff]
  %v18 = vld [vmem:[%s0 + $0x8] sm:$0xff]
  %v19 = vld [vmem:[%s0 + $0x10] sm:$0xff]
  %v20 = vld [vmem:[%s0 + $0x18] sm:$0xff]
  %v21 = vld [vmem:[%s0 + $0x20] sm:$0xff]
  %v22 = vld [vmem:[%s0 + $0x28] sm:$0xff]
  %v23 = vld [vmem:[%s0 + $0x30] sm:$0xff]
  %v24 = vld [vmem:[%s0 + $0x38] sm:$0xff]
  %v25 = vpack.c.bf16 %v19, %v17
  %v26 = vpack.c.bf16 %v20, %v18
  %v27 = vpack.c.bf16 %v23, %v21
  %v28 = vpack.c.bf16 %v24, %v22
  %v29 = vld [vmem:[%s1] sm:$0xff]
  %v30 = vld [vmem:[%s1 + $0x8] sm:$0xff]
  %v31 = vld [vmem:[%s1 + $0x10] sm:$0xff]
  %v32 = vld [vmem:[%s1 + $0x18] sm:$0xff]
  %v33 = vld [vmem:[%s1 + $0x20] sm:$0xff]
  %v34 = vld [vmem:[%s1 + $0x28] sm:$0xff]
  %v35 = vld [vmem:[%s1 + $0x30] sm:$0xff]
  %v36 = vld [vmem:[%s1 + $0x38] sm:$0xff]
  %v37 = vld [vmem:[%s1 + $0x40] sm:$0xff]
  %v38 = vld [vmem:[%s1 + $0x48] sm:$0xff]
  %v39 = vld [vmem:[%s1 + $0x50] sm:$0xff]
  %v40 = vld [vmem:[%s1 + $0x58] sm:$0xff]
  %v41 = vld [vmem:[%s1 + $0x60] sm:$0xff]
  %v42 = vld [vmem:[%s1 + $0x68] sm:$0xff]
  %v43 = vld [vmem:[%s1 + $0x70] sm:$0xff]
  %v44 = vld [vmem:[%s1 + $0x78] sm:$0xff]
  %v45 = vld [vmem:[%s1 + $0x80] sm:$0xff]
  %v46 = vld [vmem:[%s1 + $0x88] sm:$0xff]
  %v47 = vld [vmem:[%s1 + $0x90] sm:$0xff]
  %v48 = vld [vmem:[%s1 + $0x98] sm:$0xff]
  %v49 = vld [vmem:[%s1 + $0xa0] sm:$0xff]
  %v50 = vld [vmem:[%s1 + $0xa8] sm:$0xff]
  %v51 = vld [vmem:[%s1 + $0xb0] sm:$0xff]
  %v52 = vld [vmem:[%s1 + $0xb8] sm:$0xff]
  %v53 = vld [vmem:[%s1 + $0xc0] sm:$0xff]
  %v54 = vld [vmem:[%s1 + $0xc8] sm:$0xff]
  %v55 = vld [vmem:[%s1 + $0xd0] sm:$0xff]
  %v56 = vld [vmem:[%s1 + $0xd8] sm:$0xff]
  %v57 = vld [vmem:[%s1 + $0xe0] sm:$0xff]
  %v58 = vld [vmem:[%s1 + $0xe8] sm:$0xff]
  %v59 = vld [vmem:[%s1 + $0xf0] sm:$0xff]
  %v60 = vld [vmem:[%s1 + $0xf8] sm:$0xff]
  %v61 = vld [vmem:[%s1 + $0x100] sm:$0xff]
  %v62 = vld [vmem:[%s1 + $0x108] sm:$0xff]
  %v63 = vld [vmem:[%s1 + $0x110] sm:$0xff]
  %v64 = vld [vmem:[%s1 + $0x118] sm:$0xff]
  %v65 = vld [vmem:[%s1 + $0x120] sm:$0xff]
  %v66 = vld [vmem:[%s1 + $0x128] sm:$0xff]
  %v67 = vld [vmem:[%s1 + $0x130] sm:$0xff]
  %v68 = vld [vmem:[%s1 + $0x138] sm:$0xff]
  %v69 = vld [vmem:[%s1 + $0x140] sm:$0xff]
  %v70 = vld [vmem:[%s1 + $0x148] sm:$0xff]
  %v71 = vld [vmem:[%s1 + $0x150] sm:$0xff]
  %v72 = vld [vmem:[%s1 + $0x158] sm:$0xff]
  %v73 = vld [vmem:[%s1 + $0x160] sm:$0xff]
  %v74 = vld [vmem:[%s1 + $0x168] sm:$0xff]
  %v75 = vld [vmem:[%s1 + $0x170] sm:$0xff]
  %v76 = vld [vmem:[%s1 + $0x178] sm:$0xff]
  %v77 = vld [vmem:[%s1 + $0x180] sm:$0xff]
  %v78 = vld [vmem:[%s1 + $0x188] sm:$0xff]
  %v79 = vld [vmem:[%s1 + $0x190] sm:$0xff]
  %v80 = vld [vmem:[%s1 + $0x198] sm:$0xff]
  %v81 = vld [vmem:[%s1 + $0x1a0] sm:$0xff]
  %v82 = vld [vmem:[%s1 + $0x1a8] sm:$0xff]
  %v83 = vld [vmem:[%s1 + $0x1b0] sm:$0xff]
  %v84 = vld [vmem:[%s1 + $0x1b8] sm:$0xff]
  %v85 = vld [vmem:[%s1 + $0x1c0] sm:$0xff]
  %v86 = vld [vmem:[%s1 + $0x1c8] sm:$0xff]
  %v87 = vld [vmem:[%s1 + $0x1d0] sm:$0xff]
  %v88 = vld [vmem:[%s1 + $0x1d8] sm:$0xff]
  %v89 = vld [vmem:[%s1 + $0x1e0] sm:$0xff]
  %v90 = vld [vmem:[%s1 + $0x1e8] sm:$0xff]
  %v91 = vld [vmem:[%s1 + $0x1f0] sm:$0xff]
  %v92 = vld [vmem:[%s1 + $0x1f8] sm:$0xff]
  %v93 = vld [vmem:[%s1 + $0x200] sm:$0xff]
  %v94 = vld [vmem:[%s1 + $0x208] sm:$0xff]
  %v95 = vld [vmem:[%s1 + $0x210] sm:$0xff]
  %v96 = vld [vmem:[%s1 + $0x218] sm:$0xff]
  %v97 = vld [vmem:[%s1 + $0x220] sm:$0xff]
  %v98 = vld [vmem:[%s1 + $0x228] sm:$0xff]
  %v99 = vld [vmem:[%s1 + $0x230] sm:$0xff]
  %v100 = vld [vmem:[%s1 + $0x238] sm:$0xff]
  %v101 = vld [vmem:[%s1 + $0x240] sm:$0xff]
  %v102 = vld [vmem:[%s1 + $0x248] sm:$0xff]
  %v103 = vld [vmem:[%s1 + $0x250] sm:$0xff]
  %v104 = vld [vmem:[%s1 + $0x258] sm:$0xff]
  %v105 = vld [vmem:[%s1 + $0x260] sm:$0xff]
  %v106 = vld [vmem:[%s1 + $0x268] sm:$0xff]
  %v107 = vld [vmem:[%s1 + $0x270] sm:$0xff]
  %v108 = vld [vmem:[%s1 + $0x278] sm:$0xff]
  %v109 = vld [vmem:[%s1 + $0x280] sm:$0xff]
  %v110 = vld [vmem:[%s1 + $0x288] sm:$0xff]
  %v111 = vld [vmem:[%s1 + $0x290] sm:$0xff]
  %v112 = vld [vmem:[%s1 + $0x298] sm:$0xff]
  %v113 = vld [vmem:[%s1 + $0x2a0] sm:$0xff]
  %v114 = vld [vmem:[%s1 + $0x2a8] sm:$0xff]
  %v115 = vld [vmem:[%s1 + $0x2b0] sm:$0xff]
  %v116 = vld [vmem:[%s1 + $0x2b8] sm:$0xff]
  %v117 = vld [vmem:[%s1 + $0x2c0] sm:$0xff]
  %v118 = vld [vmem:[%s1 + $0x2c8] sm:$0xff]
  %v119 = vld [vmem:[%s1 + $0x2d0] sm:$0xff]
  %v120 = vld [vmem:[%s1 + $0x2d8] sm:$0xff]
  %v121 = vld [vmem:[%s1 + $0x2e0] sm:$0xff]
  %v122 = vld [vmem:[%s1 + $0x2e8] sm:$0xff]
  %v123 = vld [vmem:[%s1 + $0x2f0] sm:$0xff]
  %v124 = vld [vmem:[%s1 + $0x2f8] sm:$0xff]
  %v125 = vld [vmem:[%s1 + $0x300] sm:$0xff]
  %v126 = vld [vmem:[%s1 + $0x308] sm:$0xff]
  %v127 = vld [vmem:[%s1 + $0x310] sm:$0xff]
  %v128 = vld [vmem:[%s1 + $0x318] sm:$0xff]
  %v129 = vld [vmem:[%s1 + $0x320] sm:$0xff]
  %v130 = vld [vmem:[%s1 + $0x328] sm:$0xff]
  %v131 = vld [vmem:[%s1 + $0x330] sm:$0xff]
  %v132 = vld [vmem:[%s1 + $0x338] sm:$0xff]
  %v133 = vld [vmem:[%s1 + $0x340] sm:$0xff]
  %v134 = vld [vmem:[%s1 + $0x348] sm:$0xff]
  %v135 = vld [vmem:[%s1 + $0x350] sm:$0xff]
  %v136 = vld [vmem:[%s1 + $0x358] sm:$0xff]
  %v137 = vld [vmem:[%s1 + $0x360] sm:$0xff]
  %v138 = vld [vmem:[%s1 + $0x368] sm:$0xff]
  %v139 = vld [vmem:[%s1 + $0x370] sm:$0xff]
  %v140 = vld [vmem:[%s1 + $0x378] sm:$0xff]
  %v141 = vld [vmem:[%s1 + $0x380] sm:$0xff]
  %v142 = vld [vmem:[%s1 + $0x388] sm:$0xff]
  %v143 = vld [vmem:[%s1 + $0x390] sm:$0xff]
  %v144 = vld [vmem:[%s1 + $0x398] sm:$0xff]
  %v145 = vld [vmem:[%s1 + $0x3a0] sm:$0xff]
  %v146 = vld [vmem:[%s1 + $0x3a8] sm:$0xff]
  %v147 = vld [vmem:[%s1 + $0x3b0] sm:$0xff]
  %v148 = vld [vmem:[%s1 + $0x3b8] sm:$0xff]
  %v149 = vld [vmem:[%s1 + $0x3c0] sm:$0xff]
  %v150 = vld [vmem:[%s1 + $0x3c8] sm:$0xff]
  %v151 = vld [vmem:[%s1 + $0x3d0] sm:$0xff]
  %v152 = vld [vmem:[%s1 + $0x3d8] sm:$0xff]
  %v153 = vld [vmem:[%s1 + $0x3e0] sm:$0xff]
  %v154 = vld [vmem:[%s1 + $0x3e8] sm:$0xff]
  %v155 = vld [vmem:[%s1 + $0x3f0] sm:$0xff]
  %v156 = vld [vmem:[%s1 + $0x3f8] sm:$0xff]
  %v157 = vld [vmem:[%s1 + $0x400] sm:$0xff]
  %v158 = vld [vmem:[%s1 + $0x408] sm:$0xff]
  %v159 = vld [vmem:[%s1 + $0x410] sm:$0xff]
  %v160 = vld [vmem:[%s1 + $0x418] sm:$0xff]
  %v161 = vld [vmem:[%s1 + $0x420] sm:$0xff]
  %v162 = vld [vmem:[%s1 + $0x428] sm:$0xff]
  %v163 = vld [vmem:[%s1 + $0x430] sm:$0xff]
  %v164 = vld [vmem:[%s1 + $0x438] sm:$0xff]
  %v165 = vld [vmem:[%s1 + $0x440] sm:$0xff]
  %v166 = vld [vmem:[%s1 + $0x448] sm:$0xff]
  %v167 = vld [vmem:[%s1 + $0x450] sm:$0xff]
  %v168 = vld [vmem:[%s1 + $0x458] sm:$0xff]
  %v169 = vld [vmem:[%s1 + $0x460] sm:$0xff]
  %v170 = vld [vmem:[%s1 + $0x468] sm:$0xff]
  %v171 = vld [vmem:[%s1 + $0x470] sm:$0xff]
  %v172 = vld [vmem:[%s1 + $0x478] sm:$0xff]
  %v173 = vld [vmem:[%s1 + $0x480] sm:$0xff]
  %v174 = vld [vmem:[%s1 + $0x488] sm:$0xff]
  %v175 = vld [vmem:[%s1 + $0x490] sm:$0xff]
  %v176 = vld [vmem:[%s1 + $0x498] sm:$0xff]
  %v177 = vld [vmem:[%s1 + $0x4a0] sm:$0xff]
  %v178 = vld [vmem:[%s1 + $0x4a8] sm:$0xff]
  %v179 = vld [vmem:[%s1 + $0x4b0] sm:$0xff]
  %v180 = vld [vmem:[%s1 + $0x4b8] sm:$0xff]
  %v181 = vld [vmem:[%s1 + $0x4c0] sm:$0xff]
  %v182 = vld [vmem:[%s1 + $0x4c8] sm:$0xff]
  %v183 = vld [vmem:[%s1 + $0x4d0] sm:$0xff]
  %v184 = vld [vmem:[%s1 + $0x4d8] sm:$0xff]
  %v185 = vld [vmem:[%s1 + $0x4e0] sm:$0xff]
  %v186 = vld [vmem:[%s1 + $0x4e8] sm:$0xff]
  %v187 = vld [vmem:[%s1 + $0x4f0] sm:$0xff]
  %v188 = vld [vmem:[%s1 + $0x4f8] sm:$0xff]
  %v189 = vld [vmem:[%s1 + $0x500] sm:$0xff]
  %v190 = vld [vmem:[%s1 + $0x508] sm:$0xff]
  %v191 = vld [vmem:[%s1 + $0x510] sm:$0xff]
  %v192 = vld [vmem:[%s1 + $0x518] sm:$0xff]
  %v193 = vld [vmem:[%s1 + $0x520] sm:$0xff]
  %v194 = vld [vmem:[%s1 + $0x528] sm:$0xff]
  %v195 = vld [vmem:[%s1 + $0x530] sm:$0xff]
  %v196 = vld [vmem:[%s1 + $0x538] sm:$0xff]
  %v197 = vld [vmem:[%s1 + $0x540] sm:$0xff]
  %v198 = vld [vmem:[%s1 + $0x548] sm:$0xff]
  %v199 = vld [vmem:[%s1 + $0x550] sm:$0xff]
  %v200 = vld [vmem:[%s1 + $0x558] sm:$0xff]
  %v201 = vld [vmem:[%s1 + $0x560] sm:$0xff]
  %v202 = vld [vmem:[%s1 + $0x568] sm:$0xff]
  %v203 = vld [vmem:[%s1 + $0x570] sm:$0xff]
  %v204 = vld [vmem:[%s1 + $0x578] sm:$0xff]
  %v205 = vld [vmem:[%s1 + $0x580] sm:$0xff]
  %v206 = vld [vmem:[%s1 + $0x588] sm:$0xff]
  %v207 = vld [vmem:[%s1 + $0x590] sm:$0xff]
  %v208 = vld [vmem:[%s1 + $0x598] sm:$0xff]
  %v209 = vld [vmem:[%s1 + $0x5a0] sm:$0xff]
  %v210 = vld [vmem:[%s1 + $0x5a8] sm:$0xff]
  %v211 = vld [vmem:[%s1 + $0x5b0] sm:$0xff]
  %v212 = vld [vmem:[%s1 + $0x5b8] sm:$0xff]
  %v213 = vld [vmem:[%s1 + $0x5c0] sm:$0xff]
  %v214 = vld [vmem:[%s1 + $0x5c8] sm:$0xff]
  %v215 = vld [vmem:[%s1 + $0x5d0] sm:$0xff]
  %v216 = vld [vmem:[%s1 + $0x5d8] sm:$0xff]
  %v217 = vld [vmem:[%s1 + $0x5e0] sm:$0xff]
  %v218 = vld [vmem:[%s1 + $0x5e8] sm:$0xff]
  %v219 = vld [vmem:[%s1 + $0x5f0] sm:$0xff]
  %v220 = vld [vmem:[%s1 + $0x5f8] sm:$0xff]
  %v221 = vld [vmem:[%s2] sm:$0xff]
  %v222 = vld [vmem:[%s2 + $0x8] sm:$0xf]
  %v225 = vperm.slane %v221, 0
  %v226 = vperm.slane %v221, 1
  %v227 = vperm.slane %v221, 2
  %v228 = vperm.slane %v221, 3
  %v229 = vperm.slane %v221, 4
  %v230 = vperm.slane %v221, 5
  %v231 = vperm.slane %v221, 6
  %v232 = vperm.slane %v221, 7
  %v233 = vperm.slane %v222, 0
  %v234 = vperm.slane %v222, 1
  %v235 = vperm.slane %v222, 2
  %v236 = vperm.slane %v222, 3
  %v441 = vunpack.c.l.b16 %v29
  %v442 = vunpack.c.h.b16 %v29
  %v443 = vunpack.c.l.b16 %v30
  %v444 = vunpack.c.h.b16 %v30
  %v445 = vunpack.c.l.b16 %v31
  %v446 = vunpack.c.h.b16 %v31
  %v447 = vunpack.c.l.b16 %v32
  %v448 = vunpack.c.h.b16 %v32
  %v449 = vunpack.c.l.b16 %v33
  %v450 = vunpack.c.h.b16 %v33
  %v451 = vunpack.c.l.b16 %v34
  %v452 = vunpack.c.h.b16 %v34
  %v453 = vunpack.c.l.b16 %v35
  %v454 = vunpack.c.h.b16 %v35
  %v455 = vunpack.c.l.b16 %v36
  %v456 = vunpack.c.h.b16 %v36
  %v457 = vunpack.c.l.b16 %v37
  %v458 = vunpack.c.h.b16 %v37
  %v459 = vunpack.c.l.b16 %v38
  %v460 = vunpack.c.h.b16 %v38
  %v461 = vunpack.c.l.b16 %v39
  %v462 = vunpack.c.h.b16 %v39
  %v463 = vunpack.c.l.b16 %v40
  %v464 = vunpack.c.h.b16 %v40
  %v465 = vunpack.c.l.b16 %v41
  %v466 = vunpack.c.h.b16 %v41
  %v467 = vunpack.c.l.b16 %v42
  %v468 = vunpack.c.h.b16 %v42
  %v469 = vunpack.c.l.b16 %v43
  %v470 = vunpack.c.h.b16 %v43
  %v471 = vunpack.c.l.b16 %v44
  %v472 = vunpack.c.h.b16 %v44
  %v473 = vunpack.c.l.b16 %v45
  %v474 = vunpack.c.h.b16 %v45
  %v475 = vunpack.c.l.b16 %v46
  %v476 = vunpack.c.h.b16 %v46
  %v477 = vunpack.c.l.b16 %v47
  %v478 = vunpack.c.h.b16 %v47
  %v479 = vunpack.c.l.b16 %v48
  %v480 = vunpack.c.h.b16 %v48
  %v481 = vunpack.c.l.b16 %v49
  %v482 = vunpack.c.h.b16 %v49
  %v483 = vunpack.c.l.b16 %v50
  %v484 = vunpack.c.h.b16 %v50
  %v485 = vunpack.c.l.b16 %v51
  %v486 = vunpack.c.h.b16 %v51
  %v487 = vunpack.c.l.b16 %v52
  %v488 = vunpack.c.h.b16 %v52
  %v489 = vunpack.c.l.b16 %v53
  %v490 = vunpack.c.h.b16 %v53
  %v491 = vunpack.c.l.b16 %v54
  %v492 = vunpack.c.h.b16 %v54
  %v493 = vunpack.c.l.b16 %v55
  %v494 = vunpack.c.h.b16 %v55
  %v495 = vunpack.c.l.b16 %v56
  %v496 = vunpack.c.h.b16 %v56
  %v497 = vunpack.c.l.b16 %v57
  %v498 = vunpack.c.h.b16 %v57
  %v499 = vunpack.c.l.b16 %v58
  %v500 = vunpack.c.h.b16 %v58
  %v501 = vunpack.c.l.b16 %v59
  %v502 = vunpack.c.h.b16 %v59
  %v503 = vunpack.c.l.b16 %v60
  %v504 = vunpack.c.h.b16 %v60
  %v505 = vunpack.c.l.b16 %v61
  %v506 = vunpack.c.h.b16 %v61
  %v507 = vunpack.c.l.b16 %v62
  %v508 = vunpack.c.h.b16 %v62
  %v509 = vunpack.c.l.b16 %v63
  %v510 = vunpack.c.h.b16 %v63
  %v511 = vunpack.c.l.b16 %v64
  %v512 = vunpack.c.h.b16 %v64
  %v513 = vunpack.c.l.b16 %v65
  %v514 = vunpack.c.h.b16 %v65
  %v515 = vunpack.c.l.b16 %v66
  %v516 = vunpack.c.h.b16 %v66
  %v517 = vunpack.c.l.b16 %v67
  %v518 = vunpack.c.h.b16 %v67
  %v519 = vunpack.c.l.b16 %v68
  %v520 = vunpack.c.h.b16 %v68
  %v521 = vunpack.c.l.b16 %v69
  %v522 = vunpack.c.h.b16 %v69
  %v523 = vunpack.c.l.b16 %v70
  %v524 = vunpack.c.h.b16 %v70
  %v525 = vunpack.c.l.b16 %v71
  %v526 = vunpack.c.h.b16 %v71
  %v527 = vunpack.c.l.b16 %v72
  %v528 = vunpack.c.h.b16 %v72
  %v529 = vunpack.c.l.b16 %v73
  %v530 = vunpack.c.h.b16 %v73
  %v531 = vunpack.c.l.b16 %v74
  %v532 = vunpack.c.h.b16 %v74
  %v533 = vunpack.c.l.b16 %v75
  %v534 = vunpack.c.h.b16 %v75
  %v535 = vunpack.c.l.b16 %v76
  %v536 = vunpack.c.h.b16 %v76
  %v537 = vunpack.c.l.b16 %v77
  %v538 = vunpack.c.h.b16 %v77
  %v539 = vunpack.c.l.b16 %v78
  %v540 = vunpack.c.h.b16 %v78
  %v541 = vunpack.c.l.b16 %v79
  %v542 = vunpack.c.h.b16 %v79
  %v543 = vunpack.c.l.b16 %v80
  %v544 = vunpack.c.h.b16 %v80
  %v545 = vunpack.c.l.b16 %v81
  %v546 = vunpack.c.h.b16 %v81
  %v547 = vunpack.c.l.b16 %v82
  %v548 = vunpack.c.h.b16 %v82
  %v549 = vunpack.c.l.b16 %v83
  %v550 = vunpack.c.h.b16 %v83
  %v551 = vunpack.c.l.b16 %v84
  %v552 = vunpack.c.h.b16 %v84
  %v553 = vunpack.c.l.b16 %v85
  %v554 = vunpack.c.h.b16 %v85
  %v555 = vunpack.c.l.b16 %v86
  %v556 = vunpack.c.h.b16 %v86
  %v557 = vunpack.c.l.b16 %v87
  %v558 = vunpack.c.h.b16 %v87
  %v559 = vunpack.c.l.b16 %v88
  %v560 = vunpack.c.h.b16 %v88
  %v561 = vunpack.c.l.b16 %v89
  %v562 = vunpack.c.h.b16 %v89
  %v563 = vunpack.c.l.b16 %v90
  %v564 = vunpack.c.h.b16 %v90
  %v565 = vunpack.c.l.b16 %v91
  %v566 = vunpack.c.h.b16 %v91
  %v567 = vunpack.c.l.b16 %v92
  %v568 = vunpack.c.h.b16 %v92
  %v569 = vunpack.c.l.b16 %v93
  %v570 = vunpack.c.h.b16 %v93
  %v571 = vunpack.c.l.b16 %v94
  %v572 = vunpack.c.h.b16 %v94
  %v573 = vunpack.c.l.b16 %v95
  %v574 = vunpack.c.h.b16 %v95
  %v575 = vunpack.c.l.b16 %v96
  %v576 = vunpack.c.h.b16 %v96
  %v577 = vunpack.c.l.b16 %v97
  %v578 = vunpack.c.h.b16 %v97
  %v579 = vunpack.c.l.b16 %v98
  %v580 = vunpack.c.h.b16 %v98
  %v581 = vunpack.c.l.b16 %v99
  %v582 = vunpack.c.h.b16 %v99
  %v583 = vunpack.c.l.b16 %v100
  %v584 = vunpack.c.h.b16 %v100
  %v585 = vunpack.c.l.b16 %v101
  %v586 = vunpack.c.h.b16 %v101
  %v587 = vunpack.c.l.b16 %v102
  %v588 = vunpack.c.h.b16 %v102
  %v589 = vunpack.c.l.b16 %v103
  %v590 = vunpack.c.h.b16 %v103
  %v591 = vunpack.c.l.b16 %v104
  %v592 = vunpack.c.h.b16 %v104
  %v593 = vunpack.c.l.b16 %v105
  %v594 = vunpack.c.h.b16 %v105
  %v595 = vunpack.c.l.b16 %v106
  %v596 = vunpack.c.h.b16 %v106
  %v597 = vunpack.c.l.b16 %v107
  %v598 = vunpack.c.h.b16 %v107
  %v599 = vunpack.c.l.b16 %v108
  %v600 = vunpack.c.h.b16 %v108
  %v601 = vunpack.c.l.b16 %v109
  %v602 = vunpack.c.h.b16 %v109
  %v603 = vunpack.c.l.b16 %v110
  %v604 = vunpack.c.h.b16 %v110
  %v605 = vunpack.c.l.b16 %v111
  %v606 = vunpack.c.h.b16 %v111
  %v607 = vunpack.c.l.b16 %v112
  %v608 = vunpack.c.h.b16 %v112
  %v609 = vunpack.c.l.b16 %v113
  %v610 = vunpack.c.h.b16 %v113
  %v611 = vunpack.c.l.b16 %v114
  %v612 = vunpack.c.h.b16 %v114
  %v613 = vunpack.c.l.b16 %v115
  %v614 = vunpack.c.h.b16 %v115
  %v615 = vunpack.c.l.b16 %v116
  %v616 = vunpack.c.h.b16 %v116
  %v617 = vunpack.c.l.b16 %v117
  %v618 = vunpack.c.h.b16 %v117
  %v619 = vunpack.c.l.b16 %v118
  %v620 = vunpack.c.h.b16 %v118
  %v621 = vunpack.c.l.b16 %v119
  %v622 = vunpack.c.h.b16 %v119
  %v623 = vunpack.c.l.b16 %v120
  %v624 = vunpack.c.h.b16 %v120
  %v625 = vunpack.c.l.b16 %v121
  %v626 = vunpack.c.h.b16 %v121
  %v627 = vunpack.c.l.b16 %v122
  %v628 = vunpack.c.h.b16 %v122
  %v629 = vunpack.c.l.b16 %v123
  %v630 = vunpack.c.h.b16 %v123
  %v631 = vunpack.c.l.b16 %v124
  %v632 = vunpack.c.h.b16 %v124
  %v633 = vunpack.c.l.b16 %v125
  %v634 = vunpack.c.h.b16 %v125
  %v635 = vunpack.c.l.b16 %v126
  %v636 = vunpack.c.h.b16 %v126
  %v637 = vunpack.c.l.b16 %v127
  %v638 = vunpack.c.h.b16 %v127
  %v639 = vunpack.c.l.b16 %v128
  %v640 = vunpack.c.h.b16 %v128
  %v641 = vunpack.c.l.b16 %v129
  %v642 = vunpack.c.h.b16 %v129
  %v643 = vunpack.c.l.b16 %v130
  %v644 = vunpack.c.h.b16 %v130
  %v645 = vunpack.c.l.b16 %v131
  %v646 = vunpack.c.h.b16 %v131
  %v647 = vunpack.c.l.b16 %v132
  %v648 = vunpack.c.h.b16 %v132
  %v649 = vunpack.c.l.b16 %v133
  %v650 = vunpack.c.h.b16 %v133
  %v651 = vunpack.c.l.b16 %v134
  %v652 = vunpack.c.h.b16 %v134
  %v653 = vunpack.c.l.b16 %v135
  %v654 = vunpack.c.h.b16 %v135
  %v655 = vunpack.c.l.b16 %v136
  %v656 = vunpack.c.h.b16 %v136
  %v657 = vunpack.c.l.b16 %v137
  %v658 = vunpack.c.h.b16 %v137
  %v659 = vunpack.c.l.b16 %v138
  %v660 = vunpack.c.h.b16 %v138
  %v661 = vunpack.c.l.b16 %v139
  %v662 = vunpack.c.h.b16 %v139
  %v663 = vunpack.c.l.b16 %v140
  %v664 = vunpack.c.h.b16 %v140
  %v665 = vunpack.c.l.b16 %v141
  %v666 = vunpack.c.h.b16 %v141
  %v667 = vunpack.c.l.b16 %v142
  %v668 = vunpack.c.h.b16 %v142
  %v669 = vunpack.c.l.b16 %v143
  %v670 = vunpack.c.h.b16 %v143
  %v671 = vunpack.c.l.b16 %v144
  %v672 = vunpack.c.h.b16 %v144
  %v673 = vunpack.c.l.b16 %v145
  %v674 = vunpack.c.h.b16 %v145
  %v675 = vunpack.c.l.b16 %v146
  %v676 = vunpack.c.h.b16 %v146
  %v677 = vunpack.c.l.b16 %v147
  %v678 = vunpack.c.h.b16 %v147
  %v679 = vunpack.c.l.b16 %v148
  %v680 = vunpack.c.h.b16 %v148
  %v681 = vunpack.c.l.b16 %v149
  %v682 = vunpack.c.h.b16 %v149
  %v683 = vunpack.c.l.b16 %v150
  %v684 = vunpack.c.h.b16 %v150
  %v685 = vunpack.c.l.b16 %v151
  %v686 = vunpack.c.h.b16 %v151
  %v687 = vunpack.c.l.b16 %v152
  %v688 = vunpack.c.h.b16 %v152
  %v689 = vunpack.c.l.b16 %v153
  %v690 = vunpack.c.h.b16 %v153
  %v691 = vunpack.c.l.b16 %v154
  %v692 = vunpack.c.h.b16 %v154
  %v693 = vunpack.c.l.b16 %v155
  %v694 = vunpack.c.h.b16 %v155
  %v695 = vunpack.c.l.b16 %v156
  %v696 = vunpack.c.h.b16 %v156
  %v697 = vunpack.c.l.b16 %v157
  %v698 = vunpack.c.h.b16 %v157
  %v699 = vunpack.c.l.b16 %v158
  %v700 = vunpack.c.h.b16 %v158
  %v701 = vunpack.c.l.b16 %v159
  %v702 = vunpack.c.h.b16 %v159
  %v703 = vunpack.c.l.b16 %v160
  %v704 = vunpack.c.h.b16 %v160
  %v705 = vunpack.c.l.b16 %v161
  %v706 = vunpack.c.h.b16 %v161
  %v707 = vunpack.c.l.b16 %v162
  %v708 = vunpack.c.h.b16 %v162
  %v709 = vunpack.c.l.b16 %v163
  %v710 = vunpack.c.h.b16 %v163
  %v711 = vunpack.c.l.b16 %v164
  %v712 = vunpack.c.h.b16 %v164
  %v713 = vunpack.c.l.b16 %v165
  %v714 = vunpack.c.h.b16 %v165
  %v715 = vunpack.c.l.b16 %v166
  %v716 = vunpack.c.h.b16 %v166
  %v717 = vunpack.c.l.b16 %v167
  %v718 = vunpack.c.h.b16 %v167
  %v719 = vunpack.c.l.b16 %v168
  %v720 = vunpack.c.h.b16 %v168
  %v721 = vunpack.c.l.b16 %v169
  %v722 = vunpack.c.h.b16 %v169
  %v723 = vunpack.c.l.b16 %v170
  %v724 = vunpack.c.h.b16 %v170
  %v725 = vunpack.c.l.b16 %v171
  %v726 = vunpack.c.h.b16 %v171
  %v727 = vunpack.c.l.b16 %v172
  %v728 = vunpack.c.h.b16 %v172
  %v729 = vunpack.c.l.b16 %v173
  %v730 = vunpack.c.h.b16 %v173
  %v731 = vunpack.c.l.b16 %v174
  %v732 = vunpack.c.h.b16 %v174
  %v733 = vunpack.c.l.b16 %v175
  %v734 = vunpack.c.h.b16 %v175
  %v735 = vunpack.c.l.b16 %v176
  %v736 = vunpack.c.h.b16 %v176
  %v737 = vunpack.c.l.b16 %v177
  %v738 = vunpack.c.h.b16 %v177
  %v739 = vunpack.c.l.b16 %v178
  %v740 = vunpack.c.h.b16 %v178
  %v741 = vunpack.c.l.b16 %v179
  %v742 = vunpack.c.h.b16 %v179
  %v743 = vunpack.c.l.b16 %v180
  %v744 = vunpack.c.h.b16 %v180
  %v745 = vunpack.c.l.b16 %v181
  %v746 = vunpack.c.h.b16 %v181
  %v747 = vunpack.c.l.b16 %v182
  %v748 = vunpack.c.h.b16 %v182
  %v749 = vunpack.c.l.b16 %v183
  %v750 = vunpack.c.h.b16 %v183
  %v751 = vunpack.c.l.b16 %v184
  %v752 = vunpack.c.h.b16 %v184
  %v753 = vunpack.c.l.b16 %v185
  %v754 = vunpack.c.h.b16 %v185
  %v755 = vunpack.c.l.b16 %v186
  %v756 = vunpack.c.h.b16 %v186
  %v757 = vunpack.c.l.b16 %v187
  %v758 = vunpack.c.h.b16 %v187
  %v759 = vunpack.c.l.b16 %v188
  %v760 = vunpack.c.h.b16 %v188
  %v761 = vunpack.c.l.b16 %v189
  %v762 = vunpack.c.h.b16 %v189
  %v763 = vunpack.c.l.b16 %v190
  %v764 = vunpack.c.h.b16 %v190
  %v765 = vunpack.c.l.b16 %v191
  %v766 = vunpack.c.h.b16 %v191
  %v767 = vunpack.c.l.b16 %v192
  %v768 = vunpack.c.h.b16 %v192
  %v769 = vunpack.c.l.b16 %v193
  %v770 = vunpack.c.h.b16 %v193
  %v771 = vunpack.c.l.b16 %v194
  %v772 = vunpack.c.h.b16 %v194
  %v773 = vunpack.c.l.b16 %v195
  %v774 = vunpack.c.h.b16 %v195
  %v775 = vunpack.c.l.b16 %v196
  %v776 = vunpack.c.h.b16 %v196
  %v777 = vunpack.c.l.b16 %v197
  %v778 = vunpack.c.h.b16 %v197
  %v779 = vunpack.c.l.b16 %v198
  %v780 = vunpack.c.h.b16 %v198
  %v781 = vunpack.c.l.b16 %v199
  %v782 = vunpack.c.h.b16 %v199
  %v783 = vunpack.c.l.b16 %v200
  %v784 = vunpack.c.h.b16 %v200
  %v785 = vunpack.c.l.b16 %v201
  %v786 = vunpack.c.h.b16 %v201
  %v787 = vunpack.c.l.b16 %v202
  %v788 = vunpack.c.h.b16 %v202
  %v789 = vunpack.c.l.b16 %v203
  %v790 = vunpack.c.h.b16 %v203
  %v791 = vunpack.c.l.b16 %v204
  %v792 = vunpack.c.h.b16 %v204
  %v793 = vunpack.c.l.b16 %v205
  %v794 = vunpack.c.h.b16 %v205
  %v795 = vunpack.c.l.b16 %v206
  %v796 = vunpack.c.h.b16 %v206
  %v797 = vunpack.c.l.b16 %v207
  %v798 = vunpack.c.h.b16 %v207
  %v799 = vunpack.c.l.b16 %v208
  %v800 = vunpack.c.h.b16 %v208
  %v801 = vunpack.c.l.b16 %v209
  %v802 = vunpack.c.h.b16 %v209
  %v803 = vunpack.c.l.b16 %v210
  %v804 = vunpack.c.h.b16 %v210
  %v805 = vunpack.c.l.b16 %v211
  %v806 = vunpack.c.h.b16 %v211
  %v807 = vunpack.c.l.b16 %v212
  %v808 = vunpack.c.h.b16 %v212
  %v809 = vunpack.c.l.b16 %v213
  %v810 = vunpack.c.h.b16 %v213
  %v811 = vunpack.c.l.b16 %v214
  %v812 = vunpack.c.h.b16 %v214
  %v813 = vunpack.c.l.b16 %v215
  %v814 = vunpack.c.h.b16 %v215
  %v815 = vunpack.c.l.b16 %v216
  %v816 = vunpack.c.h.b16 %v216
  %v817 = vunpack.c.l.b16 %v217
  %v818 = vunpack.c.h.b16 %v217
  %v819 = vunpack.c.l.b16 %v218
  %v820 = vunpack.c.h.b16 %v218
  %v821 = vunpack.c.l.b16 %v219
  %v822 = vunpack.c.h.b16 %v219
  %v823 = vunpack.c.l.b16 %v220
  %v824 = vunpack.c.h.b16 %v220
  %v825 = vpack.c.b16 %v453, %v441
  %v826 = vpack.c.b16 %v454, %v442
  %v827 = vpack.c.b16 %v455, %v443
  %v828 = vpack.c.b16 %v456, %v444
  %v829 = vpack.c.b16 %v457, %v445
  %v830 = vpack.c.b16 %v458, %v446
  %v831 = vpack.c.b16 %v459, %v447
  %v832 = vpack.c.b16 %v460, %v448
  %v833 = vpack.c.b16 %v461, %v449
  %v834 = vpack.c.b16 %v462, %v450
  %v835 = vpack.c.b16 %v463, %v451
  %v836 = vpack.c.b16 %v464, %v452
  %v837 = vpack.c.b16 %v477, %v465
  %v838 = vpack.c.b16 %v478, %v466
  %v839 = vpack.c.b16 %v479, %v467
  %v840 = vpack.c.b16 %v480, %v468
  %v841 = vpack.c.b16 %v481, %v469
  %v842 = vpack.c.b16 %v482, %v470
  %v843 = vpack.c.b16 %v483, %v471
  %v844 = vpack.c.b16 %v484, %v472
  %v845 = vpack.c.b16 %v485, %v473
  %v846 = vpack.c.b16 %v486, %v474
  %v847 = vpack.c.b16 %v487, %v475
  %v848 = vpack.c.b16 %v488, %v476
  %v849 = vpack.c.b16 %v501, %v489
  %v850 = vpack.c.b16 %v502, %v490
  %v851 = vpack.c.b16 %v503, %v491
  %v852 = vpack.c.b16 %v504, %v492
  %v853 = vpack.c.b16 %v505, %v493
  %v854 = vpack.c.b16 %v506, %v494
  %v855 = vpack.c.b16 %v507, %v495
  %v856 = vpack.c.b16 %v508, %v496
  %v857 = vpack.c.b16 %v509, %v497
  %v858 = vpack.c.b16 %v510, %v498
  %v859 = vpack.c.b16 %v511, %v499
  %v860 = vpack.c.b16 %v512, %v500
  %v861 = vpack.c.b16 %v525, %v513
  %v862 = vpack.c.b16 %v526, %v514
  %v863 = vpack.c.b16 %v527, %v515
  %v864 = vpack.c.b16 %v528, %v516
  %v865 = vpack.c.b16 %v529, %v517
  %v866 = vpack.c.b16 %v530, %v518
  %v867 = vpack.c.b16 %v531, %v519
  %v868 = vpack.c.b16 %v532, %v520
  %v869 = vpack.c.b16 %v533, %v521
  %v870 = vpack.c.b16 %v534, %v522
  %v871 = vpack.c.b16 %v535, %v523
  %v872 = vpack.c.b16 %v536, %v524
  %v873 = vpack.c.b16 %v549, %v537
  %v874 = vpack.c.b16 %v550, %v538
  %v875 = vpack.c.b16 %v551, %v539
  %v876 = vpack.c.b16 %v552, %v540
  %v877 = vpack.c.b16 %v553, %v541
  %v878 = vpack.c.b16 %v554, %v542
  %v879 = vpack.c.b16 %v555, %v543
  %v880 = vpack.c.b16 %v556, %v544
  %v881 = vpack.c.b16 %v557, %v545
  %v882 = vpack.c.b16 %v558, %v546
  %v883 = vpack.c.b16 %v559, %v547
  %v884 = vpack.c.b16 %v560, %v548
  %v885 = vpack.c.b16 %v573, %v561
  %v886 = vpack.c.b16 %v574, %v562
  %v887 = vpack.c.b16 %v575, %v563
  %v888 = vpack.c.b16 %v576, %v564
  %v889 = vpack.c.b16 %v577, %v565
  %v890 = vpack.c.b16 %v578, %v566
  %v891 = vpack.c.b16 %v579, %v567
  %v892 = vpack.c.b16 %v580, %v568
  %v893 = vpack.c.b16 %v581, %v569
  %v894 = vpack.c.b16 %v582, %v570
  %v895 = vpack.c.b16 %v583, %v571
  %v896 = vpack.c.b16 %v584, %v572
  %v897 = vpack.c.b16 %v597, %v585
  %v898 = vpack.c.b16 %v598, %v586
  %v899 = vpack.c.b16 %v599, %v587
  %v900 = vpack.c.b16 %v600, %v588
  %v901 = vpack.c.b16 %v601, %v589
  %v902 = vpack.c.b16 %v602, %v590
  %v903 = vpack.c.b16 %v603, %v591
  %v904 = vpack.c.b16 %v604, %v592
  %v905 = vpack.c.b16 %v605, %v593
  %v906 = vpack.c.b16 %v606, %v594
  %v907 = vpack.c.b16 %v607, %v595
  %v908 = vpack.c.b16 %v608, %v596
  %v909 = vpack.c.b16 %v621, %v609
  %v910 = vpack.c.b16 %v622, %v610
  %v911 = vpack.c.b16 %v623, %v611
  %v912 = vpack.c.b16 %v624, %v612
  %v913 = vpack.c.b16 %v625, %v613
  %v914 = vpack.c.b16 %v626, %v614
  %v915 = vpack.c.b16 %v627, %v615
  %v916 = vpack.c.b16 %v628, %v616
  %v917 = vpack.c.b16 %v629, %v617
  %v918 = vpack.c.b16 %v630, %v618
  %v919 = vpack.c.b16 %v631, %v619
  %v920 = vpack.c.b16 %v632, %v620
  %v921 = vpack.c.b16 %v645, %v633
  %v922 = vpack.c.b16 %v646, %v634
  %v923 = vpack.c.b16 %v647, %v635
  %v924 = vpack.c.b16 %v648, %v636
  %v925 = vpack.c.b16 %v649, %v637
  %v926 = vpack.c.b16 %v650, %v638
  %v927 = vpack.c.b16 %v651, %v639
  %v928 = vpack.c.b16 %v652, %v640
  %v929 = vpack.c.b16 %v653, %v641
  %v930 = vpack.c.b16 %v654, %v642
  %v931 = vpack.c.b16 %v655, %v643
  %v932 = vpack.c.b16 %v656, %v644
  %v933 = vpack.c.b16 %v669, %v657
  %v934 = vpack.c.b16 %v670, %v658
  %v935 = vpack.c.b16 %v671, %v659
  %v936 = vpack.c.b16 %v672, %v660
  %v937 = vpack.c.b16 %v673, %v661
  %v938 = vpack.c.b16 %v674, %v662
  %v939 = vpack.c.b16 %v675, %v663
  %v940 = vpack.c.b16 %v676, %v664
  %v941 = vpack.c.b16 %v677, %v665
  %v942 = vpack.c.b16 %v678, %v666
  %v943 = vpack.c.b16 %v679, %v667
  %v944 = vpack.c.b16 %v680, %v668
  %v945 = vpack.c.b16 %v693, %v681
  %v946 = vpack.c.b16 %v694, %v682
  %v947 = vpack.c.b16 %v695, %v683
  %v948 = vpack.c.b16 %v696, %v684
  %v949 = vpack.c.b16 %v697, %v685
  %v950 = vpack.c.b16 %v698, %v686
  %v951 = vpack.c.b16 %v699, %v687
  %v952 = vpack.c.b16 %v700, %v688
  %v953 = vpack.c.b16 %v701, %v689
  %v954 = vpack.c.b16 %v702, %v690
  %v955 = vpack.c.b16 %v703, %v691
  %v956 = vpack.c.b16 %v704, %v692
  %v957 = vpack.c.b16 %v717, %v705
  %v958 = vpack.c.b16 %v718, %v706
  %v959 = vpack.c.b16 %v719, %v707
  %v960 = vpack.c.b16 %v720, %v708
  %v961 = vpack.c.b16 %v721, %v709
  %v962 = vpack.c.b16 %v722, %v710
  %v963 = vpack.c.b16 %v723, %v711
  %v964 = vpack.c.b16 %v724, %v712
  %v965 = vpack.c.b16 %v725, %v713
  %v966 = vpack.c.b16 %v726, %v714
  %v967 = vpack.c.b16 %v727, %v715
  %v968 = vpack.c.b16 %v728, %v716
  %v969 = vpack.c.b16 %v741, %v729
  %v970 = vpack.c.b16 %v742, %v730
  %v971 = vpack.c.b16 %v743, %v731
  %v972 = vpack.c.b16 %v744, %v732
  %v973 = vpack.c.b16 %v745, %v733
  %v974 = vpack.c.b16 %v746, %v734
  %v975 = vpack.c.b16 %v747, %v735
  %v976 = vpack.c.b16 %v748, %v736
  %v977 = vpack.c.b16 %v749, %v737
  %v978 = vpack.c.b16 %v750, %v738
  %v979 = vpack.c.b16 %v751, %v739
  %v980 = vpack.c.b16 %v752, %v740
  %v981 = vpack.c.b16 %v765, %v753
  %v982 = vpack.c.b16 %v766, %v754
  %v983 = vpack.c.b16 %v767, %v755
  %v984 = vpack.c.b16 %v768, %v756
  %v985 = vpack.c.b16 %v769, %v757
  %v986 = vpack.c.b16 %v770, %v758
  %v987 = vpack.c.b16 %v771, %v759
  %v988 = vpack.c.b16 %v772, %v760
  %v989 = vpack.c.b16 %v773, %v761
  %v990 = vpack.c.b16 %v774, %v762
  %v991 = vpack.c.b16 %v775, %v763
  %v992 = vpack.c.b16 %v776, %v764
  %v993 = vpack.c.b16 %v789, %v777
  %v994 = vpack.c.b16 %v790, %v778
  %v995 = vpack.c.b16 %v791, %v779
  %v996 = vpack.c.b16 %v792, %v780
  %v997 = vpack.c.b16 %v793, %v781
  %v998 = vpack.c.b16 %v794, %v782
  %v999 = vpack.c.b16 %v795, %v783
  %v1000 = vpack.c.b16 %v796, %v784
  %v1001 = vpack.c.b16 %v797, %v785
  %v1002 = vpack.c.b16 %v798, %v786
  %v1003 = vpack.c.b16 %v799, %v787
  %v1004 = vpack.c.b16 %v800, %v788
  %v1005 = vpack.c.b16 %v813, %v801
  %v1006 = vpack.c.b16 %v814, %v802
  %v1007 = vpack.c.b16 %v815, %v803
  %v1008 = vpack.c.b16 %v816, %v804
  %v1009 = vpack.c.b16 %v817, %v805
  %v1010 = vpack.c.b16 %v818, %v806
  %v1011 = vpack.c.b16 %v819, %v807
  %v1012 = vpack.c.b16 %v820, %v808
  %v1013 = vpack.c.b16 %v821, %v809
  %v1014 = vpack.c.b16 %v822, %v810
  %v1015 = vpack.c.b16 %v823, %v811
  %v1016 = vpack.c.b16 %v824, %v812
  %1209 = vmatpush.bf16.msra.mxu0 %v909
  %1210 = vmatpush.bf16.msra.mxu0 %v897
  %1211 = vmatpush.bf16.msra.mxu0 %v885
  %1212 = vmatpush.bf16.msra.mxu0 %v873
  %1213 = vmatpush.bf16.msra.mxu0 %v861
  %1214 = vmatpush.bf16.msra.mxu0 %v849
  %1215 = vmatpush.bf16.msra.mxu0 %v837
  %1216 = vmatpush.bf16.msra.mxu0 %v825
  %1217 = vmatmul.bf16.gmra.mxu0 %v25
  %v1218 = vpop.f32.mrf.mxu0
  %v1219 = vadd.f32 %v225, %v1218
  %v1220 = vpop.f32.mrf.mxu0
  %v1221 = vadd.f32 %v225, %v1220
  %1222 = vmatmul.bf16.gmra.mxu0 %v27
  %v1223 = vpop.f32.mrf.mxu0
  %v1224 = vadd.f32 %v225, %v1223
  %v1225 = vpop.f32.mrf.mxu0
  %v1226 = vadd.f32 %v225, %v1225
  %1227 = vdwg.mxu0
  %1228 = vmatpush.bf16.msra.mxu0 %v1005
  %1229 = vmatpush.bf16.msra.mxu0 %v993
  %1230 = vmatpush.bf16.msra.mxu0 %v981
  %1231 = vmatpush.bf16.msra.mxu0 %v969
  %1232 = vmatpush.bf16.msra.mxu0 %v957
  %1233 = vmatpush.bf16.msra.mxu0 %v945
  %1234 = vmatpush.bf16.msra.mxu0 %v933
  %1235 = vmatpush.bf16.msra.mxu0 %v921
  %1236 = vmatmul.bf16.gmra.mxu0 %v26
  %v1237 = vpop.f32.mrf.mxu0
  %v1238 = vadd.f32 %v1219, %v1237
  %v1239 = vpop.f32.mrf.mxu0
  %v1240 = vadd.f32 %v1221, %v1239
  %1241 = vmatmul.bf16.gmra.mxu0 %v28
  %v1242 = vpop.f32.mrf.mxu0
  %v1243 = vadd.f32 %v1224, %v1242
  %v1244 = vpop.f32.mrf.mxu0
  %v1245 = vadd.f32 %v1226, %v1244
  %1246 = vdwg.mxu0
  %1247 = vmatpush.bf16.msra.mxu0 %v910
  %1248 = vmatpush.bf16.msra.mxu0 %v898
  %1249 = vmatpush.bf16.msra.mxu0 %v886
  %1250 = vmatpush.bf16.msra.mxu0 %v874
  %1251 = vmatpush.bf16.msra.mxu0 %v862
  %1252 = vmatpush.bf16.msra.mxu0 %v850
  %1253 = vmatpush.bf16.msra.mxu0 %v838
  %1254 = vmatpush.bf16.msra.mxu0 %v826
  %1255 = vmatmul.bf16.gmra.mxu0 %v25
  %v1256 = vpop.f32.mrf.mxu0
  %v1257 = vadd.f32 %v226, %v1256
  %v1258 = vpop.f32.mrf.mxu0
  %v1259 = vadd.f32 %v226, %v1258
  %1260 = vmatmul.bf16.gmra.mxu0 %v27
  %v1261 = vpop.f32.mrf.mxu0
  %v1262 = vadd.f32 %v226, %v1261
  %v1263 = vpop.f32.mrf.mxu0
  %v1264 = vadd.f32 %v226, %v1263
  %1265 = vdwg.mxu0
  %1266 = vmatpush.bf16.msra.mxu0 %v1006
  %1267 = vmatpush.bf16.msra.mxu0 %v994
  %1268 = vmatpush.bf16.msra.mxu0 %v982
  %1269 = vmatpush.bf16.msra.mxu0 %v970
  %1270 = vmatpush.bf16.msra.mxu0 %v958
  %1271 = vmatpush.bf16.msra.mxu0 %v946
  %1272 = vmatpush.bf16.msra.mxu0 %v934
  %1273 = vmatpush.bf16.msra.mxu0 %v922
  %1274 = vmatmul.bf16.gmra.mxu0 %v26
  %v1275 = vpop.f32.mrf.mxu0
  %v1276 = vadd.f32 %v1257, %v1275
  %v1277 = vpop.f32.mrf.mxu0
  %v1278 = vadd.f32 %v1259, %v1277
  %1279 = vmatmul.bf16.gmra.mxu0 %v28
  %v1280 = vpop.f32.mrf.mxu0
  %v1281 = vadd.f32 %v1262, %v1280
  %v1282 = vpop.f32.mrf.mxu0
  %v1283 = vadd.f32 %v1264, %v1282
  %1284 = vdwg.mxu0
  %1285 = vmatpush.bf16.msra.mxu0 %v911
  %1286 = vmatpush.bf16.msra.mxu0 %v899
  %1287 = vmatpush.bf16.msra.mxu0 %v887
  %1288 = vmatpush.bf16.msra.mxu0 %v875
  %1289 = vmatpush.bf16.msra.mxu0 %v863
  %1290 = vmatpush.bf16.msra.mxu0 %v851
  %1291 = vmatpush.bf16.msra.mxu0 %v839
  %1292 = vmatpush.bf16.msra.mxu0 %v827
  %1293 = vmatmul.bf16.gmra.mxu0 %v25
  %v1294 = vpop.f32.mrf.mxu0
  %v1295 = vadd.f32 %v227, %v1294
  %v1296 = vpop.f32.mrf.mxu0
  %v1297 = vadd.f32 %v227, %v1296
  %1298 = vmatmul.bf16.gmra.mxu0 %v27
  %v1299 = vpop.f32.mrf.mxu0
  %v1300 = vadd.f32 %v227, %v1299
  %v1301 = vpop.f32.mrf.mxu0
  %v1302 = vadd.f32 %v227, %v1301
  %1303 = vdwg.mxu0
  %1304 = vmatpush.bf16.msra.mxu0 %v1007
  %1305 = vmatpush.bf16.msra.mxu0 %v995
  %1306 = vmatpush.bf16.msra.mxu0 %v983
  %1307 = vmatpush.bf16.msra.mxu0 %v971
  %1308 = vmatpush.bf16.msra.mxu0 %v959
  %1309 = vmatpush.bf16.msra.mxu0 %v947
  %1310 = vmatpush.bf16.msra.mxu0 %v935
  %1311 = vmatpush.bf16.msra.mxu0 %v923
  %1312 = vmatmul.bf16.gmra.mxu0 %v26
  %v1313 = vpop.f32.mrf.mxu0
  %v1314 = vadd.f32 %v1295, %v1313
  %v1315 = vpop.f32.mrf.mxu0
  %v1316 = vadd.f32 %v1297, %v1315
  %1317 = vmatmul.bf16.gmra.mxu0 %v28
  %v1318 = vpop.f32.mrf.mxu0
  %v1319 = vadd.f32 %v1300, %v1318
  %v1320 = vpop.f32.mrf.mxu0
  %v1321 = vadd.f32 %v1302, %v1320
  %1322 = vdwg.mxu0
  %1323 = vmatpush.bf16.msra.mxu0 %v912
  %1324 = vmatpush.bf16.msra.mxu0 %v900
  %1325 = vmatpush.bf16.msra.mxu0 %v888
  %1326 = vmatpush.bf16.msra.mxu0 %v876
  %1327 = vmatpush.bf16.msra.mxu0 %v864
  %1328 = vmatpush.bf16.msra.mxu0 %v852
  %1329 = vmatpush.bf16.msra.mxu0 %v840
  %1330 = vmatpush.bf16.msra.mxu0 %v828
  %1331 = vmatmul.bf16.gmra.mxu0 %v25
  %v1332 = vpop.f32.mrf.mxu0
  %v1333 = vadd.f32 %v228, %v1332
  %v1334 = vpop.f32.mrf.mxu0
  %v1335 = vadd.f32 %v228, %v1334
  %1336 = vmatmul.bf16.gmra.mxu0 %v27
  %v1337 = vpop.f32.mrf.mxu0
  %v1338 = vadd.f32 %v228, %v1337
  %v1339 = vpop.f32.mrf.mxu0
  %v1340 = vadd.f32 %v228, %v1339
  %1341 = vdwg.mxu0
  %1342 = vmatpush.bf16.msra.mxu0 %v1008
  %1343 = vmatpush.bf16.msra.mxu0 %v996
  %1344 = vmatpush.bf16.msra.mxu0 %v984
  %1345 = vmatpush.bf16.msra.mxu0 %v972
  %1346 = vmatpush.bf16.msra.mxu0 %v960
  %1347 = vmatpush.bf16.msra.mxu0 %v948
  %1348 = vmatpush.bf16.msra.mxu0 %v936
  %1349 = vmatpush.bf16.msra.mxu0 %v924
  %1350 = vmatmul.bf16.gmra.mxu0 %v26
  %v1351 = vpop.f32.mrf.mxu0
  %v1352 = vadd.f32 %v1333, %v1351
  %v1353 = vpop.f32.mrf.mxu0
  %v1354 = vadd.f32 %v1335, %v1353
  %1355 = vmatmul.bf16.gmra.mxu0 %v28
  %v1356 = vpop.f32.mrf.mxu0
  %v1357 = vadd.f32 %v1338, %v1356
  %v1358 = vpop.f32.mrf.mxu0
  %v1359 = vadd.f32 %v1340, %v1358
  %1360 = vdwg.mxu0
  %1361 = vmatpush.bf16.msra.mxu0 %v913
  %1362 = vmatpush.bf16.msra.mxu0 %v901
  %1363 = vmatpush.bf16.msra.mxu0 %v889
  %1364 = vmatpush.bf16.msra.mxu0 %v877
  %1365 = vmatpush.bf16.msra.mxu0 %v865
  %1366 = vmatpush.bf16.msra.mxu0 %v853
  %1367 = vmatpush.bf16.msra.mxu0 %v841
  %1368 = vmatpush.bf16.msra.mxu0 %v829
  %1369 = vmatmul.bf16.gmra.mxu0 %v25
  %v1370 = vpop.f32.mrf.mxu0
  %v1371 = vadd.f32 %v229, %v1370
  %v1372 = vpop.f32.mrf.mxu0
  %v1373 = vadd.f32 %v229, %v1372
  %1374 = vmatmul.bf16.gmra.mxu0 %v27
  %v1375 = vpop.f32.mrf.mxu0
  %v1376 = vadd.f32 %v229, %v1375
  %v1377 = vpop.f32.mrf.mxu0
  %v1378 = vadd.f32 %v229, %v1377
  %1379 = vdwg.mxu0
  %1380 = vmatpush.bf16.msra.mxu0 %v1009
  %1381 = vmatpush.bf16.msra.mxu0 %v997
  %1382 = vmatpush.bf16.msra.mxu0 %v985
  %1383 = vmatpush.bf16.msra.mxu0 %v973
  %1384 = vmatpush.bf16.msra.mxu0 %v961
  %1385 = vmatpush.bf16.msra.mxu0 %v949
  %1386 = vmatpush.bf16.msra.mxu0 %v937
  %1387 = vmatpush.bf16.msra.mxu0 %v925
  %1388 = vmatmul.bf16.gmra.mxu0 %v26
  %v1389 = vpop.f32.mrf.mxu0
  %v1390 = vadd.f32 %v1371, %v1389
  %v1391 = vpop.f32.mrf.mxu0
  %v1392 = vadd.f32 %v1373, %v1391
  %1393 = vmatmul.bf16.gmra.mxu0 %v28
  %v1394 = vpop.f32.mrf.mxu0
  %v1395 = vadd.f32 %v1376, %v1394
  %v1396 = vpop.f32.mrf.mxu0
  %v1397 = vadd.f32 %v1378, %v1396
  %1398 = vdwg.mxu0
  %1399 = vmatpush.bf16.msra.mxu0 %v914
  %1400 = vmatpush.bf16.msra.mxu0 %v902
  %1401 = vmatpush.bf16.msra.mxu0 %v890
  %1402 = vmatpush.bf16.msra.mxu0 %v878
  %1403 = vmatpush.bf16.msra.mxu0 %v866
  %1404 = vmatpush.bf16.msra.mxu0 %v854
  %1405 = vmatpush.bf16.msra.mxu0 %v842
  %1406 = vmatpush.bf16.msra.mxu0 %v830
  %1407 = vmatmul.bf16.gmra.mxu0 %v25
  %v1408 = vpop.f32.mrf.mxu0
  %v1409 = vadd.f32 %v230, %v1408
  %v1410 = vpop.f32.mrf.mxu0
  %v1411 = vadd.f32 %v230, %v1410
  %1412 = vmatmul.bf16.gmra.mxu0 %v27
  %v1413 = vpop.f32.mrf.mxu0
  %v1414 = vadd.f32 %v230, %v1413
  %v1415 = vpop.f32.mrf.mxu0
  %v1416 = vadd.f32 %v230, %v1415
  %1417 = vdwg.mxu0
  %1418 = vmatpush.bf16.msra.mxu0 %v1010
  %1419 = vmatpush.bf16.msra.mxu0 %v998
  %1420 = vmatpush.bf16.msra.mxu0 %v986
  %1421 = vmatpush.bf16.msra.mxu0 %v974
  %1422 = vmatpush.bf16.msra.mxu0 %v962
  %1423 = vmatpush.bf16.msra.mxu0 %v950
  %1424 = vmatpush.bf16.msra.mxu0 %v938
  %1425 = vmatpush.bf16.msra.mxu0 %v926
  %1426 = vmatmul.bf16.gmra.mxu0 %v26
  %v1427 = vpop.f32.mrf.mxu0
  %v1428 = vadd.f32 %v1409, %v1427
  %v1429 = vpop.f32.mrf.mxu0
  %v1430 = vadd.f32 %v1411, %v1429
  %1431 = vmatmul.bf16.gmra.mxu0 %v28
  %v1432 = vpop.f32.mrf.mxu0
  %v1433 = vadd.f32 %v1414, %v1432
  %v1434 = vpop.f32.mrf.mxu0
  %v1435 = vadd.f32 %v1416, %v1434
  %1436 = vdwg.mxu0
  %1437 = vmatpush.bf16.msra.mxu0 %v915
  %1438 = vmatpush.bf16.msra.mxu0 %v903
  %1439 = vmatpush.bf16.msra.mxu0 %v891
  %1440 = vmatpush.bf16.msra.mxu0 %v879
  %1441 = vmatpush.bf16.msra.mxu0 %v867
  %1442 = vmatpush.bf16.msra.mxu0 %v855
  %1443 = vmatpush.bf16.msra.mxu0 %v843
  %1444 = vmatpush.bf16.msra.mxu0 %v831
  %1445 = vmatmul.bf16.gmra.mxu0 %v25
  %v1446 = vpop.f32.mrf.mxu0
  %v1447 = vadd.f32 %v231, %v1446
  %v1448 = vpop.f32.mrf.mxu0
  %v1449 = vadd.f32 %v231, %v1448
  %1450 = vmatmul.bf16.gmra.mxu0 %v27
  %v1451 = vpop.f32.mrf.mxu0
  %v1452 = vadd.f32 %v231, %v1451
  %v1453 = vpop.f32.mrf.mxu0
  %v1454 = vadd.f32 %v231, %v1453
  %1455 = vdwg.mxu0
  %1456 = vmatpush.bf16.msra.mxu0 %v1011
  %1457 = vmatpush.bf16.msra.mxu0 %v999
  %1458 = vmatpush.bf16.msra.mxu0 %v987
  %1459 = vmatpush.bf16.msra.mxu0 %v975
  %1460 = vmatpush.bf16.msra.mxu0 %v963
  %1461 = vmatpush.bf16.msra.mxu0 %v951
  %1462 = vmatpush.bf16.msra.mxu0 %v939
  %1463 = vmatpush.bf16.msra.mxu0 %v927
  %1464 = vmatmul.bf16.gmra.mxu0 %v26
  %v1465 = vpop.f32.mrf.mxu0
  %v1466 = vadd.f32 %v1447, %v1465
  %v1467 = vpop.f32.mrf.mxu0
  %v1468 = vadd.f32 %v1449, %v1467
  %1469 = vmatmul.bf16.gmra.mxu0 %v28
  %v1470 = vpop.f32.mrf.mxu0
  %v1471 = vadd.f32 %v1452, %v1470
  %v1472 = vpop.f32.mrf.mxu0
  %v1473 = vadd.f32 %v1454, %v1472
  %1474 = vdwg.mxu0
  %1475 = vmatpush.bf16.msra.mxu0 %v916
  %1476 = vmatpush.bf16.msra.mxu0 %v904
  %1477 = vmatpush.bf16.msra.mxu0 %v892
  %1478 = vmatpush.bf16.msra.mxu0 %v880
  %1479 = vmatpush.bf16.msra.mxu0 %v868
  %1480 = vmatpush.bf16.msra.mxu0 %v856
  %1481 = vmatpush.bf16.msra.mxu0 %v844
  %1482 = vmatpush.bf16.msra.mxu0 %v832
  %1483 = vmatmul.bf16.gmra.mxu0 %v25
  %v1484 = vpop.f32.mrf.mxu0
  %v1485 = vadd.f32 %v232, %v1484
  %v1486 = vpop.f32.mrf.mxu0
  %v1487 = vadd.f32 %v232, %v1486
  %1488 = vmatmul.bf16.gmra.mxu0 %v27
  %v1489 = vpop.f32.mrf.mxu0
  %v1490 = vadd.f32 %v232, %v1489
  %v1491 = vpop.f32.mrf.mxu0
  %v1492 = vadd.f32 %v232, %v1491
  %1493 = vdwg.mxu0
  %1494 = vmatpush.bf16.msra.mxu0 %v1012
  %1495 = vmatpush.bf16.msra.mxu0 %v1000
  %1496 = vmatpush.bf16.msra.mxu0 %v988
  %1497 = vmatpush.bf16.msra.mxu0 %v976
  %1498 = vmatpush.bf16.msra.mxu0 %v964
  %1499 = vmatpush.bf16.msra.mxu0 %v952
  %1500 = vmatpush.bf16.msra.mxu0 %v940
  %1501 = vmatpush.bf16.msra.mxu0 %v928
  %1502 = vmatmul.bf16.gmra.mxu0 %v26
  %v1503 = vpop.f32.mrf.mxu0
  %v1504 = vadd.f32 %v1485, %v1503
  %v1505 = vpop.f32.mrf.mxu0
  %v1506 = vadd.f32 %v1487, %v1505
  %1507 = vmatmul.bf16.gmra.mxu0 %v28
  %v1508 = vpop.f32.mrf.mxu0
  %v1509 = vadd.f32 %v1490, %v1508
  %v1510 = vpop.f32.mrf.mxu0
  %v1511 = vadd.f32 %v1492, %v1510
  %1512 = vdwg.mxu0
  %1513 = vmatpush.bf16.msra.mxu0 %v917
  %1514 = vmatpush.bf16.msra.mxu0 %v905
  %1515 = vmatpush.bf16.msra.mxu0 %v893
  %1516 = vmatpush.bf16.msra.mxu0 %v881
  %1517 = vmatpush.bf16.msra.mxu0 %v869
  %1518 = vmatpush.bf16.msra.mxu0 %v857
  %1519 = vmatpush.bf16.msra.mxu0 %v845
  %1520 = vmatpush.bf16.msra.mxu0 %v833
  %1521 = vmatmul.bf16.gmra.mxu0 %v25
  %v1522 = vpop.f32.mrf.mxu0
  %v1523 = vadd.f32 %v233, %v1522
  %v1524 = vpop.f32.mrf.mxu0
  %v1525 = vadd.f32 %v233, %v1524
  %1526 = vmatmul.bf16.gmra.mxu0 %v27
  %v1527 = vpop.f32.mrf.mxu0
  %v1528 = vadd.f32 %v233, %v1527
  %v1529 = vpop.f32.mrf.mxu0
  %v1530 = vadd.f32 %v233, %v1529
  %1531 = vdwg.mxu0
  %1532 = vmatpush.bf16.msra.mxu0 %v1013
  %1533 = vmatpush.bf16.msra.mxu0 %v1001
  %1534 = vmatpush.bf16.msra.mxu0 %v989
  %1535 = vmatpush.bf16.msra.mxu0 %v977
  %1536 = vmatpush.bf16.msra.mxu0 %v965
  %1537 = vmatpush.bf16.msra.mxu0 %v953
  %1538 = vmatpush.bf16.msra.mxu0 %v941
  %1539 = vmatpush.bf16.msra.mxu0 %v929
  %1540 = vmatmul.bf16.gmra.mxu0 %v26
  %v1541 = vpop.f32.mrf.mxu0
  %v1542 = vadd.f32 %v1523, %v1541
  %v1543 = vpop.f32.mrf.mxu0
  %v1544 = vadd.f32 %v1525, %v1543
  %1545 = vmatmul.bf16.gmra.mxu0 %v28
  %v1546 = vpop.f32.mrf.mxu0
  %v1547 = vadd.f32 %v1528, %v1546
  %v1548 = vpop.f32.mrf.mxu0
  %v1549 = vadd.f32 %v1530, %v1548
  %1550 = vdwg.mxu0
  %1551 = vmatpush.bf16.msra.mxu0 %v918
  %1552 = vmatpush.bf16.msra.mxu0 %v906
  %1553 = vmatpush.bf16.msra.mxu0 %v894
  %1554 = vmatpush.bf16.msra.mxu0 %v882
  %1555 = vmatpush.bf16.msra.mxu0 %v870
  %1556 = vmatpush.bf16.msra.mxu0 %v858
  %1557 = vmatpush.bf16.msra.mxu0 %v846
  %1558 = vmatpush.bf16.msra.mxu0 %v834
  %1559 = vmatmul.bf16.gmra.mxu0 %v25
  %v1560 = vpop.f32.mrf.mxu0
  %v1561 = vadd.f32 %v234, %v1560
  %v1562 = vpop.f32.mrf.mxu0
  %v1563 = vadd.f32 %v234, %v1562
  %1564 = vmatmul.bf16.gmra.mxu0 %v27
  %v1565 = vpop.f32.mrf.mxu0
  %v1566 = vadd.f32 %v234, %v1565
  %v1567 = vpop.f32.mrf.mxu0
  %v1568 = vadd.f32 %v234, %v1567
  %1569 = vdwg.mxu0
  %1570 = vmatpush.bf16.msra.mxu0 %v1014
  %1571 = vmatpush.bf16.msra.mxu0 %v1002
  %1572 = vmatpush.bf16.msra.mxu0 %v990
  %1573 = vmatpush.bf16.msra.mxu0 %v978
  %1574 = vmatpush.bf16.msra.mxu0 %v966
  %1575 = vmatpush.bf16.msra.mxu0 %v954
  %1576 = vmatpush.bf16.msra.mxu0 %v942
  %1577 = vmatpush.bf16.msra.mxu0 %v930
  %1578 = vmatmul.bf16.gmra.mxu0 %v26
  %v1579 = vpop.f32.mrf.mxu0
  %v1580 = vadd.f32 %v1561, %v1579
  %v1581 = vpop.f32.mrf.mxu0
  %v1582 = vadd.f32 %v1563, %v1581
  %1583 = vmatmul.bf16.gmra.mxu0 %v28
  %v1584 = vpop.f32.mrf.mxu0
  %v1585 = vadd.f32 %v1566, %v1584
  %v1586 = vpop.f32.mrf.mxu0
  %v1587 = vadd.f32 %v1568, %v1586
  %1588 = vdwg.mxu0
  %1589 = vmatpush.bf16.msra.mxu0 %v919
  %1590 = vmatpush.bf16.msra.mxu0 %v907
  %1591 = vmatpush.bf16.msra.mxu0 %v895
  %1592 = vmatpush.bf16.msra.mxu0 %v883
  %1593 = vmatpush.bf16.msra.mxu0 %v871
  %1594 = vmatpush.bf16.msra.mxu0 %v859
  %1595 = vmatpush.bf16.msra.mxu0 %v847
  %1596 = vmatpush.bf16.msra.mxu0 %v835
  %1597 = vmatmul.bf16.gmra.mxu0 %v25
  %v1598 = vpop.f32.mrf.mxu0
  %v1599 = vadd.f32 %v235, %v1598
  %v1600 = vpop.f32.mrf.mxu0
  %v1601 = vadd.f32 %v235, %v1600
  %1602 = vmatmul.bf16.gmra.mxu0 %v27
  %v1603 = vpop.f32.mrf.mxu0
  %v1604 = vadd.f32 %v235, %v1603
  %v1605 = vpop.f32.mrf.mxu0
  %v1606 = vadd.f32 %v235, %v1605
  %1607 = vdwg.mxu0
  %1608 = vmatpush.bf16.msra.mxu0 %v1015
  %1609 = vmatpush.bf16.msra.mxu0 %v1003
  %1610 = vmatpush.bf16.msra.mxu0 %v991
  %1611 = vmatpush.bf16.msra.mxu0 %v979
  %1612 = vmatpush.bf16.msra.mxu0 %v967
  %1613 = vmatpush.bf16.msra.mxu0 %v955
  %1614 = vmatpush.bf16.msra.mxu0 %v943
  %1615 = vmatpush.bf16.msra.mxu0 %v931
  %1616 = vmatmul.bf16.gmra.mxu0 %v26
  %v1617 = vpop.f32.mrf.mxu0
  %v1618 = vadd.f32 %v1599, %v1617
  %v1619 = vpop.f32.mrf.mxu0
  %v1620 = vadd.f32 %v1601, %v1619
  %1621 = vmatmul.bf16.gmra.mxu0 %v28
  %v1622 = vpop.f32.mrf.mxu0
  %v1623 = vadd.f32 %v1604, %v1622
  %v1624 = vpop.f32.mrf.mxu0
  %v1625 = vadd.f32 %v1606, %v1624
  %1626 = vdwg.mxu0
  %1627 = vmatpush.bf16.msra.mxu0 %v920
  %1628 = vmatpush.bf16.msra.mxu0 %v908
  %1629 = vmatpush.bf16.msra.mxu0 %v896
  %1630 = vmatpush.bf16.msra.mxu0 %v884
  %1631 = vmatpush.bf16.msra.mxu0 %v872
  %1632 = vmatpush.bf16.msra.mxu0 %v860
  %1633 = vmatpush.bf16.msra.mxu0 %v848
  %1634 = vmatpush.bf16.msra.mxu0 %v836
  %1635 = vmatmul.bf16.gmra.mxu0 %v25
  %v1636 = vpop.f32.mrf.mxu0
  %v1637 = vadd.f32 %v236, %v1636
  %v1638 = vpop.f32.mrf.mxu0
  %v1639 = vadd.f32 %v236, %v1638
  %1640 = vmatmul.bf16.gmra.mxu0 %v27
  %v1641 = vpop.f32.mrf.mxu0
  %v1642 = vadd.f32 %v236, %v1641
  %v1643 = vpop.f32.mrf.mxu0
  %v1644 = vadd.f32 %v236, %v1643
  %1645 = vdwg.mxu0
  %1646 = vmatpush.bf16.msra.mxu0 %v1016
  %1647 = vmatpush.bf16.msra.mxu0 %v1004
  %1648 = vmatpush.bf16.msra.mxu0 %v992
  %1649 = vmatpush.bf16.msra.mxu0 %v980
  %1650 = vmatpush.bf16.msra.mxu0 %v968
  %1651 = vmatpush.bf16.msra.mxu0 %v956
  %1652 = vmatpush.bf16.msra.mxu0 %v944
  %1653 = vmatpush.bf16.msra.mxu0 %v932
  %1654 = vmatmul.bf16.gmra.mxu0 %v26
  %v1655 = vpop.f32.mrf.mxu0
  %v1656 = vadd.f32 %v1637, %v1655
  %v1657 = vpop.f32.mrf.mxu0
  %v1658 = vadd.f32 %v1639, %v1657
  %1659 = vmatmul.bf16.gmra.mxu0 %v28
  %v1660 = vpop.f32.mrf.mxu0
  %v1661 = vadd.f32 %v1642, %v1660
  %v1662 = vpop.f32.mrf.mxu0
  %v1663 = vadd.f32 %v1644, %v1662
  %1664 = vdwg.mxu0
  %v1665 = vld [vmem:[%s3] sm:$0xff]
  %v1666 = vld [vmem:[%s3 + $0x8] sm:$0xff]
  %v1667 = vld [vmem:[%s3 + $0x10] sm:$0xff]
  %v1668 = vld [vmem:[%s3 + $0x18] sm:$0xff]
  %v1669 = vld [vmem:[%s3 + $0x20] sm:$0xff]
  %v1670 = vld [vmem:[%s3 + $0x28] sm:$0xff]
  %v1671 = vld [vmem:[%s3 + $0x30] sm:$0xff]
  %v1672 = vld [vmem:[%s3 + $0x38] sm:$0xff]
  %v1673 = vld [vmem:[%s3 + $0x40] sm:$0xff]
  %v1674 = vld [vmem:[%s3 + $0x48] sm:$0xff]
  %v1675 = vld [vmem:[%s3 + $0x50] sm:$0xff]
  %v1676 = vld [vmem:[%s3 + $0x58] sm:$0xff]
  %v1677 = vld [vmem:[%s3 + $0x60] sm:$0xff]
  %v1678 = vld [vmem:[%s3 + $0x68] sm:$0xff]
  %v1679 = vld [vmem:[%s3 + $0x70] sm:$0xff]
  %v1680 = vld [vmem:[%s3 + $0x78] sm:$0xff]
  %v1681 = vld [vmem:[%s3 + $0x80] sm:$0xff]
  %v1682 = vld [vmem:[%s3 + $0x88] sm:$0xff]
  %v1683 = vld [vmem:[%s3 + $0x90] sm:$0xff]
  %v1684 = vld [vmem:[%s3 + $0x98] sm:$0xff]
  %v1685 = vld [vmem:[%s3 + $0xa0] sm:$0xff]
  %v1686 = vld [vmem:[%s3 + $0xa8] sm:$0xff]
  %v1687 = vld [vmem:[%s3 + $0xb0] sm:$0xff]
  %v1688 = vld [vmem:[%s3 + $0xb8] sm:$0xff]
  %v1689 = vld [vmem:[%s3 + $0xc0] sm:$0xff]
  %v1690 = vld [vmem:[%s3 + $0xc8] sm:$0xff]
  %v1691 = vld [vmem:[%s3 + $0xd0] sm:$0xff]
  %v1692 = vld [vmem:[%s3 + $0xd8] sm:$0xff]
  %v1693 = vld [vmem:[%s3 + $0xe0] sm:$0xff]
  %v1694 = vld [vmem:[%s3 + $0xe8] sm:$0xff]
  %v1695 = vld [vmem:[%s3 + $0xf0] sm:$0xff]
  %v1696 = vld [vmem:[%s3 + $0xf8] sm:$0xff]
  %v1697 = vld [vmem:[%s3 + $0x100] sm:$0xff]
  %v1698 = vld [vmem:[%s3 + $0x108] sm:$0xff]
  %v1699 = vld [vmem:[%s3 + $0x110] sm:$0xff]
  %v1700 = vld [vmem:[%s3 + $0x118] sm:$0xff]
  %v1701 = vld [vmem:[%s3 + $0x120] sm:$0xff]
  %v1702 = vld [vmem:[%s3 + $0x128] sm:$0xff]
  %v1703 = vld [vmem:[%s3 + $0x130] sm:$0xff]
  %v1704 = vld [vmem:[%s3 + $0x138] sm:$0xff]
  %v1705 = vld [vmem:[%s3 + $0x140] sm:$0xff]
  %v1706 = vld [vmem:[%s3 + $0x148] sm:$0xff]
  %v1707 = vld [vmem:[%s3 + $0x150] sm:$0xff]
  %v1708 = vld [vmem:[%s3 + $0x158] sm:$0xff]
  %v1709 = vld [vmem:[%s3 + $0x160] sm:$0xff]
  %v1710 = vld [vmem:[%s3 + $0x168] sm:$0xff]
  %v1711 = vld [vmem:[%s3 + $0x170] sm:$0xff]
  %v1712 = vld [vmem:[%s3 + $0x178] sm:$0xff]
  %v1713 = vadd.f32 %v1238, %v1665
  %v1714 = vadd.f32 %v1276, %v1666
  %v1715 = vadd.f32 %v1314, %v1667
  %v1716 = vadd.f32 %v1352, %v1668
  %v1717 = vadd.f32 %v1390, %v1669
  %v1718 = vadd.f32 %v1428, %v1670
  %v1719 = vadd.f32 %v1466, %v1671
  %v1720 = vadd.f32 %v1504, %v1672
  %v1721 = vadd.f32 %v1542, %v1673
  %v1722 = vadd.f32 %v1580, %v1674
  %v1723 = vadd.f32 %v1618, %v1675
  %v1724 = vadd.f32 %v1656, %v1676
  %v1725 = vadd.f32 %v1240, %v1677
  %v1726 = vadd.f32 %v1278, %v1678
  %v1727 = vadd.f32 %v1316, %v1679
  %v1728 = vadd.f32 %v1354, %v1680
  %v1729 = vadd.f32 %v1392, %v1681
  %v1730 = vadd.f32 %v1430, %v1682
  %v1731 = vadd.f32 %v1468, %v1683
  %v1732 = vadd.f32 %v1506, %v1684
  %v1733 = vadd.f32 %v1544, %v1685
  %v1734 = vadd.f32 %v1582, %v1686
  %v1735 = vadd.f32 %v1620, %v1687
  %v1736 = vadd.f32 %v1658, %v1688
  %v1737 = vadd.f32 %v1243, %v1689
  %v1738 = vadd.f32 %v1281, %v1690
  %v1739 = vadd.f32 %v1319, %v1691
  %v1740 = vadd.f32 %v1357, %v1692
  %v1741 = vadd.f32 %v1395, %v1693
  %v1742 = vadd.f32 %v1433, %v1694
  %v1743 = vadd.f32 %v1471, %v1695
  %v1744 = vadd.f32 %v1509, %v1696
  %v1745 = vadd.f32 %v1547, %v1697
  %v1746 = vadd.f32 %v1585, %v1698
  %v1747 = vadd.f32 %v1623, %v1699
  %v1748 = vadd.f32 %v1661, %v1700
  %v1749 = vadd.f32 %v1245, %v1701
  %v1750 = vadd.f32 %v1283, %v1702
  %v1751 = vadd.f32 %v1321, %v1703
  %v1752 = vadd.f32 %v1359, %v1704
  %v1753 = vadd.f32 %v1397, %v1705
  %v1754 = vadd.f32 %v1435, %v1706
  %v1755 = vadd.f32 %v1473, %v1707
  %v1756 = vadd.f32 %v1511, %v1708
  %v1757 = vadd.f32 %v1549, %v1709
  %v1758 = vadd.f32 %v1587, %v1710
  %v1759 = vadd.f32 %v1625, %v1711
  %v1760 = vadd.f32 %v1663, %v1712
  %1761 = vst [vmem:[%s4] sm:$0xff] %v1713
  %1762 = vst [vmem:[%s4 + $0x8] sm:$0xff] %v1714
  %1763 = vst [vmem:[%s4 + $0x10] sm:$0xff] %v1715
  %1764 = vst [vmem:[%s4 + $0x18] sm:$0xff] %v1716
  %1765 = vst [vmem:[%s4 + $0x20] sm:$0xff] %v1717
  %1766 = vst [vmem:[%s4 + $0x28] sm:$0xff] %v1718
  %1767 = vst [vmem:[%s4 + $0x30] sm:$0xff] %v1719
  %1768 = vst [vmem:[%s4 + $0x38] sm:$0xff] %v1720
  %1769 = vst [vmem:[%s4 + $0x40] sm:$0xff] %v1721
  %1770 = vst [vmem:[%s4 + $0x48] sm:$0xff] %v1722
  %1771 = vst [vmem:[%s4 + $0x50] sm:$0xff] %v1723
  %1772 = vst [vmem:[%s4 + $0x58] sm:$0xff] %v1724
  %1773 = vst [vmem:[%s4 + $0x60] sm:$0xff] %v1725
  %1774 = vst [vmem:[%s4 + $0x68] sm:$0xff] %v1726
  %1775 = vst [vmem:[%s4 + $0x70] sm:$0xff] %v1727
  %1776 = vst [vmem:[%s4 + $0x78] sm:$0xff] %v1728
  %1777 = vst [vmem:[%s4 + $0x80] sm:$0xff] %v1729
  %1778 = vst [vmem:[%s4 + $0x88] sm:$0xff] %v1730
  %1779 = vst [vmem:[%s4 + $0x90] sm:$0xff] %v1731
  %1780 = vst [vmem:[%s4 + $0x98] sm:$0xff] %v1732
  %1781 = vst [vmem:[%s4 + $0xa0] sm:$0xff] %v1733
  %1782 = vst [vmem:[%s4 + $0xa8] sm:$0xff] %v1734
  %1783 = vst [vmem:[%s4 + $0xb0] sm:$0xff] %v1735
  %1784 = vst [vmem:[%s4 + $0xb8] sm:$0xff] %v1736
  %1785 = vst [vmem:[%s4 + $0xc0] sm:$0xff] %v1737
  %1786 = vst [vmem:[%s4 + $0xc8] sm:$0xff] %v1738
  %1787 = vst [vmem:[%s4 + $0xd0] sm:$0xff] %v1739
  %1788 = vst [vmem:[%s4 + $0xd8] sm:$0xff] %v1740
  %1789 = vst [vmem:[%s4 + $0xe0] sm:$0xff] %v1741
  %1790 = vst [vmem:[%s4 + $0xe8] sm:$0xff] %v1742
  %1791 = vst [vmem:[%s4 + $0xf0] sm:$0xff] %v1743
  %1792 = vst [vmem:[%s4 + $0xf8] sm:$0xff] %v1744
  %1793 = vst [vmem:[%s4 + $0x100] sm:$0xff] %v1745
  %1794 = vst [vmem:[%s4 + $0x108] sm:$0xff] %v1746
  %1795 = vst [vmem:[%s4 + $0x110] sm:$0xff] %v1747
  %1796 = vst [vmem:[%s4 + $0x118] sm:$0xff] %v1748
  %1797 = vst [vmem:[%s4 + $0x120] sm:$0xff] %v1749
  %1798 = vst [vmem:[%s4 + $0x128] sm:$0xff] %v1750
  %1799 = vst [vmem:[%s4 + $0x130] sm:$0xff] %v1751
  %1800 = vst [vmem:[%s4 + $0x138] sm:$0xff] %v1752
  %1801 = vst [vmem:[%s4 + $0x140] sm:$0xff] %v1753
  %1802 = vst [vmem:[%s4 + $0x148] sm:$0xff] %v1754
  %1803 = vst [vmem:[%s4 + $0x150] sm:$0xff] %v1755
  %1804 = vst [vmem:[%s4 + $0x158] sm:$0xff] %v1756
  %1805 = vst [vmem:[%s4 + $0x160] sm:$0xff] %v1757
  %1806 = vst [vmem:[%s4 + $0x168] sm:$0xff] %v1758
  %1807 = vst [vmem:[%s4 + $0x170] sm:$0xff] %v1759
  %1808 = vst [vmem:[%s4 + $0x178] sm:$0xff] %v1760
  // Predicated region
  $region18: #{swin_block4_forward.13} parent=0 // pred_check
    _
  $region19: #{swin_block4_forward.13} parent=0 // pred_check_branch
    %1810 = sbr.rel (0) target = $region21
  $region20: #{swin_block4_forward.13} parent=0 // pred_region
    _
  $region21: #{swin_block4_forward.13} parent=0 // pred_fallthru
    _
  // Predicated region
  $region22: #{swin_block4_forward.13} parent=0 // pred_check
    _
  $region23: #{swin_block4_forward.13} parent=0 // pred_check_branch
    %1812 = sbr.rel (0) target = $region25
  $region24: #{swin_block4_forward.13} parent=0 // pred_region
    _
  $region25: #{swin_block4_forward.13} parent=0 // pred_fallthru
    _

// kernel: swin_block4_forward.12
$region0: #{swin_block4_forward.12}
  #allocation0 [shape = 'u32[]', space=smem, size = 0x4, offset = 0x4, fixed_abs, tag = 'smem constant byte address 0x4 - core index']
  #allocation1 [shape = 'u32[72,128]{1,0:T(1,128)}', space=vmem, size = 0x9000, scoped, tag = 'internal scratch']
  %s0 = inlined_call_operand.vmem [shape: f32[32,1536], index: 0, kind: input, shape index: {}]
  %s1 = inlined_call_operand.vmem [shape: bf16[1536,256], index: 1, kind: input, shape index: {}]
  %s2 = inlined_call_operand.vmem [shape: f32[1,1536], index: 2, kind: input, shape index: {}]
  %s3 = inlined_call_operand.vmem [shape: f32[1,1536], index: 3, kind: input, shape index: {}]
  %s4 = inlined_call_operand.vmem [shape: f32[1,256], index: 4, kind: input, shape index: {}]
  %s5 = inlined_call_operand.vmem [shape: f32[32,256], index: 5, kind: output, shape index: {}]
  %s6 = sld [smem:[#allocation0]]
  $region30: #{swin_block4_forward.12} parent=0
    _
  %s8 = ssub.s32 1, %s6
  %s9 = scalar_select 0, %s8, %s6
  // Predicated region
  $region2: #{swin_block4_forward.12} parent=0 // pred_check
    _
  $region3: #{swin_block4_forward.12} parent=0 // pred_check_branch
    %11 = sbr.rel (0) target = $region5
  $region4: #{swin_block4_forward.12} parent=0 // pred_region
    _
  $region5: #{swin_block4_forward.12} parent=0 // pred_fallthru
    _
  // Predicated region
  $region6: #{swin_block4_forward.12} parent=0 // pred_check
    _
  $region7: #{swin_block4_forward.12} parent=0 // pred_check_branch
    %13 = sbr.rel (0) target = $region9
  $region8: #{swin_block4_forward.12} parent=0 // pred_region
    _
  $region9: #{swin_block4_forward.12} parent=0 // pred_fallthru
    _
  // Predicated region
  $region10: #{swin_block4_forward.12} parent=0 // pred_check
    _
  $region11: #{swin_block4_forward.12} parent=0 // pred_check_branch
    %15 = sbr.rel (0) target = $region13
  $region12: #{swin_block4_forward.12} parent=0 // pred_region
    _
  $region13: #{swin_block4_forward.12} parent=0 // pred_fallthru
    _
  // Predicated region
  $region14: #{swin_block4_forward.12} parent=0 // pred_check
    _
  $region15: #{swin_block4_forward.12} parent=0 // pred_check_branch
    %17 = sbr.rel (0) target = $region17
  $region16: #{swin_block4_forward.12} parent=0 // pred_region
    _
  $region17: #{swin_block4_forward.12} parent=0 // pred_fallthru
    _
  // Predicated region
  $region18: #{swin_block4_forward.12} parent=0 // pred_check
    _
  $region19: #{swin_block4_forward.12} parent=0 // pred_check_branch
    %19 = sbr.rel (0) target = $region21
  $region20: #{swin_block4_forward.12} parent=0 // pred_region
    _
  $region21: #{swin_block4_forward.12} parent=0 // pred_fallthru
    _
  %v20 = vld [vmem:[%s0] sm:$0xff]
  %v21 = vld [vmem:[%s0 + $0x8] sm:$0xff]
  %v22 = vld [vmem:[%s0 + $0x10] sm:$0xff]
  %v23 = vld [vmem:[%s0 + $0x18] sm:$0xff]
  %v24 = vld [vmem:[%s0 + $0x20] sm:$0xff]
  %v25 = vld [vmem:[%s0 + $0x28] sm:$0xff]
  %v26 = vld [vmem:[%s0 + $0x30] sm:$0xff]
  %v27 = vld [vmem:[%s0 + $0x38] sm:$0xff]
  %v28 = vld [vmem:[%s0 + $0x40] sm:$0xff]
  %v29 = vld [vmem:[%s0 + $0x48] sm:$0xff]
  %v30 = vld [vmem:[%s0 + $0x50] sm:$0xff]
  %v31 = vld [vmem:[%s0 + $0x58] sm:$0xff]
  %v32 = vld [vmem:[%s0 + $0x60] sm:$0xff]
  %v33 = vld [vmem:[%s0 + $0x68] sm:$0xff]
  %v34 = vld [vmem:[%s0 + $0x70] sm:$0xff]
  %v35 = vld [vmem:[%s0 + $0x78] sm:$0xff]
  %v36 = vld [vmem:[%s0 + $0x80] sm:$0xff]
  %v37 = vld [vmem:[%s0 + $0x88] sm:$0xff]
  %v38 = vld [vmem:[%s0 + $0x90] sm:$0xff]
  %v39 = vld [vmem:[%s0 + $0x98] sm:$0xff]
  %v40 = vld [vmem:[%s0 + $0xa0] sm:$0xff]
  %v41 = vld [vmem:[%s0 + $0xa8] sm:$0xff]
  %v42 = vld [vmem:[%s0 + $0xb0] sm:$0xff]
  %v43 = vld [vmem:[%s0 + $0xb8] sm:$0xff]
  %v44 = vld [vmem:[%s0 + $0xc0] sm:$0xff]
  %v45 = vld [vmem:[%s0 + $0xc8] sm:$0xff]
  %v46 = vld [vmem:[%s0 + $0xd0] sm:$0xff]
  %v47 = vld [vmem:[%s0 + $0xd8] sm:$0xff]
  %v48 = vld [vmem:[%s0 + $0xe0] sm:$0xff]
  %v49 = vld [vmem:[%s0 + $0xe8] sm:$0xff]
  %v50 = vld [vmem:[%s0 + $0xf0] sm:$0xff]
  %v51 = vld [vmem:[%s0 + $0xf8] sm:$0xff]
  %v52 = vld [vmem:[%s0 + $0x100] sm:$0xff]
  %v53 = vld [vmem:[%s0 + $0x108] sm:$0xff]
  %v54 = vld [vmem:[%s0 + $0x110] sm:$0xff]
  %v55 = vld [vmem:[%s0 + $0x118] sm:$0xff]
  %v56 = vld [vmem:[%s0 + $0x120] sm:$0xff]
  %v57 = vld [vmem:[%s0 + $0x128] sm:$0xff]
  %v58 = vld [vmem:[%s0 + $0x130] sm:$0xff]
  %v59 = vld [vmem:[%s0 + $0x138] sm:$0xff]
  %v60 = vld [vmem:[%s0 + $0x140] sm:$0xff]
  %v61 = vld [vmem:[%s0 + $0x148] sm:$0xff]
  %v62 = vld [vmem:[%s0 + $0x150] sm:$0xff]
  %v63 = vld [vmem:[%s0 + $0x158] sm:$0xff]
  %v64 = vld [vmem:[%s0 + $0x160] sm:$0xff]
  %v65 = vld [vmem:[%s0 + $0x168] sm:$0xff]
  %v66 = vld [vmem:[%s0 + $0x170] sm:$0xff]
  %v67 = vld [vmem:[%s0 + $0x178] sm:$0xff]
  %v68 = vld [vmem:[%s2] sm:$0xff]
  %v69 = vld [vmem:[%s2 + $0x8] sm:$0xf]
  %v72 = vperm.slane %v68, 0
  %v73 = vperm.slane %v68, 1
  %v74 = vperm.slane %v68, 2
  %v75 = vperm.slane %v68, 3
  %v76 = vperm.slane %v68, 4
  %v77 = vperm.slane %v68, 5
  %v78 = vperm.slane %v68, 6
  %v79 = vperm.slane %v68, 7
  %v80 = vperm.slane %v69, 0
  %v81 = vperm.slane %v69, 1
  %v82 = vperm.slane %v69, 2
  %v83 = vperm.slane %v69, 3
  %v96 = vmul.f32 %v20, %v72
  %v97 = vmul.f32 %v21, %v73
  %v98 = vmul.f32 %v22, %v74
  %v99 = vmul.f32 %v23, %v75
  %v100 = vmul.f32 %v24, %v76
  %v101 = vmul.f32 %v25, %v77
  %v102 = vmul.f32 %v26, %v78
  %v103 = vmul.f32 %v27, %v79
  %v104 = vmul.f32 %v28, %v80
  %v105 = vmul.f32 %v29, %v81
  %v106 = vmul.f32 %v30, %v82
  %v107 = vmul.f32 %v31, %v83
  %v108 = vmul.f32 %v32, %v72
  %v109 = vmul.f32 %v33, %v73
  %v110 = vmul.f32 %v34, %v74
  %v111 = vmul.f32 %v35, %v75
  %v112 = vmul.f32 %v36, %v76
  %v113 = vmul.f32 %v37, %v77
  %v114 = vmul.f32 %v38, %v78
  %v115 = vmul.f32 %v39, %v79
  %v116 = vmul.f32 %v40, %v80
  %v117 = vmul.f32 %v41, %v81
  %v118 = vmul.f32 %v42, %v82
  %v119 = vmul.f32 %v43, %v83
  %v120 = vmul.f32 %v44, %v72
  %v121 = vmul.f32 %v45, %v73
  %v122 = vmul.f32 %v46, %v74
  %v123 = vmul.f32 %v47, %v75
  %v124 = vmul.f32 %v48, %v76
  %v125 = vmul.f32 %v49, %v77
  %v126 = vmul.f32 %v50, %v78
  %v127 = vmul.f32 %v51, %v79
  %v128 = vmul.f32 %v52, %v80
  %v129 = vmul.f32 %v53, %v81
  %v130 = vmul.f32 %v54, %v82
  %v131 = vmul.f32 %v55, %v83
  %v132 = vmul.f32 %v56, %v72
  %v133 = vmul.f32 %v57, %v73
  %v134 = vmul.f32 %v58, %v74
  %v135 = vmul.f32 %v59, %v75
  %v136 = vmul.f32 %v60, %v76
  %v137 = vmul.f32 %v61, %v77
  %v138 = vmul.f32 %v62, %v78
  %v139 = vmul.f32 %v63, %v79
  %v140 = vmul.f32 %v64, %v80
  %v141 = vmul.f32 %v65, %v81
  %v142 = vmul.f32 %v66, %v82
  %v143 = vmul.f32 %v67, %v83
  %v144 = vld [vmem:[%s3] sm:$0xff]
  %v145 = vld [vmem:[%s3 + $0x8] sm:$0xf]
  %v148 = vperm.slane %v144, 0
  %v149 = vperm.slane %v144, 1
  %v150 = vperm.slane %v144, 2
  %v151 = vperm.slane %v144, 3
  %v152 = vperm.slane %v144, 4
  %v153 = vperm.slane %v144, 5
  %v154 = vperm.slane %v144, 6
  %v155 = vperm.slane %v144, 7
  %v156 = vperm.slane %v145, 0
  %v157 = vperm.slane %v145, 1
  %v158 = vperm.slane %v145, 2
  %v159 = vperm.slane %v145, 3
  %v172 = vadd.f32 %v96, %v148
  %v173 = vadd.f32 %v97, %v149
  %v174 = vadd.f32 %v98, %v150
  %v175 = vadd.f32 %v99, %v151
  %v176 = vadd.f32 %v100, %v152
  %v177 = vadd.f32 %v101, %v153
  %v178 = vadd.f32 %v102, %v154
  %v179 = vadd.f32 %v103, %v155
  %v180 = vadd.f32 %v104, %v156
  %v181 = vadd.f32 %v105, %v157
  %v182 = vadd.f32 %v106, %v158
  %v183 = vadd.f32 %v107, %v159
  %v184 = vadd.f32 %v108, %v148
  %v185 = vadd.f32 %v109, %v149
  %v186 = vadd.f32 %v110, %v150
  %v187 = vadd.f32 %v111, %v151
  %v188 = vadd.f32 %v112, %v152
  %v189 = vadd.f32 %v113, %v153
  %v190 = vadd.f32 %v114, %v154
  %v191 = vadd.f32 %v115, %v155
  %v192 = vadd.f32 %v116, %v156
  %v193 = vadd.f32 %v117, %v157
  %v194 = vadd.f32 %v118, %v158
  %v195 = vadd.f32 %v119, %v159
  %v196 = vadd.f32 %v120, %v148
  %v197 = vadd.f32 %v121, %v149
  %v198 = vadd.f32 %v122, %v150
  %v199 = vadd.f32 %v123, %v151
  %v200 = vadd.f32 %v124, %v152
  %v201 = vadd.f32 %v125, %v153
  %v202 = vadd.f32 %v126, %v154
  %v203 = vadd.f32 %v127, %v155
  %v204 = vadd.f32 %v128, %v156
  %v205 = vadd.f32 %v129, %v157
  %v206 = vadd.f32 %v130, %v158
  %v207 = vadd.f32 %v131, %v159
  %v208 = vadd.f32 %v132, %v148
  %v209 = vadd.f32 %v133, %v149
  %v210 = vadd.f32 %v134, %v150
  %v211 = vadd.f32 %v135, %v151
  %v212 = vadd.f32 %v136, %v152
  %v213 = vadd.f32 %v137, %v153
  %v214 = vadd.f32 %v138, %v154
  %v215 = vadd.f32 %v139, %v155
  %v216 = vadd.f32 %v140, %v156
  %v217 = vadd.f32 %v141, %v157
  %v218 = vadd.f32 %v142, %v158
  %v219 = vadd.f32 %v143, %v159
  %v220 = vpack.c.bf16 %v184, %v172
  %v221 = vpack.c.bf16 %v185, %v173
  %v222 = vpack.c.bf16 %v186, %v174
  %v223 = vpack.c.bf16 %v187, %v175
  %v224 = vpack.c.bf16 %v188, %v176
  %v225 = vpack.c.bf16 %v189, %v177
  %v226 = vpack.c.bf16 %v190, %v178
  %v227 = vpack.c.bf16 %v191, %v179
  %v228 = vpack.c.bf16 %v192, %v180
  %v229 = vpack.c.bf16 %v193, %v181
  %v230 = vpack.c.bf16 %v194, %v182
  %v231 = vpack.c.bf16 %v195, %v183
  %v232 = vpack.c.bf16 %v208, %v196
  %v233 = vpack.c.bf16 %v209, %v197
  %v234 = vpack.c.bf16 %v210, %v198
  %v235 = vpack.c.bf16 %v211, %v199
  %v236 = vpack.c.bf16 %v212, %v200
  %v237 = vpack.c.bf16 %v213, %v201
  %v238 = vpack.c.bf16 %v214, %v202
  %v239 = vpack.c.bf16 %v215, %v203
  %v240 = vpack.c.bf16 %v216, %v204
  %v241 = vpack.c.bf16 %v217, %v205
  %v242 = vpack.c.bf16 %v218, %v206
  %v243 = vpack.c.bf16 %v219, %v207
  %v244 = vld [vmem:[%s1] sm:$0xff]
  %v245 = vld [vmem:[%s1 + $0x8] sm:$0xff]
  %v246 = vld [vmem:[%s1 + $0x10] sm:$0xff]
  %v247 = vld [vmem:[%s1 + $0x18] sm:$0xff]
  %v248 = vld [vmem:[%s1 + $0x20] sm:$0xff]
  %v249 = vld [vmem:[%s1 + $0x28] sm:$0xff]
  %v250 = vld [vmem:[%s1 + $0x30] sm:$0xff]
  %v251 = vld [vmem:[%s1 + $0x38] sm:$0xff]
  %v252 = vld [vmem:[%s1 + $0x40] sm:$0xff]
  %v253 = vld [vmem:[%s1 + $0x48] sm:$0xff]
  %v254 = vld [vmem:[%s1 + $0x50] sm:$0xff]
  %v255 = vld [vmem:[%s1 + $0x58] sm:$0xff]
  %v256 = vld [vmem:[%s1 + $0x60] sm:$0xff]
  %v257 = vld [vmem:[%s1 + $0x68] sm:$0xff]
  %v258 = vld [vmem:[%s1 + $0x70] sm:$0xff]
  %v259 = vld [vmem:[%s1 + $0x78] sm:$0xff]
  %v260 = vld [vmem:[%s1 + $0x80] sm:$0xff]
  %v261 = vld [vmem:[%s1 + $0x88] sm:$0xff]
  %v262 = vld [vmem:[%s1 + $0x90] sm:$0xff]
  %v263 = vld [vmem:[%s1 + $0x98] sm:$0xff]
  %v264 = vld [vmem:[%s1 + $0xa0] sm:$0xff]
  %v265 = vld [vmem:[%s1 + $0xa8] sm:$0xff]
  %v266 = vld [vmem:[%s1 + $0xb0] sm:$0xff]
  %v267 = vld [vmem:[%s1 + $0xb8] sm:$0xff]
  %v268 = vld [vmem:[%s1 + $0xc0] sm:$0xff]
  %v269 = vld [vmem:[%s1 + $0xc8] sm:$0xff]
  %v270 = vld [vmem:[%s1 + $0xd0] sm:$0xff]
  %v271 = vld [vmem:[%s1 + $0xd8] sm:$0xff]
  %v272 = vld [vmem:[%s1 + $0xe0] sm:$0xff]
  %v273 = vld [vmem:[%s1 + $0xe8] sm:$0xff]
  %v274 = vld [vmem:[%s1 + $0xf0] sm:$0xff]
  %v275 = vld [vmem:[%s1 + $0xf8] sm:$0xff]
  %v276 = vld [vmem:[%s1 + $0x100] sm:$0xff]
  %v277 = vld [vmem:[%s1 + $0x108] sm:$0xff]
  %v278 = vld [vmem:[%s1 + $0x110] sm:$0xff]
  %v279 = vld [vmem:[%s1 + $0x118] sm:$0xff]
  %v280 = vld [vmem:[%s1 + $0x120] sm:$0xff]
  %v281 = vld [vmem:[%s1 + $0x128] sm:$0xff]
  %v282 = vld [vmem:[%s1 + $0x130] sm:$0xff]
  %v283 = vld [vmem:[%s1 + $0x138] sm:$0xff]
  %v284 = vld [vmem:[%s1 + $0x140] sm:$0xff]
  %v285 = vld [vmem:[%s1 + $0x148] sm:$0xff]
  %v286 = vld [vmem:[%s1 + $0x150] sm:$0xff]
  %v287 = vld [vmem:[%s1 + $0x158] sm:$0xff]
  %v288 = vld [vmem:[%s1 + $0x160] sm:$0xff]
  %v289 = vld [vmem:[%s1 + $0x168] sm:$0xff]
  %v290 = vld [vmem:[%s1 + $0x170] sm:$0xff]
  %v291 = vld [vmem:[%s1 + $0x178] sm:$0xff]
  %v292 = vld [vmem:[%s1 + $0x180] sm:$0xff]
  %v293 = vld [vmem:[%s1 + $0x188] sm:$0xff]
  %v294 = vld [vmem:[%s1 + $0x190] sm:$0xff]
  %v295 = vld [vmem:[%s1 + $0x198] sm:$0xff]
  %v296 = vld [vmem:[%s1 + $0x1a0] sm:$0xff]
  %v297 = vld [vmem:[%s1 + $0x1a8] sm:$0xff]
  %v298 = vld [vmem:[%s1 + $0x1b0] sm:$0xff]
  %v299 = vld [vmem:[%s1 + $0x1b8] sm:$0xff]
  %v300 = vld [vmem:[%s1 + $0x1c0] sm:$0xff]
  %v301 = vld [vmem:[%s1 + $0x1c8] sm:$0xff]
  %v302 = vld [vmem:[%s1 + $0x1d0] sm:$0xff]
  %v303 = vld [vmem:[%s1 + $0x1d8] sm:$0xff]
  %v304 = vld [vmem:[%s1 + $0x1e0] sm:$0xff]
  %v305 = vld [vmem:[%s1 + $0x1e8] sm:$0xff]
  %v306 = vld [vmem:[%s1 + $0x1f0] sm:$0xff]
  %v307 = vld [vmem:[%s1 + $0x1f8] sm:$0xff]
  %v308 = vld [vmem:[%s1 + $0x200] sm:$0xff]
  %v309 = vld [vmem:[%s1 + $0x208] sm:$0xff]
  %v310 = vld [vmem:[%s1 + $0x210] sm:$0xff]
  %v311 = vld [vmem:[%s1 + $0x218] sm:$0xff]
  %v312 = vld [vmem:[%s1 + $0x220] sm:$0xff]
  %v313 = vld [vmem:[%s1 + $0x228] sm:$0xff]
  %v314 = vld [vmem:[%s1 + $0x230] sm:$0xff]
  %v315 = vld [vmem:[%s1 + $0x238] sm:$0xff]
  %v316 = vld [vmem:[%s1 + $0x240] sm:$0xff]
  %v317 = vld [vmem:[%s1 + $0x248] sm:$0xff]
  %v318 = vld [vmem:[%s1 + $0x250] sm:$0xff]
  %v319 = vld [vmem:[%s1 + $0x258] sm:$0xff]
  %v320 = vld [vmem:[%s1 + $0x260] sm:$0xff]
  %v321 = vld [vmem:[%s1 + $0x268] sm:$0xff]
  %v322 = vld [vmem:[%s1 + $0x270] sm:$0xff]
  %v323 = vld [vmem:[%s1 + $0x278] sm:$0xff]
  %v324 = vld [vmem:[%s1 + $0x280] sm:$0xff]
  %v325 = vld [vmem:[%s1 + $0x288] sm:$0xff]
  %v326 = vld [vmem:[%s1 + $0x290] sm:$0xff]
  %v327 = vld [vmem:[%s1 + $0x298] sm:$0xff]
  %v328 = vld [vmem:[%s1 + $0x2a0] sm:$0xff]
  %v329 = vld [vmem:[%s1 + $0x2a8] sm:$0xff]
  %v330 = vld [vmem:[%s1 + $0x2b0] sm:$0xff]
  %v331 = vld [vmem:[%s1 + $0x2b8] sm:$0xff]
  %v332 = vld [vmem:[%s1 + $0x2c0] sm:$0xff]
  %v333 = vld [vmem:[%s1 + $0x2c8] sm:$0xff]
  %v334 = vld [vmem:[%s1 + $0x2d0] sm:$0xff]
  %v335 = vld [vmem:[%s1 + $0x2d8] sm:$0xff]
  %v336 = vld [vmem:[%s1 + $0x2e0] sm:$0xff]
  %v337 = vld [vmem:[%s1 + $0x2e8] sm:$0xff]
  %v338 = vld [vmem:[%s1 + $0x2f0] sm:$0xff]
  %v339 = vld [vmem:[%s1 + $0x2f8] sm:$0xff]
  %v340 = vld [vmem:[%s1 + $0x300] sm:$0xff]
  %v341 = vld [vmem:[%s1 + $0x308] sm:$0xff]
  %v342 = vld [vmem:[%s1 + $0x310] sm:$0xff]
  %v343 = vld [vmem:[%s1 + $0x318] sm:$0xff]
  %v344 = vld [vmem:[%s1 + $0x320] sm:$0xff]
  %v345 = vld [vmem:[%s1 + $0x328] sm:$0xff]
  %v346 = vld [vmem:[%s1 + $0x330] sm:$0xff]
  %v347 = vld [vmem:[%s1 + $0x338] sm:$0xff]
  %v348 = vld [vmem:[%s1 + $0x340] sm:$0xff]
  %v349 = vld [vmem:[%s1 + $0x348] sm:$0xff]
  %v350 = vld [vmem:[%s1 + $0x350] sm:$0xff]
  %v351 = vld [vmem:[%s1 + $0x358] sm:$0xff]
  %v352 = vld [vmem:[%s1 + $0x360] sm:$0xff]
  %v353 = vld [vmem:[%s1 + $0x368] sm:$0xff]
  %v354 = vld [vmem:[%s1 + $0x370] sm:$0xff]
  %v355 = vld [vmem:[%s1 + $0x378] sm:$0xff]
  %v356 = vld [vmem:[%s1 + $0x380] sm:$0xff]
  %v357 = vld [vmem:[%s1 + $0x388] sm:$0xff]
  %v358 = vld [vmem:[%s1 + $0x390] sm:$0xff]
  %v359 = vld [vmem:[%s1 + $0x398] sm:$0xff]
  %v360 = vld [vmem:[%s1 + $0x3a0] sm:$0xff]
  %v361 = vld [vmem:[%s1 + $0x3a8] sm:$0xff]
  %v362 = vld [vmem:[%s1 + $0x3b0] sm:$0xff]
  %v363 = vld [vmem:[%s1 + $0x3b8] sm:$0xff]
  %v364 = vld [vmem:[%s1 + $0x3c0] sm:$0xff]
  %v365 = vld [vmem:[%s1 + $0x3c8] sm:$0xff]
  %v366 = vld [vmem:[%s1 + $0x3d0] sm:$0xff]
  %v367 = vld [vmem:[%s1 + $0x3d8] sm:$0xff]
  %v368 = vld [vmem:[%s1 + $0x3e0] sm:$0xff]
  %v369 = vld [vmem:[%s1 + $0x3e8] sm:$0xff]
  %v370 = vld [vmem:[%s1 + $0x3f0] sm:$0xff]
  %v371 = vld [vmem:[%s1 + $0x3f8] sm:$0xff]
  %v372 = vld [vmem:[%s1 + $0x400] sm:$0xff]
  %v373 = vld [vmem:[%s1 + $0x408] sm:$0xff]
  %v374 = vld [vmem:[%s1 + $0x410] sm:$0xff]
  %v375 = vld [vmem:[%s1 + $0x418] sm:$0xff]
  %v376 = vld [vmem:[%s1 + $0x420] sm:$0xff]
  %v377 = vld [vmem:[%s1 + $0x428] sm:$0xff]
  %v378 = vld [vmem:[%s1 + $0x430] sm:$0xff]
  %v379 = vld [vmem:[%s1 + $0x438] sm:$0xff]
  %v380 = vld [vmem:[%s1 + $0x440] sm:$0xff]
  %v381 = vld [vmem:[%s1 + $0x448] sm:$0xff]
  %v382 = vld [vmem:[%s1 + $0x450] sm:$0xff]
  %v383 = vld [vmem:[%s1 + $0x458] sm:$0xff]
  %v384 = vld [vmem:[%s1 + $0x460] sm:$0xff]
  %v385 = vld [vmem:[%s1 + $0x468] sm:$0xff]
  %v386 = vld [vmem:[%s1 + $0x470] sm:$0xff]
  %v387 = vld [vmem:[%s1 + $0x478] sm:$0xff]
  %v388 = vld [vmem:[%s1 + $0x480] sm:$0xff]
  %v389 = vld [vmem:[%s1 + $0x488] sm:$0xff]
  %v390 = vld [vmem:[%s1 + $0x490] sm:$0xff]
  %v391 = vld [vmem:[%s1 + $0x498] sm:$0xff]
  %v392 = vld [vmem:[%s1 + $0x4a0] sm:$0xff]
  %v393 = vld [vmem:[%s1 + $0x4a8] sm:$0xff]
  %v394 = vld [vmem:[%s1 + $0x4b0] sm:$0xff]
  %v395 = vld [vmem:[%s1 + $0x4b8] sm:$0xff]
  %v396 = vld [vmem:[%s1 + $0x4c0] sm:$0xff]
  %v397 = vld [vmem:[%s1 + $0x4c8] sm:$0xff]
  %v398 = vld [vmem:[%s1 + $0x4d0] sm:$0xff]
  %v399 = vld [vmem:[%s1 + $0x4d8] sm:$0xff]
  %v400 = vld [vmem:[%s1 + $0x4e0] sm:$0xff]
  %v401 = vld [vmem:[%s1 + $0x4e8] sm:$0xff]
  %v402 = vld [vmem:[%s1 + $0x4f0] sm:$0xff]
  %v403 = vld [vmem:[%s1 + $0x4f8] sm:$0xff]
  %v404 = vld [vmem:[%s1 + $0x500] sm:$0xff]
  %v405 = vld [vmem:[%s1 + $0x508] sm:$0xff]
  %v406 = vld [vmem:[%s1 + $0x510] sm:$0xff]
  %v407 = vld [vmem:[%s1 + $0x518] sm:$0xff]
  %v408 = vld [vmem:[%s1 + $0x520] sm:$0xff]
  %v409 = vld [vmem:[%s1 + $0x528] sm:$0xff]
  %v410 = vld [vmem:[%s1 + $0x530] sm:$0xff]
  %v411 = vld [vmem:[%s1 + $0x538] sm:$0xff]
  %v412 = vld [vmem:[%s1 + $0x540] sm:$0xff]
  %v413 = vld [vmem:[%s1 + $0x548] sm:$0xff]
  %v414 = vld [vmem:[%s1 + $0x550] sm:$0xff]
  %v415 = vld [vmem:[%s1 + $0x558] sm:$0xff]
  %v416 = vld [vmem:[%s1 + $0x560] sm:$0xff]
  %v417 = vld [vmem:[%s1 + $0x568] sm:$0xff]
  %v418 = vld [vmem:[%s1 + $0x570] sm:$0xff]
  %v419 = vld [vmem:[%s1 + $0x578] sm:$0xff]
  %v420 = vld [vmem:[%s1 + $0x580] sm:$0xff]
  %v421 = vld [vmem:[%s1 + $0x588] sm:$0xff]
  %v422 = vld [vmem:[%s1 + $0x590] sm:$0xff]
  %v423 = vld [vmem:[%s1 + $0x598] sm:$0xff]
  %v424 = vld [vmem:[%s1 + $0x5a0] sm:$0xff]
  %v425 = vld [vmem:[%s1 + $0x5a8] sm:$0xff]
  %v426 = vld [vmem:[%s1 + $0x5b0] sm:$0xff]
  %v427 = vld [vmem:[%s1 + $0x5b8] sm:$0xff]
  %v428 = vld [vmem:[%s1 + $0x5c0] sm:$0xff]
  %v429 = vld [vmem:[%s1 + $0x5c8] sm:$0xff]
  %v430 = vld [vmem:[%s1 + $0x5d0] sm:$0xff]
  %v431 = vld [vmem:[%s1 + $0x5d8] sm:$0xff]
  %v432 = vld [vmem:[%s1 + $0x5e0] sm:$0xff]
  %v433 = vld [vmem:[%s1 + $0x5e8] sm:$0xff]
  %v434 = vld [vmem:[%s1 + $0x5f0] sm:$0xff]
  %v435 = vld [vmem:[%s1 + $0x5f8] sm:$0xff]
  %v436 = vld [vmem:[%s4] sm:$0x3]
  %v438 = vperm.slane %v436, 0
  %v439 = vperm.slane %v436, 1
  %v634 = vunpack.c.l.b16 %v244
  %v635 = vunpack.c.h.b16 %v244
  %v636 = vunpack.c.l.b16 %v245
  %v637 = vunpack.c.h.b16 %v245
  %v638 = vunpack.c.l.b16 %v246
  %v639 = vunpack.c.h.b16 %v246
  %v640 = vunpack.c.l.b16 %v247
  %v641 = vunpack.c.h.b16 %v247
  %v642 = vunpack.c.l.b16 %v248
  %v643 = vunpack.c.h.b16 %v248
  %v644 = vunpack.c.l.b16 %v249
  %v645 = vunpack.c.h.b16 %v249
  %v646 = vunpack.c.l.b16 %v250
  %v647 = vunpack.c.h.b16 %v250
  %v648 = vunpack.c.l.b16 %v251
  %v649 = vunpack.c.h.b16 %v251
  %v650 = vunpack.c.l.b16 %v252
  %v651 = vunpack.c.h.b16 %v252
  %v652 = vunpack.c.l.b16 %v253
  %v653 = vunpack.c.h.b16 %v253
  %v654 = vunpack.c.l.b16 %v254
  %v655 = vunpack.c.h.b16 %v254
  %v656 = vunpack.c.l.b16 %v255
  %v657 = vunpack.c.h.b16 %v255
  %v658 = vunpack.c.l.b16 %v256
  %v659 = vunpack.c.h.b16 %v256
  %v660 = vunpack.c.l.b16 %v257
  %v661 = vunpack.c.h.b16 %v257
  %v662 = vunpack.c.l.b16 %v258
  %v663 = vunpack.c.h.b16 %v258
  %v664 = vunpack.c.l.b16 %v259
  %v665 = vunpack.c.h.b16 %v259
  %v666 = vunpack.c.l.b16 %v260
  %v667 = vunpack.c.h.b16 %v260
  %v668 = vunpack.c.l.b16 %v261
  %v669 = vunpack.c.h.b16 %v261
  %v670 = vunpack.c.l.b16 %v262
  %v671 = vunpack.c.h.b16 %v262
  %v672 = vunpack.c.l.b16 %v263
  %v673 = vunpack.c.h.b16 %v263
  %v674 = vunpack.c.l.b16 %v264
  %v675 = vunpack.c.h.b16 %v264
  %v676 = vunpack.c.l.b16 %v265
  %v677 = vunpack.c.h.b16 %v265
  %v678 = vunpack.c.l.b16 %v266
  %v679 = vunpack.c.h.b16 %v266
  %v680 = vunpack.c.l.b16 %v267
  %v681 = vunpack.c.h.b16 %v267
  %v682 = vunpack.c.l.b16 %v268
  %v683 = vunpack.c.h.b16 %v268
  %v684 = vunpack.c.l.b16 %v269
  %v685 = vunpack.c.h.b16 %v269
  %v686 = vunpack.c.l.b16 %v270
  %v687 = vunpack.c.h.b16 %v270
  %v688 = vunpack.c.l.b16 %v271
  %v689 = vunpack.c.h.b16 %v271
  %v690 = vunpack.c.l.b16 %v272
  %v691 = vunpack.c.h.b16 %v272
  %v692 = vunpack.c.l.b16 %v273
  %v693 = vunpack.c.h.b16 %v273
  %v694 = vunpack.c.l.b16 %v274
  %v695 = vunpack.c.h.b16 %v274
  %v696 = vunpack.c.l.b16 %v275
  %v697 = vunpack.c.h.b16 %v275
  %v698 = vunpack.c.l.b16 %v276
  %v699 = vunpack.c.h.b16 %v276
  %v700 = vunpack.c.l.b16 %v277
  %v701 = vunpack.c.h.b16 %v277
  %v702 = vunpack.c.l.b16 %v278
  %v703 = vunpack.c.h.b16 %v278
  %v704 = vunpack.c.l.b16 %v279
  %v705 = vunpack.c.h.b16 %v279
  %v706 = vunpack.c.l.b16 %v280
  %v707 = vunpack.c.h.b16 %v280
  %v708 = vunpack.c.l.b16 %v281
  %v709 = vunpack.c.h.b16 %v281
  %v710 = vunpack.c.l.b16 %v282
  %v711 = vunpack.c.h.b16 %v282
  %v712 = vunpack.c.l.b16 %v283
  %v713 = vunpack.c.h.b16 %v283
  %v714 = vunpack.c.l.b16 %v284
  %v715 = vunpack.c.h.b16 %v284
  %v716 = vunpack.c.l.b16 %v285
  %v717 = vunpack.c.h.b16 %v285
  %v718 = vunpack.c.l.b16 %v286
  %v719 = vunpack.c.h.b16 %v286
  %v720 = vunpack.c.l.b16 %v287
  %v721 = vunpack.c.h.b16 %v287
  %v722 = vunpack.c.l.b16 %v288
  %v723 = vunpack.c.h.b16 %v288
  %v724 = vunpack.c.l.b16 %v289
  %v725 = vunpack.c.h.b16 %v289
  %v726 = vunpack.c.l.b16 %v290
  %v727 = vunpack.c.h.b16 %v290
  %v728 = vunpack.c.l.b16 %v291
  %v729 = vunpack.c.h.b16 %v291
  %v730 = vunpack.c.l.b16 %v292
  %v731 = vunpack.c.h.b16 %v292
  %v732 = vunpack.c.l.b16 %v293
  %v733 = vunpack.c.h.b16 %v293
  %v734 = vunpack.c.l.b16 %v294
  %v735 = vunpack.c.h.b16 %v294
  %v736 = vunpack.c.l.b16 %v295
  %v737 = vunpack.c.h.b16 %v295
  %v738 = vunpack.c.l.b16 %v296
  %v739 = vunpack.c.h.b16 %v296
  %v740 = vunpack.c.l.b16 %v297
  %v741 = vunpack.c.h.b16 %v297
  %v742 = vunpack.c.l.b16 %v298
  %v743 = vunpack.c.h.b16 %v298
  %v744 = vunpack.c.l.b16 %v299
  %v745 = vunpack.c.h.b16 %v299
  %v746 = vunpack.c.l.b16 %v300
  %v747 = vunpack.c.h.b16 %v300
  %v748 = vunpack.c.l.b16 %v301
  %v749 = vunpack.c.h.b16 %v301
  %v750 = vunpack.c.l.b16 %v302
  %v751 = vunpack.c.h.b16 %v302
  %v752 = vunpack.c.l.b16 %v303
  %v753 = vunpack.c.h.b16 %v303
  %v754 = vunpack.c.l.b16 %v304
  %v755 = vunpack.c.h.b16 %v304
  %v756 = vunpack.c.l.b16 %v305
  %v757 = vunpack.c.h.b16 %v305
  %v758 = vunpack.c.l.b16 %v306
  %v759 = vunpack.c.h.b16 %v306
  %v760 = vunpack.c.l.b16 %v307
  %v761 = vunpack.c.h.b16 %v307
  %v762 = vunpack.c.l.b16 %v308
  %v763 = vunpack.c.h.b16 %v308
  %v764 = vunpack.c.l.b16 %v309
  %v765 = vunpack.c.h.b16 %v309
  %v766 = vunpack.c.l.b16 %v310
  %v767 = vunpack.c.h.b16 %v310
  %v768 = vunpack.c.l.b16 %v311
  %v769 = vunpack.c.h.b16 %v311
  %v770 = vunpack.c.l.b16 %v312
  %v771 = vunpack.c.h.b16 %v312
  %v772 = vunpack.c.l.b16 %v313
  %v773 = vunpack.c.h.b16 %v313
  %v774 = vunpack.c.l.b16 %v314
  %v775 = vunpack.c.h.b16 %v314
  %v776 = vunpack.c.l.b16 %v315
  %v777 = vunpack.c.h.b16 %v315
  %v778 = vunpack.c.l.b16 %v316
  %v779 = vunpack.c.h.b16 %v316
  %v780 = vunpack.c.l.b16 %v317
  %v781 = vunpack.c.h.b16 %v317
  %v782 = vunpack.c.l.b16 %v318
  %v783 = vunpack.c.h.b16 %v318
  %v784 = vunpack.c.l.b16 %v319
  %v785 = vunpack.c.h.b16 %v319
  %v786 = vunpack.c.l.b16 %v320
  %v787 = vunpack.c.h.b16 %v320
  %v788 = vunpack.c.l.b16 %v321
  %v789 = vunpack.c.h.b16 %v321
  %v790 = vunpack.c.l.b16 %v322
  %v791 = vunpack.c.h.b16 %v322
  %v792 = vunpack.c.l.b16 %v323
  %v793 = vunpack.c.h.b16 %v323
  %v794 = vunpack.c.l.b16 %v324
  %v795 = vunpack.c.h.b16 %v324
  %v796 = vunpack.c.l.b16 %v325
  %v797 = vunpack.c.h.b16 %v325
  %v798 = vunpack.c.l.b16 %v326
  %v799 = vunpack.c.h.b16 %v326
  %v800 = vunpack.c.l.b16 %v327
  %v801 = vunpack.c.h.b16 %v327
  %v802 = vunpack.c.l.b16 %v328
  %v803 = vunpack.c.h.b16 %v328
  %v804 = vunpack.c.l.b16 %v329
  %v805 = vunpack.c.h.b16 %v329
  %v806 = vunpack.c.l.b16 %v330
  %v807 = vunpack.c.h.b16 %v330
  %v808 = vunpack.c.l.b16 %v331
  %v809 = vunpack.c.h.b16 %v331
  %v810 = vunpack.c.l.b16 %v332
  %v811 = vunpack.c.h.b16 %v332
  %v812 = vunpack.c.l.b16 %v333
  %v813 = vunpack.c.h.b16 %v333
  %v814 = vunpack.c.l.b16 %v334
  %v815 = vunpack.c.h.b16 %v334
  %v816 = vunpack.c.l.b16 %v335
  %v817 = vunpack.c.h.b16 %v335
  %v818 = vunpack.c.l.b16 %v336
  %v819 = vunpack.c.h.b16 %v336
  %v820 = vunpack.c.l.b16 %v337
  %v821 = vunpack.c.h.b16 %v337
  %v822 = vunpack.c.l.b16 %v338
  %v823 = vunpack.c.h.b16 %v338
  %v824 = vunpack.c.l.b16 %v339
  %v825 = vunpack.c.h.b16 %v339
  %v826 = vunpack.c.l.b16 %v340
  %v827 = vunpack.c.h.b16 %v340
  %v828 = vunpack.c.l.b16 %v341
  %v829 = vunpack.c.h.b16 %v341
  %v830 = vunpack.c.l.b16 %v342
  %v831 = vunpack.c.h.b16 %v342
  %v832 = vunpack.c.l.b16 %v343
  %v833 = vunpack.c.h.b16 %v343
  %v834 = vunpack.c.l.b16 %v344
  %v835 = vunpack.c.h.b16 %v344
  %v836 = vunpack.c.l.b16 %v345
  %v837 = vunpack.c.h.b16 %v345
  %v838 = vunpack.c.l.b16 %v346
  %v839 = vunpack.c.h.b16 %v346
  %v840 = vunpack.c.l.b16 %v347
  %v841 = vunpack.c.h.b16 %v347
  %v842 = vunpack.c.l.b16 %v348
  %v843 = vunpack.c.h.b16 %v348
  %v844 = vunpack.c.l.b16 %v349
  %v845 = vunpack.c.h.b16 %v349
  %v846 = vunpack.c.l.b16 %v350
  %v847 = vunpack.c.h.b16 %v350
  %v848 = vunpack.c.l.b16 %v351
  %v849 = vunpack.c.h.b16 %v351
  %v850 = vunpack.c.l.b16 %v352
  %v851 = vunpack.c.h.b16 %v352
  %v852 = vunpack.c.l.b16 %v353
  %v853 = vunpack.c.h.b16 %v353
  %v854 = vunpack.c.l.b16 %v354
  %v855 = vunpack.c.h.b16 %v354
  %v856 = vunpack.c.l.b16 %v355
  %v857 = vunpack.c.h.b16 %v355
  %v858 = vunpack.c.l.b16 %v356
  %v859 = vunpack.c.h.b16 %v356
  %v860 = vunpack.c.l.b16 %v357
  %v861 = vunpack.c.h.b16 %v357
  %v862 = vunpack.c.l.b16 %v358
  %v863 = vunpack.c.h.b16 %v358
  %v864 = vunpack.c.l.b16 %v359
  %v865 = vunpack.c.h.b16 %v359
  %v866 = vunpack.c.l.b16 %v360
  %v867 = vunpack.c.h.b16 %v360
  %v868 = vunpack.c.l.b16 %v361
  %v869 = vunpack.c.h.b16 %v361
  %v870 = vunpack.c.l.b16 %v362
  %v871 = vunpack.c.h.b16 %v362
  %v872 = vunpack.c.l.b16 %v363
  %v873 = vunpack.c.h.b16 %v363
  %v874 = vunpack.c.l.b16 %v364
  %v875 = vunpack.c.h.b16 %v364
  %v876 = vunpack.c.l.b16 %v365
  %v877 = vunpack.c.h.b16 %v365
  %v878 = vunpack.c.l.b16 %v366
  %v879 = vunpack.c.h.b16 %v366
  %v880 = vunpack.c.l.b16 %v367
  %v881 = vunpack.c.h.b16 %v367
  %v882 = vunpack.c.l.b16 %v368
  %v883 = vunpack.c.h.b16 %v368
  %v884 = vunpack.c.l.b16 %v369
  %v885 = vunpack.c.h.b16 %v369
  %v886 = vunpack.c.l.b16 %v370
  %v887 = vunpack.c.h.b16 %v370
  %v888 = vunpack.c.l.b16 %v371
  %v889 = vunpack.c.h.b16 %v371
  %v890 = vunpack.c.l.b16 %v372
  %v891 = vunpack.c.h.b16 %v372
  %v892 = vunpack.c.l.b16 %v373
  %v893 = vunpack.c.h.b16 %v373
  %v894 = vunpack.c.l.b16 %v374
  %v895 = vunpack.c.h.b16 %v374
  %v896 = vunpack.c.l.b16 %v375
  %v897 = vunpack.c.h.b16 %v375
  %v898 = vunpack.c.l.b16 %v376
  %v899 = vunpack.c.h.b16 %v376
  %v900 = vunpack.c.l.b16 %v377
  %v901 = vunpack.c.h.b16 %v377
  %v902 = vunpack.c.l.b16 %v378
  %v903 = vunpack.c.h.b16 %v378
  %v904 = vunpack.c.l.b16 %v379
  %v905 = vunpack.c.h.b16 %v379
  %v906 = vunpack.c.l.b16 %v380
  %v907 = vunpack.c.h.b16 %v380
  %v908 = vunpack.c.l.b16 %v381
  %v909 = vunpack.c.h.b16 %v381
  %v910 = vunpack.c.l.b16 %v382
  %v911 = vunpack.c.h.b16 %v382
  %v912 = vunpack.c.l.b16 %v383
  %v913 = vunpack.c.h.b16 %v383
  %v914 = vunpack.c.l.b16 %v384
  %v915 = vunpack.c.h.b16 %v384
  %v916 = vunpack.c.l.b16 %v385
  %v917 = vunpack.c.h.b16 %v385
  %v918 = vunpack.c.l.b16 %v386
  %v919 = vunpack.c.h.b16 %v386
  %v920 = vunpack.c.l.b16 %v387
  %v921 = vunpack.c.h.b16 %v387
  %v922 = vunpack.c.l.b16 %v388
  %v923 = vunpack.c.h.b16 %v388
  %v924 = vunpack.c.l.b16 %v389
  %v925 = vunpack.c.h.b16 %v389
  %v926 = vunpack.c.l.b16 %v390
  %v927 = vunpack.c.h.b16 %v390
  %v928 = vunpack.c.l.b16 %v391
  %v929 = vunpack.c.h.b16 %v391
  %v930 = vunpack.c.l.b16 %v392
  %v931 = vunpack.c.h.b16 %v392
  %v932 = vunpack.c.l.b16 %v393
  %v933 = vunpack.c.h.b16 %v393
  %v934 = vunpack.c.l.b16 %v394
  %v935 = vunpack.c.h.b16 %v394
  %v936 = vunpack.c.l.b16 %v395
  %v937 = vunpack.c.h.b16 %v395
  %v938 = vunpack.c.l.b16 %v396
  %v939 = vunpack.c.h.b16 %v396
  %v940 = vunpack.c.l.b16 %v397
  %v941 = vunpack.c.h.b16 %v397
  %v942 = vunpack.c.l.b16 %v398
  %v943 = vunpack.c.h.b16 %v398
  %v944 = vunpack.c.l.b16 %v399
  %v945 = vunpack.c.h.b16 %v399
  %v946 = vunpack.c.l.b16 %v400
  %v947 = vunpack.c.h.b16 %v400
  %v948 = vunpack.c.l.b16 %v401
  %v949 = vunpack.c.h.b16 %v401
  %v950 = vunpack.c.l.b16 %v402
  %v951 = vunpack.c.h.b16 %v402
  %v952 = vunpack.c.l.b16 %v403
  %v953 = vunpack.c.h.b16 %v403
  %v954 = vunpack.c.l.b16 %v404
  %v955 = vunpack.c.h.b16 %v404
  %v956 = vunpack.c.l.b16 %v405
  %v957 = vunpack.c.h.b16 %v405
  %v958 = vunpack.c.l.b16 %v406
  %v959 = vunpack.c.h.b16 %v406
  %v960 = vunpack.c.l.b16 %v407
  %v961 = vunpack.c.h.b16 %v407
  %v962 = vunpack.c.l.b16 %v408
  %v963 = vunpack.c.h.b16 %v408
  %v964 = vunpack.c.l.b16 %v409
  %v965 = vunpack.c.h.b16 %v409
  %v966 = vunpack.c.l.b16 %v410
  %v967 = vunpack.c.h.b16 %v410
  %v968 = vunpack.c.l.b16 %v411
  %v969 = vunpack.c.h.b16 %v411
  %v970 = vunpack.c.l.b16 %v412
  %v971 = vunpack.c.h.b16 %v412
  %v972 = vunpack.c.l.b16 %v413
  %v973 = vunpack.c.h.b16 %v413
  %v974 = vunpack.c.l.b16 %v414
  %v975 = vunpack.c.h.b16 %v414
  %v976 = vunpack.c.l.b16 %v415
  %v977 = vunpack.c.h.b16 %v415
  %v978 = vunpack.c.l.b16 %v416
  %v979 = vunpack.c.h.b16 %v416
  %v980 = vunpack.c.l.b16 %v417
  %v981 = vunpack.c.h.b16 %v417
  %v982 = vunpack.c.l.b16 %v418
  %v983 = vunpack.c.h.b16 %v418
  %v984 = vunpack.c.l.b16 %v419
  %v985 = vunpack.c.h.b16 %v419
  %v986 = vunpack.c.l.b16 %v420
  %v987 = vunpack.c.h.b16 %v420
  %v988 = vunpack.c.l.b16 %v421
  %v989 = vunpack.c.h.b16 %v421
  %v990 = vunpack.c.l.b16 %v422
  %v991 = vunpack.c.h.b16 %v422
  %v992 = vunpack.c.l.b16 %v423
  %v993 = vunpack.c.h.b16 %v423
  %v994 = vunpack.c.l.b16 %v424
  %v995 = vunpack.c.h.b16 %v424
  %v996 = vunpack.c.l.b16 %v425
  %v997 = vunpack.c.h.b16 %v425
  %v998 = vunpack.c.l.b16 %v426
  %v999 = vunpack.c.h.b16 %v426
  %v1000 = vunpack.c.l.b16 %v427
  %v1001 = vunpack.c.h.b16 %v427
  %v1002 = vunpack.c.l.b16 %v428
  %v1003 = vunpack.c.h.b16 %v428
  %v1004 = vunpack.c.l.b16 %v429
  %v1005 = vunpack.c.h.b16 %v429
  %v1006 = vunpack.c.l.b16 %v430
  %v1007 = vunpack.c.h.b16 %v430
  %v1008 = vunpack.c.l.b16 %v431
  %v1009 = vunpack.c.h.b16 %v431
  %v1010 = vunpack.c.l.b16 %v432
  %v1011 = vunpack.c.h.b16 %v432
  %v1012 = vunpack.c.l.b16 %v433
  %v1013 = vunpack.c.h.b16 %v433
  %v1014 = vunpack.c.l.b16 %v434
  %v1015 = vunpack.c.h.b16 %v434
  %v1016 = vunpack.c.l.b16 %v435
  %v1017 = vunpack.c.h.b16 %v435
  %v1018 = vpack.c.b16 %v636, %v634
  %v1019 = vpack.c.b16 %v637, %v635
  %v1020 = vpack.c.b16 %v640, %v638
  %v1021 = vpack.c.b16 %v641, %v639
  %v1022 = vpack.c.b16 %v644, %v642
  %v1023 = vpack.c.b16 %v645, %v643
  %v1024 = vpack.c.b16 %v648, %v646
  %v1025 = vpack.c.b16 %v649, %v647
  %v1026 = vpack.c.b16 %v652, %v650
  %v1027 = vpack.c.b16 %v653, %v651
  %v1028 = vpack.c.b16 %v656, %v654
  %v1029 = vpack.c.b16 %v657, %v655
  %v1030 = vpack.c.b16 %v660, %v658
  %v1031 = vpack.c.b16 %v661, %v659
  %v1032 = vpack.c.b16 %v664, %v662
  %v1033 = vpack.c.b16 %v665, %v663
  %v1034 = vpack.c.b16 %v668, %v666
  %v1035 = vpack.c.b16 %v669, %v667
  %v1036 = vpack.c.b16 %v672, %v670
  %v1037 = vpack.c.b16 %v673, %v671
  %v1038 = vpack.c.b16 %v676, %v674
  %v1039 = vpack.c.b16 %v677, %v675
  %v1040 = vpack.c.b16 %v680, %v678
  %v1041 = vpack.c.b16 %v681, %v679
  %v1042 = vpack.c.b16 %v684, %v682
  %v1043 = vpack.c.b16 %v685, %v683
  %v1044 = vpack.c.b16 %v688, %v686
  %v1045 = vpack.c.b16 %v689, %v687
  %v1046 = vpack.c.b16 %v692, %v690
  %v1047 = vpack.c.b16 %v693, %v691
  %v1048 = vpack.c.b16 %v696, %v694
  %v1049 = vpack.c.b16 %v697, %v695
  %v1050 = vpack.c.b16 %v700, %v698
  %v1051 = vpack.c.b16 %v701, %v699
  %v1052 = vpack.c.b16 %v704, %v702
  %v1053 = vpack.c.b16 %v705, %v703
  %v1054 = vpack.c.b16 %v708, %v706
  %v1055 = vpack.c.b16 %v709, %v707
  %v1056 = vpack.c.b16 %v712, %v710
  %v1057 = vpack.c.b16 %v713, %v711
  %v1058 = vpack.c.b16 %v716, %v714
  %v1059 = vpack.c.b16 %v717, %v715
  %v1060 = vpack.c.b16 %v720, %v718
  %v1061 = vpack.c.b16 %v721, %v719
  %v1062 = vpack.c.b16 %v724, %v722
  %v1063 = vpack.c.b16 %v725, %v723
  %v1064 = vpack.c.b16 %v728, %v726
  %v1065 = vpack.c.b16 %v729, %v727
  %v1066 = vpack.c.b16 %v732, %v730
  %v1067 = vpack.c.b16 %v733, %v731
  %v1068 = vpack.c.b16 %v736, %v734
  %v1069 = vpack.c.b16 %v737, %v735
  %v1070 = vpack.c.b16 %v740, %v738
  %v1071 = vpack.c.b16 %v741, %v739
  %v1072 = vpack.c.b16 %v744, %v742
  %v1073 = vpack.c.b16 %v745, %v743
  %v1074 = vpack.c.b16 %v748, %v746
  %v1075 = vpack.c.b16 %v749, %v747
  %v1076 = vpack.c.b16 %v752, %v750
  %v1077 = vpack.c.b16 %v753, %v751
  %v1078 = vpack.c.b16 %v756, %v754
  %v1079 = vpack.c.b16 %v757, %v755
  %v1080 = vpack.c.b16 %v760, %v758
  %v1081 = vpack.c.b16 %v761, %v759
  %v1082 = vpack.c.b16 %v764, %v762
  %v1083 = vpack.c.b16 %v765, %v763
  %v1084 = vpack.c.b16 %v768, %v766
  %v1085 = vpack.c.b16 %v769, %v767
  %v1086 = vpack.c.b16 %v772, %v770
  %v1087 = vpack.c.b16 %v773, %v771
  %v1088 = vpack.c.b16 %v776, %v774
  %v1089 = vpack.c.b16 %v777, %v775
  %v1090 = vpack.c.b16 %v780, %v778
  %v1091 = vpack.c.b16 %v781, %v779
  %v1092 = vpack.c.b16 %v784, %v782
  %v1093 = vpack.c.b16 %v785, %v783
  %v1094 = vpack.c.b16 %v788, %v786
  %v1095 = vpack.c.b16 %v789, %v787
  %v1096 = vpack.c.b16 %v792, %v790
  %v1097 = vpack.c.b16 %v793, %v791
  %v1098 = vpack.c.b16 %v796, %v794
  %v1099 = vpack.c.b16 %v797, %v795
  %v1100 = vpack.c.b16 %v800, %v798
  %v1101 = vpack.c.b16 %v801, %v799
  %v1102 = vpack.c.b16 %v804, %v802
  %v1103 = vpack.c.b16 %v805, %v803
  %v1104 = vpack.c.b16 %v808, %v806
  %v1105 = vpack.c.b16 %v809, %v807
  %v1106 = vpack.c.b16 %v812, %v810
  %v1107 = vpack.c.b16 %v813, %v811
  %v1108 = vpack.c.b16 %v816, %v814
  %v1109 = vpack.c.b16 %v817, %v815
  %v1110 = vpack.c.b16 %v820, %v818
  %v1111 = vpack.c.b16 %v821, %v819
  %v1112 = vpack.c.b16 %v824, %v822
  %v1113 = vpack.c.b16 %v825, %v823
  %v1114 = vpack.c.b16 %v828, %v826
  %v1115 = vpack.c.b16 %v829, %v827
  %v1116 = vpack.c.b16 %v832, %v830
  %v1117 = vpack.c.b16 %v833, %v831
  %v1118 = vpack.c.b16 %v836, %v834
  %v1119 = vpack.c.b16 %v837, %v835
  %v1120 = vpack.c.b16 %v840, %v838
  %v1121 = vpack.c.b16 %v841, %v839
  %v1122 = vpack.c.b16 %v844, %v842
  %v1123 = vpack.c.b16 %v845, %v843
  %v1124 = vpack.c.b16 %v848, %v846
  %v1125 = vpack.c.b16 %v849, %v847
  %v1126 = vpack.c.b16 %v852, %v850
  %v1127 = vpack.c.b16 %v853, %v851
  %v1128 = vpack.c.b16 %v856, %v854
  %v1129 = vpack.c.b16 %v857, %v855
  %v1130 = vpack.c.b16 %v860, %v858
  %v1131 = vpack.c.b16 %v861, %v859
  %v1132 = vpack.c.b16 %v864, %v862
  %v1133 = vpack.c.b16 %v865, %v863
  %v1134 = vpack.c.b16 %v868, %v866
  %v1135 = vpack.c.b16 %v869, %v867
  %v1136 = vpack.c.b16 %v872, %v870
  %v1137 = vpack.c.b16 %v873, %v871
  %v1138 = vpack.c.b16 %v876, %v874
  %v1139 = vpack.c.b16 %v877, %v875
  %v1140 = vpack.c.b16 %v880, %v878
  %v1141 = vpack.c.b16 %v881, %v879
  %v1142 = vpack.c.b16 %v884, %v882
  %v1143 = vpack.c.b16 %v885, %v883
  %v1144 = vpack.c.b16 %v888, %v886
  %v1145 = vpack.c.b16 %v889, %v887
  %v1146 = vpack.c.b16 %v892, %v890
  %v1147 = vpack.c.b16 %v893, %v891
  %v1148 = vpack.c.b16 %v896, %v894
  %v1149 = vpack.c.b16 %v897, %v895
  %v1150 = vpack.c.b16 %v900, %v898
  %v1151 = vpack.c.b16 %v901, %v899
  %v1152 = vpack.c.b16 %v904, %v902
  %v1153 = vpack.c.b16 %v905, %v903
  %v1154 = vpack.c.b16 %v908, %v906
  %v1155 = vpack.c.b16 %v909, %v907
  %v1156 = vpack.c.b16 %v912, %v910
  %v1157 = vpack.c.b16 %v913, %v911
  %v1158 = vpack.c.b16 %v916, %v914
  %v1159 = vpack.c.b16 %v917, %v915
  %v1160 = vpack.c.b16 %v920, %v918
  %v1161 = vpack.c.b16 %v921, %v919
  %v1162 = vpack.c.b16 %v924, %v922
  %v1163 = vpack.c.b16 %v925, %v923
  %v1164 = vpack.c.b16 %v928, %v926
  %v1165 = vpack.c.b16 %v929, %v927
  %v1166 = vpack.c.b16 %v932, %v930
  %v1167 = vpack.c.b16 %v933, %v931
  %v1168 = vpack.c.b16 %v936, %v934
  %v1169 = vpack.c.b16 %v937, %v935
  %v1170 = vpack.c.b16 %v940, %v938
  %v1171 = vpack.c.b16 %v941, %v939
  %v1172 = vpack.c.b16 %v944, %v942
  %v1173 = vpack.c.b16 %v945, %v943
  %v1174 = vpack.c.b16 %v948, %v946
  %v1175 = vpack.c.b16 %v949, %v947
  %v1176 = vpack.c.b16 %v952, %v950
  %v1177 = vpack.c.b16 %v953, %v951
  %v1178 = vpack.c.b16 %v956, %v954
  %v1179 = vpack.c.b16 %v957, %v955
  %v1180 = vpack.c.b16 %v960, %v958
  %v1181 = vpack.c.b16 %v961, %v959
  %v1182 = vpack.c.b16 %v964, %v962
  %v1183 = vpack.c.b16 %v965, %v963
  %v1184 = vpack.c.b16 %v968, %v966
  %v1185 = vpack.c.b16 %v969, %v967
  %v1186 = vpack.c.b16 %v972, %v970
  %v1187 = vpack.c.b16 %v973, %v971
  %v1188 = vpack.c.b16 %v976, %v974
  %v1189 = vpack.c.b16 %v977, %v975
  %v1190 = vpack.c.b16 %v980, %v978
  %v1191 = vpack.c.b16 %v981, %v979
  %v1192 = vpack.c.b16 %v984, %v982
  %v1193 = vpack.c.b16 %v985, %v983
  %v1194 = vpack.c.b16 %v988, %v986
  %v1195 = vpack.c.b16 %v989, %v987
  %v1196 = vpack.c.b16 %v992, %v990
  %v1197 = vpack.c.b16 %v993, %v991
  %v1198 = vpack.c.b16 %v996, %v994
  %v1199 = vpack.c.b16 %v997, %v995
  %v1200 = vpack.c.b16 %v1000, %v998
  %v1201 = vpack.c.b16 %v1001, %v999
  %v1202 = vpack.c.b16 %v1004, %v1002
  %v1203 = vpack.c.b16 %v1005, %v1003
  %v1204 = vpack.c.b16 %v1008, %v1006
  %v1205 = vpack.c.b16 %v1009, %v1007
  %v1206 = vpack.c.b16 %v1012, %v1010
  %v1207 = vpack.c.b16 %v1013, %v1011
  %v1208 = vpack.c.b16 %v1016, %v1014
  %v1209 = vpack.c.b16 %v1017, %v1015
  %1402 = vmatpush.bf16.msra.mxu0 %v1032
  %1403 = vmatpush.bf16.msra.mxu0 %v1030
  %1404 = vmatpush.bf16.msra.mxu0 %v1028
  %1405 = vmatpush.bf16.msra.mxu0 %v1026
  %1406 = vmatpush.bf16.msra.mxu0 %v1024
  %1407 = vmatpush.bf16.msra.mxu0 %v1022
  %1408 = vmatpush.bf16.msra.mxu0 %v1020
  %1409 = vmatpush.bf16.msra.mxu0 %v1018
  %1410 = vmatmul.bf16.gmra.mxu0 %v220
  %v1411 = vpop.f32.mrf.mxu0
  %v1412 = vadd.f32 %v438, %v1411
  %v1413 = vpop.f32.mrf.mxu0
  %v1414 = vadd.f32 %v438, %v1413
  %1415 = vmatmul.bf16.gmra.mxu0 %v232
  %v1416 = vpop.f32.mrf.mxu0
  %v1417 = vadd.f32 %v438, %v1416
  %v1418 = vpop.f32.mrf.mxu0
  %v1419 = vadd.f32 %v438, %v1418
  %1420 = vdwg.mxu0
  %1421 = vmatpush.bf16.msra.mxu0 %v1048
  %1422 = vmatpush.bf16.msra.mxu0 %v1046
  %1423 = vmatpush.bf16.msra.mxu0 %v1044
  %1424 = vmatpush.bf16.msra.mxu0 %v1042
  %1425 = vmatpush.bf16.msra.mxu0 %v1040
  %1426 = vmatpush.bf16.msra.mxu0 %v1038
  %1427 = vmatpush.bf16.msra.mxu0 %v1036
  %1428 = vmatpush.bf16.msra.mxu0 %v1034
  %1429 = vmatmul.bf16.gmra.mxu0 %v221
  %v1430 = vpop.f32.mrf.mxu0
  %v1431 = vadd.f32 %v1412, %v1430
  %v1432 = vpop.f32.mrf.mxu0
  %v1433 = vadd.f32 %v1414, %v1432
  %1434 = vmatmul.bf16.gmra.mxu0 %v233
  %v1435 = vpop.f32.mrf.mxu0
  %v1436 = vadd.f32 %v1417, %v1435
  %v1437 = vpop.f32.mrf.mxu0
  %v1438 = vadd.f32 %v1419, %v1437
  %1439 = vdwg.mxu0
  %1440 = vmatpush.bf16.msra.mxu0 %v1064
  %1441 = vmatpush.bf16.msra.mxu0 %v1062
  %1442 = vmatpush.bf16.msra.mxu0 %v1060
  %1443 = vmatpush.bf16.msra.mxu0 %v1058
  %1444 = vmatpush.bf16.msra.mxu0 %v1056
  %1445 = vmatpush.bf16.msra.mxu0 %v1054
  %1446 = vmatpush.bf16.msra.mxu0 %v1052
  %1447 = vmatpush.bf16.msra.mxu0 %v1050
  %1448 = vmatmul.bf16.gmra.mxu0 %v222
  %v1449 = vpop.f32.mrf.mxu0
  %v1450 = vadd.f32 %v1431, %v1449
  %v1451 = vpop.f32.mrf.mxu0
  %v1452 = vadd.f32 %v1433, %v1451
  %1453 = vmatmul.bf16.gmra.mxu0 %v234
  %v1454 = vpop.f32.mrf.mxu0
  %v1455 = vadd.f32 %v1436, %v1454
  %v1456 = vpop.f32.mrf.mxu0
  %v1457 = vadd.f32 %v1438, %v1456
  %1458 = vdwg.mxu0
  %1459 = vmatpush.bf16.msra.mxu0 %v1080
  %1460 = vmatpush.bf16.msra.mxu0 %v1078
  %1461 = vmatpush.bf16.msra.mxu0 %v1076
  %1462 = vmatpush.bf16.msra.mxu0 %v1074
  %1463 = vmatpush.bf16.msra.mxu0 %v1072
  %1464 = vmatpush.bf16.msra.mxu0 %v1070
  %1465 = vmatpush.bf16.msra.mxu0 %v1068
  %1466 = vmatpush.bf16.msra.mxu0 %v1066
  %1467 = vmatmul.bf16.gmra.mxu0 %v223
  %v1468 = vpop.f32.mrf.mxu0
  %v1469 = vadd.f32 %v1450, %v1468
  %v1470 = vpop.f32.mrf.mxu0
  %v1471 = vadd.f32 %v1452, %v1470
  %1472 = vmatmul.bf16.gmra.mxu0 %v235
  %v1473 = vpop.f32.mrf.mxu0
  %v1474 = vadd.f32 %v1455, %v1473
  %v1475 = vpop.f32.mrf.mxu0
  %v1476 = vadd.f32 %v1457, %v1475
  %1477 = vdwg.mxu0
  %1478 = vmatpush.bf16.msra.mxu0 %v1096
  %1479 = vmatpush.bf16.msra.mxu0 %v1094
  %1480 = vmatpush.bf16.msra.mxu0 %v1092
  %1481 = vmatpush.bf16.msra.mxu0 %v1090
  %1482 = vmatpush.bf16.msra.mxu0 %v1088
  %1483 = vmatpush.bf16.msra.mxu0 %v1086
  %1484 = vmatpush.bf16.msra.mxu0 %v1084
  %1485 = vmatpush.bf16.msra.mxu0 %v1082
  %1486 = vmatmul.bf16.gmra.mxu0 %v224
  %v1487 = vpop.f32.mrf.mxu0
  %v1488 = vadd.f32 %v1469, %v1487
  %v1489 = vpop.f32.mrf.mxu0
  %v1490 = vadd.f32 %v1471, %v1489
  %1491 = vmatmul.bf16.gmra.mxu0 %v236
  %v1492 = vpop.f32.mrf.mxu0
  %v1493 = vadd.f32 %v1474, %v1492
  %v1494 = vpop.f32.mrf.mxu0
  %v1495 = vadd.f32 %v1476, %v1494
  %1496 = vdwg.mxu0
  %1497 = vmatpush.bf16.msra.mxu0 %v1112
  %1498 = vmatpush.bf16.msra.mxu0 %v1110
  %1499 = vmatpush.bf16.msra.mxu0 %v1108
  %1500 = vmatpush.bf16.msra.mxu0 %v1106
  %1501 = vmatpush.bf16.msra.mxu0 %v1104
  %1502 = vmatpush.bf16.msra.mxu0 %v1102
  %1503 = vmatpush.bf16.msra.mxu0 %v1100
  %1504 = vmatpush.bf16.msra.mxu0 %v1098
  %1505 = vmatmul.bf16.gmra.mxu0 %v225
  %v1506 = vpop.f32.mrf.mxu0
  %v1507 = vadd.f32 %v1488, %v1506
  %v1508 = vpop.f32.mrf.mxu0
  %v1509 = vadd.f32 %v1490, %v1508
  %1510 = vmatmul.bf16.gmra.mxu0 %v237
  %v1511 = vpop.f32.mrf.mxu0
  %v1512 = vadd.f32 %v1493, %v1511
  %v1513 = vpop.f32.mrf.mxu0
  %v1514 = vadd.f32 %v1495, %v1513
  %1515 = vdwg.mxu0
  %1516 = vmatpush.bf16.msra.mxu0 %v1128
  %1517 = vmatpush.bf16.msra.mxu0 %v1126
  %1518 = vmatpush.bf16.msra.mxu0 %v1124
  %1519 = vmatpush.bf16.msra.mxu0 %v1122
  %1520 = vmatpush.bf16.msra.mxu0 %v1120
  %1521 = vmatpush.bf16.msra.mxu0 %v1118
  %1522 = vmatpush.bf16.msra.mxu0 %v1116
  %1523 = vmatpush.bf16.msra.mxu0 %v1114
  %1524 = vmatmul.bf16.gmra.mxu0 %v226
  %v1525 = vpop.f32.mrf.mxu0
  %v1526 = vadd.f32 %v1507, %v1525
  %v1527 = vpop.f32.mrf.mxu0
  %v1528 = vadd.f32 %v1509, %v1527
  %1529 = vmatmul.bf16.gmra.mxu0 %v238
  %v1530 = vpop.f32.mrf.mxu0
  %v1531 = vadd.f32 %v1512, %v1530
  %v1532 = vpop.f32.mrf.mxu0
  %v1533 = vadd.f32 %v1514, %v1532
  %1534 = vdwg.mxu0
  %1535 = vmatpush.bf16.msra.mxu0 %v1144
  %1536 = vmatpush.bf16.msra.mxu0 %v1142
  %1537 = vmatpush.bf16.msra.mxu0 %v1140
  %1538 = vmatpush.bf16.msra.mxu0 %v1138
  %1539 = vmatpush.bf16.msra.mxu0 %v1136
  %1540 = vmatpush.bf16.msra.mxu0 %v1134
  %1541 = vmatpush.bf16.msra.mxu0 %v1132
  %1542 = vmatpush.bf16.msra.mxu0 %v1130
  %1543 = vmatmul.bf16.gmra.mxu0 %v227
  %v1544 = vpop.f32.mrf.mxu0
  %v1545 = vadd.f32 %v1526, %v1544
  %v1546 = vpop.f32.mrf.mxu0
  %v1547 = vadd.f32 %v1528, %v1546
  %1548 = vmatmul.bf16.gmra.mxu0 %v239
  %v1549 = vpop.f32.mrf.mxu0
  %v1550 = vadd.f32 %v1531, %v1549
  %v1551 = vpop.f32.mrf.mxu0
  %v1552 = vadd.f32 %v1533, %v1551
  %1553 = vdwg.mxu0
  %1554 = vmatpush.bf16.msra.mxu0 %v1160
  %1555 = vmatpush.bf16.msra.mxu0 %v1158
  %1556 = vmatpush.bf16.msra.mxu0 %v1156
  %1557 = vmatpush.bf16.msra.mxu0 %v1154
  %1558 = vmatpush.bf16.msra.mxu0 %v1152
  %1559 = vmatpush.bf16.msra.mxu0 %v1150
  %1560 = vmatpush.bf16.msra.mxu0 %v1148
  %1561 = vmatpush.bf16.msra.mxu0 %v1146
  %1562 = vmatmul.bf16.gmra.mxu0 %v228
  %v1563 = vpop.f32.mrf.mxu0
  %v1564 = vadd.f32 %v1545, %v1563
  %v1565 = vpop.f32.mrf.mxu0
  %v1566 = vadd.f32 %v1547, %v1565
  %1567 = vmatmul.bf16.gmra.mxu0 %v240
  %v1568 = vpop.f32.mrf.mxu0
  %v1569 = vadd.f32 %v1550, %v1568
  %v1570 = vpop.f32.mrf.mxu0
  %v1571 = vadd.f32 %v1552, %v1570
  %1572 = vdwg.mxu0
  %1573 = vmatpush.bf16.msra.mxu0 %v1176
  %1574 = vmatpush.bf16.msra.mxu0 %v1174
  %1575 = vmatpush.bf16.msra.mxu0 %v1172
  %1576 = vmatpush.bf16.msra.mxu0 %v1170
  %1577 = vmatpush.bf16.msra.mxu0 %v1168
  %1578 = vmatpush.bf16.msra.mxu0 %v1166
  %1579 = vmatpush.bf16.msra.mxu0 %v1164
  %1580 = vmatpush.bf16.msra.mxu0 %v1162
  %1581 = vmatmul.bf16.gmra.mxu0 %v229
  %v1582 = vpop.f32.mrf.mxu0
  %v1583 = vadd.f32 %v1564, %v1582
  %v1584 = vpop.f32.mrf.mxu0
  %v1585 = vadd.f32 %v1566, %v1584
  %1586 = vmatmul.bf16.gmra.mxu0 %v241
  %v1587 = vpop.f32.mrf.mxu0
  %v1588 = vadd.f32 %v1569, %v1587
  %v1589 = vpop.f32.mrf.mxu0
  %v1590 = vadd.f32 %v1571, %v1589
  %1591 = vdwg.mxu0
  %1592 = vmatpush.bf16.msra.mxu0 %v1192
  %1593 = vmatpush.bf16.msra.mxu0 %v1190
  %1594 = vmatpush.bf16.msra.mxu0 %v1188
  %1595 = vmatpush.bf16.msra.mxu0 %v1186
  %1596 = vmatpush.bf16.msra.mxu0 %v1184
  %1597 = vmatpush.bf16.msra.mxu0 %v1182
  %1598 = vmatpush.bf16.msra.mxu0 %v1180
  %1599 = vmatpush.bf16.msra.mxu0 %v1178
  %1600 = vmatmul.bf16.gmra.mxu0 %v230
  %v1601 = vpop.f32.mrf.mxu0
  %v1602 = vadd.f32 %v1583, %v1601
  %v1603 = vpop.f32.mrf.mxu0
  %v1604 = vadd.f32 %v1585, %v1603
  %1605 = vmatmul.bf16.gmra.mxu0 %v242
  %v1606 = vpop.f32.mrf.mxu0
  %v1607 = vadd.f32 %v1588, %v1606
  %v1608 = vpop.f32.mrf.mxu0
  %v1609 = vadd.f32 %v1590, %v1608
  %1610 = vdwg.mxu0
  %1611 = vmatpush.bf16.msra.mxu0 %v1208
  %1612 = vmatpush.bf16.msra.mxu0 %v1206
  %1613 = vmatpush.bf16.msra.mxu0 %v1204
  %1614 = vmatpush.bf16.msra.mxu0 %v1202
  %1615 = vmatpush.bf16.msra.mxu0 %v1200
  %1616 = vmatpush.bf16.msra.mxu0 %v1198
  %1617 = vmatpush.bf16.msra.mxu0 %v1196
  %1618 = vmatpush.bf16.msra.mxu0 %v1194
  %1619 = vmatmul.bf16.gmra.mxu0 %v231
  %v1620 = vpop.f32.mrf.mxu0
  %v1621 = vadd.f32 %v1602, %v1620
  %v1622 = vpop.f32.mrf.mxu0
  %v1623 = vadd.f32 %v1604, %v1622
  %1624 = vmatmul.bf16.gmra.mxu0 %v243
  %v1625 = vpop.f32.mrf.mxu0
  %v1626 = vadd.f32 %v1607, %v1625
  %v1627 = vpop.f32.mrf.mxu0
  %v1628 = vadd.f32 %v1609, %v1627
  %1629 = vdwg.mxu0
  %1630 = vmatpush.bf16.msra.mxu0 %v1033
  %1631 = vmatpush.bf16.msra.mxu0 %v1031
  %1632 = vmatpush.bf16.msra.mxu0 %v1029
  %1633 = vmatpush.bf16.msra.mxu0 %v1027
  %1634 = vmatpush.bf16.msra.mxu0 %v1025
  %1635 = vmatpush.bf16.msra.mxu0 %v1023
  %1636 = vmatpush.bf16.msra.mxu0 %v1021
  %1637 = vmatpush.bf16.msra.mxu0 %v1019
  %1638 = vmatmul.bf16.gmra.mxu0 %v220
  %v1639 = vpop.f32.mrf.mxu0
  %v1640 = vadd.f32 %v439, %v1639
  %v1641 = vpop.f32.mrf.mxu0
  %v1642 = vadd.f32 %v439, %v1641
  %1643 = vmatmul.bf16.gmra.mxu0 %v232
  %v1644 = vpop.f32.mrf.mxu0
  %v1645 = vadd.f32 %v439, %v1644
  %v1646 = vpop.f32.mrf.mxu0
  %v1647 = vadd.f32 %v439, %v1646
  %1648 = vdwg.mxu0
  %1649 = vmatpush.bf16.msra.mxu0 %v1049
  %1650 = vmatpush.bf16.msra.mxu0 %v1047
  %1651 = vmatpush.bf16.msra.mxu0 %v1045
  %1652 = vmatpush.bf16.msra.mxu0 %v1043
  %1653 = vmatpush.bf16.msra.mxu0 %v1041
  %1654 = vmatpush.bf16.msra.mxu0 %v1039
  %1655 = vmatpush.bf16.msra.mxu0 %v1037
  %1656 = vmatpush.bf16.msra.mxu0 %v1035
  %1657 = vmatmul.bf16.gmra.mxu0 %v221
  %v1658 = vpop.f32.mrf.mxu0
  %v1659 = vadd.f32 %v1640, %v1658
  %v1660 = vpop.f32.mrf.mxu0
  %v1661 = vadd.f32 %v1642, %v1660
  %1662 = vmatmul.bf16.gmra.mxu0 %v233
  %v1663 = vpop.f32.mrf.mxu0
  %v1664 = vadd.f32 %v1645, %v1663
  %v1665 = vpop.f32.mrf.mxu0
  %v1666 = vadd.f32 %v1647, %v1665
  %1667 = vdwg.mxu0
  %1668 = vmatpush.bf16.msra.mxu0 %v1065
  %1669 = vmatpush.bf16.msra.mxu0 %v1063
  %1670 = vmatpush.bf16.msra.mxu0 %v1061
  %1671 = vmatpush.bf16.msra.mxu0 %v1059
  %1672 = vmatpush.bf16.msra.mxu0 %v1057
  %1673 = vmatpush.bf16.msra.mxu0 %v1055
  %1674 = vmatpush.bf16.msra.mxu0 %v1053
  %1675 = vmatpush.bf16.msra.mxu0 %v1051
  %1676 = vmatmul.bf16.gmra.mxu0 %v222
  %v1677 = vpop.f32.mrf.mxu0
  %v1678 = vadd.f32 %v1659, %v1677
  %v1679 = vpop.f32.mrf.mxu0
  %v1680 = vadd.f32 %v1661, %v1679
  %1681 = vmatmul.bf16.gmra.mxu0 %v234
  %v1682 = vpop.f32.mrf.mxu0
  %v1683 = vadd.f32 %v1664, %v1682
  %v1684 = vpop.f32.mrf.mxu0
  %v1685 = vadd.f32 %v1666, %v1684
  %1686 = vdwg.mxu0
  %1687 = vmatpush.bf16.msra.mxu0 %v1081
  %1688 = vmatpush.bf16.msra.mxu0 %v1079
  %1689 = vmatpush.bf16.msra.mxu0 %v1077
  %1690 = vmatpush.bf16.msra.mxu0 %v1075
  %1691 = vmatpush.bf16.msra.mxu0 %v1073
  %1692 = vmatpush.bf16.msra.mxu0 %v1071
  %1693 = vmatpush.bf16.msra.mxu0 %v1069
  %1694 = vmatpush.bf16.msra.mxu0 %v1067
  %1695 = vmatmul.bf16.gmra.mxu0 %v223
  %v1696 = vpop.f32.mrf.mxu0
  %v1697 = vadd.f32 %v1678, %v1696
  %v1698 = vpop.f32.mrf.mxu0
  %v1699 = vadd.f32 %v1680, %v1698
  %1700 = vmatmul.bf16.gmra.mxu0 %v235
  %v1701 = vpop.f32.mrf.mxu0
  %v1702 = vadd.f32 %v1683, %v1701
  %v1703 = vpop.f32.mrf.mxu0
  %v1704 = vadd.f32 %v1685, %v1703
  %1705 = vdwg.mxu0
  %1706 = vmatpush.bf16.msra.mxu0 %v1097
  %1707 = vmatpush.bf16.msra.mxu0 %v1095
  %1708 = vmatpush.bf16.msra.mxu0 %v1093
  %1709 = vmatpush.bf16.msra.mxu0 %v1091
  %1710 = vmatpush.bf16.msra.mxu0 %v1089
  %1711 = vmatpush.bf16.msra.mxu0 %v1087
  %1712 = vmatpush.bf16.msra.mxu0 %v1085
  %1713 = vmatpush.bf16.msra.mxu0 %v1083
  %1714 = vmatmul.bf16.gmra.mxu0 %v224
  %v1715 = vpop.f32.mrf.mxu0
  %v1716 = vadd.f32 %v1697, %v1715
  %v1717 = vpop.f32.mrf.mxu0
  %v1718 = vadd.f32 %v1699, %v1717
  %1719 = vmatmul.bf16.gmra.mxu0 %v236
  %v1720 = vpop.f32.mrf.mxu0
  %v1721 = vadd.f32 %v1702, %v1720
  %v1722 = vpop.f32.mrf.mxu0
  %v1723 = vadd.f32 %v1704, %v1722
  %1724 = vdwg.mxu0
  %1725 = vmatpush.bf16.msra.mxu0 %v1113
  %1726 = vmatpush.bf16.msra.mxu0 %v1111
  %1727 = vmatpush.bf16.msra.mxu0 %v1109
  %1728 = vmatpush.bf16.msra.mxu0 %v1107
  %1729 = vmatpush.bf16.msra.mxu0 %v1105
  %1730 = vmatpush.bf16.msra.mxu0 %v1103
  %1731 = vmatpush.bf16.msra.mxu0 %v1101
  %1732 = vmatpush.bf16.msra.mxu0 %v1099
  %1733 = vmatmul.bf16.gmra.mxu0 %v225
  %v1734 = vpop.f32.mrf.mxu0
  %v1735 = vadd.f32 %v1716, %v1734
  %v1736 = vpop.f32.mrf.mxu0
  %v1737 = vadd.f32 %v1718, %v1736
  %1738 = vmatmul.bf16.gmra.mxu0 %v237
  %v1739 = vpop.f32.mrf.mxu0
  %v1740 = vadd.f32 %v1721, %v1739
  %v1741 = vpop.f32.mrf.mxu0
  %v1742 = vadd.f32 %v1723, %v1741
  %1743 = vdwg.mxu0
  %1744 = vmatpush.bf16.msra.mxu0 %v1129
  %1745 = vmatpush.bf16.msra.mxu0 %v1127
  %1746 = vmatpush.bf16.msra.mxu0 %v1125
  %1747 = vmatpush.bf16.msra.mxu0 %v1123
  %1748 = vmatpush.bf16.msra.mxu0 %v1121
  %1749 = vmatpush.bf16.msra.mxu0 %v1119
  %1750 = vmatpush.bf16.msra.mxu0 %v1117
  %1751 = vmatpush.bf16.msra.mxu0 %v1115
  %1752 = vmatmul.bf16.gmra.mxu0 %v226
  %v1753 = vpop.f32.mrf.mxu0
  %v1754 = vadd.f32 %v1735, %v1753
  %v1755 = vpop.f32.mrf.mxu0
  %v1756 = vadd.f32 %v1737, %v1755
  %1757 = vmatmul.bf16.gmra.mxu0 %v238
  %v1758 = vpop.f32.mrf.mxu0
  %v1759 = vadd.f32 %v1740, %v1758
  %v1760 = vpop.f32.mrf.mxu0
  %v1761 = vadd.f32 %v1742, %v1760
  %1762 = vdwg.mxu0
  %1763 = vmatpush.bf16.msra.mxu0 %v1145
  %1764 = vmatpush.bf16.msra.mxu0 %v1143
  %1765 = vmatpush.bf16.msra.mxu0 %v1141
  %1766 = vmatpush.bf16.msra.mxu0 %v1139
  %1767 = vmatpush.bf16.msra.mxu0 %v1137
  %1768 = vmatpush.bf16.msra.mxu0 %v1135
  %1769 = vmatpush.bf16.msra.mxu0 %v1133
  %1770 = vmatpush.bf16.msra.mxu0 %v1131
  %1771 = vmatmul.bf16.gmra.mxu0 %v227
  %v1772 = vpop.f32.mrf.mxu0
  %v1773 = vadd.f32 %v1754, %v1772
  %v1774 = vpop.f32.mrf.mxu0
  %v1775 = vadd.f32 %v1756, %v1774
  %1776 = vmatmul.bf16.gmra.mxu0 %v239
  %v1777 = vpop.f32.mrf.mxu0
  %v1778 = vadd.f32 %v1759, %v1777
  %v1779 = vpop.f32.mrf.mxu0
  %v1780 = vadd.f32 %v1761, %v1779
  %1781 = vdwg.mxu0
  %1782 = vmatpush.bf16.msra.mxu0 %v1161
  %1783 = vmatpush.bf16.msra.mxu0 %v1159
  %1784 = vmatpush.bf16.msra.mxu0 %v1157
  %1785 = vmatpush.bf16.msra.mxu0 %v1155
  %1786 = vmatpush.bf16.msra.mxu0 %v1153
  %1787 = vmatpush.bf16.msra.mxu0 %v1151
  %1788 = vmatpush.bf16.msra.mxu0 %v1149
  %1789 = vmatpush.bf16.msra.mxu0 %v1147
  %1790 = vmatmul.bf16.gmra.mxu0 %v228
  %v1791 = vpop.f32.mrf.mxu0
  %v1792 = vadd.f32 %v1773, %v1791
  %v1793 = vpop.f32.mrf.mxu0
  %v1794 = vadd.f32 %v1775, %v1793
  %1795 = vmatmul.bf16.gmra.mxu0 %v240
  %v1796 = vpop.f32.mrf.mxu0
  %v1797 = vadd.f32 %v1778, %v1796
  %v1798 = vpop.f32.mrf.mxu0
  %v1799 = vadd.f32 %v1780, %v1798
  %1800 = vdwg.mxu0
  %1801 = vmatpush.bf16.msra.mxu0 %v1177
  %1802 = vmatpush.bf16.msra.mxu0 %v1175
  %1803 = vmatpush.bf16.msra.mxu0 %v1173
  %1804 = vmatpush.bf16.msra.mxu0 %v1171
  %1805 = vmatpush.bf16.msra.mxu0 %v1169
  %1806 = vmatpush.bf16.msra.mxu0 %v1167
  %1807 = vmatpush.bf16.msra.mxu0 %v1165
  %1808 = vmatpush.bf16.msra.mxu0 %v1163
  %1809 = vmatmul.bf16.gmra.mxu0 %v229
  %v1810 = vpop.f32.mrf.mxu0
  %v1811 = vadd.f32 %v1792, %v1810
  %v1812 = vpop.f32.mrf.mxu0
  %v1813 = vadd.f32 %v1794, %v1812
  %1814 = vmatmul.bf16.gmra.mxu0 %v241
  %v1815 = vpop.f32.mrf.mxu0
  %v1816 = vadd.f32 %v1797, %v1815
  %v1817 = vpop.f32.mrf.mxu0
  %v1818 = vadd.f32 %v1799, %v1817
  %1819 = vdwg.mxu0
  %1820 = vmatpush.bf16.msra.mxu0 %v1193
  %1821 = vmatpush.bf16.msra.mxu0 %v1191
  %1822 = vmatpush.bf16.msra.mxu0 %v1189
  %1823 = vmatpush.bf16.msra.mxu0 %v1187
  %1824 = vmatpush.bf16.msra.mxu0 %v1185
  %1825 = vmatpush.bf16.msra.mxu0 %v1183
  %1826 = vmatpush.bf16.msra.mxu0 %v1181
  %1827 = vmatpush.bf16.msra.mxu0 %v1179
  %1828 = vmatmul.bf16.gmra.mxu0 %v230
  %v1829 = vpop.f32.mrf.mxu0
  %v1830 = vadd.f32 %v1811, %v1829
  %v1831 = vpop.f32.mrf.mxu0
  %v1832 = vadd.f32 %v1813, %v1831
  %1833 = vmatmul.bf16.gmra.mxu0 %v242
  %v1834 = vpop.f32.mrf.mxu0
  %v1835 = vadd.f32 %v1816, %v1834
  %v1836 = vpop.f32.mrf.mxu0
  %v1837 = vadd.f32 %v1818, %v1836
  %1838 = vdwg.mxu0
  %1839 = vmatpush.bf16.msra.mxu0 %v1209
  %1840 = vmatpush.bf16.msra.mxu0 %v1207
  %1841 = vmatpush.bf16.msra.mxu0 %v1205
  %1842 = vmatpush.bf16.msra.mxu0 %v1203
  %1843 = vmatpush.bf16.msra.mxu0 %v1201
  %1844 = vmatpush.bf16.msra.mxu0 %v1199
  %1845 = vmatpush.bf16.msra.mxu0 %v1197
  %1846 = vmatpush.bf16.msra.mxu0 %v1195
  %1847 = vmatmul.bf16.gmra.mxu0 %v231
  %v1848 = vpop.f32.mrf.mxu0
  %v1849 = vadd.f32 %v1830, %v1848
  %v1850 = vpop.f32.mrf.mxu0
  %v1851 = vadd.f32 %v1832, %v1850
  %1852 = vmatmul.bf16.gmra.mxu0 %v243
  %v1853 = vpop.f32.mrf.mxu0
  %v1854 = vadd.f32 %v1835, %v1853
  %v1855 = vpop.f32.mrf.mxu0
  %v1856 = vadd.f32 %v1837, %v1855
  %1857 = vdwg.mxu0
  %v1858 = vmul.f32 %v1621, 0.70710677
  %v1859 = vmul.f32 %v1849, 0.70710677
  %v1860 = vmul.f32 %v1623, 0.70710677
  %v1861 = vmul.f32 %v1851, 0.70710677
  %v1862 = vmul.f32 %v1626, 0.70710677
  %v1863 = vmul.f32 %v1854, 0.70710677
  %v1864 = vmul.f32 %v1628, 0.70710677
  %v1865 = vmul.f32 %v1856, 0.70710677
  %v1866 = vand.u32 2147483647, %v1858
  %v1867 = vand.u32 2147483647, %v1859
  %v1868 = vand.u32 2147483647, %v1860
  %v1869 = vand.u32 2147483647, %v1861
  %v1870 = vand.u32 2147483647, %v1862
  %v1871 = vand.u32 2147483647, %v1863
  %v1872 = vand.u32 2147483647, %v1864
  %v1873 = vand.u32 2147483647, %v1865
  %v1874 = vmul.f32 %v1866, 0.3275911
  %v1875 = vmul.f32 %v1867, 0.3275911
  %v1876 = vmul.f32 %v1868, 0.3275911
  %v1877 = vmul.f32 %v1869, 0.3275911
  %v1878 = vmul.f32 %v1870, 0.3275911
  %v1879 = vmul.f32 %v1871, 0.3275911
  %v1880 = vmul.f32 %v1872, 0.3275911
  %v1881 = vmul.f32 %v1873, 0.3275911
  %v1882 = vadd.f32 %v1874, 1.0
  %v1883 = vadd.f32 %v1875, 1.0
  %v1884 = vadd.f32 %v1876, 1.0
  %v1885 = vadd.f32 %v1877, 1.0
  %v1886 = vadd.f32 %v1878, 1.0
  %v1887 = vadd.f32 %v1879, 1.0
  %v1888 = vadd.f32 %v1880, 1.0
  %v1889 = vadd.f32 %v1881, 1.0
  %v1890 = vrcp.pop %v1882
  %v1891 = vmul.f32 %v1882, %v1890
  %v1892 = vsub.f32 1.0, %v1891
  %v1893 = vmul.f32 %v1890, %v1892
  %v1894 = vadd.f32 %v1890, %v1893
  %vm1895 = vweird.f32 %v1882
  %vm1896 = vweird.f32 %v1890
  %vm1897 = vmor %vm1895, %vm1896
  %v1898 = vsel %vm1897, %v1890, %v1894
  %v1899 = vand.u32 2147483647, %v1882
  %vm1900 = vcmp.eq.f32.partialorder %v1899, 8.507059e+37
  %v1901 = vand.u32 %v1882, 2147483648
  %v1902 = vor.u32 1.1754944e-38, %v1901
  %v1903 = vsel %vm1900, %v1902, %v1898
  %v1904 = vmul.f32 1.0, %v1903
  %v1905 = vrcp.pop %v1883
  %v1906 = vmul.f32 %v1883, %v1905
  %v1907 = vsub.f32 1.0, %v1906
  %v1908 = vmul.f32 %v1905, %v1907
  %v1909 = vadd.f32 %v1905, %v1908
  %vm1910 = vweird.f32 %v1883
  %vm1911 = vweird.f32 %v1905
  %vm1912 = vmor %vm1910, %vm1911
  %v1913 = vsel %vm1912, %v1905, %v1909
  %v1914 = vand.u32 2147483647, %v1883
  %vm1915 = vcmp.eq.f32.partialorder %v1914, 8.507059e+37
  %v1916 = vand.u32 %v1883, 2147483648
  %v1917 = vor.u32 1.1754944e-38, %v1916
  %v1918 = vsel %vm1915, %v1917, %v1913
  %v1919 = vmul.f32 1.0, %v1918
  %v1920 = vrcp.pop %v1884
  %v1921 = vmul.f32 %v1884, %v1920
  %v1922 = vsub.f32 1.0, %v1921
  %v1923 = vmul.f32 %v1920, %v1922
  %v1924 = vadd.f32 %v1920, %v1923
  %vm1925 = vweird.f32 %v1884
  %vm1926 = vweird.f32 %v1920
  %vm1927 = vmor %vm1925, %vm1926
  %v1928 = vsel %vm1927, %v1920, %v1924
  %v1929 = vand.u32 2147483647, %v1884
  %vm1930 = vcmp.eq.f32.partialorder %v1929, 8.507059e+37
  %v1931 = vand.u32 %v1884, 2147483648
  %v1932 = vor.u32 1.1754944e-38, %v1931
  %v1933 = vsel %vm1930, %v1932, %v1928
  %v1934 = vmul.f32 1.0, %v1933
  %v1935 = vrcp.pop %v1885
  %v1936 = vmul.f32 %v1885, %v1935
  %v1937 = vsub.f32 1.0, %v1936
  %v1938 = vmul.f32 %v1935, %v1937
  %v1939 = vadd.f32 %v1935, %v1938
  %vm1940 = vweird.f32 %v1885
  %vm1941 = vweird.f32 %v1935
  %vm1942 = vmor %vm1940, %vm1941
  %v1943 = vsel %vm1942, %v1935, %v1939
  %v1944 = vand.u32 2147483647, %v1885
  %vm1945 = vcmp.eq.f32.partialorder %v1944, 8.507059e+37
  %v1946 = vand.u32 %v1885, 2147483648
  %v1947 = vor.u32 1.1754944e-38, %v1946
  %v1948 = vsel %vm1945, %v1947, %v1943
  %v1949 = vmul.f32 1.0, %v1948
  %v1950 = vrcp.pop %v1886
  %v1951 = vmul.f32 %v1886, %v1950
  %v1952 = vsub.f32 1.0, %v1951
  %v1953 = vmul.f32 %v1950, %v1952
  %v1954 = vadd.f32 %v1950, %v1953
  %vm1955 = vweird.f32 %v1886
  %vm1956 = vweird.f32 %v1950
  %vm1957 = vmor %vm1955, %vm1956
  %v1958 = vsel %vm1957, %v1950, %v1954
  %v1959 = vand.u32 2147483647, %v1886
  %vm1960 = vcmp.eq.f32.partialorder %v1959, 8.507059e+37
  %v1961 = vand.u32 %v1886, 2147483648
  %v1962 = vor.u32 1.1754944e-38, %v1961
  %v1963 = vsel %vm1960, %v1962, %v1958
  %v1964 = vmul.f32 1.0, %v1963
  %v1965 = vrcp.pop %v1887
  %v1966 = vmul.f32 %v1887, %v1965
  %v1967 = vsub.f32 1.0, %v1966
  %v1968 = vmul.f32 %v1965, %v1967
  %v1969 = vadd.f32 %v1965, %v1968
  %vm1970 = vweird.f32 %v1887
  %vm1971 = vweird.f32 %v1965
  %vm1972 = vmor %vm1970, %vm1971
  %v1973 = vsel %vm1972, %v1965, %v1969
  %v1974 = vand.u32 2147483647, %v1887
  %vm1975 = vcmp.eq.f32.partialorder %v1974, 8.507059e+37
  %v1976 = vand.u32 %v1887, 2147483648
  %v1977 = vor.u32 1.1754944e-38, %v1976
  %v1978 = vsel %vm1975, %v1977, %v1973
  %v1979 = vmul.f32 1.0, %v1978
  %v1980 = vrcp.pop %v1888
  %v1981 = vmul.f32 %v1888, %v1980
  %v1982 = vsub.f32 1.0, %v1981
  %v1983 = vmul.f32 %v1980, %v1982
  %v1984 = vadd.f32 %v1980, %v1983
  %vm1985 = vweird.f32 %v1888
  %vm1986 = vweird.f32 %v1980
  %vm1987 = vmor %vm1985, %vm1986
  %v1988 = vsel %vm1987, %v1980, %v1984
  %v1989 = vand.u32 2147483647, %v1888
  %vm1990 = vcmp.eq.f32.partialorder %v1989, 8.507059e+37
  %v1991 = vand.u32 %v1888, 2147483648
  %v1992 = vor.u32 1.1754944e-38, %v1991
  %v1993 = vsel %vm1990, %v1992, %v1988
  %v1994 = vmul.f32 1.0, %v1993
  %v1995 = vrcp.pop %v1889
  %v1996 = vmul.f32 %v1889, %v1995
  %v1997 = vsub.f32 1.0, %v1996
  %v1998 = vmul.f32 %v1995, %v1997
  %v1999 = vadd.f32 %v1995, %v1998
  %vm2000 = vweird.f32 %v1889
  %vm2001 = vweird.f32 %v1995
  %vm2002 = vmor %vm2000, %vm2001
  %v2003 = vsel %vm2002, %v1995, %v1999
  %v2004 = vand.u32 2147483647, %v1889
  %vm2005 = vcmp.eq.f32.partialorder %v2004, 8.507059e+37
  %v2006 = vand.u32 %v1889, 2147483648
  %v2007 = vor.u32 1.1754944e-38, %v2006
  %v2008 = vsel %vm2005, %v2007, %v2003
  %v2009 = vmul.f32 1.0, %v2008
  %v2010 = vmul.f32 %v1904, 1.0614054
  %v2011 = vmul.f32 %v1919, 1.0614054
  %v2012 = vmul.f32 %v1934, 1.0614054
  %v2013 = vmul.f32 %v1949, 1.0614054
  %v2014 = vmul.f32 %v1964, 1.0614054
  %v2015 = vmul.f32 %v1979, 1.0614054
  %v2016 = vmul.f32 %v1994, 1.0614054
  %v2017 = vmul.f32 %v2009, 1.0614054
  %v2018 = vsub.f32 %v2010, 1.4531521
  %v2019 = vsub.f32 %v2011, 1.4531521
  %v2020 = vsub.f32 %v2012, 1.4531521
  %v2021 = vsub.f32 %v2013, 1.4531521
  %v2022 = vsub.f32 %v2014, 1.4531521
  %v2023 = vsub.f32 %v2015, 1.4531521
  %v2024 = vsub.f32 %v2016, 1.4531521
  %v2025 = vsub.f32 %v2017, 1.4531521
  %v2026 = vmul.f32 %v2018, %v1904
  %v2027 = vmul.f32 %v2019, %v1919
  %v2028 = vmul.f32 %v2020, %v1934
  %v2029 = vmul.f32 %v2021, %v1949
  %v2030 = vmul.f32 %v2022, %v1964
  %v2031 = vmul.f32 %v2023, %v1979
  %v2032 = vmul.f32 %v2024, %v1994
  %v2033 = vmul.f32 %v2025, %v2009
  %v2034 = vadd.f32 %v2026, 1.4214138
  %v2035 = vadd.f32 %v2027, 1.4214138
  %v2036 = vadd.f32 %v2028, 1.4214138
  %v2037 = vadd.f32 %v2029, 1.4214138
  %v2038 = vadd.f32 %v2030, 1.4214138
  %v2039 = vadd.f32 %v2031, 1.4214138
  %v2040 = vadd.f32 %v2032, 1.4214138
  %v2041 = vadd.f32 %v2033, 1.4214138
  %v2042 = vmul.f32 %v2034, %v1904
  %v2043 = vmul.f32 %v2035, %v1919
  %v2044 = vmul.f32 %v2036, %v1934
  %v2045 = vmul.f32 %v2037, %v1949
  %v2046 = vmul.f32 %v2038, %v1964
  %v2047 = vmul.f32 %v2039, %v1979
  %v2048 = vmul.f32 %v2040, %v1994
  %v2049 = vmul.f32 %v2041, %v2009
  %v2050 = vsub.f32 %v2042, 0.28449672
  %v2051 = vsub.f32 %v2043, 0.28449672
  %v2052 = vsub.f32 %v2044, 0.28449672
  %v2053 = vsub.f32 %v2045, 0.28449672
  %v2054 = vsub.f32 %v2046, 0.28449672
  %v2055 = vsub.f32 %v2047, 0.28449672
  %v2056 = vsub.f32 %v2048, 0.28449672
  %v2057 = vsub.f32 %v2049, 0.28449672
  %v2058 = vmul.f32 %v2050, %v1904
  %v2059 = vmul.f32 %v2051, %v1919
  %v2060 = vmul.f32 %v2052, %v1934
  %v2061 = vmul.f32 %v2053, %v1949
  %v2062 = vmul.f32 %v2054, %v1964
  %v2063 = vmul.f32 %v2055, %v1979
  %v2064 = vmul.f32 %v2056, %v1994
  %v2065 = vmul.f32 %v2057, %v2009
  %v2066 = vadd.f32 %v2058, 0.2548296
  %v2067 = vadd.f32 %v2059, 0.2548296
  %v2068 = vadd.f32 %v2060, 0.2548296
  %v2069 = vadd.f32 %v2061, 0.2548296
  %v2070 = vadd.f32 %v2062, 0.2548296
  %v2071 = vadd.f32 %v2063, 0.2548296
  %v2072 = vadd.f32 %v2064, 0.2548296
  %v2073 = vadd.f32 %v2065, 0.2548296
  %v2074 = vmul.f32 %v2066, %v1904
  %v2075 = vmul.f32 %v2067, %v1919
  %v2076 = vmul.f32 %v2068, %v1934
  %v2077 = vmul.f32 %v2069, %v1949
  %v2078 = vmul.f32 %v2070, %v1964
  %v2079 = vmul.f32 %v2071, %v1979
  %v2080 = vmul.f32 %v2072, %v1994
  %v2081 = vmul.f32 %v2073, %v2009
  %v2082 = vsub.f32 0.0, %v1866
  %v2083 = vsub.f32 0.0, %v1867
  %v2084 = vsub.f32 0.0, %v1868
  %v2085 = vsub.f32 0.0, %v1869
  %v2086 = vsub.f32 0.0, %v1870
  %v2087 = vsub.f32 0.0, %v1871
  %v2088 = vsub.f32 0.0, %v1872
  %v2089 = vsub.f32 0.0, %v1873
  %v2090 = vmul.f32 %v2082, %v1866
  %v2091 = vmul.f32 %v2083, %v1867
  %v2092 = vmul.f32 %v2084, %v1868
  %v2093 = vmul.f32 %v2085, %v1869
  %v2094 = vmul.f32 %v2086, %v1870
  %v2095 = vmul.f32 %v2087, %v1871
  %v2096 = vmul.f32 %v2088, %v1872
  %v2097 = vmul.f32 %v2089, %v1873
  %v2098 = vmul.f32 %v2090, 1.442695
  %v2099 = vpow.pop %v2098
  %v2100 = vmul.f32 %v2091, 1.442695
  %v2101 = vpow.pop %v2100
  %v2102 = vmul.f32 %v2092, 1.442695
  %v2103 = vpow.pop %v2102
  %v2104 = vmul.f32 %v2093, 1.442695
  %v2105 = vpow.pop %v2104
  %v2106 = vmul.f32 %v2094, 1.442695
  %v2107 = vpow.pop %v2106
  %v2108 = vmul.f32 %v2095, 1.442695
  %v2109 = vpow.pop %v2108
  %v2110 = vmul.f32 %v2096, 1.442695
  %v2111 = vpow.pop %v2110
  %v2112 = vmul.f32 %v2097, 1.442695
  %v2113 = vpow.pop %v2112
  %v2114 = vmul.f32 %v2074, %v2099
  %v2115 = vmul.f32 %v2075, %v2101
  %v2116 = vmul.f32 %v2076, %v2103
  %v2117 = vmul.f32 %v2077, %v2105
  %v2118 = vmul.f32 %v2078, %v2107
  %v2119 = vmul.f32 %v2079, %v2109
  %v2120 = vmul.f32 %v2080, %v2111
  %v2121 = vmul.f32 %v2081, %v2113
  %v2122 = vsub.f32 1.0, %v2114
  %v2123 = vsub.f32 1.0, %v2115
  %v2124 = vsub.f32 1.0, %v2116
  %v2125 = vsub.f32 1.0, %v2117
  %v2126 = vsub.f32 1.0, %v2118
  %v2127 = vsub.f32 1.0, %v2119
  %v2128 = vsub.f32 1.0, %v2120
  %v2129 = vsub.f32 1.0, %v2121
  %vm2130 = vcmp.ge.f32.partialorder %v1858, 0.0
  %vm2131 = vcmp.ge.f32.partialorder %v1859, 0.0
  %vm2132 = vcmp.ge.f32.partialorder %v1860, 0.0
  %vm2133 = vcmp.ge.f32.partialorder %v1861, 0.0
  %vm2134 = vcmp.ge.f32.partialorder %v1862, 0.0
  %vm2135 = vcmp.ge.f32.partialorder %v1863, 0.0
  %vm2136 = vcmp.ge.f32.partialorder %v1864, 0.0
  %vm2137 = vcmp.ge.f32.partialorder %v1865, 0.0
  %v2138 = vsub.f32 0.0, %v2122
  %v2139 = vsub.f32 0.0, %v2123
  %v2140 = vsub.f32 0.0, %v2124
  %v2141 = vsub.f32 0.0, %v2125
  %v2142 = vsub.f32 0.0, %v2126
  %v2143 = vsub.f32 0.0, %v2127
  %v2144 = vsub.f32 0.0, %v2128
  %v2145 = vsub.f32 0.0, %v2129
  %v2146 = vsel %vm2130, %v2122, %v2138
  %v2147 = vsel %vm2131, %v2123, %v2139
  %v2148 = vsel %vm2132, %v2124, %v2140
  %v2149 = vsel %vm2133, %v2125, %v2141
  %v2150 = vsel %vm2134, %v2126, %v2142
  %v2151 = vsel %vm2135, %v2127, %v2143
  %v2152 = vsel %vm2136, %v2128, %v2144
  %v2153 = vsel %vm2137, %v2129, %v2145
  %v2154 = vmul.f32 %v1621, 0.5
  %v2155 = vmul.f32 %v1849, 0.5
  %v2156 = vmul.f32 %v1623, 0.5
  %v2157 = vmul.f32 %v1851, 0.5
  %v2158 = vmul.f32 %v1626, 0.5
  %v2159 = vmul.f32 %v1854, 0.5
  %v2160 = vmul.f32 %v1628, 0.5
  %v2161 = vmul.f32 %v1856, 0.5
  %v2162 = vadd.f32 %v2146, 1.0
  %v2163 = vadd.f32 %v2147, 1.0
  %v2164 = vadd.f32 %v2148, 1.0
  %v2165 = vadd.f32 %v2149, 1.0
  %v2166 = vadd.f32 %v2150, 1.0
  %v2167 = vadd.f32 %v2151, 1.0
  %v2168 = vadd.f32 %v2152, 1.0
  %v2169 = vadd.f32 %v2153, 1.0
  %v2170 = vmul.f32 %v2154, %v2162
  %v2171 = vmul.f32 %v2155, %v2163
  %v2172 = vmul.f32 %v2156, %v2164
  %v2173 = vmul.f32 %v2157, %v2165
  %v2174 = vmul.f32 %v2158, %v2166
  %v2175 = vmul.f32 %v2159, %v2167
  %v2176 = vmul.f32 %v2160, %v2168
  %v2177 = vmul.f32 %v2161, %v2169
  %2178 = vst [vmem:[%s5] sm:$0xff] %v2170
  %2179 = vst [vmem:[%s5 + $0x8] sm:$0xff] %v2171
  %2180 = vst [vmem:[%s5 + $0x10] sm:$0xff] %v2172
  %2181 = vst [vmem:[%s5 + $0x18] sm:$0xff] %v2173
  %2182 = vst [vmem:[%s5 + $0x20] sm:$0xff] %v2174
  %2183 = vst [vmem:[%s5 + $0x28] sm:$0xff] %v2175
  %2184 = vst [vmem:[%s5 + $0x30] sm:$0xff] %v2176
  %2185 = vst [vmem:[%s5 + $0x38] sm:$0xff] %v2177
  // Predicated region
  $region22: #{swin_block4_forward.12} parent=0 // pred_check
    _
  $region23: #{swin_block4_forward.12} parent=0 // pred_check_branch
    %2187 = sbr.rel (0) target = $region25
  $region24: #{swin_block4_forward.12} parent=0 // pred_region
    _
  $region25: #{swin_block4_forward.12} parent=0 // pred_fallthru
    _
  // Predicated region
  $region26: #{swin_block4_forward.12} parent=0 // pred_check
    _
  $region27: #{swin_block4_forward.12} parent=0 // pred_check_branch
    %2189 = sbr.rel (0) target = $region29
  $region28: #{swin_block4_forward.12} parent=0 // pred_region
    _
  $region29: #{swin_block4_forward.12} parent=0 // pred_fallthru
    _

</llo_original>
